<compile_context>
chip_gen: v7x
topology: tpu7x:2x2x1
jax: 0.10.0
libtpu: 0.0.40
codegen_flags: <defaults>
</compile_context>

<pallas_src>
import functools

import jax
import jax.numpy as jnp
from jax.experimental import pallas as pl
from jax.experimental.pallas import tpu as pltpu

LN_EPS = 1e-5  # torch.nn.LayerNorm default


# --------------------------------------------------------------------------- #
# Kernel
# --------------------------------------------------------------------------- #
def rnn_critic_seq_kernel(
    x_ref, h0_ref,                    # x chunk (T_blk, Bb, D), initial hidden (Bb, HP)
    w1_ref, b1_ref,                   # fc1: (D, HP), (1, HP)
    g_ref, beta_ref,                  # LayerNorm gamma/beta: (1, HP)
    wih_ref, bih_ref,                 # GRU input proj:     (HP, 3*HP), (1, 3*HP)
    whh_ref, bhh_ref,                 # GRU recurrent proj: (HP, 3*HP), (1, 3*HP) (f32)
    w2_ref, b2_ref,                   # fc2 (lane padded):  (HP, OP), (1, OP)
    v_ref, hout_ref,                  # outputs: (T_blk, Bb, OP), (Bb, HP)
    hcarry_ref,                       # VMEM scratch (Bb, HP): hidden carry across chunks
    *, hid_size,
):
    t = pl.program_id(1)
    HP = h0_ref.shape[-1]             # padded hidden dim (multiple of 128)
    T_blk = x_ref.shape[0]
    inv_h = 1.0 / float(hid_size)

    # Initialize the hidden-state carry from h0 on the first time chunk of this block.
    @pl.when(t == 0)
    def _init():
        hcarry_ref[...] = h0_ref[...].astype(jnp.float32)

    h = hcarry_ref[...]               # (Bb, HP), f32; padding lanes are exactly 0

    # Fused rollout over the time chunk.  T_blk is small and static, so a Python loop
    # fully unrolls with compile-time-constant ref indices (static slices are free);
    # the hidden state h is carried purely in registers between steps.
    for s in range(T_blk):
        # ---- fc1 ----
        x = x_ref[s]                                              # (Bb, D) f32
        y = jnp.dot(x.astype(w1_ref.dtype), w1_ref[...],
                    preferred_element_type=jnp.float32) + b1_ref[...]

        # ---- LayerNorm over the real hid_size lanes (biased var, eps = 1e-5) ----
        # Padding lanes of y are exactly 0 (zero-padded w1/b1), so plain lane sums
        # rescaled by 1/hid_size give the correct statistics (no mask needed).
        mean = jnp.sum(y, axis=-1, keepdims=True) * inv_h
        e2 = jnp.sum(y * y, axis=-1, keepdims=True) * inv_h
        var = jnp.maximum(e2 - mean * mean, 0.0)
        y = (y - mean) * jax.lax.rsqrt(var + LN_EPS)
        y = y * g_ref[...] + beta_ref[...]        # gamma/beta padded 0 -> pad lanes = 0

        # ---- hidden activation (relu) ----
        y = jnp.maximum(y, 0.0)

        # ---- GRUCell: two clean dots, y and h stay in registers --------------
        gi = jnp.dot(y.astype(wih_ref.dtype), wih_ref[...],
                     preferred_element_type=jnp.float32) + bih_ref[...]
        gh = jnp.dot(h.astype(whh_ref.dtype), whh_ref[...],
                     preferred_element_type=jnp.float32) + bhh_ref[...]
        # Gate blocks are laid out on 128-lane boundaries -> vreg-aligned slices.
        r = jax.nn.sigmoid(gi[:, 0 * HP:1 * HP] + gh[:, 0 * HP:1 * HP])
        z = jax.nn.sigmoid(gi[:, 1 * HP:2 * HP] + gh[:, 1 * HP:2 * HP])
        n = jnp.tanh(gi[:, 2 * HP:3 * HP] + r * gh[:, 2 * HP:3 * HP])
        h = (1.0 - z) * n + z * h                 # padding lanes stay exactly 0

        # ---- fc2 (output padded to a full 128-lane tile -> unmasked vst) ----
        v = jnp.dot(h.astype(w2_ref.dtype), w2_ref[...],
                    preferred_element_type=jnp.float32) + b2_ref[...]
        v_ref[s] = v.astype(v_ref.dtype)

    # Carry h to the next time chunk (only touched at chunk boundaries).
    hcarry_ref[...] = h

    # Final hidden state written back once per batch block.
    @pl.when(t == pl.num_programs(1) - 1)
    def _finalize():
        hout_ref[...] = h.astype(hout_ref.dtype)


# --------------------------------------------------------------------------- #
# Wrappers
# --------------------------------------------------------------------------- #
@functools.partial(jax.jit,
                   static_argnames=("hid_size", "out_features", "block_b", "t_block"))
def rnn_critic_forward_seq(x_seq, h0, packed, *, hid_size, out_features,
                           block_b=None, t_block=None):
    """Fused T-step forward.

    x_seq: (T, B, D) f32, h0: (B, hid_size) f32, packed: packed params (pack_params).
    Returns (values (T, B, out_features) f32, final hidden (B, hid_size) f32).
    Note: the padded hidden buffer is internally aliased/donated to the output.
    """
    T, B, D = x_seq.shape
    HP = packed["w1"].shape[-1]        # padded hidden dim
    OP = packed["w2"].shape[-1]        # padded output dim

    if block_b is None:
        # Two batch blocks when B allows -> v7x megacore uses both TensorCores;
        # otherwise a single block (no extra grid overhead on 1-TC v5e/v6e).
        block_b = B // 2 if (B >= 16 and B % 16 == 0) else B
    assert B % block_b == 0 and (block_b == B or block_b % 8 == 0)
    NB = B // block_b

    if t_block is None:
        t_block = T                    # fuse the whole rollout into one grid iteration
    assert T % t_block == 0
    NT = T // t_block
    grid = (NB, NT)

    # Pad the initial hidden state to the lane-aligned width (padding lanes = 0).
    h0_pad = jnp.zeros((B, HP), jnp.float32).at[:, :hid_size].set(
        h0.astype(jnp.float32))

    def _const(b, t):                  # weights/biases: resident in VMEM for all steps
        return (0, 0)

    in_specs = [
        pl.BlockSpec((t_block, block_b, D), lambda b, t: (t, b, 0)),   # x chunk
        pl.BlockSpec((block_b, HP), lambda b, t: (b, 0)),              # h0
        pl.BlockSpec(packed["w1"].shape, _const),
        pl.BlockSpec(packed["b1"].shape, _const),
        pl.BlockSpec(packed["ln_g"].shape, _const),
        pl.BlockSpec(packed["ln_b"].shape, _const),
        pl.BlockSpec(packed["w_ih"].shape, _const),
        pl.BlockSpec(packed["b_ih"].shape, _const),
        pl.BlockSpec(packed["w_hh"].shape, _const),
        pl.BlockSpec(packed["b_hh"].shape, _const),
        pl.BlockSpec(packed["w2"].shape, _const),
        pl.BlockSpec(packed["b2"].shape, _const),
    ]
    out_specs = (
        pl.BlockSpec((t_block, block_b, OP), lambda b, t: (t, b, 0)),  # v (lane dense)
        pl.BlockSpec((block_b, HP), lambda b, t: (b, 0)),              # final h
    )

    # Advisory cost estimate using the real (padded) matmul shapes.
    flops = 2 * T * B * (D * HP + 2 * (HP * 3 * HP) + HP * OP)
    transcendentals = T * B * (3 * HP + 1)
    weight_keys = ("w1", "b1", "ln_g", "ln_b", "w_ih", "b_ih", "w_hh", "b_hh",
                   "w2", "b2")
    weight_bytes = sum(int(packed[k].size) * packed[k].dtype.itemsize
                       for k in weight_keys)
    bytes_accessed = (x_seq.size * 4 + B * HP * 4 + weight_bytes
                      + T * B * OP * 4 + B * HP * 4)

    kernel = functools.partial(rnn_critic_seq_kernel, hid_size=hid_size)

    # TODO(synk): for very large T*B on v5e, pack several timesteps' real outputs into
    # one 128-lane tile to avoid the 32x padded-value HBM writeback; at demo sizes the
    # lane-dense padded store is the right trade.
    v_pad, h_out = pl.pallas_call(
        kernel,
        out_shape=(
            jax.ShapeDtypeStruct((T, B, OP), jnp.float32),
            jax.ShapeDtypeStruct((B, HP), jnp.float32),
        ),
        grid=grid,
        in_specs=in_specs,
        out_specs=out_specs,
        scratch_shapes=[pltpu.VMEM((block_b, HP), jnp.float32)],
        input_output_aliases={1: 1},   # padded h0 buffer reused for the final hidden
        compiler_params=pltpu.CompilerParams(
            dimension_semantics=("parallel", "arbitrary"),
            vmem_limit_bytes=32 << 20,
        ),
        cost_estimate=pl.CostEstimate(
            flops=flops, transcendentals=transcendentals,
            bytes_accessed=bytes_accessed),
    )(x_seq, h0_pad,
      packed["w1"], packed["b1"], packed["ln_g"], packed["ln_b"],
      packed["w_ih"], packed["b_ih"], packed["w_hh"], packed["b_hh"],
      packed["w2"], packed["b2"])

    return v_pad[..., :out_features], h_out[:, :hid_size]


def rnn_critic_forward(inputs, hidden_state, packed, *, hid_size, out_features):
    """Matches RNNCritic.forward(inputs, hidden_state) -> (v, h) for one step."""
    h0 = hidden_state.reshape(-1, hid_size)
    v_seq, h = rnn_critic_forward_seq(inputs[None], h0, packed,
                                      hid_size=hid_size, out_features=out_features)
    return v_seq[0], h


# --------------------------------------------------------------------------- #
# Parameter construction / packing
# --------------------------------------------------------------------------- #
def init_params(key, input_shape, hid_size, output_shape):
    """Deterministic synthetic parameters (shapes match the torch module)."""
    ks = jax.random.split(key, 8)

    def u(k, shape, fan_in):
        bound = 1.0 / jnp.sqrt(jnp.float32(fan_in))
        return jax.random.uniform(k, shape, jnp.float32, -bound, bound)

    return {
        # fc1: torch weight (H, D_in) stored transposed as (D_in, H)
        "w1": u(ks[0], (input_shape, hid_size), input_shape),
        "b1": u(ks[1], (1, hid_size), input_shape),
        # LayerNorm
        "ln_g": jnp.ones((1, hid_size), jnp.float32),
        "ln_b": jnp.zeros((1, hid_size), jnp.float32),
        # GRUCell: torch weight_ih/weight_hh (3H, H) stored transposed as (H, 3H)
        "w_ih": u(ks[2], (hid_size, 3 * hid_size), hid_size),
        "b_ih": u(ks[3], (1, 3 * hid_size), hid_size),
        "w_hh": u(ks[4], (hid_size, 3 * hid_size), hid_size),
        "b_hh": u(ks[5], (1, 3 * hid_size), hid_size),
        # fc2: torch weight (O, H) stored transposed as (H, O)
        "w2": u(ks[6], (hid_size, output_shape), hid_size),
        "b2": u(ks[7], (1, output_shape), hid_size),
    }


def _round_up(n, m):
    return ((n + m - 1) // m) * m


def pack_params(p, *, weight_dtype=jnp.bfloat16):
    """Pack raw params for the kernel.

    * Hidden dim padded to a multiple of 128 lanes; GRU gate blocks each placed on a
      128-lane boundary; fc2 output padded to a 128-lane tile.
    * fc1 / W_ih / fc2 weights cast to `weight_dtype` (default bf16, f32 MXU accum);
      the recurrent weight W_hh stays f32 so the carried hidden state is never
      down-cast across timesteps.  Biases / LayerNorm params stay f32.
    """
    D, H = p["w1"].shape
    O = p["w2"].shape[1]
    HP = _round_up(max(H, 128), 128)
    OP = _round_up(max(O, 128), 128)

    w1 = jnp.zeros((D, HP), jnp.float32).at[:, :H].set(p["w1"])
    b1 = jnp.zeros((1, HP), jnp.float32).at[:, :H].set(p["b1"])
    ln_g = jnp.zeros((1, HP), jnp.float32).at[:, :H].set(p["ln_g"])
    ln_b = jnp.zeros((1, HP), jnp.float32).at[:, :H].set(p["ln_b"])

    w_ih = jnp.zeros((HP, 3 * HP), jnp.float32)
    w_hh = jnp.zeros((HP, 3 * HP), jnp.float32)
    b_ih = jnp.zeros((1, 3 * HP), jnp.float32)
    b_hh = jnp.zeros((1, 3 * HP), jnp.float32)
    for g in range(3):                       # gate blocks on 128-lane boundaries
        w_ih = w_ih.at[:H, g * HP:g * HP + H].set(p["w_ih"][:, g * H:(g + 1) * H])
        w_hh = w_hh.at[:H, g * HP:g * HP + H].set(p["w_hh"][:, g * H:(g + 1) * H])
        b_ih = b_ih.at[:, g * HP:g * HP + H].set(p["b_ih"][:, g * H:(g + 1) * H])
        b_hh = b_hh.at[:, g * HP:g * HP + H].set(p["b_hh"][:, g * H:(g + 1) * H])

    w2 = jnp.zeros((HP, OP), jnp.float32).at[:H, :O].set(p["w2"])
    b2 = jnp.zeros((1, OP), jnp.float32).at[:, :O].set(p["b2"])

    wd = weight_dtype
    return {
        "w1": w1.astype(wd), "b1": b1,
        "ln_g": ln_g, "ln_b": ln_b,
        "w_ih": w_ih.astype(wd), "b_ih": b_ih,
        "w_hh": w_hh, "b_hh": b_hh,          # recurrent weight kept f32
        "w2": w2.astype(wd), "b2": b2,
    }


# --------------------------------------------------------------------------- #
# Pure-JAX reference (PyTorch semantics, f32)
# --------------------------------------------------------------------------- #
def reference_forward(inputs, hidden_state, p):
    y = inputs @ p["w1"] + p["b1"]
    mean = y.mean(-1, keepdims=True)
    var = ((y - mean) ** 2).mean(-1, keepdims=True)
    y = (y - mean) / jnp.sqrt(var + LN_EPS) * p["ln_g"] + p["ln_b"]
    y = jnp.maximum(y, 0.0)
    H = hidden_state.shape[-1]
    gi = y @ p["w_ih"] + p["b_ih"]
    gh = hidden_state @ p["w_hh"] + p["b_hh"]
    r = jax.nn.sigmoid(gi[:, :H] + gh[:, :H])
    z = jax.nn.sigmoid(gi[:, H:2 * H] + gh[:, H:2 * H])
    n = jnp.tanh(gi[:, 2 * H:] + r * gh[:, 2 * H:])
    h = (1.0 - z) * n + z * hidden_state
    v = h @ p["w2"] + p["b2"]
    return v, h


def reference_forward_seq(x_seq, h0, p):
    def step(h, x):
        v, h_new = reference_forward(x, h, p)
        return h_new, v
    h_final, vs = jax.lax.scan(step, h0, x_seq)
    return vs, h_final


# --------------------------------------------------------------------------- #
# Main
# --------------------------------------------------------------------------- #
if __name__ == "__main__":
    T, B, D_IN, HID, OUT = 8, 8, 48, 32, 4

    key = jax.random.PRNGKey(0)
    k_x, k_h, k_p = jax.random.split(key, 3)
    x_seq = jax.random.normal(k_x, (T, B, D_IN), jnp.float32)
    hidden = jax.random.normal(k_h, (B, HID), jnp.float32)
    raw = init_params(k_p, D_IN, HID, OUT)

    # Pure-JAX reference.
    v_ref, h_ref = reference_forward_seq(x_seq, hidden, raw)

    # ---- f32 weights: exact PyTorch semantics ----
    packed_f32 = pack_params(raw, weight_dtype=jnp.float32)
    v, h = rnn_critic_forward_seq(x_seq, hidden, packed_f32,
                                  hid_size=HID, out_features=OUT)
    jax.block_until_ready((v, h))
    assert jnp.allclose(v, v_ref, atol=1e-4, rtol=1e-4), "value head mismatch (f32)"
    assert jnp.allclose(h, h_ref, atol=1e-4, rtol=1e-4), "hidden state mismatch (f32)"

    # ---- single-step path (matches RNNCritic.forward exactly) ----
    v1, h1 = rnn_critic_forward(x_seq[0], hidden, packed_f32,
                                hid_size=HID, out_features=OUT)
    jax.block_until_ready((v1, h1))
    v1_ref, h1_ref = reference_forward(x_seq[0], hidden, raw)
    assert jnp.allclose(v1, v1_ref, atol=1e-5, rtol=1e-5), "single-step v mismatch"
    assert jnp.allclose(h1, h1_ref, atol=1e-5, rtol=1e-5), "single-step h mismatch"

    # ---- bf16 weights (default): halves weight DMA, f32 accum, f32 recurrent W_hh ----
    packed_bf16 = pack_params(raw)
    v16, h16 = rnn_critic_forward_seq(x_seq, hidden, packed_bf16,
                                      hid_size=HID, out_features=OUT)
    jax.block_until_ready((v16, h16))
    assert jnp.allclose(v16, v_ref, atol=1e-1, rtol=1e-1), "value head mismatch (bf16)"
    assert jnp.allclose(h16, h_ref, atol=1e-1, rtol=1e-1), "hidden state mismatch (bf16)"

    print("KERNEL_OK")
</pallas_src>

<mosaic_0001>
module attributes {stable_mosaic.version = 11 : i64} {
  func.func @rnn_critic_seq_kernel(%arg0: i32, %arg1: i32, %arg2: memref<8x8x48xf32, #tpu.memory_space<vmem>>, %arg3: memref<8x128xf32, #tpu.memory_space<vmem>>, %arg4: memref<48x128xf32, #tpu.memory_space<vmem>>, %arg5: memref<1x128xf32, #tpu.memory_space<vmem>>, %arg6: memref<1x128xf32, #tpu.memory_space<vmem>>, %arg7: memref<1x128xf32, #tpu.memory_space<vmem>>, %arg8: memref<128x384xf32, #tpu.memory_space<vmem>>, %arg9: memref<1x384xf32, #tpu.memory_space<vmem>>, %arg10: memref<128x384xf32, #tpu.memory_space<vmem>>, %arg11: memref<1x384xf32, #tpu.memory_space<vmem>>, %arg12: memref<128x128xf32, #tpu.memory_space<vmem>>, %arg13: memref<1x128xf32, #tpu.memory_space<vmem>>, %arg14: memref<8x8x128xf32, #tpu.memory_space<vmem>>, %arg15: memref<8x128xf32, #tpu.memory_space<vmem>>, %arg16: memref<8x128xf32, #tpu.memory_space<vmem>>) attributes {dimension_semantics = [#tpu.dimension_semantics<parallel>, #tpu.dimension_semantics<arbitrary>], iteration_bounds = array<i64: 1, 1>, scalar_prefetch = 0 : i64, scratch_operands = 1 : i64, tpu.core_type = #tpu.core_type<tc>, window_params = [{transform_indices = @transform_0, window_bounds = array<i64: 8, 8, 48>}, {transform_indices = @transform_1, window_bounds = array<i64: 8, 128>}, {pipeline_mode = #tpu.pipeline_mode<synchronous>, transform_indices = @transform_2, window_bounds = array<i64: 48, 128>}, {pipeline_mode = #tpu.pipeline_mode<synchronous>, transform_indices = @transform_3, window_bounds = array<i64: 1, 128>}, {pipeline_mode = #tpu.pipeline_mode<synchronous>, transform_indices = @transform_4, window_bounds = array<i64: 1, 128>}, {pipeline_mode = #tpu.pipeline_mode<synchronous>, transform_indices = @transform_5, window_bounds = array<i64: 1, 128>}, {pipeline_mode = #tpu.pipeline_mode<synchronous>, transform_indices = @transform_6, window_bounds = array<i64: 128, 384>}, {pipeline_mode = #tpu.pipeline_mode<synchronous>, transform_indices = @transform_7, window_bounds = array<i64: 1, 384>}, {pipeline_mode = #tpu.pipeline_mode<synchronous>, transform_indices = @transform_8, window_bounds = array<i64: 128, 384>}, {pipeline_mode = #tpu.pipeline_mode<synchronous>, transform_indices = @transform_9, window_bounds = array<i64: 1, 384>}, {pipeline_mode = #tpu.pipeline_mode<synchronous>, transform_indices = @transform_10, window_bounds = array<i64: 128, 128>}, {pipeline_mode = #tpu.pipeline_mode<synchronous>, transform_indices = @transform_11, window_bounds = array<i64: 1, 128>}, {transform_indices = @transform_12, window_bounds = array<i64: 8, 8, 128>}, {transform_indices = @transform_13, window_bounds = array<i64: 8, 128>}]} {
    %c0_i32 = arith.constant 0 : i32
    %0 = arith.cmpi eq, %arg1, %c0_i32 : i32
    %1 = arith.extui %0 : i1 to i32
    %c0_i32_0 = arith.constant 0 : i32
    %2 = arith.cmpi ne, %1, %c0_i32_0 : i32
    scf.if %2 {
      %c0_318 = arith.constant 0 : index
      %c0_319 = arith.constant 0 : index
      %640 = vector.load %arg3[%c0_318, %c0_319] : memref<8x128xf32, #tpu.memory_space<vmem>>, vector<8x128xf32>
      %c0_320 = arith.constant 0 : index
      %c0_321 = arith.constant 0 : index
      %641 = vector.load %arg16[%c0_320, %c0_321] : memref<8x128xf32, #tpu.memory_space<vmem>>, vector<8x128xf32>
      tpu.vector_store %arg16[%c0_320, %c0_321], %640 {strides = array<i32>} : memref<8x128xf32, #tpu.memory_space<vmem>>, vector<8x128xf32>,
    } else {
    }
    %c0 = arith.constant 0 : index
    %c0_1 = arith.constant 0 : index
    %3 = vector.load %arg16[%c0, %c0_1] : memref<8x128xf32, #tpu.memory_space<vmem>>, vector<8x128xf32>
    %c0_2 = arith.constant 0 : index
    %c0_3 = arith.constant 0 : index
    %c0_4 = arith.constant 0 : index
    %4 = vector.load %arg2[%c0_2, %c0_3, %c0_4] : memref<8x8x48xf32, #tpu.memory_space<vmem>>, vector<1x8x48xf32>
    %5 = vector.shape_cast %4 : vector<1x8x48xf32> to vector<8x48xf32>
    %c0_5 = arith.constant 0 : index
    %c0_6 = arith.constant 0 : index
    %6 = vector.load %arg4[%c0_5, %c0_6] : memref<48x128xf32, #tpu.memory_space<vmem>>, vector<48x128xf32>
    %cst = arith.constant dense<0.000000e+00> : vector<8x128xf32>
    %7 = tpu.matmul %5, %6, %cst {dimension_numbers = #tpu.dot_dimension_numbers<[1], [0], [0], [1], [0, 0, 1, 1], [], []>} : vector<8x48xf32>, vector<48x128xf32>, vector<8x128xf32> -> vector<8x128xf32>
    %c0_7 = arith.constant 0 : index
    %c0_8 = arith.constant 0 : index
    %8 = vector.load %arg5[%c0_7, %c0_8] : memref<1x128xf32, #tpu.memory_space<vmem>>, vector<1x128xf32>
    %9 = vector.broadcast %8 : vector<1x128xf32> to vector<8x128xf32>
    %10 = arith.addf %7, %9 : vector<8x128xf32>
    %cst_9 = arith.constant dense<0.000000e+00> : vector<8xf32>
    %11 = vector.multi_reduction <add>, %10, %cst_9 [1] : vector<8x128xf32> to vector<8xf32>
    %12 = vector.shape_cast %11 : vector<8xf32> to vector<8x1xf32>
    %cst_10 = arith.constant 3.125000e-02 : f32
    %13 = vector.broadcast %cst_10 : f32 to vector<8x1xf32>
    %14 = arith.mulf %12, %13 : vector<8x1xf32>
    %15 = arith.mulf %10, %10 : vector<8x128xf32>
    %cst_11 = arith.constant dense<0.000000e+00> : vector<8xf32>
    %16 = vector.multi_reduction <add>, %15, %cst_11 [1] : vector<8x128xf32> to vector<8xf32>
    %17 = vector.shape_cast %16 : vector<8xf32> to vector<8x1xf32>
    %cst_12 = arith.constant 3.125000e-02 : f32
    %18 = vector.broadcast %cst_12 : f32 to vector<8x1xf32>
    %19 = arith.mulf %17, %18 : vector<8x1xf32>
    %20 = arith.mulf %14, %14 : vector<8x1xf32>
    %21 = arith.subf %19, %20 : vector<8x1xf32>
    %cst_13 = arith.constant 0.000000e+00 : f32
    %22 = vector.broadcast %cst_13 : f32 to vector<8x1xf32>
    %23 = arith.maximumf %21, %22 : vector<8x1xf32>
    %24 = vector.broadcast %14 : vector<8x1xf32> to vector<8x128xf32>
    %25 = arith.subf %10, %24 : vector<8x128xf32>
    %cst_14 = arith.constant 9.99999974E-6 : f32
    %26 = vector.broadcast %cst_14 : f32 to vector<8x1xf32>
    %27 = arith.addf %23, %26 : vector<8x1xf32>
    %28 = math.rsqrt %27 : vector<8x1xf32>
    %29 = vector.broadcast %28 : vector<8x1xf32> to vector<8x128xf32>
    %30 = arith.mulf %25, %29 : vector<8x128xf32>
    %c0_15 = arith.constant 0 : index
    %c0_16 = arith.constant 0 : index
    %31 = vector.load %arg6[%c0_15, %c0_16] : memref<1x128xf32, #tpu.memory_space<vmem>>, vector<1x128xf32>
    %32 = vector.broadcast %31 : vector<1x128xf32> to vector<8x128xf32>
    %33 = arith.mulf %30, %32 : vector<8x128xf32>
    %c0_17 = arith.constant 0 : index
    %c0_18 = arith.constant 0 : index
    %34 = vector.load %arg7[%c0_17, %c0_18] : memref<1x128xf32, #tpu.memory_space<vmem>>, vector<1x128xf32>
    %35 = vector.broadcast %34 : vector<1x128xf32> to vector<8x128xf32>
    %36 = arith.addf %33, %35 : vector<8x128xf32>
    %cst_19 = arith.constant 0.000000e+00 : f32
    %37 = vector.broadcast %cst_19 : f32 to vector<8x128xf32>
    %38 = arith.maximumf %36, %37 : vector<8x128xf32>
    %c0_20 = arith.constant 0 : index
    %c0_21 = arith.constant 0 : index
    %39 = vector.load %arg8[%c0_20, %c0_21] : memref<128x384xf32, #tpu.memory_space<vmem>>, vector<128x384xf32>
    %cst_22 = arith.constant dense<0.000000e+00> : vector<8x384xf32>
    %40 = tpu.matmul %38, %39, %cst_22 {dimension_numbers = #tpu.dot_dimension_numbers<[1], [0], [0], [1], [0, 0, 1, 1], [], []>} : vector<8x128xf32>, vector<128x384xf32>, vector<8x384xf32> -> vector<8x384xf32>
    %c0_23 = arith.constant 0 : index
    %c0_24 = arith.constant 0 : index
    %41 = vector.load %arg9[%c0_23, %c0_24] : memref<1x384xf32, #tpu.memory_space<vmem>>, vector<1x384xf32>
    %42 = vector.broadcast %41 : vector<1x384xf32> to vector<8x384xf32>
    %43 = arith.addf %40, %42 : vector<8x384xf32>
    %c0_25 = arith.constant 0 : index
    %c0_26 = arith.constant 0 : index
    %44 = vector.load %arg10[%c0_25, %c0_26] : memref<128x384xf32, #tpu.memory_space<vmem>>, vector<128x384xf32>
    %cst_27 = arith.constant dense<0.000000e+00> : vector<8x384xf32>
    %45 = tpu.matmul %3, %44, %cst_27 {dimension_numbers = #tpu.dot_dimension_numbers<[1], [0], [0], [1], [0, 0, 1, 1], [], []>} : vector<8x128xf32>, vector<128x384xf32>, vector<8x384xf32> -> vector<8x384xf32>
    %c0_28 = arith.constant 0 : index
    %c0_29 = arith.constant 0 : index
    %46 = vector.load %arg11[%c0_28, %c0_29] : memref<1x384xf32, #tpu.memory_space<vmem>>, vector<1x384xf32>
    %47 = vector.broadcast %46 : vector<1x384xf32> to vector<8x384xf32>
    %48 = arith.addf %45, %47 : vector<8x384xf32>
    %49 = vector.extract_strided_slice %43 {offsets = [0, 0], sizes = [8, 128], strides = [1, 1]} : vector<8x384xf32> to vector<8x128xf32>
    %50 = vector.extract_strided_slice %48 {offsets = [0, 0], sizes = [8, 128], strides = [1, 1]} : vector<8x384xf32> to vector<8x128xf32>
    %51 = arith.addf %49, %50 : vector<8x128xf32>
    %52 = arith.negf %51 : vector<8x128xf32>
    %53 = math.exp %52 : vector<8x128xf32>
    %cst_30 = arith.constant 1.000000e+00 : f32
    %54 = vector.broadcast %cst_30 : f32 to vector<8x128xf32>
    %55 = arith.addf %54, %53 : vector<8x128xf32>
    %56 = arith.divf %54, %55 : vector<8x128xf32>
    %57 = vector.extract_strided_slice %43 {offsets = [0, 128], sizes = [8, 128], strides = [1, 1]} : vector<8x384xf32> to vector<8x128xf32>
    %58 = vector.extract_strided_slice %48 {offsets = [0, 128], sizes = [8, 128], strides = [1, 1]} : vector<8x384xf32> to vector<8x128xf32>
    %59 = arith.addf %57, %58 : vector<8x128xf32>
    %60 = arith.negf %59 : vector<8x128xf32>
    %61 = math.exp %60 : vector<8x128xf32>
    %cst_31 = arith.constant 1.000000e+00 : f32
    %62 = vector.broadcast %cst_31 : f32 to vector<8x128xf32>
    %63 = arith.addf %62, %61 : vector<8x128xf32>
    %64 = arith.divf %62, %63 : vector<8x128xf32>
    %65 = vector.extract_strided_slice %43 {offsets = [0, 256], sizes = [8, 128], strides = [1, 1]} : vector<8x384xf32> to vector<8x128xf32>
    %66 = vector.extract_strided_slice %48 {offsets = [0, 256], sizes = [8, 128], strides = [1, 1]} : vector<8x384xf32> to vector<8x128xf32>
    %67 = arith.mulf %56, %66 : vector<8x128xf32>
    %68 = arith.addf %65, %67 : vector<8x128xf32>
    %69 = math.tanh %68 : vector<8x128xf32>
    %cst_32 = arith.constant 1.000000e+00 : f32
    %70 = vector.broadcast %cst_32 : f32 to vector<8x128xf32>
    %71 = arith.subf %70, %64 : vector<8x128xf32>
    %72 = arith.mulf %71, %69 : vector<8x128xf32>
    %73 = arith.mulf %64, %3 : vector<8x128xf32>
    %74 = arith.addf %72, %73 : vector<8x128xf32>
    %c0_33 = arith.constant 0 : index
    %c0_34 = arith.constant 0 : index
    %75 = vector.load %arg12[%c0_33, %c0_34] : memref<128x128xf32, #tpu.memory_space<vmem>>, vector<128x128xf32>
    %cst_35 = arith.constant dense<0.000000e+00> : vector<8x128xf32>
    %76 = tpu.matmul %74, %75, %cst_35 {dimension_numbers = #tpu.dot_dimension_numbers<[1], [0], [0], [1], [0, 0, 1, 1], [], []>} : vector<8x128xf32>, vector<128x128xf32>, vector<8x128xf32> -> vector<8x128xf32>
    %c0_36 = arith.constant 0 : index
    %c0_37 = arith.constant 0 : index
    %77 = vector.load %arg13[%c0_36, %c0_37] : memref<1x128xf32, #tpu.memory_space<vmem>>, vector<1x128xf32>
    %78 = vector.broadcast %77 : vector<1x128xf32> to vector<8x128xf32>
    %79 = arith.addf %76, %78 : vector<8x128xf32>
    %c0_38 = arith.constant 0 : index
    %c0_39 = arith.constant 0 : index
    %c0_40 = arith.constant 0 : index
    %80 = vector.load %arg14[%c0_38, %c0_39, %c0_40] : memref<8x8x128xf32, #tpu.memory_space<vmem>>, vector<1x8x128xf32>
    %81 = vector.shape_cast %80 : vector<1x8x128xf32> to vector<8x128xf32>
    %82 = vector.shape_cast %79 : vector<8x128xf32> to vector<1x8x128xf32>
    tpu.vector_store %arg14[%c0_38, %c0_39, %c0_40], %82 {strides = array<i32>} : memref<8x8x128xf32, #tpu.memory_space<vmem>>, vector<1x8x128xf32>,
    %c1 = arith.constant 1 : index
    %c0_41 = arith.constant 0 : index
    %c0_42 = arith.constant 0 : index
    %83 = vector.load %arg2[%c1, %c0_41, %c0_42] : memref<8x8x48xf32, #tpu.memory_space<vmem>>, vector<1x8x48xf32>
    %84 = vector.shape_cast %83 : vector<1x8x48xf32> to vector<8x48xf32>
    %c0_43 = arith.constant 0 : index
    %c0_44 = arith.constant 0 : index
    %85 = vector.load %arg4[%c0_43, %c0_44] : memref<48x128xf32, #tpu.memory_space<vmem>>, vector<48x128xf32>
    %cst_45 = arith.constant dense<0.000000e+00> : vector<8x128xf32>
    %86 = tpu.matmul %84, %85, %cst_45 {dimension_numbers = #tpu.dot_dimension_numbers<[1], [0], [0], [1], [0, 0, 1, 1], [], []>} : vector<8x48xf32>, vector<48x128xf32>, vector<8x128xf32> -> vector<8x128xf32>
    %c0_46 = arith.constant 0 : index
    %c0_47 = arith.constant 0 : index
    %87 = vector.load %arg5[%c0_46, %c0_47] : memref<1x128xf32, #tpu.memory_space<vmem>>, vector<1x128xf32>
    %88 = vector.broadcast %87 : vector<1x128xf32> to vector<8x128xf32>
    %89 = arith.addf %86, %88 : vector<8x128xf32>
    %cst_48 = arith.constant dense<0.000000e+00> : vector<8xf32>
    %90 = vector.multi_reduction <add>, %89, %cst_48 [1] : vector<8x128xf32> to vector<8xf32>
    %91 = vector.shape_cast %90 : vector<8xf32> to vector<8x1xf32>
    %cst_49 = arith.constant 3.125000e-02 : f32
    %92 = vector.broadcast %cst_49 : f32 to vector<8x1xf32>
    %93 = arith.mulf %91, %92 : vector<8x1xf32>
    %94 = arith.mulf %89, %89 : vector<8x128xf32>
    %cst_50 = arith.constant dense<0.000000e+00> : vector<8xf32>
    %95 = vector.multi_reduction <add>, %94, %cst_50 [1] : vector<8x128xf32> to vector<8xf32>
    %96 = vector.shape_cast %95 : vector<8xf32> to vector<8x1xf32>
    %cst_51 = arith.constant 3.125000e-02 : f32
    %97 = vector.broadcast %cst_51 : f32 to vector<8x1xf32>
    %98 = arith.mulf %96, %97 : vector<8x1xf32>
    %99 = arith.mulf %93, %93 : vector<8x1xf32>
    %100 = arith.subf %98, %99 : vector<8x1xf32>
    %cst_52 = arith.constant 0.000000e+00 : f32
    %101 = vector.broadcast %cst_52 : f32 to vector<8x1xf32>
    %102 = arith.maximumf %100, %101 : vector<8x1xf32>
    %103 = vector.broadcast %93 : vector<8x1xf32> to vector<8x128xf32>
    %104 = arith.subf %89, %103 : vector<8x128xf32>
    %cst_53 = arith.constant 9.99999974E-6 : f32
    %105 = vector.broadcast %cst_53 : f32 to vector<8x1xf32>
    %106 = arith.addf %102, %105 : vector<8x1xf32>
    %107 = math.rsqrt %106 : vector<8x1xf32>
    %108 = vector.broadcast %107 : vector<8x1xf32> to vector<8x128xf32>
    %109 = arith.mulf %104, %108 : vector<8x128xf32>
    %c0_54 = arith.constant 0 : index
    %c0_55 = arith.constant 0 : index
    %110 = vector.load %arg6[%c0_54, %c0_55] : memref<1x128xf32, #tpu.memory_space<vmem>>, vector<1x128xf32>
    %111 = vector.broadcast %110 : vector<1x128xf32> to vector<8x128xf32>
    %112 = arith.mulf %109, %111 : vector<8x128xf32>
    %c0_56 = arith.constant 0 : index
    %c0_57 = arith.constant 0 : index
    %113 = vector.load %arg7[%c0_56, %c0_57] : memref<1x128xf32, #tpu.memory_space<vmem>>, vector<1x128xf32>
    %114 = vector.broadcast %113 : vector<1x128xf32> to vector<8x128xf32>
    %115 = arith.addf %112, %114 : vector<8x128xf32>
    %cst_58 = arith.constant 0.000000e+00 : f32
    %116 = vector.broadcast %cst_58 : f32 to vector<8x128xf32>
    %117 = arith.maximumf %115, %116 : vector<8x128xf32>
    %c0_59 = arith.constant 0 : index
    %c0_60 = arith.constant 0 : index
    %118 = vector.load %arg8[%c0_59, %c0_60] : memref<128x384xf32, #tpu.memory_space<vmem>>, vector<128x384xf32>
    %cst_61 = arith.constant dense<0.000000e+00> : vector<8x384xf32>
    %119 = tpu.matmul %117, %118, %cst_61 {dimension_numbers = #tpu.dot_dimension_numbers<[1], [0], [0], [1], [0, 0, 1, 1], [], []>} : vector<8x128xf32>, vector<128x384xf32>, vector<8x384xf32> -> vector<8x384xf32>
    %c0_62 = arith.constant 0 : index
    %c0_63 = arith.constant 0 : index
    %120 = vector.load %arg9[%c0_62, %c0_63] : memref<1x384xf32, #tpu.memory_space<vmem>>, vector<1x384xf32>
    %121 = vector.broadcast %120 : vector<1x384xf32> to vector<8x384xf32>
    %122 = arith.addf %119, %121 : vector<8x384xf32>
    %c0_64 = arith.constant 0 : index
    %c0_65 = arith.constant 0 : index
    %123 = vector.load %arg10[%c0_64, %c0_65] : memref<128x384xf32, #tpu.memory_space<vmem>>, vector<128x384xf32>
    %cst_66 = arith.constant dense<0.000000e+00> : vector<8x384xf32>
    %124 = tpu.matmul %74, %123, %cst_66 {dimension_numbers = #tpu.dot_dimension_numbers<[1], [0], [0], [1], [0, 0, 1, 1], [], []>} : vector<8x128xf32>, vector<128x384xf32>, vector<8x384xf32> -> vector<8x384xf32>
    %c0_67 = arith.constant 0 : index
    %c0_68 = arith.constant 0 : index
    %125 = vector.load %arg11[%c0_67, %c0_68] : memref<1x384xf32, #tpu.memory_space<vmem>>, vector<1x384xf32>
    %126 = vector.broadcast %125 : vector<1x384xf32> to vector<8x384xf32>
    %127 = arith.addf %124, %126 : vector<8x384xf32>
    %128 = vector.extract_strided_slice %122 {offsets = [0, 0], sizes = [8, 128], strides = [1, 1]} : vector<8x384xf32> to vector<8x128xf32>
    %129 = vector.extract_strided_slice %127 {offsets = [0, 0], sizes = [8, 128], strides = [1, 1]} : vector<8x384xf32> to vector<8x128xf32>
    %130 = arith.addf %128, %129 : vector<8x128xf32>
    %131 = arith.negf %130 : vector<8x128xf32>
    %132 = math.exp %131 : vector<8x128xf32>
    %cst_69 = arith.constant 1.000000e+00 : f32
    %133 = vector.broadcast %cst_69 : f32 to vector<8x128xf32>
    %134 = arith.addf %133, %132 : vector<8x128xf32>
    %135 = arith.divf %133, %134 : vector<8x128xf32>
    %136 = vector.extract_strided_slice %122 {offsets = [0, 128], sizes = [8, 128], strides = [1, 1]} : vector<8x384xf32> to vector<8x128xf32>
    %137 = vector.extract_strided_slice %127 {offsets = [0, 128], sizes = [8, 128], strides = [1, 1]} : vector<8x384xf32> to vector<8x128xf32>
    %138 = arith.addf %136, %137 : vector<8x128xf32>
    %139 = arith.negf %138 : vector<8x128xf32>
    %140 = math.exp %139 : vector<8x128xf32>
    %cst_70 = arith.constant 1.000000e+00 : f32
    %141 = vector.broadcast %cst_70 : f32 to vector<8x128xf32>
    %142 = arith.addf %141, %140 : vector<8x128xf32>
    %143 = arith.divf %141, %142 : vector<8x128xf32>
    %144 = vector.extract_strided_slice %122 {offsets = [0, 256], sizes = [8, 128], strides = [1, 1]} : vector<8x384xf32> to vector<8x128xf32>
    %145 = vector.extract_strided_slice %127 {offsets = [0, 256], sizes = [8, 128], strides = [1, 1]} : vector<8x384xf32> to vector<8x128xf32>
    %146 = arith.mulf %135, %145 : vector<8x128xf32>
    %147 = arith.addf %144, %146 : vector<8x128xf32>
    %148 = math.tanh %147 : vector<8x128xf32>
    %cst_71 = arith.constant 1.000000e+00 : f32
    %149 = vector.broadcast %cst_71 : f32 to vector<8x128xf32>
    %150 = arith.subf %149, %143 : vector<8x128xf32>
    %151 = arith.mulf %150, %148 : vector<8x128xf32>
    %152 = arith.mulf %143, %74 : vector<8x128xf32>
    %153 = arith.addf %151, %152 : vector<8x128xf32>
    %c0_72 = arith.constant 0 : index
    %c0_73 = arith.constant 0 : index
    %154 = vector.load %arg12[%c0_72, %c0_73] : memref<128x128xf32, #tpu.memory_space<vmem>>, vector<128x128xf32>
    %cst_74 = arith.constant dense<0.000000e+00> : vector<8x128xf32>
    %155 = tpu.matmul %153, %154, %cst_74 {dimension_numbers = #tpu.dot_dimension_numbers<[1], [0], [0], [1], [0, 0, 1, 1], [], []>} : vector<8x128xf32>, vector<128x128xf32>, vector<8x128xf32> -> vector<8x128xf32>
    %c0_75 = arith.constant 0 : index
    %c0_76 = arith.constant 0 : index
    %156 = vector.load %arg13[%c0_75, %c0_76] : memref<1x128xf32, #tpu.memory_space<vmem>>, vector<1x128xf32>
    %157 = vector.broadcast %156 : vector<1x128xf32> to vector<8x128xf32>
    %158 = arith.addf %155, %157 : vector<8x128xf32>
    %c1_77 = arith.constant 1 : index
    %c0_78 = arith.constant 0 : index
    %c0_79 = arith.constant 0 : index
    %159 = vector.load %arg14[%c1_77, %c0_78, %c0_79] : memref<8x8x128xf32, #tpu.memory_space<vmem>>, vector<1x8x128xf32>
    %160 = vector.shape_cast %159 : vector<1x8x128xf32> to vector<8x128xf32>
    %161 = vector.shape_cast %158 : vector<8x128xf32> to vector<1x8x128xf32>
    tpu.vector_store %arg14[%c1_77, %c0_78, %c0_79], %161 {strides = array<i32>} : memref<8x8x128xf32, #tpu.memory_space<vmem>>, vector<1x8x128xf32>,
    %c2 = arith.constant 2 : index
    %c0_80 = arith.constant 0 : index
    %c0_81 = arith.constant 0 : index
    %162 = vector.load %arg2[%c2, %c0_80, %c0_81] : memref<8x8x48xf32, #tpu.memory_space<vmem>>, vector<1x8x48xf32>
    %163 = vector.shape_cast %162 : vector<1x8x48xf32> to vector<8x48xf32>
    %c0_82 = arith.constant 0 : index
    %c0_83 = arith.constant 0 : index
    %164 = vector.load %arg4[%c0_82, %c0_83] : memref<48x128xf32, #tpu.memory_space<vmem>>, vector<48x128xf32>
    %cst_84 = arith.constant dense<0.000000e+00> : vector<8x128xf32>
    %165 = tpu.matmul %163, %164, %cst_84 {dimension_numbers = #tpu.dot_dimension_numbers<[1], [0], [0], [1], [0, 0, 1, 1], [], []>} : vector<8x48xf32>, vector<48x128xf32>, vector<8x128xf32> -> vector<8x128xf32>
    %c0_85 = arith.constant 0 : index
    %c0_86 = arith.constant 0 : index
    %166 = vector.load %arg5[%c0_85, %c0_86] : memref<1x128xf32, #tpu.memory_space<vmem>>, vector<1x128xf32>
    %167 = vector.broadcast %166 : vector<1x128xf32> to vector<8x128xf32>
    %168 = arith.addf %165, %167 : vector<8x128xf32>
    %cst_87 = arith.constant dense<0.000000e+00> : vector<8xf32>
    %169 = vector.multi_reduction <add>, %168, %cst_87 [1] : vector<8x128xf32> to vector<8xf32>
    %170 = vector.shape_cast %169 : vector<8xf32> to vector<8x1xf32>
    %cst_88 = arith.constant 3.125000e-02 : f32
    %171 = vector.broadcast %cst_88 : f32 to vector<8x1xf32>
    %172 = arith.mulf %170, %171 : vector<8x1xf32>
    %173 = arith.mulf %168, %168 : vector<8x128xf32>
    %cst_89 = arith.constant dense<0.000000e+00> : vector<8xf32>
    %174 = vector.multi_reduction <add>, %173, %cst_89 [1] : vector<8x128xf32> to vector<8xf32>
    %175 = vector.shape_cast %174 : vector<8xf32> to vector<8x1xf32>
    %cst_90 = arith.constant 3.125000e-02 : f32
    %176 = vector.broadcast %cst_90 : f32 to vector<8x1xf32>
    %177 = arith.mulf %175, %176 : vector<8x1xf32>
    %178 = arith.mulf %172, %172 : vector<8x1xf32>
    %179 = arith.subf %177, %178 : vector<8x1xf32>
    %cst_91 = arith.constant 0.000000e+00 : f32
    %180 = vector.broadcast %cst_91 : f32 to vector<8x1xf32>
    %181 = arith.maximumf %179, %180 : vector<8x1xf32>
    %182 = vector.broadcast %172 : vector<8x1xf32> to vector<8x128xf32>
    %183 = arith.subf %168, %182 : vector<8x128xf32>
    %cst_92 = arith.constant 9.99999974E-6 : f32
    %184 = vector.broadcast %cst_92 : f32 to vector<8x1xf32>
    %185 = arith.addf %181, %184 : vector<8x1xf32>
    %186 = math.rsqrt %185 : vector<8x1xf32>
    %187 = vector.broadcast %186 : vector<8x1xf32> to vector<8x128xf32>
    %188 = arith.mulf %183, %187 : vector<8x128xf32>
    %c0_93 = arith.constant 0 : index
    %c0_94 = arith.constant 0 : index
    %189 = vector.load %arg6[%c0_93, %c0_94] : memref<1x128xf32, #tpu.memory_space<vmem>>, vector<1x128xf32>
    %190 = vector.broadcast %189 : vector<1x128xf32> to vector<8x128xf32>
    %191 = arith.mulf %188, %190 : vector<8x128xf32>
    %c0_95 = arith.constant 0 : index
    %c0_96 = arith.constant 0 : index
    %192 = vector.load %arg7[%c0_95, %c0_96] : memref<1x128xf32, #tpu.memory_space<vmem>>, vector<1x128xf32>
    %193 = vector.broadcast %192 : vector<1x128xf32> to vector<8x128xf32>
    %194 = arith.addf %191, %193 : vector<8x128xf32>
    %cst_97 = arith.constant 0.000000e+00 : f32
    %195 = vector.broadcast %cst_97 : f32 to vector<8x128xf32>
    %196 = arith.maximumf %194, %195 : vector<8x128xf32>
    %c0_98 = arith.constant 0 : index
    %c0_99 = arith.constant 0 : index
    %197 = vector.load %arg8[%c0_98, %c0_99] : memref<128x384xf32, #tpu.memory_space<vmem>>, vector<128x384xf32>
    %cst_100 = arith.constant dense<0.000000e+00> : vector<8x384xf32>
    %198 = tpu.matmul %196, %197, %cst_100 {dimension_numbers = #tpu.dot_dimension_numbers<[1], [0], [0], [1], [0, 0, 1, 1], [], []>} : vector<8x128xf32>, vector<128x384xf32>, vector<8x384xf32> -> vector<8x384xf32>
    %c0_101 = arith.constant 0 : index
    %c0_102 = arith.constant 0 : index
    %199 = vector.load %arg9[%c0_101, %c0_102] : memref<1x384xf32, #tpu.memory_space<vmem>>, vector<1x384xf32>
    %200 = vector.broadcast %199 : vector<1x384xf32> to vector<8x384xf32>
    %201 = arith.addf %198, %200 : vector<8x384xf32>
    %c0_103 = arith.constant 0 : index
    %c0_104 = arith.constant 0 : index
    %202 = vector.load %arg10[%c0_103, %c0_104] : memref<128x384xf32, #tpu.memory_space<vmem>>, vector<128x384xf32>
    %cst_105 = arith.constant dense<0.000000e+00> : vector<8x384xf32>
    %203 = tpu.matmul %153, %202, %cst_105 {dimension_numbers = #tpu.dot_dimension_numbers<[1], [0], [0], [1], [0, 0, 1, 1], [], []>} : vector<8x128xf32>, vector<128x384xf32>, vector<8x384xf32> -> vector<8x384xf32>
    %c0_106 = arith.constant 0 : index
    %c0_107 = arith.constant 0 : index
    %204 = vector.load %arg11[%c0_106, %c0_107] : memref<1x384xf32, #tpu.memory_space<vmem>>, vector<1x384xf32>
    %205 = vector.broadcast %204 : vector<1x384xf32> to vector<8x384xf32>
    %206 = arith.addf %203, %205 : vector<8x384xf32>
    %207 = vector.extract_strided_slice %201 {offsets = [0, 0], sizes = [8, 128], strides = [1, 1]} : vector<8x384xf32> to vector<8x128xf32>
    %208 = vector.extract_strided_slice %206 {offsets = [0, 0], sizes = [8, 128], strides = [1, 1]} : vector<8x384xf32> to vector<8x128xf32>
    %209 = arith.addf %207, %208 : vector<8x128xf32>
    %210 = arith.negf %209 : vector<8x128xf32>
    %211 = math.exp %210 : vector<8x128xf32>
    %cst_108 = arith.constant 1.000000e+00 : f32
    %212 = vector.broadcast %cst_108 : f32 to vector<8x128xf32>
    %213 = arith.addf %212, %211 : vector<8x128xf32>
    %214 = arith.divf %212, %213 : vector<8x128xf32>
    %215 = vector.extract_strided_slice %201 {offsets = [0, 128], sizes = [8, 128], strides = [1, 1]} : vector<8x384xf32> to vector<8x128xf32>
    %216 = vector.extract_strided_slice %206 {offsets = [0, 128], sizes = [8, 128], strides = [1, 1]} : vector<8x384xf32> to vector<8x128xf32>
    %217 = arith.addf %215, %216 : vector<8x128xf32>
    %218 = arith.negf %217 : vector<8x128xf32>
    %219 = math.exp %218 : vector<8x128xf32>
    %cst_109 = arith.constant 1.000000e+00 : f32
    %220 = vector.broadcast %cst_109 : f32 to vector<8x128xf32>
    %221 = arith.addf %220, %219 : vector<8x128xf32>
    %222 = arith.divf %220, %221 : vector<8x128xf32>
    %223 = vector.extract_strided_slice %201 {offsets = [0, 256], sizes = [8, 128], strides = [1, 1]} : vector<8x384xf32> to vector<8x128xf32>
    %224 = vector.extract_strided_slice %206 {offsets = [0, 256], sizes = [8, 128], strides = [1, 1]} : vector<8x384xf32> to vector<8x128xf32>
    %225 = arith.mulf %214, %224 : vector<8x128xf32>
    %226 = arith.addf %223, %225 : vector<8x128xf32>
    %227 = math.tanh %226 : vector<8x128xf32>
    %cst_110 = arith.constant 1.000000e+00 : f32
    %228 = vector.broadcast %cst_110 : f32 to vector<8x128xf32>
    %229 = arith.subf %228, %222 : vector<8x128xf32>
    %230 = arith.mulf %229, %227 : vector<8x128xf32>
    %231 = arith.mulf %222, %153 : vector<8x128xf32>
    %232 = arith.addf %230, %231 : vector<8x128xf32>
    %c0_111 = arith.constant 0 : index
    %c0_112 = arith.constant 0 : index
    %233 = vector.load %arg12[%c0_111, %c0_112] : memref<128x128xf32, #tpu.memory_space<vmem>>, vector<128x128xf32>
    %cst_113 = arith.constant dense<0.000000e+00> : vector<8x128xf32>
    %234 = tpu.matmul %232, %233, %cst_113 {dimension_numbers = #tpu.dot_dimension_numbers<[1], [0], [0], [1], [0, 0, 1, 1], [], []>} : vector<8x128xf32>, vector<128x128xf32>, vector<8x128xf32> -> vector<8x128xf32>
    %c0_114 = arith.constant 0 : index
    %c0_115 = arith.constant 0 : index
    %235 = vector.load %arg13[%c0_114, %c0_115] : memref<1x128xf32, #tpu.memory_space<vmem>>, vector<1x128xf32>
    %236 = vector.broadcast %235 : vector<1x128xf32> to vector<8x128xf32>
    %237 = arith.addf %234, %236 : vector<8x128xf32>
    %c2_116 = arith.constant 2 : index
    %c0_117 = arith.constant 0 : index
    %c0_118 = arith.constant 0 : index
    %238 = vector.load %arg14[%c2_116, %c0_117, %c0_118] : memref<8x8x128xf32, #tpu.memory_space<vmem>>, vector<1x8x128xf32>
    %239 = vector.shape_cast %238 : vector<1x8x128xf32> to vector<8x128xf32>
    %240 = vector.shape_cast %237 : vector<8x128xf32> to vector<1x8x128xf32>
    tpu.vector_store %arg14[%c2_116, %c0_117, %c0_118], %240 {strides = array<i32>} : memref<8x8x128xf32, #tpu.memory_space<vmem>>, vector<1x8x128xf32>,
    %c3 = arith.constant 3 : index
    %c0_119 = arith.constant 0 : index
    %c0_120 = arith.constant 0 : index
    %241 = vector.load %arg2[%c3, %c0_119, %c0_120] : memref<8x8x48xf32, #tpu.memory_space<vmem>>, vector<1x8x48xf32>
    %242 = vector.shape_cast %241 : vector<1x8x48xf32> to vector<8x48xf32>
    %c0_121 = arith.constant 0 : index
    %c0_122 = arith.constant 0 : index
    %243 = vector.load %arg4[%c0_121, %c0_122] : memref<48x128xf32, #tpu.memory_space<vmem>>, vector<48x128xf32>
    %cst_123 = arith.constant dense<0.000000e+00> : vector<8x128xf32>
    %244 = tpu.matmul %242, %243, %cst_123 {dimension_numbers = #tpu.dot_dimension_numbers<[1], [0], [0], [1], [0, 0, 1, 1], [], []>} : vector<8x48xf32>, vector<48x128xf32>, vector<8x128xf32> -> vector<8x128xf32>
    %c0_124 = arith.constant 0 : index
    %c0_125 = arith.constant 0 : index
    %245 = vector.load %arg5[%c0_124, %c0_125] : memref<1x128xf32, #tpu.memory_space<vmem>>, vector<1x128xf32>
    %246 = vector.broadcast %245 : vector<1x128xf32> to vector<8x128xf32>
    %247 = arith.addf %244, %246 : vector<8x128xf32>
    %cst_126 = arith.constant dense<0.000000e+00> : vector<8xf32>
    %248 = vector.multi_reduction <add>, %247, %cst_126 [1] : vector<8x128xf32> to vector<8xf32>
    %249 = vector.shape_cast %248 : vector<8xf32> to vector<8x1xf32>
    %cst_127 = arith.constant 3.125000e-02 : f32
    %250 = vector.broadcast %cst_127 : f32 to vector<8x1xf32>
    %251 = arith.mulf %249, %250 : vector<8x1xf32>
    %252 = arith.mulf %247, %247 : vector<8x128xf32>
    %cst_128 = arith.constant dense<0.000000e+00> : vector<8xf32>
    %253 = vector.multi_reduction <add>, %252, %cst_128 [1] : vector<8x128xf32> to vector<8xf32>
    %254 = vector.shape_cast %253 : vector<8xf32> to vector<8x1xf32>
    %cst_129 = arith.constant 3.125000e-02 : f32
    %255 = vector.broadcast %cst_129 : f32 to vector<8x1xf32>
    %256 = arith.mulf %254, %255 : vector<8x1xf32>
    %257 = arith.mulf %251, %251 : vector<8x1xf32>
    %258 = arith.subf %256, %257 : vector<8x1xf32>
    %cst_130 = arith.constant 0.000000e+00 : f32
    %259 = vector.broadcast %cst_130 : f32 to vector<8x1xf32>
    %260 = arith.maximumf %258, %259 : vector<8x1xf32>
    %261 = vector.broadcast %251 : vector<8x1xf32> to vector<8x128xf32>
    %262 = arith.subf %247, %261 : vector<8x128xf32>
    %cst_131 = arith.constant 9.99999974E-6 : f32
    %263 = vector.broadcast %cst_131 : f32 to vector<8x1xf32>
    %264 = arith.addf %260, %263 : vector<8x1xf32>
    %265 = math.rsqrt %264 : vector<8x1xf32>
    %266 = vector.broadcast %265 : vector<8x1xf32> to vector<8x128xf32>
    %267 = arith.mulf %262, %266 : vector<8x128xf32>
    %c0_132 = arith.constant 0 : index
    %c0_133 = arith.constant 0 : index
    %268 = vector.load %arg6[%c0_132, %c0_133] : memref<1x128xf32, #tpu.memory_space<vmem>>, vector<1x128xf32>
    %269 = vector.broadcast %268 : vector<1x128xf32> to vector<8x128xf32>
    %270 = arith.mulf %267, %269 : vector<8x128xf32>
    %c0_134 = arith.constant 0 : index
    %c0_135 = arith.constant 0 : index
    %271 = vector.load %arg7[%c0_134, %c0_135] : memref<1x128xf32, #tpu.memory_space<vmem>>, vector<1x128xf32>
    %272 = vector.broadcast %271 : vector<1x128xf32> to vector<8x128xf32>
    %273 = arith.addf %270, %272 : vector<8x128xf32>
    %cst_136 = arith.constant 0.000000e+00 : f32
    %274 = vector.broadcast %cst_136 : f32 to vector<8x128xf32>
    %275 = arith.maximumf %273, %274 : vector<8x128xf32>
    %c0_137 = arith.constant 0 : index
    %c0_138 = arith.constant 0 : index
    %276 = vector.load %arg8[%c0_137, %c0_138] : memref<128x384xf32, #tpu.memory_space<vmem>>, vector<128x384xf32>
    %cst_139 = arith.constant dense<0.000000e+00> : vector<8x384xf32>
    %277 = tpu.matmul %275, %276, %cst_139 {dimension_numbers = #tpu.dot_dimension_numbers<[1], [0], [0], [1], [0, 0, 1, 1], [], []>} : vector<8x128xf32>, vector<128x384xf32>, vector<8x384xf32> -> vector<8x384xf32>
    %c0_140 = arith.constant 0 : index
    %c0_141 = arith.constant 0 : index
    %278 = vector.load %arg9[%c0_140, %c0_141] : memref<1x384xf32, #tpu.memory_space<vmem>>, vector<1x384xf32>
    %279 = vector.broadcast %278 : vector<1x384xf32> to vector<8x384xf32>
    %280 = arith.addf %277, %279 : vector<8x384xf32>
    %c0_142 = arith.constant 0 : index
    %c0_143 = arith.constant 0 : index
    %281 = vector.load %arg10[%c0_142, %c0_143] : memref<128x384xf32, #tpu.memory_space<vmem>>, vector<128x384xf32>
    %cst_144 = arith.constant dense<0.000000e+00> : vector<8x384xf32>
    %282 = tpu.matmul %232, %281, %cst_144 {dimension_numbers = #tpu.dot_dimension_numbers<[1], [0], [0], [1], [0, 0, 1, 1], [], []>} : vector<8x128xf32>, vector<128x384xf32>, vector<8x384xf32> -> vector<8x384xf32>
    %c0_145 = arith.constant 0 : index
    %c0_146 = arith.constant 0 : index
    %283 = vector.load %arg11[%c0_145, %c0_146] : memref<1x384xf32, #tpu.memory_space<vmem>>, vector<1x384xf32>
    %284 = vector.broadcast %283 : vector<1x384xf32> to vector<8x384xf32>
    %285 = arith.addf %282, %284 : vector<8x384xf32>
    %286 = vector.extract_strided_slice %280 {offsets = [0, 0], sizes = [8, 128], strides = [1, 1]} : vector<8x384xf32> to vector<8x128xf32>
    %287 = vector.extract_strided_slice %285 {offsets = [0, 0], sizes = [8, 128], strides = [1, 1]} : vector<8x384xf32> to vector<8x128xf32>
    %288 = arith.addf %286, %287 : vector<8x128xf32>
    %289 = arith.negf %288 : vector<8x128xf32>
    %290 = math.exp %289 : vector<8x128xf32>
    %cst_147 = arith.constant 1.000000e+00 : f32
    %291 = vector.broadcast %cst_147 : f32 to vector<8x128xf32>
    %292 = arith.addf %291, %290 : vector<8x128xf32>
    %293 = arith.divf %291, %292 : vector<8x128xf32>
    %294 = vector.extract_strided_slice %280 {offsets = [0, 128], sizes = [8, 128], strides = [1, 1]} : vector<8x384xf32> to vector<8x128xf32>
    %295 = vector.extract_strided_slice %285 {offsets = [0, 128], sizes = [8, 128], strides = [1, 1]} : vector<8x384xf32> to vector<8x128xf32>
    %296 = arith.addf %294, %295 : vector<8x128xf32>
    %297 = arith.negf %296 : vector<8x128xf32>
    %298 = math.exp %297 : vector<8x128xf32>
    %cst_148 = arith.constant 1.000000e+00 : f32
    %299 = vector.broadcast %cst_148 : f32 to vector<8x128xf32>
    %300 = arith.addf %299, %298 : vector<8x128xf32>
    %301 = arith.divf %299, %300 : vector<8x128xf32>
    %302 = vector.extract_strided_slice %280 {offsets = [0, 256], sizes = [8, 128], strides = [1, 1]} : vector<8x384xf32> to vector<8x128xf32>
    %303 = vector.extract_strided_slice %285 {offsets = [0, 256], sizes = [8, 128], strides = [1, 1]} : vector<8x384xf32> to vector<8x128xf32>
    %304 = arith.mulf %293, %303 : vector<8x128xf32>
    %305 = arith.addf %302, %304 : vector<8x128xf32>
    %306 = math.tanh %305 : vector<8x128xf32>
    %cst_149 = arith.constant 1.000000e+00 : f32
    %307 = vector.broadcast %cst_149 : f32 to vector<8x128xf32>
    %308 = arith.subf %307, %301 : vector<8x128xf32>
    %309 = arith.mulf %308, %306 : vector<8x128xf32>
    %310 = arith.mulf %301, %232 : vector<8x128xf32>
    %311 = arith.addf %309, %310 : vector<8x128xf32>
    %c0_150 = arith.constant 0 : index
    %c0_151 = arith.constant 0 : index
    %312 = vector.load %arg12[%c0_150, %c0_151] : memref<128x128xf32, #tpu.memory_space<vmem>>, vector<128x128xf32>
    %cst_152 = arith.constant dense<0.000000e+00> : vector<8x128xf32>
    %313 = tpu.matmul %311, %312, %cst_152 {dimension_numbers = #tpu.dot_dimension_numbers<[1], [0], [0], [1], [0, 0, 1, 1], [], []>} : vector<8x128xf32>, vector<128x128xf32>, vector<8x128xf32> -> vector<8x128xf32>
    %c0_153 = arith.constant 0 : index
    %c0_154 = arith.constant 0 : index
    %314 = vector.load %arg13[%c0_153, %c0_154] : memref<1x128xf32, #tpu.memory_space<vmem>>, vector<1x128xf32>
    %315 = vector.broadcast %314 : vector<1x128xf32> to vector<8x128xf32>
    %316 = arith.addf %313, %315 : vector<8x128xf32>
    %c3_155 = arith.constant 3 : index
    %c0_156 = arith.constant 0 : index
    %c0_157 = arith.constant 0 : index
    %317 = vector.load %arg14[%c3_155, %c0_156, %c0_157] : memref<8x8x128xf32, #tpu.memory_space<vmem>>, vector<1x8x128xf32>
    %318 = vector.shape_cast %317 : vector<1x8x128xf32> to vector<8x128xf32>
    %319 = vector.shape_cast %316 : vector<8x128xf32> to vector<1x8x128xf32>
    tpu.vector_store %arg14[%c3_155, %c0_156, %c0_157], %319 {strides = array<i32>} : memref<8x8x128xf32, #tpu.memory_space<vmem>>, vector<1x8x128xf32>,
    %c4 = arith.constant 4 : index
    %c0_158 = arith.constant 0 : index
    %c0_159 = arith.constant 0 : index
    %320 = vector.load %arg2[%c4, %c0_158, %c0_159] : memref<8x8x48xf32, #tpu.memory_space<vmem>>, vector<1x8x48xf32>
    %321 = vector.shape_cast %320 : vector<1x8x48xf32> to vector<8x48xf32>
    %c0_160 = arith.constant 0 : index
    %c0_161 = arith.constant 0 : index
    %322 = vector.load %arg4[%c0_160, %c0_161] : memref<48x128xf32, #tpu.memory_space<vmem>>, vector<48x128xf32>
    %cst_162 = arith.constant dense<0.000000e+00> : vector<8x128xf32>
    %323 = tpu.matmul %321, %322, %cst_162 {dimension_numbers = #tpu.dot_dimension_numbers<[1], [0], [0], [1], [0, 0, 1, 1], [], []>} : vector<8x48xf32>, vector<48x128xf32>, vector<8x128xf32> -> vector<8x128xf32>
    %c0_163 = arith.constant 0 : index
    %c0_164 = arith.constant 0 : index
    %324 = vector.load %arg5[%c0_163, %c0_164] : memref<1x128xf32, #tpu.memory_space<vmem>>, vector<1x128xf32>
    %325 = vector.broadcast %324 : vector<1x128xf32> to vector<8x128xf32>
    %326 = arith.addf %323, %325 : vector<8x128xf32>
    %cst_165 = arith.constant dense<0.000000e+00> : vector<8xf32>
    %327 = vector.multi_reduction <add>, %326, %cst_165 [1] : vector<8x128xf32> to vector<8xf32>
    %328 = vector.shape_cast %327 : vector<8xf32> to vector<8x1xf32>
    %cst_166 = arith.constant 3.125000e-02 : f32
    %329 = vector.broadcast %cst_166 : f32 to vector<8x1xf32>
    %330 = arith.mulf %328, %329 : vector<8x1xf32>
    %331 = arith.mulf %326, %326 : vector<8x128xf32>
    %cst_167 = arith.constant dense<0.000000e+00> : vector<8xf32>
    %332 = vector.multi_reduction <add>, %331, %cst_167 [1] : vector<8x128xf32> to vector<8xf32>
    %333 = vector.shape_cast %332 : vector<8xf32> to vector<8x1xf32>
    %cst_168 = arith.constant 3.125000e-02 : f32
    %334 = vector.broadcast %cst_168 : f32 to vector<8x1xf32>
    %335 = arith.mulf %333, %334 : vector<8x1xf32>
    %336 = arith.mulf %330, %330 : vector<8x1xf32>
    %337 = arith.subf %335, %336 : vector<8x1xf32>
    %cst_169 = arith.constant 0.000000e+00 : f32
    %338 = vector.broadcast %cst_169 : f32 to vector<8x1xf32>
    %339 = arith.maximumf %337, %338 : vector<8x1xf32>
    %340 = vector.broadcast %330 : vector<8x1xf32> to vector<8x128xf32>
    %341 = arith.subf %326, %340 : vector<8x128xf32>
    %cst_170 = arith.constant 9.99999974E-6 : f32
    %342 = vector.broadcast %cst_170 : f32 to vector<8x1xf32>
    %343 = arith.addf %339, %342 : vector<8x1xf32>
    %344 = math.rsqrt %343 : vector<8x1xf32>
    %345 = vector.broadcast %344 : vector<8x1xf32> to vector<8x128xf32>
    %346 = arith.mulf %341, %345 : vector<8x128xf32>
    %c0_171 = arith.constant 0 : index
    %c0_172 = arith.constant 0 : index
    %347 = vector.load %arg6[%c0_171, %c0_172] : memref<1x128xf32, #tpu.memory_space<vmem>>, vector<1x128xf32>
    %348 = vector.broadcast %347 : vector<1x128xf32> to vector<8x128xf32>
    %349 = arith.mulf %346, %348 : vector<8x128xf32>
    %c0_173 = arith.constant 0 : index
    %c0_174 = arith.constant 0 : index
    %350 = vector.load %arg7[%c0_173, %c0_174] : memref<1x128xf32, #tpu.memory_space<vmem>>, vector<1x128xf32>
    %351 = vector.broadcast %350 : vector<1x128xf32> to vector<8x128xf32>
    %352 = arith.addf %349, %351 : vector<8x128xf32>
    %cst_175 = arith.constant 0.000000e+00 : f32
    %353 = vector.broadcast %cst_175 : f32 to vector<8x128xf32>
    %354 = arith.maximumf %352, %353 : vector<8x128xf32>
    %c0_176 = arith.constant 0 : index
    %c0_177 = arith.constant 0 : index
    %355 = vector.load %arg8[%c0_176, %c0_177] : memref<128x384xf32, #tpu.memory_space<vmem>>, vector<128x384xf32>
    %cst_178 = arith.constant dense<0.000000e+00> : vector<8x384xf32>
    %356 = tpu.matmul %354, %355, %cst_178 {dimension_numbers = #tpu.dot_dimension_numbers<[1], [0], [0], [1], [0, 0, 1, 1], [], []>} : vector<8x128xf32>, vector<128x384xf32>, vector<8x384xf32> -> vector<8x384xf32>
    %c0_179 = arith.constant 0 : index
    %c0_180 = arith.constant 0 : index
    %357 = vector.load %arg9[%c0_179, %c0_180] : memref<1x384xf32, #tpu.memory_space<vmem>>, vector<1x384xf32>
    %358 = vector.broadcast %357 : vector<1x384xf32> to vector<8x384xf32>
    %359 = arith.addf %356, %358 : vector<8x384xf32>
    %c0_181 = arith.constant 0 : index
    %c0_182 = arith.constant 0 : index
    %360 = vector.load %arg10[%c0_181, %c0_182] : memref<128x384xf32, #tpu.memory_space<vmem>>, vector<128x384xf32>
    %cst_183 = arith.constant dense<0.000000e+00> : vector<8x384xf32>
    %361 = tpu.matmul %311, %360, %cst_183 {dimension_numbers = #tpu.dot_dimension_numbers<[1], [0], [0], [1], [0, 0, 1, 1], [], []>} : vector<8x128xf32>, vector<128x384xf32>, vector<8x384xf32> -> vector<8x384xf32>
    %c0_184 = arith.constant 0 : index
    %c0_185 = arith.constant 0 : index
    %362 = vector.load %arg11[%c0_184, %c0_185] : memref<1x384xf32, #tpu.memory_space<vmem>>, vector<1x384xf32>
    %363 = vector.broadcast %362 : vector<1x384xf32> to vector<8x384xf32>
    %364 = arith.addf %361, %363 : vector<8x384xf32>
    %365 = vector.extract_strided_slice %359 {offsets = [0, 0], sizes = [8, 128], strides = [1, 1]} : vector<8x384xf32> to vector<8x128xf32>
    %366 = vector.extract_strided_slice %364 {offsets = [0, 0], sizes = [8, 128], strides = [1, 1]} : vector<8x384xf32> to vector<8x128xf32>
    %367 = arith.addf %365, %366 : vector<8x128xf32>
    %368 = arith.negf %367 : vector<8x128xf32>
    %369 = math.exp %368 : vector<8x128xf32>
    %cst_186 = arith.constant 1.000000e+00 : f32
    %370 = vector.broadcast %cst_186 : f32 to vector<8x128xf32>
    %371 = arith.addf %370, %369 : vector<8x128xf32>
    %372 = arith.divf %370, %371 : vector<8x128xf32>
    %373 = vector.extract_strided_slice %359 {offsets = [0, 128], sizes = [8, 128], strides = [1, 1]} : vector<8x384xf32> to vector<8x128xf32>
    %374 = vector.extract_strided_slice %364 {offsets = [0, 128], sizes = [8, 128], strides = [1, 1]} : vector<8x384xf32> to vector<8x128xf32>
    %375 = arith.addf %373, %374 : vector<8x128xf32>
    %376 = arith.negf %375 : vector<8x128xf32>
    %377 = math.exp %376 : vector<8x128xf32>
    %cst_187 = arith.constant 1.000000e+00 : f32
    %378 = vector.broadcast %cst_187 : f32 to vector<8x128xf32>
    %379 = arith.addf %378, %377 : vector<8x128xf32>
    %380 = arith.divf %378, %379 : vector<8x128xf32>
    %381 = vector.extract_strided_slice %359 {offsets = [0, 256], sizes = [8, 128], strides = [1, 1]} : vector<8x384xf32> to vector<8x128xf32>
    %382 = vector.extract_strided_slice %364 {offsets = [0, 256], sizes = [8, 128], strides = [1, 1]} : vector<8x384xf32> to vector<8x128xf32>
    %383 = arith.mulf %372, %382 : vector<8x128xf32>
    %384 = arith.addf %381, %383 : vector<8x128xf32>
    %385 = math.tanh %384 : vector<8x128xf32>
    %cst_188 = arith.constant 1.000000e+00 : f32
    %386 = vector.broadcast %cst_188 : f32 to vector<8x128xf32>
    %387 = arith.subf %386, %380 : vector<8x128xf32>
    %388 = arith.mulf %387, %385 : vector<8x128xf32>
    %389 = arith.mulf %380, %311 : vector<8x128xf32>
    %390 = arith.addf %388, %389 : vector<8x128xf32>
    %c0_189 = arith.constant 0 : index
    %c0_190 = arith.constant 0 : index
    %391 = vector.load %arg12[%c0_189, %c0_190] : memref<128x128xf32, #tpu.memory_space<vmem>>, vector<128x128xf32>
    %cst_191 = arith.constant dense<0.000000e+00> : vector<8x128xf32>
    %392 = tpu.matmul %390, %391, %cst_191 {dimension_numbers = #tpu.dot_dimension_numbers<[1], [0], [0], [1], [0, 0, 1, 1], [], []>} : vector<8x128xf32>, vector<128x128xf32>, vector<8x128xf32> -> vector<8x128xf32>
    %c0_192 = arith.constant 0 : index
    %c0_193 = arith.constant 0 : index
    %393 = vector.load %arg13[%c0_192, %c0_193] : memref<1x128xf32, #tpu.memory_space<vmem>>, vector<1x128xf32>
    %394 = vector.broadcast %393 : vector<1x128xf32> to vector<8x128xf32>
    %395 = arith.addf %392, %394 : vector<8x128xf32>
    %c4_194 = arith.constant 4 : index
    %c0_195 = arith.constant 0 : index
    %c0_196 = arith.constant 0 : index
    %396 = vector.load %arg14[%c4_194, %c0_195, %c0_196] : memref<8x8x128xf32, #tpu.memory_space<vmem>>, vector<1x8x128xf32>
    %397 = vector.shape_cast %396 : vector<1x8x128xf32> to vector<8x128xf32>
    %398 = vector.shape_cast %395 : vector<8x128xf32> to vector<1x8x128xf32>
    tpu.vector_store %arg14[%c4_194, %c0_195, %c0_196], %398 {strides = array<i32>} : memref<8x8x128xf32, #tpu.memory_space<vmem>>, vector<1x8x128xf32>,
    %c5 = arith.constant 5 : index
    %c0_197 = arith.constant 0 : index
    %c0_198 = arith.constant 0 : index
    %399 = vector.load %arg2[%c5, %c0_197, %c0_198] : memref<8x8x48xf32, #tpu.memory_space<vmem>>, vector<1x8x48xf32>
    %400 = vector.shape_cast %399 : vector<1x8x48xf32> to vector<8x48xf32>
    %c0_199 = arith.constant 0 : index
    %c0_200 = arith.constant 0 : index
    %401 = vector.load %arg4[%c0_199, %c0_200] : memref<48x128xf32, #tpu.memory_space<vmem>>, vector<48x128xf32>
    %cst_201 = arith.constant dense<0.000000e+00> : vector<8x128xf32>
    %402 = tpu.matmul %400, %401, %cst_201 {dimension_numbers = #tpu.dot_dimension_numbers<[1], [0], [0], [1], [0, 0, 1, 1], [], []>} : vector<8x48xf32>, vector<48x128xf32>, vector<8x128xf32> -> vector<8x128xf32>
    %c0_202 = arith.constant 0 : index
    %c0_203 = arith.constant 0 : index
    %403 = vector.load %arg5[%c0_202, %c0_203] : memref<1x128xf32, #tpu.memory_space<vmem>>, vector<1x128xf32>
    %404 = vector.broadcast %403 : vector<1x128xf32> to vector<8x128xf32>
    %405 = arith.addf %402, %404 : vector<8x128xf32>
    %cst_204 = arith.constant dense<0.000000e+00> : vector<8xf32>
    %406 = vector.multi_reduction <add>, %405, %cst_204 [1] : vector<8x128xf32> to vector<8xf32>
    %407 = vector.shape_cast %406 : vector<8xf32> to vector<8x1xf32>
    %cst_205 = arith.constant 3.125000e-02 : f32
    %408 = vector.broadcast %cst_205 : f32 to vector<8x1xf32>
    %409 = arith.mulf %407, %408 : vector<8x1xf32>
    %410 = arith.mulf %405, %405 : vector<8x128xf32>
    %cst_206 = arith.constant dense<0.000000e+00> : vector<8xf32>
    %411 = vector.multi_reduction <add>, %410, %cst_206 [1] : vector<8x128xf32> to vector<8xf32>
    %412 = vector.shape_cast %411 : vector<8xf32> to vector<8x1xf32>
    %cst_207 = arith.constant 3.125000e-02 : f32
    %413 = vector.broadcast %cst_207 : f32 to vector<8x1xf32>
    %414 = arith.mulf %412, %413 : vector<8x1xf32>
    %415 = arith.mulf %409, %409 : vector<8x1xf32>
    %416 = arith.subf %414, %415 : vector<8x1xf32>
    %cst_208 = arith.constant 0.000000e+00 : f32
    %417 = vector.broadcast %cst_208 : f32 to vector<8x1xf32>
    %418 = arith.maximumf %416, %417 : vector<8x1xf32>
    %419 = vector.broadcast %409 : vector<8x1xf32> to vector<8x128xf32>
    %420 = arith.subf %405, %419 : vector<8x128xf32>
    %cst_209 = arith.constant 9.99999974E-6 : f32
    %421 = vector.broadcast %cst_209 : f32 to vector<8x1xf32>
    %422 = arith.addf %418, %421 : vector<8x1xf32>
    %423 = math.rsqrt %422 : vector<8x1xf32>
    %424 = vector.broadcast %423 : vector<8x1xf32> to vector<8x128xf32>
    %425 = arith.mulf %420, %424 : vector<8x128xf32>
    %c0_210 = arith.constant 0 : index
    %c0_211 = arith.constant 0 : index
    %426 = vector.load %arg6[%c0_210, %c0_211] : memref<1x128xf32, #tpu.memory_space<vmem>>, vector<1x128xf32>
    %427 = vector.broadcast %426 : vector<1x128xf32> to vector<8x128xf32>
    %428 = arith.mulf %425, %427 : vector<8x128xf32>
    %c0_212 = arith.constant 0 : index
    %c0_213 = arith.constant 0 : index
    %429 = vector.load %arg7[%c0_212, %c0_213] : memref<1x128xf32, #tpu.memory_space<vmem>>, vector<1x128xf32>
    %430 = vector.broadcast %429 : vector<1x128xf32> to vector<8x128xf32>
    %431 = arith.addf %428, %430 : vector<8x128xf32>
    %cst_214 = arith.constant 0.000000e+00 : f32
    %432 = vector.broadcast %cst_214 : f32 to vector<8x128xf32>
    %433 = arith.maximumf %431, %432 : vector<8x128xf32>
    %c0_215 = arith.constant 0 : index
    %c0_216 = arith.constant 0 : index
    %434 = vector.load %arg8[%c0_215, %c0_216] : memref<128x384xf32, #tpu.memory_space<vmem>>, vector<128x384xf32>
    %cst_217 = arith.constant dense<0.000000e+00> : vector<8x384xf32>
    %435 = tpu.matmul %433, %434, %cst_217 {dimension_numbers = #tpu.dot_dimension_numbers<[1], [0], [0], [1], [0, 0, 1, 1], [], []>} : vector<8x128xf32>, vector<128x384xf32>, vector<8x384xf32> -> vector<8x384xf32>
    %c0_218 = arith.constant 0 : index
    %c0_219 = arith.constant 0 : index
    %436 = vector.load %arg9[%c0_218, %c0_219] : memref<1x384xf32, #tpu.memory_space<vmem>>, vector<1x384xf32>
    %437 = vector.broadcast %436 : vector<1x384xf32> to vector<8x384xf32>
    %438 = arith.addf %435, %437 : vector<8x384xf32>
    %c0_220 = arith.constant 0 : index
    %c0_221 = arith.constant 0 : index
    %439 = vector.load %arg10[%c0_220, %c0_221] : memref<128x384xf32, #tpu.memory_space<vmem>>, vector<128x384xf32>
    %cst_222 = arith.constant dense<0.000000e+00> : vector<8x384xf32>
    %440 = tpu.matmul %390, %439, %cst_222 {dimension_numbers = #tpu.dot_dimension_numbers<[1], [0], [0], [1], [0, 0, 1, 1], [], []>} : vector<8x128xf32>, vector<128x384xf32>, vector<8x384xf32> -> vector<8x384xf32>
    %c0_223 = arith.constant 0 : index
    %c0_224 = arith.constant 0 : index
    %441 = vector.load %arg11[%c0_223, %c0_224] : memref<1x384xf32, #tpu.memory_space<vmem>>, vector<1x384xf32>
    %442 = vector.broadcast %441 : vector<1x384xf32> to vector<8x384xf32>
    %443 = arith.addf %440, %442 : vector<8x384xf32>
    %444 = vector.extract_strided_slice %438 {offsets = [0, 0], sizes = [8, 128], strides = [1, 1]} : vector<8x384xf32> to vector<8x128xf32>
    %445 = vector.extract_strided_slice %443 {offsets = [0, 0], sizes = [8, 128], strides = [1, 1]} : vector<8x384xf32> to vector<8x128xf32>
    %446 = arith.addf %444, %445 : vector<8x128xf32>
    %447 = arith.negf %446 : vector<8x128xf32>
    %448 = math.exp %447 : vector<8x128xf32>
    %cst_225 = arith.constant 1.000000e+00 : f32
    %449 = vector.broadcast %cst_225 : f32 to vector<8x128xf32>
    %450 = arith.addf %449, %448 : vector<8x128xf32>
    %451 = arith.divf %449, %450 : vector<8x128xf32>
    %452 = vector.extract_strided_slice %438 {offsets = [0, 128], sizes = [8, 128], strides = [1, 1]} : vector<8x384xf32> to vector<8x128xf32>
    %453 = vector.extract_strided_slice %443 {offsets = [0, 128], sizes = [8, 128], strides = [1, 1]} : vector<8x384xf32> to vector<8x128xf32>
    %454 = arith.addf %452, %453 : vector<8x128xf32>
    %455 = arith.negf %454 : vector<8x128xf32>
    %456 = math.exp %455 : vector<8x128xf32>
    %cst_226 = arith.constant 1.000000e+00 : f32
    %457 = vector.broadcast %cst_226 : f32 to vector<8x128xf32>
    %458 = arith.addf %457, %456 : vector<8x128xf32>
    %459 = arith.divf %457, %458 : vector<8x128xf32>
    %460 = vector.extract_strided_slice %438 {offsets = [0, 256], sizes = [8, 128], strides = [1, 1]} : vector<8x384xf32> to vector<8x128xf32>
    %461 = vector.extract_strided_slice %443 {offsets = [0, 256], sizes = [8, 128], strides = [1, 1]} : vector<8x384xf32> to vector<8x128xf32>
    %462 = arith.mulf %451, %461 : vector<8x128xf32>
    %463 = arith.addf %460, %462 : vector<8x128xf32>
    %464 = math.tanh %463 : vector<8x128xf32>
    %cst_227 = arith.constant 1.000000e+00 : f32
    %465 = vector.broadcast %cst_227 : f32 to vector<8x128xf32>
    %466 = arith.subf %465, %459 : vector<8x128xf32>
    %467 = arith.mulf %466, %464 : vector<8x128xf32>
    %468 = arith.mulf %459, %390 : vector<8x128xf32>
    %469 = arith.addf %467, %468 : vector<8x128xf32>
    %c0_228 = arith.constant 0 : index
    %c0_229 = arith.constant 0 : index
    %470 = vector.load %arg12[%c0_228, %c0_229] : memref<128x128xf32, #tpu.memory_space<vmem>>, vector<128x128xf32>
    %cst_230 = arith.constant dense<0.000000e+00> : vector<8x128xf32>
    %471 = tpu.matmul %469, %470, %cst_230 {dimension_numbers = #tpu.dot_dimension_numbers<[1], [0], [0], [1], [0, 0, 1, 1], [], []>} : vector<8x128xf32>, vector<128x128xf32>, vector<8x128xf32> -> vector<8x128xf32>
    %c0_231 = arith.constant 0 : index
    %c0_232 = arith.constant 0 : index
    %472 = vector.load %arg13[%c0_231, %c0_232] : memref<1x128xf32, #tpu.memory_space<vmem>>, vector<1x128xf32>
    %473 = vector.broadcast %472 : vector<1x128xf32> to vector<8x128xf32>
    %474 = arith.addf %471, %473 : vector<8x128xf32>
    %c5_233 = arith.constant 5 : index
    %c0_234 = arith.constant 0 : index
    %c0_235 = arith.constant 0 : index
    %475 = vector.load %arg14[%c5_233, %c0_234, %c0_235] : memref<8x8x128xf32, #tpu.memory_space<vmem>>, vector<1x8x128xf32>
    %476 = vector.shape_cast %475 : vector<1x8x128xf32> to vector<8x128xf32>
    %477 = vector.shape_cast %474 : vector<8x128xf32> to vector<1x8x128xf32>
    tpu.vector_store %arg14[%c5_233, %c0_234, %c0_235], %477 {strides = array<i32>} : memref<8x8x128xf32, #tpu.memory_space<vmem>>, vector<1x8x128xf32>,
    %c6 = arith.constant 6 : index
    %c0_236 = arith.constant 0 : index
    %c0_237 = arith.constant 0 : index
    %478 = vector.load %arg2[%c6, %c0_236, %c0_237] : memref<8x8x48xf32, #tpu.memory_space<vmem>>, vector<1x8x48xf32>
    %479 = vector.shape_cast %478 : vector<1x8x48xf32> to vector<8x48xf32>
    %c0_238 = arith.constant 0 : index
    %c0_239 = arith.constant 0 : index
    %480 = vector.load %arg4[%c0_238, %c0_239] : memref<48x128xf32, #tpu.memory_space<vmem>>, vector<48x128xf32>
    %cst_240 = arith.constant dense<0.000000e+00> : vector<8x128xf32>
    %481 = tpu.matmul %479, %480, %cst_240 {dimension_numbers = #tpu.dot_dimension_numbers<[1], [0], [0], [1], [0, 0, 1, 1], [], []>} : vector<8x48xf32>, vector<48x128xf32>, vector<8x128xf32> -> vector<8x128xf32>
    %c0_241 = arith.constant 0 : index
    %c0_242 = arith.constant 0 : index
    %482 = vector.load %arg5[%c0_241, %c0_242] : memref<1x128xf32, #tpu.memory_space<vmem>>, vector<1x128xf32>
    %483 = vector.broadcast %482 : vector<1x128xf32> to vector<8x128xf32>
    %484 = arith.addf %481, %483 : vector<8x128xf32>
    %cst_243 = arith.constant dense<0.000000e+00> : vector<8xf32>
    %485 = vector.multi_reduction <add>, %484, %cst_243 [1] : vector<8x128xf32> to vector<8xf32>
    %486 = vector.shape_cast %485 : vector<8xf32> to vector<8x1xf32>
    %cst_244 = arith.constant 3.125000e-02 : f32
    %487 = vector.broadcast %cst_244 : f32 to vector<8x1xf32>
    %488 = arith.mulf %486, %487 : vector<8x1xf32>
    %489 = arith.mulf %484, %484 : vector<8x128xf32>
    %cst_245 = arith.constant dense<0.000000e+00> : vector<8xf32>
    %490 = vector.multi_reduction <add>, %489, %cst_245 [1] : vector<8x128xf32> to vector<8xf32>
    %491 = vector.shape_cast %490 : vector<8xf32> to vector<8x1xf32>
    %cst_246 = arith.constant 3.125000e-02 : f32
    %492 = vector.broadcast %cst_246 : f32 to vector<8x1xf32>
    %493 = arith.mulf %491, %492 : vector<8x1xf32>
    %494 = arith.mulf %488, %488 : vector<8x1xf32>
    %495 = arith.subf %493, %494 : vector<8x1xf32>
    %cst_247 = arith.constant 0.000000e+00 : f32
    %496 = vector.broadcast %cst_247 : f32 to vector<8x1xf32>
    %497 = arith.maximumf %495, %496 : vector<8x1xf32>
    %498 = vector.broadcast %488 : vector<8x1xf32> to vector<8x128xf32>
    %499 = arith.subf %484, %498 : vector<8x128xf32>
    %cst_248 = arith.constant 9.99999974E-6 : f32
    %500 = vector.broadcast %cst_248 : f32 to vector<8x1xf32>
    %501 = arith.addf %497, %500 : vector<8x1xf32>
    %502 = math.rsqrt %501 : vector<8x1xf32>
    %503 = vector.broadcast %502 : vector<8x1xf32> to vector<8x128xf32>
    %504 = arith.mulf %499, %503 : vector<8x128xf32>
    %c0_249 = arith.constant 0 : index
    %c0_250 = arith.constant 0 : index
    %505 = vector.load %arg6[%c0_249, %c0_250] : memref<1x128xf32, #tpu.memory_space<vmem>>, vector<1x128xf32>
    %506 = vector.broadcast %505 : vector<1x128xf32> to vector<8x128xf32>
    %507 = arith.mulf %504, %506 : vector<8x128xf32>
    %c0_251 = arith.constant 0 : index
    %c0_252 = arith.constant 0 : index
    %508 = vector.load %arg7[%c0_251, %c0_252] : memref<1x128xf32, #tpu.memory_space<vmem>>, vector<1x128xf32>
    %509 = vector.broadcast %508 : vector<1x128xf32> to vector<8x128xf32>
    %510 = arith.addf %507, %509 : vector<8x128xf32>
    %cst_253 = arith.constant 0.000000e+00 : f32
    %511 = vector.broadcast %cst_253 : f32 to vector<8x128xf32>
    %512 = arith.maximumf %510, %511 : vector<8x128xf32>
    %c0_254 = arith.constant 0 : index
    %c0_255 = arith.constant 0 : index
    %513 = vector.load %arg8[%c0_254, %c0_255] : memref<128x384xf32, #tpu.memory_space<vmem>>, vector<128x384xf32>
    %cst_256 = arith.constant dense<0.000000e+00> : vector<8x384xf32>
    %514 = tpu.matmul %512, %513, %cst_256 {dimension_numbers = #tpu.dot_dimension_numbers<[1], [0], [0], [1], [0, 0, 1, 1], [], []>} : vector<8x128xf32>, vector<128x384xf32>, vector<8x384xf32> -> vector<8x384xf32>
    %c0_257 = arith.constant 0 : index
    %c0_258 = arith.constant 0 : index
    %515 = vector.load %arg9[%c0_257, %c0_258] : memref<1x384xf32, #tpu.memory_space<vmem>>, vector<1x384xf32>
    %516 = vector.broadcast %515 : vector<1x384xf32> to vector<8x384xf32>
    %517 = arith.addf %514, %516 : vector<8x384xf32>
    %c0_259 = arith.constant 0 : index
    %c0_260 = arith.constant 0 : index
    %518 = vector.load %arg10[%c0_259, %c0_260] : memref<128x384xf32, #tpu.memory_space<vmem>>, vector<128x384xf32>
    %cst_261 = arith.constant dense<0.000000e+00> : vector<8x384xf32>
    %519 = tpu.matmul %469, %518, %cst_261 {dimension_numbers = #tpu.dot_dimension_numbers<[1], [0], [0], [1], [0, 0, 1, 1], [], []>} : vector<8x128xf32>, vector<128x384xf32>, vector<8x384xf32> -> vector<8x384xf32>
    %c0_262 = arith.constant 0 : index
    %c0_263 = arith.constant 0 : index
    %520 = vector.load %arg11[%c0_262, %c0_263] : memref<1x384xf32, #tpu.memory_space<vmem>>, vector<1x384xf32>
    %521 = vector.broadcast %520 : vector<1x384xf32> to vector<8x384xf32>
    %522 = arith.addf %519, %521 : vector<8x384xf32>
    %523 = vector.extract_strided_slice %517 {offsets = [0, 0], sizes = [8, 128], strides = [1, 1]} : vector<8x384xf32> to vector<8x128xf32>
    %524 = vector.extract_strided_slice %522 {offsets = [0, 0], sizes = [8, 128], strides = [1, 1]} : vector<8x384xf32> to vector<8x128xf32>
    %525 = arith.addf %523, %524 : vector<8x128xf32>
    %526 = arith.negf %525 : vector<8x128xf32>
    %527 = math.exp %526 : vector<8x128xf32>
    %cst_264 = arith.constant 1.000000e+00 : f32
    %528 = vector.broadcast %cst_264 : f32 to vector<8x128xf32>
    %529 = arith.addf %528, %527 : vector<8x128xf32>
    %530 = arith.divf %528, %529 : vector<8x128xf32>
    %531 = vector.extract_strided_slice %517 {offsets = [0, 128], sizes = [8, 128], strides = [1, 1]} : vector<8x384xf32> to vector<8x128xf32>
    %532 = vector.extract_strided_slice %522 {offsets = [0, 128], sizes = [8, 128], strides = [1, 1]} : vector<8x384xf32> to vector<8x128xf32>
    %533 = arith.addf %531, %532 : vector<8x128xf32>
    %534 = arith.negf %533 : vector<8x128xf32>
    %535 = math.exp %534 : vector<8x128xf32>
    %cst_265 = arith.constant 1.000000e+00 : f32
    %536 = vector.broadcast %cst_265 : f32 to vector<8x128xf32>
    %537 = arith.addf %536, %535 : vector<8x128xf32>
    %538 = arith.divf %536, %537 : vector<8x128xf32>
    %539 = vector.extract_strided_slice %517 {offsets = [0, 256], sizes = [8, 128], strides = [1, 1]} : vector<8x384xf32> to vector<8x128xf32>
    %540 = vector.extract_strided_slice %522 {offsets = [0, 256], sizes = [8, 128], strides = [1, 1]} : vector<8x384xf32> to vector<8x128xf32>
    %541 = arith.mulf %530, %540 : vector<8x128xf32>
    %542 = arith.addf %539, %541 : vector<8x128xf32>
    %543 = math.tanh %542 : vector<8x128xf32>
    %cst_266 = arith.constant 1.000000e+00 : f32
    %544 = vector.broadcast %cst_266 : f32 to vector<8x128xf32>
    %545 = arith.subf %544, %538 : vector<8x128xf32>
    %546 = arith.mulf %545, %543 : vector<8x128xf32>
    %547 = arith.mulf %538, %469 : vector<8x128xf32>
    %548 = arith.addf %546, %547 : vector<8x128xf32>
    %c0_267 = arith.constant 0 : index
    %c0_268 = arith.constant 0 : index
    %549 = vector.load %arg12[%c0_267, %c0_268] : memref<128x128xf32, #tpu.memory_space<vmem>>, vector<128x128xf32>
    %cst_269 = arith.constant dense<0.000000e+00> : vector<8x128xf32>
    %550 = tpu.matmul %548, %549, %cst_269 {dimension_numbers = #tpu.dot_dimension_numbers<[1], [0], [0], [1], [0, 0, 1, 1], [], []>} : vector<8x128xf32>, vector<128x128xf32>, vector<8x128xf32> -> vector<8x128xf32>
    %c0_270 = arith.constant 0 : index
    %c0_271 = arith.constant 0 : index
    %551 = vector.load %arg13[%c0_270, %c0_271] : memref<1x128xf32, #tpu.memory_space<vmem>>, vector<1x128xf32>
    %552 = vector.broadcast %551 : vector<1x128xf32> to vector<8x128xf32>
    %553 = arith.addf %550, %552 : vector<8x128xf32>
    %c6_272 = arith.constant 6 : index
    %c0_273 = arith.constant 0 : index
    %c0_274 = arith.constant 0 : index
    %554 = vector.load %arg14[%c6_272, %c0_273, %c0_274] : memref<8x8x128xf32, #tpu.memory_space<vmem>>, vector<1x8x128xf32>
    %555 = vector.shape_cast %554 : vector<1x8x128xf32> to vector<8x128xf32>
    %556 = vector.shape_cast %553 : vector<8x128xf32> to vector<1x8x128xf32>
    tpu.vector_store %arg14[%c6_272, %c0_273, %c0_274], %556 {strides = array<i32>} : memref<8x8x128xf32, #tpu.memory_space<vmem>>, vector<1x8x128xf32>,
    %c7 = arith.constant 7 : index
    %c0_275 = arith.constant 0 : index
    %c0_276 = arith.constant 0 : index
    %557 = vector.load %arg2[%c7, %c0_275, %c0_276] : memref<8x8x48xf32, #tpu.memory_space<vmem>>, vector<1x8x48xf32>
    %558 = vector.shape_cast %557 : vector<1x8x48xf32> to vector<8x48xf32>
    %c0_277 = arith.constant 0 : index
    %c0_278 = arith.constant 0 : index
    %559 = vector.load %arg4[%c0_277, %c0_278] : memref<48x128xf32, #tpu.memory_space<vmem>>, vector<48x128xf32>
    %cst_279 = arith.constant dense<0.000000e+00> : vector<8x128xf32>
    %560 = tpu.matmul %558, %559, %cst_279 {dimension_numbers = #tpu.dot_dimension_numbers<[1], [0], [0], [1], [0, 0, 1, 1], [], []>} : vector<8x48xf32>, vector<48x128xf32>, vector<8x128xf32> -> vector<8x128xf32>
    %c0_280 = arith.constant 0 : index
    %c0_281 = arith.constant 0 : index
    %561 = vector.load %arg5[%c0_280, %c0_281] : memref<1x128xf32, #tpu.memory_space<vmem>>, vector<1x128xf32>
    %562 = vector.broadcast %561 : vector<1x128xf32> to vector<8x128xf32>
    %563 = arith.addf %560, %562 : vector<8x128xf32>
    %cst_282 = arith.constant dense<0.000000e+00> : vector<8xf32>
    %564 = vector.multi_reduction <add>, %563, %cst_282 [1] : vector<8x128xf32> to vector<8xf32>
    %565 = vector.shape_cast %564 : vector<8xf32> to vector<8x1xf32>
    %cst_283 = arith.constant 3.125000e-02 : f32
    %566 = vector.broadcast %cst_283 : f32 to vector<8x1xf32>
    %567 = arith.mulf %565, %566 : vector<8x1xf32>
    %568 = arith.mulf %563, %563 : vector<8x128xf32>
    %cst_284 = arith.constant dense<0.000000e+00> : vector<8xf32>
    %569 = vector.multi_reduction <add>, %568, %cst_284 [1] : vector<8x128xf32> to vector<8xf32>
    %570 = vector.shape_cast %569 : vector<8xf32> to vector<8x1xf32>
    %cst_285 = arith.constant 3.125000e-02 : f32
    %571 = vector.broadcast %cst_285 : f32 to vector<8x1xf32>
    %572 = arith.mulf %570, %571 : vector<8x1xf32>
    %573 = arith.mulf %567, %567 : vector<8x1xf32>
    %574 = arith.subf %572, %573 : vector<8x1xf32>
    %cst_286 = arith.constant 0.000000e+00 : f32
    %575 = vector.broadcast %cst_286 : f32 to vector<8x1xf32>
    %576 = arith.maximumf %574, %575 : vector<8x1xf32>
    %577 = vector.broadcast %567 : vector<8x1xf32> to vector<8x128xf32>
    %578 = arith.subf %563, %577 : vector<8x128xf32>
    %cst_287 = arith.constant 9.99999974E-6 : f32
    %579 = vector.broadcast %cst_287 : f32 to vector<8x1xf32>
    %580 = arith.addf %576, %579 : vector<8x1xf32>
    %581 = math.rsqrt %580 : vector<8x1xf32>
    %582 = vector.broadcast %581 : vector<8x1xf32> to vector<8x128xf32>
    %583 = arith.mulf %578, %582 : vector<8x128xf32>
    %c0_288 = arith.constant 0 : index
    %c0_289 = arith.constant 0 : index
    %584 = vector.load %arg6[%c0_288, %c0_289] : memref<1x128xf32, #tpu.memory_space<vmem>>, vector<1x128xf32>
    %585 = vector.broadcast %584 : vector<1x128xf32> to vector<8x128xf32>
    %586 = arith.mulf %583, %585 : vector<8x128xf32>
    %c0_290 = arith.constant 0 : index
    %c0_291 = arith.constant 0 : index
    %587 = vector.load %arg7[%c0_290, %c0_291] : memref<1x128xf32, #tpu.memory_space<vmem>>, vector<1x128xf32>
    %588 = vector.broadcast %587 : vector<1x128xf32> to vector<8x128xf32>
    %589 = arith.addf %586, %588 : vector<8x128xf32>
    %cst_292 = arith.constant 0.000000e+00 : f32
    %590 = vector.broadcast %cst_292 : f32 to vector<8x128xf32>
    %591 = arith.maximumf %589, %590 : vector<8x128xf32>
    %c0_293 = arith.constant 0 : index
    %c0_294 = arith.constant 0 : index
    %592 = vector.load %arg8[%c0_293, %c0_294] : memref<128x384xf32, #tpu.memory_space<vmem>>, vector<128x384xf32>
    %cst_295 = arith.constant dense<0.000000e+00> : vector<8x384xf32>
    %593 = tpu.matmul %591, %592, %cst_295 {dimension_numbers = #tpu.dot_dimension_numbers<[1], [0], [0], [1], [0, 0, 1, 1], [], []>} : vector<8x128xf32>, vector<128x384xf32>, vector<8x384xf32> -> vector<8x384xf32>
    %c0_296 = arith.constant 0 : index
    %c0_297 = arith.constant 0 : index
    %594 = vector.load %arg9[%c0_296, %c0_297] : memref<1x384xf32, #tpu.memory_space<vmem>>, vector<1x384xf32>
    %595 = vector.broadcast %594 : vector<1x384xf32> to vector<8x384xf32>
    %596 = arith.addf %593, %595 : vector<8x384xf32>
    %c0_298 = arith.constant 0 : index
    %c0_299 = arith.constant 0 : index
    %597 = vector.load %arg10[%c0_298, %c0_299] : memref<128x384xf32, #tpu.memory_space<vmem>>, vector<128x384xf32>
    %cst_300 = arith.constant dense<0.000000e+00> : vector<8x384xf32>
    %598 = tpu.matmul %548, %597, %cst_300 {dimension_numbers = #tpu.dot_dimension_numbers<[1], [0], [0], [1], [0, 0, 1, 1], [], []>} : vector<8x128xf32>, vector<128x384xf32>, vector<8x384xf32> -> vector<8x384xf32>
    %c0_301 = arith.constant 0 : index
    %c0_302 = arith.constant 0 : index
    %599 = vector.load %arg11[%c0_301, %c0_302] : memref<1x384xf32, #tpu.memory_space<vmem>>, vector<1x384xf32>
    %600 = vector.broadcast %599 : vector<1x384xf32> to vector<8x384xf32>
    %601 = arith.addf %598, %600 : vector<8x384xf32>
    %602 = vector.extract_strided_slice %596 {offsets = [0, 0], sizes = [8, 128], strides = [1, 1]} : vector<8x384xf32> to vector<8x128xf32>
    %603 = vector.extract_strided_slice %601 {offsets = [0, 0], sizes = [8, 128], strides = [1, 1]} : vector<8x384xf32> to vector<8x128xf32>
    %604 = arith.addf %602, %603 : vector<8x128xf32>
    %605 = arith.negf %604 : vector<8x128xf32>
    %606 = math.exp %605 : vector<8x128xf32>
    %cst_303 = arith.constant 1.000000e+00 : f32
    %607 = vector.broadcast %cst_303 : f32 to vector<8x128xf32>
    %608 = arith.addf %607, %606 : vector<8x128xf32>
    %609 = arith.divf %607, %608 : vector<8x128xf32>
    %610 = vector.extract_strided_slice %596 {offsets = [0, 128], sizes = [8, 128], strides = [1, 1]} : vector<8x384xf32> to vector<8x128xf32>
    %611 = vector.extract_strided_slice %601 {offsets = [0, 128], sizes = [8, 128], strides = [1, 1]} : vector<8x384xf32> to vector<8x128xf32>
    %612 = arith.addf %610, %611 : vector<8x128xf32>
    %613 = arith.negf %612 : vector<8x128xf32>
    %614 = math.exp %613 : vector<8x128xf32>
    %cst_304 = arith.constant 1.000000e+00 : f32
    %615 = vector.broadcast %cst_304 : f32 to vector<8x128xf32>
    %616 = arith.addf %615, %614 : vector<8x128xf32>
    %617 = arith.divf %615, %616 : vector<8x128xf32>
    %618 = vector.extract_strided_slice %596 {offsets = [0, 256], sizes = [8, 128], strides = [1, 1]} : vector<8x384xf32> to vector<8x128xf32>
    %619 = vector.extract_strided_slice %601 {offsets = [0, 256], sizes = [8, 128], strides = [1, 1]} : vector<8x384xf32> to vector<8x128xf32>
    %620 = arith.mulf %609, %619 : vector<8x128xf32>
    %621 = arith.addf %618, %620 : vector<8x128xf32>
    %622 = math.tanh %621 : vector<8x128xf32>
    %cst_305 = arith.constant 1.000000e+00 : f32
    %623 = vector.broadcast %cst_305 : f32 to vector<8x128xf32>
    %624 = arith.subf %623, %617 : vector<8x128xf32>
    %625 = arith.mulf %624, %622 : vector<8x128xf32>
    %626 = arith.mulf %617, %548 : vector<8x128xf32>
    %627 = arith.addf %625, %626 : vector<8x128xf32>
    %c0_306 = arith.constant 0 : index
    %c0_307 = arith.constant 0 : index
    %628 = vector.load %arg12[%c0_306, %c0_307] : memref<128x128xf32, #tpu.memory_space<vmem>>, vector<128x128xf32>
    %cst_308 = arith.constant dense<0.000000e+00> : vector<8x128xf32>
    %629 = tpu.matmul %627, %628, %cst_308 {dimension_numbers = #tpu.dot_dimension_numbers<[1], [0], [0], [1], [0, 0, 1, 1], [], []>} : vector<8x128xf32>, vector<128x128xf32>, vector<8x128xf32> -> vector<8x128xf32>
    %c0_309 = arith.constant 0 : index
    %c0_310 = arith.constant 0 : index
    %630 = vector.load %arg13[%c0_309, %c0_310] : memref<1x128xf32, #tpu.memory_space<vmem>>, vector<1x128xf32>
    %631 = vector.broadcast %630 : vector<1x128xf32> to vector<8x128xf32>
    %632 = arith.addf %629, %631 : vector<8x128xf32>
    %c7_311 = arith.constant 7 : index
    %c0_312 = arith.constant 0 : index
    %c0_313 = arith.constant 0 : index
    %633 = vector.load %arg14[%c7_311, %c0_312, %c0_313] : memref<8x8x128xf32, #tpu.memory_space<vmem>>, vector<1x8x128xf32>
    %634 = vector.shape_cast %633 : vector<1x8x128xf32> to vector<8x128xf32>
    %635 = vector.shape_cast %632 : vector<8x128xf32> to vector<1x8x128xf32>
    tpu.vector_store %arg14[%c7_311, %c0_312, %c0_313], %635 {strides = array<i32>} : memref<8x8x128xf32, #tpu.memory_space<vmem>>, vector<1x8x128xf32>,
    %c0_314 = arith.constant 0 : index
    %c0_315 = arith.constant 0 : index
    %636 = vector.load %arg16[%c0_314, %c0_315] : memref<8x128xf32, #tpu.memory_space<vmem>>, vector<8x128xf32>
    tpu.vector_store %arg16[%c0_314, %c0_315], %627 {strides = array<i32>} : memref<8x128xf32, #tpu.memory_space<vmem>>, vector<8x128xf32>,
    %c0_i32_316 = arith.constant 0 : i32
    %637 = arith.cmpi eq, %arg1, %c0_i32_316 : i32
    %638 = arith.extui %637 : i1 to i32
    %c0_i32_317 = arith.constant 0 : i32
    %639 = arith.cmpi ne, %638, %c0_i32_317 : i32
    scf.if %639 {
      %c0_318 = arith.constant 0 : index
      %c0_319 = arith.constant 0 : index
      %640 = vector.load %arg15[%c0_318, %c0_319] : memref<8x128xf32, #tpu.memory_space<vmem>>, vector<8x128xf32>
      tpu.vector_store %arg15[%c0_318, %c0_319], %627 {strides = array<i32>} : memref<8x128xf32, #tpu.memory_space<vmem>>, vector<8x128xf32>,
    } else {
    }
    return
  }
  func.func @transform_0(%arg0: i32, %arg1: i32) -> (i32, i32, i32) {
    %c0_i32 = arith.constant 0 : i32
    %c0_i32_0 = arith.constant 0 : i32
    return %arg1, %arg0, %c0_i32 : i32, i32, i32
  }
  func.func @transform_1(%arg0: i32, %arg1: i32) -> (i32, i32) {
    %c0_i32 = arith.constant 0 : i32
    %c0_i32_0 = arith.constant 0 : i32
    return %arg0, %c0_i32 : i32, i32
  }
  func.func @transform_2(%arg0: i32, %arg1: i32) -> (i32, i32) {
    %c0_i32 = arith.constant 0 : i32
    %c0_i32_0 = arith.constant 0 : i32
    %c0_i32_1 = arith.constant 0 : i32
    return %c0_i32, %c0_i32_0 : i32, i32
  }
  func.func @transform_3(%arg0: i32, %arg1: i32) -> (i32, i32) {
    %c0_i32 = arith.constant 0 : i32
    %c0_i32_0 = arith.constant 0 : i32
    %c0_i32_1 = arith.constant 0 : i32
    return %c0_i32, %c0_i32_0 : i32, i32
  }
  func.func @transform_4(%arg0: i32, %arg1: i32) -> (i32, i32) {
    %c0_i32 = arith.constant 0 : i32
    %c0_i32_0 = arith.constant 0 : i32
    %c0_i32_1 = arith.constant 0 : i32
    return %c0_i32, %c0_i32_0 : i32, i32
  }
  func.func @transform_5(%arg0: i32, %arg1: i32) -> (i32, i32) {
    %c0_i32 = arith.constant 0 : i32
    %c0_i32_0 = arith.constant 0 : i32
    %c0_i32_1 = arith.constant 0 : i32
    return %c0_i32, %c0_i32_0 : i32, i32
  }
  func.func @transform_6(%arg0: i32, %arg1: i32) -> (i32, i32) {
    %c0_i32 = arith.constant 0 : i32
    %c0_i32_0 = arith.constant 0 : i32
    %c0_i32_1 = arith.constant 0 : i32
    return %c0_i32, %c0_i32_0 : i32, i32
  }
  func.func @transform_7(%arg0: i32, %arg1: i32) -> (i32, i32) {
    %c0_i32 = arith.constant 0 : i32
    %c0_i32_0 = arith.constant 0 : i32
    %c0_i32_1 = arith.constant 0 : i32
    return %c0_i32, %c0_i32_0 : i32, i32
  }
  func.func @transform_8(%arg0: i32, %arg1: i32) -> (i32, i32) {
    %c0_i32 = arith.constant 0 : i32
    %c0_i32_0 = arith.constant 0 : i32
    %c0_i32_1 = arith.constant 0 : i32
    return %c0_i32, %c0_i32_0 : i32, i32
  }
  func.func @transform_9(%arg0: i32, %arg1: i32) -> (i32, i32) {
    %c0_i32 = arith.constant 0 : i32
    %c0_i32_0 = arith.constant 0 : i32
    %c0_i32_1 = arith.constant 0 : i32
    return %c0_i32, %c0_i32_0 : i32, i32
  }
  func.func @transform_10(%arg0: i32, %arg1: i32) -> (i32, i32) {
    %c0_i32 = arith.constant 0 : i32
    %c0_i32_0 = arith.constant 0 : i32
    %c0_i32_1 = arith.constant 0 : i32
    return %c0_i32, %c0_i32_0 : i32, i32
  }
  func.func @transform_11(%arg0: i32, %arg1: i32) -> (i32, i32) {
    %c0_i32 = arith.constant 0 : i32
    %c0_i32_0 = arith.constant 0 : i32
    %c0_i32_1 = arith.constant 0 : i32
    return %c0_i32, %c0_i32_0 : i32, i32
  }
  func.func @transform_12(%arg0: i32, %arg1: i32) -> (i32, i32, i32) {
    %c0_i32 = arith.constant 0 : i32
    %c0_i32_0 = arith.constant 0 : i32
    return %arg1, %arg0, %c0_i32 : i32, i32, i32
  }
  func.func @transform_13(%arg0: i32, %arg1: i32) -> (i32, i32) {
    %c0_i32 = arith.constant 0 : i32
    %c0_i32_0 = arith.constant 0 : i32
    return %arg0, %c0_i32 : i32, i32
  }
}

</mosaic_0001>

<llo_original>
// kernel: rnn_critic_forward_seq.1
$region0: #{rnn_critic_forward_seq.1}
  #allocation0 [shape = 'u32[]', space=smem, size = 0x4, offset = 0x4, fixed_abs, tag = 'smem constant byte address 0x4 - core index']
  #allocation1 [shape = 'u32[144,128]{1,0:T(1,128)}', space=vmem, size = 0x12000, scoped, tag = 'internal scratch']
  #allocation2 [shape = 'f32[8,128]{1,0:T(8,128)}', space=vmem, size = 0x1000, scoped, tag = 'scratch operand']
  %s0 = inlined_call_operand.hbm [shape: f32[8,8,48], index: 0, kind: input, shape index: {}]
  %s1 = inlined_call_operand.vmem [shape: f32[8,128], index: 1, kind: input, shape index: {}, may-alias: {1,13}]
  %s2 = inlined_call_operand.vmem [shape: f32[48,128], index: 2, kind: input, shape index: {}]
  %s3 = inlined_call_operand.vmem [shape: f32[1,128], index: 3, kind: input, shape index: {}]
  %s4 = inlined_call_operand.vmem [shape: f32[1,128], index: 4, kind: input, shape index: {}]
  %s5 = inlined_call_operand.vmem [shape: f32[1,128], index: 5, kind: input, shape index: {}]
  %s6 = inlined_call_operand.hbm [shape: f32[128,384], index: 6, kind: input, shape index: {}]
  %s7 = inlined_call_operand.vmem [shape: f32[1,384], index: 7, kind: input, shape index: {}]
  %s8 = inlined_call_operand.hbm [shape: f32[128,384], index: 8, kind: input, shape index: {}]
  %s9 = inlined_call_operand.vmem [shape: f32[1,384], index: 9, kind: input, shape index: {}]
  %s10 = inlined_call_operand.hbm [shape: f32[128,128], index: 10, kind: input, shape index: {}]
  %s11 = inlined_call_operand.vmem [shape: f32[1,128], index: 11, kind: input, shape index: {}]
  %s12 = inlined_call_operand.vmem [shape: f32[8,8,128], index: 12, kind: output, shape index: {0}]
  %s13 = inlined_call_operand.vmem [shape: f32[8,128], index: 13, kind: output, shape index: {1}, may-alias: {1,13}]
  %14 = xla_tuple %s12, %s13
  %s15 = sld [smem:[#allocation0]]
  $region90: #{rnn_critic_forward_seq.1} parent=0
    _
  %s17 = ssub.s32 1, %s15
  %s18 = scalar_select 0, %s17, %s15
  $region1: #{rnn_critic_forward_seq.1} parent=0
    #allocation3 [shape = 'u8[32768]{0}', space=vmem, size = 0x8000, scoped, tag = 'input window, operand 0, single buffered']
    #allocation4 [shape = 's32[1]{0}', space=sflag, size = 0x4, scoped, tag = 'scoped memory for rnn_critic_forward_seq.1']
    #allocation5 [shape = 'u8[196608]{0}', space=vmem, size = 0x30000, scoped, tag = 'input window, operand 6, single buffered']
    #allocation6 [shape = 's32[1]{0}', space=sflag, size = 0x4, scoped, tag = 'scoped memory for rnn_critic_forward_seq.1']
    #allocation7 [shape = 'u8[196608]{0}', space=vmem, size = 0x30000, scoped, tag = 'input window, operand 8, single buffered']
    #allocation8 [shape = 'u8[65536]{0}', space=vmem, size = 0x10000, scoped, tag = 'input window, operand 10, single buffered']
    #allocation9 [shape = 's32[1]{0}', space=sflag, size = 0x4, scoped, tag = 'scoped memory for rnn_critic_forward_seq.1']
    %19 = vsyncpa [#allocation4], 0
    %20 = vsyncpa [#allocation6], 0
    %21 = vsyncpa [#allocation9], 0
    // Predicated region
    $region2: #{rnn_critic_forward_seq.1} parent=1 // pred_check
      _
    $region3: #{rnn_critic_forward_seq.1} parent=1 // pred_check_branch
      %23 = sbr.rel (0) target = $region5
    $region4: #{rnn_critic_forward_seq.1} parent=1 // pred_region
      %s25 = ssub.s32 1024, 1024
      %26 = vsyncadd [#allocation4], %s25
      %s27 = sshll.u32 [#allocation3], 4
      %s28 = int_to_ptr.vmem [resolvable:$true] %s27
      %33 = dma.hbm_to_vmem [thread:$0]  %s0, 1024, %s28, [#allocation4], 128, 128, 8
    $region5: #{rnn_critic_forward_seq.1} parent=1 // pred_fallthru
      _
    // Predicated region
    $region6: #{rnn_critic_forward_seq.1} parent=1 // pred_check
      _
    $region7: #{rnn_critic_forward_seq.1} parent=1 // pred_check_branch
      %35 = sbr.rel (0) target = $region9
    $region8: #{rnn_critic_forward_seq.1} parent=1 // pred_region
      _
    $region9: #{rnn_critic_forward_seq.1} parent=1 // pred_fallthru
      _
    // Predicated region
    $region10: #{rnn_critic_forward_seq.1} parent=1 // pred_check
      _
    $region11: #{rnn_critic_forward_seq.1} parent=1 // pred_check_branch
      %37 = sbr.rel (0) target = $region13
    $region12: #{rnn_critic_forward_seq.1} parent=1 // pred_region
      _
    $region13: #{rnn_critic_forward_seq.1} parent=1 // pred_fallthru
      _
    // Predicated region
    $region14: #{rnn_critic_forward_seq.1} parent=1 // pred_check
      _
    $region15: #{rnn_critic_forward_seq.1} parent=1 // pred_check_branch
      %39 = sbr.rel (0) target = $region17
    $region16: #{rnn_critic_forward_seq.1} parent=1 // pred_region
      _
    $region17: #{rnn_critic_forward_seq.1} parent=1 // pred_fallthru
      _
    // Predicated region
    $region18: #{rnn_critic_forward_seq.1} parent=1 // pred_check
      _
    $region19: #{rnn_critic_forward_seq.1} parent=1 // pred_check_branch
      %41 = sbr.rel (0) target = $region21
    $region20: #{rnn_critic_forward_seq.1} parent=1 // pred_region
      _
    $region21: #{rnn_critic_forward_seq.1} parent=1 // pred_fallthru
      _
    // Predicated region
    $region22: #{rnn_critic_forward_seq.1} parent=1 // pred_check
      _
    $region23: #{rnn_critic_forward_seq.1} parent=1 // pred_check_branch
      %43 = sbr.rel (0) target = $region25
    $region24: #{rnn_critic_forward_seq.1} parent=1 // pred_region
      _
    $region25: #{rnn_critic_forward_seq.1} parent=1 // pred_fallthru
      _
    // Predicated region
    $region26: #{rnn_critic_forward_seq.1} parent=1 // pred_check
      _
    $region27: #{rnn_critic_forward_seq.1} parent=1 // pred_check_branch
      %45 = sbr.rel (0) target = $region29
    $region28: #{rnn_critic_forward_seq.1} parent=1 // pred_region
      %s47 = ssub.s32 6144, 6144
      %48 = vsyncadd [#allocation6], %s47
      %s49 = sshll.u32 [#allocation5], 4
      %s50 = int_to_ptr.vmem [resolvable:$true] %s49
      %55 = dma.hbm_to_vmem [thread:$0]  %s6, 6144, %s50, [#allocation6], 384, 384, 24
    $region29: #{rnn_critic_forward_seq.1} parent=1 // pred_fallthru
      _
    // Predicated region
    $region30: #{rnn_critic_forward_seq.1} parent=1 // pred_check
      _
    $region31: #{rnn_critic_forward_seq.1} parent=1 // pred_check_branch
      %57 = sbr.rel (0) target = $region33
    $region32: #{rnn_critic_forward_seq.1} parent=1 // pred_region
      _
    $region33: #{rnn_critic_forward_seq.1} parent=1 // pred_fallthru
      _
    // Predicated region
    $region34: #{rnn_critic_forward_seq.1} parent=1 // pred_check
      _
    $region35: #{rnn_critic_forward_seq.1} parent=1 // pred_check_branch
      %59 = sbr.rel (0) target = $region37
    $region36: #{rnn_critic_forward_seq.1} parent=1 // pred_region
      %s61 = ssub.s32 6144, 6144
      %62 = vsyncadd [#allocation6], %s61
      %s63 = sshll.u32 [#allocation7], 4
      %s64 = int_to_ptr.vmem [resolvable:$true] %s63
      %69 = dma.hbm_to_vmem [thread:$0]  %s8, 6144, %s64, [#allocation6], 384, 384, 24
    $region37: #{rnn_critic_forward_seq.1} parent=1 // pred_fallthru
      _
    // Predicated region
    $region38: #{rnn_critic_forward_seq.1} parent=1 // pred_check
      _
    $region39: #{rnn_critic_forward_seq.1} parent=1 // pred_check_branch
      %71 = sbr.rel (0) target = $region41
    $region40: #{rnn_critic_forward_seq.1} parent=1 // pred_region
      _
    $region41: #{rnn_critic_forward_seq.1} parent=1 // pred_fallthru
      _
    // Predicated region
    $region42: #{rnn_critic_forward_seq.1} parent=1 // pred_check
      _
    $region43: #{rnn_critic_forward_seq.1} parent=1 // pred_check_branch
      %73 = sbr.rel (0) target = $region45
    $region44: #{rnn_critic_forward_seq.1} parent=1 // pred_region
      %s75 = ssub.s32 2048, 2048
      %76 = vsyncadd [#allocation9], %s75
      %s77 = sshll.u32 [#allocation8], 4
      %s78 = int_to_ptr.vmem [resolvable:$true] %s77
      %83 = dma.hbm_to_vmem [thread:$0]  %s10, 2048, %s78, [#allocation9], 128, 128, 8
    $region45: #{rnn_critic_forward_seq.1} parent=1 // pred_fallthru
      _
    // Predicated region
    $region46: #{rnn_critic_forward_seq.1} parent=1 // pred_check
      _
    $region47: #{rnn_critic_forward_seq.1} parent=1 // pred_check_branch
      %85 = sbr.rel (0) target = $region49
    $region48: #{rnn_critic_forward_seq.1} parent=1 // pred_region
      _
    $region49: #{rnn_critic_forward_seq.1} parent=1 // pred_fallthru
      _
    // Predicated region
    $region50: #{rnn_critic_forward_seq.1} parent=1 // pred_check
      _
    $region51: #{rnn_critic_forward_seq.1} parent=1 // pred_check_branch
      %87 = sbr.rel (0) target = $region53
    $region52: #{rnn_critic_forward_seq.1} parent=1 // pred_region
      %88 = dma.done [#allocation4], 1024
    $region53: #{rnn_critic_forward_seq.1} parent=1 // pred_fallthru
      _
    // Predicated region
    $region54: #{rnn_critic_forward_seq.1} parent=1 // pred_check
      _
    $region55: #{rnn_critic_forward_seq.1} parent=1 // pred_check_branch
      %90 = sbr.rel (0) target = $region57
    $region56: #{rnn_critic_forward_seq.1} parent=1 // pred_region
      %91 = dma.done [#allocation6], 6144
    $region57: #{rnn_critic_forward_seq.1} parent=1 // pred_fallthru
      _
    // Predicated region
    $region58: #{rnn_critic_forward_seq.1} parent=1 // pred_check
      _
    $region59: #{rnn_critic_forward_seq.1} parent=1 // pred_check_branch
      %93 = sbr.rel (0) target = $region61
    $region60: #{rnn_critic_forward_seq.1} parent=1 // pred_region
      %94 = dma.done [#allocation6], 6144
    $region61: #{rnn_critic_forward_seq.1} parent=1 // pred_fallthru
      _
    // Predicated region
    $region62: #{rnn_critic_forward_seq.1} parent=1 // pred_check
      _
    $region63: #{rnn_critic_forward_seq.1} parent=1 // pred_check_branch
      %96 = sbr.rel (0) target = $region65
    $region64: #{rnn_critic_forward_seq.1} parent=1 // pred_region
      %97 = dma.done [#allocation9], 2048
    $region65: #{rnn_critic_forward_seq.1} parent=1 // pred_fallthru
      _
    %p98 = scmp.eq.s32.totalorder 0, 0
    // Predicated region
    $region66: #{rnn_critic_forward_seq.1} parent=1 // pred_check
      %p99 = pneg %p98
    $region67: #{rnn_critic_forward_seq.1} parent=1 // pred_check_branch
      %101 = sbr.rel (%p99) target = $region69
    $region68: #{rnn_critic_forward_seq.1} parent=1 // pred_region
      %v102 = vld [vmem:[%s1] sm:$0xff]
      %103 = vst [vmem:[#allocation2] sm:$0xff] %v102
    $region69: #{rnn_critic_forward_seq.1} parent=1 // pred_fallthru
      _
    %v104 = vld [vmem:[#allocation2] sm:$0xff]
    %v105 = vld [vmem:[#allocation3] sm:$0xff]
    %v106 = vld [vmem:[%s2] sm:$0xff]
    %v107 = vld [vmem:[%s2 + $0x8] sm:$0xff]
    %v108 = vld [vmem:[%s2 + $0x10] sm:$0xff]
    %v109 = vld [vmem:[%s2 + $0x18] sm:$0xff]
    %v110 = vld [vmem:[%s2 + $0x20] sm:$0xff]
    %v111 = vld [vmem:[%s2 + $0x28] sm:$0xff]
    %v112 = vld [vmem:[%s3] sm:$0x1]
    %v114 = vlaneseq
    %v115 = vshrl.u32 %v114, 7
    %v116 = vsub.s32 0, %v115
    %v117 = vrot.slane %v112, %v116
    %vm119 = vcmask 392192
    %v121 = vsel %vm119, %v105, 0
    %123 = vmatprep.subr.mxu0 0.0
    %124 = vmatpush1.msra.mxu0 %v106
    %125 = vmatprep.subr.mxu0 0.0
    %126 = vmatpush1.msra.mxu0 %v107
    %127 = vmatprep.subr.mxu0 0.0
    %128 = vmatpush1.msra.mxu0 %v108
    %129 = vmatprep.subr.mxu0 0.0
    %130 = vmatpush1.msra.mxu0 %v109
    %131 = vmatprep.subr.mxu0 0.0
    %132 = vmatpush1.msra.mxu0 %v110
    %133 = vmatprep.subr.mxu0 0.0
    %134 = vmatpush1.msra.mxu0 %v111
    %135 = vmatprep.subr.mxu0 0.0
    %136 = vmatpush1.msra.mxu0 0.0
    %137 = vmatprep.subr.mxu0 0.0
    %138 = vmatpush1.msra.mxu0 0.0
    %139 = vmatprep.subr.mxu0 0.0
    %140 = vmatpush1.msra.mxu0 0.0
    %141 = vmatprep.subr.mxu0 0.0
    %142 = vmatpush1.msra.mxu0 0.0
    %143 = vmatprep.subr.mxu0 0.0
    %144 = vmatpush1.msra.mxu0 0.0
    %145 = vmatprep.subr.mxu0 0.0
    %146 = vmatpush1.msra.mxu0 0.0
    %147 = vmatprep.subr.mxu0 0.0
    %148 = vmatpush1.msra.mxu0 0.0
    %149 = vmatprep.subr.mxu0 0.0
    %150 = vmatpush1.msra.mxu0 0.0
    %151 = vmatprep.subr.mxu0 0.0
    %152 = vmatpush1.msra.mxu0 0.0
    %153 = vmatprep.subr.mxu0 0.0
    %154 = vmatpush1.msra.mxu0 0.0
    %155 = vmatprep.subr.mxu0 0.0
    %156 = vmatpush1.msra.mxu0 0.0
    %157 = vmatprep.subr.mxu0 0.0
    %158 = vmatpush1.msra.mxu0 0.0
    %159 = vmatprep.subr.mxu0 0.0
    %160 = vmatpush1.msra.mxu0 0.0
    %161 = vmatprep.subr.mxu0 0.0
    %162 = vmatpush1.msra.mxu0 0.0
    %163 = vmatprep.subr.mxu0 0.0
    %164 = vmatpush1.msra.mxu0 0.0
    %165 = vmatprep.subr.mxu0 0.0
    %166 = vmatpush1.msra.mxu0 0.0
    %167 = vmatprep.subr.mxu0 0.0
    %168 = vmatpush1.msra.mxu0 0.0
    %169 = vmatprep.subr.mxu0 0.0
    %170 = vmatpush1.msra.mxu0 0.0
    %171 = vmatprep.subr.mxu0 0.0
    %172 = vmatpush1.msra.mxu0 0.0
    %173 = vmatprep.subr.mxu0 0.0
    %174 = vmatpush1.msra.mxu0 0.0
    %175 = vmatprep.subr.mxu0 0.0
    %176 = vmatpush1.msra.mxu0 0.0
    %177 = vmatprep.subr.mxu0 0.0
    %178 = vmatpush1.msra.mxu0 0.0
    %179 = vmatprep.subr.mxu0 0.0
    %180 = vmatpush1.msra.mxu0 0.0
    %181 = vmatprep.subr.mxu0 0.0
    %182 = vmatpush1.msra.mxu0 0.0
    %183 = vmatprep.subr.mxu0 0.0
    %184 = vmatpush1.msra.mxu0 0.0
    %185 = vmatprep.subr.mxu0 0.0
    %186 = vmatpush1.msra.mxu0 0.0
    %187 = vmatprep.mubr.f32.mxu0 0.0
    %188 = vmatmul.mubr.f32.gmra.mrb[0].mxu0 %v121
    %v189 = vpop.f32.mrb[0].mxu0
    %v190 = vadd.f32 %v117, %v189
    %v191 = vpop.f32.mrb[0].mxu0
    %192 = vdwg.mxu0
    %193 = vadd.xlane.f32.xlu0 %v190
    %v194 = vpop.xlane.xlu0 %193
    %v195 = vmul.f32 %v194, 0.03125
    %v196 = vmul.f32 %v190, %v190
    %197 = vadd.xlane.f32.xlu0 %v196
    %v198 = vpop.xlane.xlu0 %197
    %v199 = vmul.f32 %v198, 0.03125
    %v200 = vmul.f32 %v195, %v195
    %v201 = vsub.f32 %v199, %v200
    %v202 = vmax.f32 %v201, 0.0
    %v203 = vsub.f32 %v190, %v195
    %v204 = vadd.f32 %v202, 1e-05
    %v205 = vrsqrt.pop %v204
    %v206 = vmul.f32 %v203, %v205
    %v207 = vld [vmem:[%s4] sm:$0x1]
    %v209 = vlaneseq
    %v210 = vshrl.u32 %v209, 7
    %v211 = vsub.s32 0, %v210
    %v212 = vrot.slane %v207, %v211
    %v214 = vmul.f32 %v206, %v212
    %v215 = vld [vmem:[%s5] sm:$0x1]
    %v217 = vlaneseq
    %v218 = vshrl.u32 %v217, 7
    %v219 = vsub.s32 0, %v218
    %v220 = vrot.slane %v215, %v219
    %v222 = vadd.f32 %v214, %v220
    %v223 = vmax.f32 %v222, 0.0
    %v224 = vld [vmem:[#allocation5] sm:$0xff]
    %v225 = vld [vmem:[#allocation5 + $0x8] sm:$0xff]
    %v226 = vld [vmem:[#allocation5 + $0x10] sm:$0xff]
    %v227 = vld [vmem:[#allocation5 + $0x18] sm:$0xff]
    %v228 = vld [vmem:[#allocation5 + $0x20] sm:$0xff]
    %v229 = vld [vmem:[#allocation5 + $0x28] sm:$0xff]
    %v230 = vld [vmem:[#allocation5 + $0x30] sm:$0xff]
    %v231 = vld [vmem:[#allocation5 + $0x38] sm:$0xff]
    %v232 = vld [vmem:[#allocation5 + $0x40] sm:$0xff]
    %v233 = vld [vmem:[#allocation5 + $0x48] sm:$0xff]
    %v234 = vld [vmem:[#allocation5 + $0x50] sm:$0xff]
    %v235 = vld [vmem:[#allocation5 + $0x58] sm:$0xff]
    %v236 = vld [vmem:[#allocation5 + $0x60] sm:$0xff]
    %v237 = vld [vmem:[#allocation5 + $0x68] sm:$0xff]
    %v238 = vld [vmem:[#allocation5 + $0x70] sm:$0xff]
    %v239 = vld [vmem:[#allocation5 + $0x78] sm:$0xff]
    %v240 = vld [vmem:[#allocation5 + $0x80] sm:$0xff]
    %v241 = vld [vmem:[#allocation5 + $0x88] sm:$0xff]
    %v242 = vld [vmem:[#allocation5 + $0x90] sm:$0xff]
    %v243 = vld [vmem:[#allocation5 + $0x98] sm:$0xff]
    %v244 = vld [vmem:[#allocation5 + $0xa0] sm:$0xff]
    %v245 = vld [vmem:[#allocation5 + $0xa8] sm:$0xff]
    %v246 = vld [vmem:[#allocation5 + $0xb0] sm:$0xff]
    %v247 = vld [vmem:[#allocation5 + $0xb8] sm:$0xff]
    %v248 = vld [vmem:[#allocation5 + $0xc0] sm:$0xff]
    %v249 = vld [vmem:[#allocation5 + $0xc8] sm:$0xff]
    %v250 = vld [vmem:[#allocation5 + $0xd0] sm:$0xff]
    %v251 = vld [vmem:[#allocation5 + $0xd8] sm:$0xff]
    %v252 = vld [vmem:[#allocation5 + $0xe0] sm:$0xff]
    %v253 = vld [vmem:[#allocation5 + $0xe8] sm:$0xff]
    %v254 = vld [vmem:[#allocation5 + $0xf0] sm:$0xff]
    %v255 = vld [vmem:[#allocation5 + $0xf8] sm:$0xff]
    %v256 = vld [vmem:[#allocation5 + $0x100] sm:$0xff]
    %v257 = vld [vmem:[#allocation5 + $0x108] sm:$0xff]
    %v258 = vld [vmem:[#allocation5 + $0x110] sm:$0xff]
    %v259 = vld [vmem:[#allocation5 + $0x118] sm:$0xff]
    %v260 = vld [vmem:[#allocation5 + $0x120] sm:$0xff]
    %v261 = vld [vmem:[#allocation5 + $0x128] sm:$0xff]
    %v262 = vld [vmem:[#allocation5 + $0x130] sm:$0xff]
    %v263 = vld [vmem:[#allocation5 + $0x138] sm:$0xff]
    %v264 = vld [vmem:[#allocation5 + $0x140] sm:$0xff]
    %v265 = vld [vmem:[#allocation5 + $0x148] sm:$0xff]
    %v266 = vld [vmem:[#allocation5 + $0x150] sm:$0xff]
    %v267 = vld [vmem:[#allocation5 + $0x158] sm:$0xff]
    %v268 = vld [vmem:[#allocation5 + $0x160] sm:$0xff]
    %v269 = vld [vmem:[#allocation5 + $0x168] sm:$0xff]
    %v270 = vld [vmem:[#allocation5 + $0x170] sm:$0xff]
    %v271 = vld [vmem:[#allocation5 + $0x178] sm:$0xff]
    %v272 = vld [vmem:[%s7] sm:$0x7]
    %v274 = vlaneseq
    %v275 = vshrl.u32 %v274, 7
    %v276 = vsub.s32 0, %v275
    %v277 = vrot.slane %v272, %v276
    %v278 = vlaneseq
    %v279 = vshrl.u32 %v278, 7
    %v280 = vsub.s32 1, %v279
    %v281 = vrot.slane %v272, %v280
    %v282 = vlaneseq
    %v283 = vshrl.u32 %v282, 7
    %v284 = vsub.s32 2, %v283
    %v285 = vrot.slane %v272, %v284
    %289 = vmatprep.subr.mxu0 %v225
    %290 = vmatpush1.msra.mxu0 %v224
    %291 = vmatprep.subr.mxu0 %v228
    %292 = vmatpush1.msra.mxu0 %v227
    %293 = vmatprep.subr.mxu0 %v231
    %294 = vmatpush1.msra.mxu0 %v230
    %295 = vmatprep.subr.mxu0 %v234
    %296 = vmatpush1.msra.mxu0 %v233
    %297 = vmatprep.subr.mxu0 %v237
    %298 = vmatpush1.msra.mxu0 %v236
    %299 = vmatprep.subr.mxu0 %v240
    %300 = vmatpush1.msra.mxu0 %v239
    %301 = vmatprep.subr.mxu0 %v243
    %302 = vmatpush1.msra.mxu0 %v242
    %303 = vmatprep.subr.mxu0 %v246
    %304 = vmatpush1.msra.mxu0 %v245
    %305 = vmatprep.subr.mxu0 %v249
    %306 = vmatpush1.msra.mxu0 %v248
    %307 = vmatprep.subr.mxu0 %v252
    %308 = vmatpush1.msra.mxu0 %v251
    %309 = vmatprep.subr.mxu0 %v255
    %310 = vmatpush1.msra.mxu0 %v254
    %311 = vmatprep.subr.mxu0 %v258
    %312 = vmatpush1.msra.mxu0 %v257
    %313 = vmatprep.subr.mxu0 %v261
    %314 = vmatpush1.msra.mxu0 %v260
    %315 = vmatprep.subr.mxu0 %v264
    %316 = vmatpush1.msra.mxu0 %v263
    %317 = vmatprep.subr.mxu0 %v267
    %318 = vmatpush1.msra.mxu0 %v266
    %319 = vmatprep.subr.mxu0 %v270
    %320 = vmatpush1.msra.mxu0 %v269
    %321 = vmatprep.subr.mxu0 0.0
    %322 = vmatpush1.msra.mxu0 0.0
    %323 = vmatprep.subr.mxu0 0.0
    %324 = vmatpush1.msra.mxu0 0.0
    %325 = vmatprep.subr.mxu0 0.0
    %326 = vmatpush1.msra.mxu0 0.0
    %327 = vmatprep.subr.mxu0 0.0
    %328 = vmatpush1.msra.mxu0 0.0
    %329 = vmatprep.subr.mxu0 0.0
    %330 = vmatpush1.msra.mxu0 0.0
    %331 = vmatprep.subr.mxu0 0.0
    %332 = vmatpush1.msra.mxu0 0.0
    %333 = vmatprep.subr.mxu0 0.0
    %334 = vmatpush1.msra.mxu0 0.0
    %335 = vmatprep.subr.mxu0 0.0
    %336 = vmatpush1.msra.mxu0 0.0
    %337 = vmatprep.subr.mxu0 0.0
    %338 = vmatpush1.msra.mxu0 0.0
    %339 = vmatprep.subr.mxu0 0.0
    %340 = vmatpush1.msra.mxu0 0.0
    %341 = vmatprep.subr.mxu0 0.0
    %342 = vmatpush1.msra.mxu0 0.0
    %343 = vmatprep.subr.mxu0 0.0
    %344 = vmatpush1.msra.mxu0 0.0
    %345 = vmatprep.subr.mxu0 0.0
    %346 = vmatpush1.msra.mxu0 0.0
    %347 = vmatprep.subr.mxu0 0.0
    %348 = vmatpush1.msra.mxu0 0.0
    %349 = vmatprep.subr.mxu0 0.0
    %350 = vmatpush1.msra.mxu0 0.0
    %351 = vmatprep.subr.mxu0 0.0
    %352 = vmatpush1.msra.mxu0 0.0
    %353 = vmatprep.mubr.f32.mxu0 0.0
    %354 = vmatmul.mubr.f32.gmra.mrb[0].mxu0 %v223
    %v355 = vpop.f32.mrb[0].mxu0
    %v356 = vadd.f32 %v277, %v355
    %v357 = vpop.f32.mrb[0].mxu0
    %v358 = vadd.f32 %v281, %v357
    %359 = vdwg.mxu0
    %360 = vmatprep.subr.mxu0 0.0
    %361 = vmatpush1.msra.mxu0 %v226
    %362 = vmatprep.subr.mxu0 0.0
    %363 = vmatpush1.msra.mxu0 %v229
    %364 = vmatprep.subr.mxu0 0.0
    %365 = vmatpush1.msra.mxu0 %v232
    %366 = vmatprep.subr.mxu0 0.0
    %367 = vmatpush1.msra.mxu0 %v235
    %368 = vmatprep.subr.mxu0 0.0
    %369 = vmatpush1.msra.mxu0 %v238
    %370 = vmatprep.subr.mxu0 0.0
    %371 = vmatpush1.msra.mxu0 %v241
    %372 = vmatprep.subr.mxu0 0.0
    %373 = vmatpush1.msra.mxu0 %v244
    %374 = vmatprep.subr.mxu0 0.0
    %375 = vmatpush1.msra.mxu0 %v247
    %376 = vmatprep.subr.mxu0 0.0
    %377 = vmatpush1.msra.mxu0 %v250
    %378 = vmatprep.subr.mxu0 0.0
    %379 = vmatpush1.msra.mxu0 %v253
    %380 = vmatprep.subr.mxu0 0.0
    %381 = vmatpush1.msra.mxu0 %v256
    %382 = vmatprep.subr.mxu0 0.0
    %383 = vmatpush1.msra.mxu0 %v259
    %384 = vmatprep.subr.mxu0 0.0
    %385 = vmatpush1.msra.mxu0 %v262
    %386 = vmatprep.subr.mxu0 0.0
    %387 = vmatpush1.msra.mxu0 %v265
    %388 = vmatprep.subr.mxu0 0.0
    %389 = vmatpush1.msra.mxu0 %v268
    %390 = vmatprep.subr.mxu0 0.0
    %391 = vmatpush1.msra.mxu0 %v271
    %392 = vmatprep.subr.mxu0 0.0
    %393 = vmatpush1.msra.mxu0 0.0
    %394 = vmatprep.subr.mxu0 0.0
    %395 = vmatpush1.msra.mxu0 0.0
    %396 = vmatprep.subr.mxu0 0.0
    %397 = vmatpush1.msra.mxu0 0.0
    %398 = vmatprep.subr.mxu0 0.0
    %399 = vmatpush1.msra.mxu0 0.0
    %400 = vmatprep.subr.mxu0 0.0
    %401 = vmatpush1.msra.mxu0 0.0
    %402 = vmatprep.subr.mxu0 0.0
    %403 = vmatpush1.msra.mxu0 0.0
    %404 = vmatprep.subr.mxu0 0.0
    %405 = vmatpush1.msra.mxu0 0.0
    %406 = vmatprep.subr.mxu0 0.0
    %407 = vmatpush1.msra.mxu0 0.0
    %408 = vmatprep.subr.mxu0 0.0
    %409 = vmatpush1.msra.mxu0 0.0
    %410 = vmatprep.subr.mxu0 0.0
    %411 = vmatpush1.msra.mxu0 0.0
    %412 = vmatprep.subr.mxu0 0.0
    %413 = vmatpush1.msra.mxu0 0.0
    %414 = vmatprep.subr.mxu0 0.0
    %415 = vmatpush1.msra.mxu0 0.0
    %416 = vmatprep.subr.mxu0 0.0
    %417 = vmatpush1.msra.mxu0 0.0
    %418 = vmatprep.subr.mxu0 0.0
    %419 = vmatpush1.msra.mxu0 0.0
    %420 = vmatprep.subr.mxu0 0.0
    %421 = vmatpush1.msra.mxu0 0.0
    %422 = vmatprep.subr.mxu0 0.0
    %423 = vmatpush1.msra.mxu0 0.0
    %424 = vmatprep.mubr.f32.mxu0 0.0
    %425 = vmatmul.mubr.f32.gmra.mrb[0].mxu0 %v223
    %v426 = vpop.f32.mrb[0].mxu0
    %v427 = vadd.f32 %v285, %v426
    %v428 = vpop.f32.mrb[0].mxu0
    %429 = vdwg.mxu0
    %v430 = vld [vmem:[#allocation7] sm:$0xff]
    %v431 = vld [vmem:[#allocation7 + $0x8] sm:$0xff]
    %v432 = vld [vmem:[#allocation7 + $0x10] sm:$0xff]
    %v433 = vld [vmem:[#allocation7 + $0x18] sm:$0xff]
    %v434 = vld [vmem:[#allocation7 + $0x20] sm:$0xff]
    %v435 = vld [vmem:[#allocation7 + $0x28] sm:$0xff]
    %v436 = vld [vmem:[#allocation7 + $0x30] sm:$0xff]
    %v437 = vld [vmem:[#allocation7 + $0x38] sm:$0xff]
    %v438 = vld [vmem:[#allocation7 + $0x40] sm:$0xff]
    %v439 = vld [vmem:[#allocation7 + $0x48] sm:$0xff]
    %v440 = vld [vmem:[#allocation7 + $0x50] sm:$0xff]
    %v441 = vld [vmem:[#allocation7 + $0x58] sm:$0xff]
    %v442 = vld [vmem:[#allocation7 + $0x60] sm:$0xff]
    %v443 = vld [vmem:[#allocation7 + $0x68] sm:$0xff]
    %v444 = vld [vmem:[#allocation7 + $0x70] sm:$0xff]
    %v445 = vld [vmem:[#allocation7 + $0x78] sm:$0xff]
    %v446 = vld [vmem:[#allocation7 + $0x80] sm:$0xff]
    %v447 = vld [vmem:[#allocation7 + $0x88] sm:$0xff]
    %v448 = vld [vmem:[#allocation7 + $0x90] sm:$0xff]
    %v449 = vld [vmem:[#allocation7 + $0x98] sm:$0xff]
    %v450 = vld [vmem:[#allocation7 + $0xa0] sm:$0xff]
    %v451 = vld [vmem:[#allocation7 + $0xa8] sm:$0xff]
    %v452 = vld [vmem:[#allocation7 + $0xb0] sm:$0xff]
    %v453 = vld [vmem:[#allocation7 + $0xb8] sm:$0xff]
    %v454 = vld [vmem:[#allocation7 + $0xc0] sm:$0xff]
    %v455 = vld [vmem:[#allocation7 + $0xc8] sm:$0xff]
    %v456 = vld [vmem:[#allocation7 + $0xd0] sm:$0xff]
    %v457 = vld [vmem:[#allocation7 + $0xd8] sm:$0xff]
    %v458 = vld [vmem:[#allocation7 + $0xe0] sm:$0xff]
    %v459 = vld [vmem:[#allocation7 + $0xe8] sm:$0xff]
    %v460 = vld [vmem:[#allocation7 + $0xf0] sm:$0xff]
    %v461 = vld [vmem:[#allocation7 + $0xf8] sm:$0xff]
    %v462 = vld [vmem:[#allocation7 + $0x100] sm:$0xff]
    %v463 = vld [vmem:[#allocation7 + $0x108] sm:$0xff]
    %v464 = vld [vmem:[#allocation7 + $0x110] sm:$0xff]
    %v465 = vld [vmem:[#allocation7 + $0x118] sm:$0xff]
    %v466 = vld [vmem:[#allocation7 + $0x120] sm:$0xff]
    %v467 = vld [vmem:[#allocation7 + $0x128] sm:$0xff]
    %v468 = vld [vmem:[#allocation7 + $0x130] sm:$0xff]
    %v469 = vld [vmem:[#allocation7 + $0x138] sm:$0xff]
    %v470 = vld [vmem:[#allocation7 + $0x140] sm:$0xff]
    %v471 = vld [vmem:[#allocation7 + $0x148] sm:$0xff]
    %v472 = vld [vmem:[#allocation7 + $0x150] sm:$0xff]
    %v473 = vld [vmem:[#allocation7 + $0x158] sm:$0xff]
    %v474 = vld [vmem:[#allocation7 + $0x160] sm:$0xff]
    %v475 = vld [vmem:[#allocation7 + $0x168] sm:$0xff]
    %v476 = vld [vmem:[#allocation7 + $0x170] sm:$0xff]
    %v477 = vld [vmem:[#allocation7 + $0x178] sm:$0xff]
    %v478 = vld [vmem:[%s9] sm:$0x7]
    %v480 = vlaneseq
    %v481 = vshrl.u32 %v480, 7
    %v482 = vsub.s32 0, %v481
    %v483 = vrot.slane %v478, %v482
    %v484 = vlaneseq
    %v485 = vshrl.u32 %v484, 7
    %v486 = vsub.s32 1, %v485
    %v487 = vrot.slane %v478, %v486
    %v488 = vlaneseq
    %v489 = vshrl.u32 %v488, 7
    %v490 = vsub.s32 2, %v489
    %v491 = vrot.slane %v478, %v490
    %495 = vmatprep.subr.mxu0 %v431
    %496 = vmatpush1.msra.mxu0 %v430
    %497 = vmatprep.subr.mxu0 %v434
    %498 = vmatpush1.msra.mxu0 %v433
    %499 = vmatprep.subr.mxu0 %v437
    %500 = vmatpush1.msra.mxu0 %v436
    %501 = vmatprep.subr.mxu0 %v440
    %502 = vmatpush1.msra.mxu0 %v439
    %503 = vmatprep.subr.mxu0 %v443
    %504 = vmatpush1.msra.mxu0 %v442
    %505 = vmatprep.subr.mxu0 %v446
    %506 = vmatpush1.msra.mxu0 %v445
    %507 = vmatprep.subr.mxu0 %v449
    %508 = vmatpush1.msra.mxu0 %v448
    %509 = vmatprep.subr.mxu0 %v452
    %510 = vmatpush1.msra.mxu0 %v451
    %511 = vmatprep.subr.mxu0 %v455
    %512 = vmatpush1.msra.mxu0 %v454
    %513 = vmatprep.subr.mxu0 %v458
    %514 = vmatpush1.msra.mxu0 %v457
    %515 = vmatprep.subr.mxu0 %v461
    %516 = vmatpush1.msra.mxu0 %v460
    %517 = vmatprep.subr.mxu0 %v464
    %518 = vmatpush1.msra.mxu0 %v463
    %519 = vmatprep.subr.mxu0 %v467
    %520 = vmatpush1.msra.mxu0 %v466
    %521 = vmatprep.subr.mxu0 %v470
    %522 = vmatpush1.msra.mxu0 %v469
    %523 = vmatprep.subr.mxu0 %v473
    %524 = vmatpush1.msra.mxu0 %v472
    %525 = vmatprep.subr.mxu0 %v476
    %526 = vmatpush1.msra.mxu0 %v475
    %527 = vmatprep.subr.mxu0 0.0
    %528 = vmatpush1.msra.mxu0 0.0
    %529 = vmatprep.subr.mxu0 0.0
    %530 = vmatpush1.msra.mxu0 0.0
    %531 = vmatprep.subr.mxu0 0.0
    %532 = vmatpush1.msra.mxu0 0.0
    %533 = vmatprep.subr.mxu0 0.0
    %534 = vmatpush1.msra.mxu0 0.0
    %535 = vmatprep.subr.mxu0 0.0
    %536 = vmatpush1.msra.mxu0 0.0
    %537 = vmatprep.subr.mxu0 0.0
    %538 = vmatpush1.msra.mxu0 0.0
    %539 = vmatprep.subr.mxu0 0.0
    %540 = vmatpush1.msra.mxu0 0.0
    %541 = vmatprep.subr.mxu0 0.0
    %542 = vmatpush1.msra.mxu0 0.0
    %543 = vmatprep.subr.mxu0 0.0
    %544 = vmatpush1.msra.mxu0 0.0
    %545 = vmatprep.subr.mxu0 0.0
    %546 = vmatpush1.msra.mxu0 0.0
    %547 = vmatprep.subr.mxu0 0.0
    %548 = vmatpush1.msra.mxu0 0.0
    %549 = vmatprep.subr.mxu0 0.0
    %550 = vmatpush1.msra.mxu0 0.0
    %551 = vmatprep.subr.mxu0 0.0
    %552 = vmatpush1.msra.mxu0 0.0
    %553 = vmatprep.subr.mxu0 0.0
    %554 = vmatpush1.msra.mxu0 0.0
    %555 = vmatprep.subr.mxu0 0.0
    %556 = vmatpush1.msra.mxu0 0.0
    %557 = vmatprep.subr.mxu0 0.0
    %558 = vmatpush1.msra.mxu0 0.0
    %559 = vmatprep.mubr.f32.mxu0 0.0
    %560 = vmatmul.mubr.f32.gmra.mrb[0].mxu0 %v104
    %v561 = vpop.f32.mrb[0].mxu0
    %v562 = vadd.f32 %v483, %v561
    %v563 = vpop.f32.mrb[0].mxu0
    %v564 = vadd.f32 %v487, %v563
    %565 = vdwg.mxu0
    %566 = vmatprep.subr.mxu0 0.0
    %567 = vmatpush1.msra.mxu0 %v432
    %568 = vmatprep.subr.mxu0 0.0
    %569 = vmatpush1.msra.mxu0 %v435
    %570 = vmatprep.subr.mxu0 0.0
    %571 = vmatpush1.msra.mxu0 %v438
    %572 = vmatprep.subr.mxu0 0.0
    %573 = vmatpush1.msra.mxu0 %v441
    %574 = vmatprep.subr.mxu0 0.0
    %575 = vmatpush1.msra.mxu0 %v444
    %576 = vmatprep.subr.mxu0 0.0
    %577 = vmatpush1.msra.mxu0 %v447
    %578 = vmatprep.subr.mxu0 0.0
    %579 = vmatpush1.msra.mxu0 %v450
    %580 = vmatprep.subr.mxu0 0.0
    %581 = vmatpush1.msra.mxu0 %v453
    %582 = vmatprep.subr.mxu0 0.0
    %583 = vmatpush1.msra.mxu0 %v456
    %584 = vmatprep.subr.mxu0 0.0
    %585 = vmatpush1.msra.mxu0 %v459
    %586 = vmatprep.subr.mxu0 0.0
    %587 = vmatpush1.msra.mxu0 %v462
    %588 = vmatprep.subr.mxu0 0.0
    %589 = vmatpush1.msra.mxu0 %v465
    %590 = vmatprep.subr.mxu0 0.0
    %591 = vmatpush1.msra.mxu0 %v468
    %592 = vmatprep.subr.mxu0 0.0
    %593 = vmatpush1.msra.mxu0 %v471
    %594 = vmatprep.subr.mxu0 0.0
    %595 = vmatpush1.msra.mxu0 %v474
    %596 = vmatprep.subr.mxu0 0.0
    %597 = vmatpush1.msra.mxu0 %v477
    %598 = vmatprep.subr.mxu0 0.0
    %599 = vmatpush1.msra.mxu0 0.0
    %600 = vmatprep.subr.mxu0 0.0
    %601 = vmatpush1.msra.mxu0 0.0
    %602 = vmatprep.subr.mxu0 0.0
    %603 = vmatpush1.msra.mxu0 0.0
    %604 = vmatprep.subr.mxu0 0.0
    %605 = vmatpush1.msra.mxu0 0.0
    %606 = vmatprep.subr.mxu0 0.0
    %607 = vmatpush1.msra.mxu0 0.0
    %608 = vmatprep.subr.mxu0 0.0
    %609 = vmatpush1.msra.mxu0 0.0
    %610 = vmatprep.subr.mxu0 0.0
    %611 = vmatpush1.msra.mxu0 0.0
    %612 = vmatprep.subr.mxu0 0.0
    %613 = vmatpush1.msra.mxu0 0.0
    %614 = vmatprep.subr.mxu0 0.0
    %615 = vmatpush1.msra.mxu0 0.0
    %616 = vmatprep.subr.mxu0 0.0
    %617 = vmatpush1.msra.mxu0 0.0
    %618 = vmatprep.subr.mxu0 0.0
    %619 = vmatpush1.msra.mxu0 0.0
    %620 = vmatprep.subr.mxu0 0.0
    %621 = vmatpush1.msra.mxu0 0.0
    %622 = vmatprep.subr.mxu0 0.0
    %623 = vmatpush1.msra.mxu0 0.0
    %624 = vmatprep.subr.mxu0 0.0
    %625 = vmatpush1.msra.mxu0 0.0
    %626 = vmatprep.subr.mxu0 0.0
    %627 = vmatpush1.msra.mxu0 0.0
    %628 = vmatprep.subr.mxu0 0.0
    %629 = vmatpush1.msra.mxu0 0.0
    %630 = vmatprep.mubr.f32.mxu0 0.0
    %631 = vmatmul.mubr.f32.gmra.mrb[0].mxu0 %v104
    %v632 = vpop.f32.mrb[0].mxu0
    %v633 = vadd.f32 %v491, %v632
    %v634 = vpop.f32.mrb[0].mxu0
    %635 = vdwg.mxu0
    %v636 = vadd.f32 %v356, %v562
    %v637 = vxor.u32 %v636, 2147483648
    %v638 = vmul.f32 %v637, 1.442695
    %v639 = vpow.pop %v638
    %v640 = vadd.f32 %v639, 1.0
    %v641 = vrcp.pop %v640
    %v642 = vmul.f32 1.0, %v641
    %v643 = vadd.f32 %v358, %v564
    %v644 = vxor.u32 %v643, 2147483648
    %v645 = vmul.f32 %v644, 1.442695
    %v646 = vpow.pop %v645
    %v647 = vadd.f32 %v646, 1.0
    %v648 = vrcp.pop %v647
    %v649 = vmul.f32 1.0, %v648
    %v650 = vmul.f32 %v642, %v633
    %v651 = vadd.f32 %v427, %v650
    %v652 = vtanh.pop %v651
    %v653 = vsub.f32 1.0, %v649
    %v654 = vmul.f32 %v653, %v652
    %v655 = vmul.f32 %v649, %v104
    %v656 = vadd.f32 %v654, %v655
    %v657 = vld [vmem:[#allocation8] sm:$0xff]
    %v658 = vld [vmem:[#allocation8 + $0x8] sm:$0xff]
    %v659 = vld [vmem:[#allocation8 + $0x10] sm:$0xff]
    %v660 = vld [vmem:[#allocation8 + $0x18] sm:$0xff]
    %v661 = vld [vmem:[#allocation8 + $0x20] sm:$0xff]
    %v662 = vld [vmem:[#allocation8 + $0x28] sm:$0xff]
    %v663 = vld [vmem:[#allocation8 + $0x30] sm:$0xff]
    %v664 = vld [vmem:[#allocation8 + $0x38] sm:$0xff]
    %v665 = vld [vmem:[#allocation8 + $0x40] sm:$0xff]
    %v666 = vld [vmem:[#allocation8 + $0x48] sm:$0xff]
    %v667 = vld [vmem:[#allocation8 + $0x50] sm:$0xff]
    %v668 = vld [vmem:[#allocation8 + $0x58] sm:$0xff]
    %v669 = vld [vmem:[#allocation8 + $0x60] sm:$0xff]
    %v670 = vld [vmem:[#allocation8 + $0x68] sm:$0xff]
    %v671 = vld [vmem:[#allocation8 + $0x70] sm:$0xff]
    %v672 = vld [vmem:[#allocation8 + $0x78] sm:$0xff]
    %v673 = vld [vmem:[%s11] sm:$0x1]
    %v675 = vlaneseq
    %v676 = vshrl.u32 %v675, 7
    %v677 = vsub.s32 0, %v676
    %v678 = vrot.slane %v673, %v677
    %680 = vmatprep.subr.mxu0 0.0
    %681 = vmatpush1.msra.mxu0 %v657
    %682 = vmatprep.subr.mxu0 0.0
    %683 = vmatpush1.msra.mxu0 %v658
    %684 = vmatprep.subr.mxu0 0.0
    %685 = vmatpush1.msra.mxu0 %v659
    %686 = vmatprep.subr.mxu0 0.0
    %687 = vmatpush1.msra.mxu0 %v660
    %688 = vmatprep.subr.mxu0 0.0
    %689 = vmatpush1.msra.mxu0 %v661
    %690 = vmatprep.subr.mxu0 0.0
    %691 = vmatpush1.msra.mxu0 %v662
    %692 = vmatprep.subr.mxu0 0.0
    %693 = vmatpush1.msra.mxu0 %v663
    %694 = vmatprep.subr.mxu0 0.0
    %695 = vmatpush1.msra.mxu0 %v664
    %696 = vmatprep.subr.mxu0 0.0
    %697 = vmatpush1.msra.mxu0 %v665
    %698 = vmatprep.subr.mxu0 0.0
    %699 = vmatpush1.msra.mxu0 %v666
    %700 = vmatprep.subr.mxu0 0.0
    %701 = vmatpush1.msra.mxu0 %v667
    %702 = vmatprep.subr.mxu0 0.0
    %703 = vmatpush1.msra.mxu0 %v668
    %704 = vmatprep.subr.mxu0 0.0
    %705 = vmatpush1.msra.mxu0 %v669
    %706 = vmatprep.subr.mxu0 0.0
    %707 = vmatpush1.msra.mxu0 %v670
    %708 = vmatprep.subr.mxu0 0.0
    %709 = vmatpush1.msra.mxu0 %v671
    %710 = vmatprep.subr.mxu0 0.0
    %711 = vmatpush1.msra.mxu0 %v672
    %712 = vmatprep.subr.mxu0 0.0
    %713 = vmatpush1.msra.mxu0 0.0
    %714 = vmatprep.subr.mxu0 0.0
    %715 = vmatpush1.msra.mxu0 0.0
    %716 = vmatprep.subr.mxu0 0.0
    %717 = vmatpush1.msra.mxu0 0.0
    %718 = vmatprep.subr.mxu0 0.0
    %719 = vmatpush1.msra.mxu0 0.0
    %720 = vmatprep.subr.mxu0 0.0
    %721 = vmatpush1.msra.mxu0 0.0
    %722 = vmatprep.subr.mxu0 0.0
    %723 = vmatpush1.msra.mxu0 0.0
    %724 = vmatprep.subr.mxu0 0.0
    %725 = vmatpush1.msra.mxu0 0.0
    %726 = vmatprep.subr.mxu0 0.0
    %727 = vmatpush1.msra.mxu0 0.0
    %728 = vmatprep.subr.mxu0 0.0
    %729 = vmatpush1.msra.mxu0 0.0
    %730 = vmatprep.subr.mxu0 0.0
    %731 = vmatpush1.msra.mxu0 0.0
    %732 = vmatprep.subr.mxu0 0.0
    %733 = vmatpush1.msra.mxu0 0.0
    %734 = vmatprep.subr.mxu0 0.0
    %735 = vmatpush1.msra.mxu0 0.0
    %736 = vmatprep.subr.mxu0 0.0
    %737 = vmatpush1.msra.mxu0 0.0
    %738 = vmatprep.subr.mxu0 0.0
    %739 = vmatpush1.msra.mxu0 0.0
    %740 = vmatprep.subr.mxu0 0.0
    %741 = vmatpush1.msra.mxu0 0.0
    %742 = vmatprep.subr.mxu0 0.0
    %743 = vmatpush1.msra.mxu0 0.0
    %744 = vmatprep.mubr.f32.mxu0 0.0
    %745 = vmatmul.mubr.f32.gmra.mrb[0].mxu0 %v656
    %v746 = vpop.f32.mrb[0].mxu0
    %v747 = vadd.f32 %v678, %v746
    %v748 = vpop.f32.mrb[0].mxu0
    %749 = vdwg.mxu0
    %750 = vst [vmem:[%s12] sm:$0xff] %v747
    %s751 = scalar_lea.vmem [#allocation3], 8
    %v752 = vld [vmem:[%s751] sm:$0xff]
    %v753 = vld [vmem:[%s2] sm:$0xff]
    %v754 = vld [vmem:[%s2 + $0x8] sm:$0xff]
    %v755 = vld [vmem:[%s2 + $0x10] sm:$0xff]
    %v756 = vld [vmem:[%s2 + $0x18] sm:$0xff]
    %v757 = vld [vmem:[%s2 + $0x20] sm:$0xff]
    %v758 = vld [vmem:[%s2 + $0x28] sm:$0xff]
    %v759 = vld [vmem:[%s3] sm:$0x1]
    %v761 = vlaneseq
    %v762 = vshrl.u32 %v761, 7
    %v763 = vsub.s32 0, %v762
    %v764 = vrot.slane %v759, %v763
    %v767 = vsel %vm119, %v752, 0
    %769 = vmatprep.subr.mxu0 0.0
    %770 = vmatpush1.msra.mxu0 %v753
    %771 = vmatprep.subr.mxu0 0.0
    %772 = vmatpush1.msra.mxu0 %v754
    %773 = vmatprep.subr.mxu0 0.0
    %774 = vmatpush1.msra.mxu0 %v755
    %775 = vmatprep.subr.mxu0 0.0
    %776 = vmatpush1.msra.mxu0 %v756
    %777 = vmatprep.subr.mxu0 0.0
    %778 = vmatpush1.msra.mxu0 %v757
    %779 = vmatprep.subr.mxu0 0.0
    %780 = vmatpush1.msra.mxu0 %v758
    %781 = vmatprep.subr.mxu0 0.0
    %782 = vmatpush1.msra.mxu0 0.0
    %783 = vmatprep.subr.mxu0 0.0
    %784 = vmatpush1.msra.mxu0 0.0
    %785 = vmatprep.subr.mxu0 0.0
    %786 = vmatpush1.msra.mxu0 0.0
    %787 = vmatprep.subr.mxu0 0.0
    %788 = vmatpush1.msra.mxu0 0.0
    %789 = vmatprep.subr.mxu0 0.0
    %790 = vmatpush1.msra.mxu0 0.0
    %791 = vmatprep.subr.mxu0 0.0
    %792 = vmatpush1.msra.mxu0 0.0
    %793 = vmatprep.subr.mxu0 0.0
    %794 = vmatpush1.msra.mxu0 0.0
    %795 = vmatprep.subr.mxu0 0.0
    %796 = vmatpush1.msra.mxu0 0.0
    %797 = vmatprep.subr.mxu0 0.0
    %798 = vmatpush1.msra.mxu0 0.0
    %799 = vmatprep.subr.mxu0 0.0
    %800 = vmatpush1.msra.mxu0 0.0
    %801 = vmatprep.subr.mxu0 0.0
    %802 = vmatpush1.msra.mxu0 0.0
    %803 = vmatprep.subr.mxu0 0.0
    %804 = vmatpush1.msra.mxu0 0.0
    %805 = vmatprep.subr.mxu0 0.0
    %806 = vmatpush1.msra.mxu0 0.0
    %807 = vmatprep.subr.mxu0 0.0
    %808 = vmatpush1.msra.mxu0 0.0
    %809 = vmatprep.subr.mxu0 0.0
    %810 = vmatpush1.msra.mxu0 0.0
    %811 = vmatprep.subr.mxu0 0.0
    %812 = vmatpush1.msra.mxu0 0.0
    %813 = vmatprep.subr.mxu0 0.0
    %814 = vmatpush1.msra.mxu0 0.0
    %815 = vmatprep.subr.mxu0 0.0
    %816 = vmatpush1.msra.mxu0 0.0
    %817 = vmatprep.subr.mxu0 0.0
    %818 = vmatpush1.msra.mxu0 0.0
    %819 = vmatprep.subr.mxu0 0.0
    %820 = vmatpush1.msra.mxu0 0.0
    %821 = vmatprep.subr.mxu0 0.0
    %822 = vmatpush1.msra.mxu0 0.0
    %823 = vmatprep.subr.mxu0 0.0
    %824 = vmatpush1.msra.mxu0 0.0
    %825 = vmatprep.subr.mxu0 0.0
    %826 = vmatpush1.msra.mxu0 0.0
    %827 = vmatprep.subr.mxu0 0.0
    %828 = vmatpush1.msra.mxu0 0.0
    %829 = vmatprep.subr.mxu0 0.0
    %830 = vmatpush1.msra.mxu0 0.0
    %831 = vmatprep.subr.mxu0 0.0
    %832 = vmatpush1.msra.mxu0 0.0
    %833 = vmatprep.mubr.f32.mxu0 0.0
    %834 = vmatmul.mubr.f32.gmra.mrb[0].mxu0 %v767
    %v835 = vpop.f32.mrb[0].mxu0
    %v836 = vadd.f32 %v764, %v835
    %v837 = vpop.f32.mrb[0].mxu0
    %838 = vdwg.mxu0
    %839 = vadd.xlane.f32.xlu0 %v836
    %v840 = vpop.xlane.xlu0 %839
    %v841 = vmul.f32 %v840, 0.03125
    %v842 = vmul.f32 %v836, %v836
    %843 = vadd.xlane.f32.xlu0 %v842
    %v844 = vpop.xlane.xlu0 %843
    %v845 = vmul.f32 %v844, 0.03125
    %v846 = vmul.f32 %v841, %v841
    %v847 = vsub.f32 %v845, %v846
    %v848 = vmax.f32 %v847, 0.0
    %v849 = vsub.f32 %v836, %v841
    %v850 = vadd.f32 %v848, 1e-05
    %v851 = vrsqrt.pop %v850
    %v852 = vmul.f32 %v849, %v851
    %v853 = vld [vmem:[%s4] sm:$0x1]
    %v855 = vlaneseq
    %v856 = vshrl.u32 %v855, 7
    %v857 = vsub.s32 0, %v856
    %v858 = vrot.slane %v853, %v857
    %v860 = vmul.f32 %v852, %v858
    %v861 = vld [vmem:[%s5] sm:$0x1]
    %v863 = vlaneseq
    %v864 = vshrl.u32 %v863, 7
    %v865 = vsub.s32 0, %v864
    %v866 = vrot.slane %v861, %v865
    %v868 = vadd.f32 %v860, %v866
    %v869 = vmax.f32 %v868, 0.0
    %v870 = vld [vmem:[#allocation5] sm:$0xff]
    %v871 = vld [vmem:[#allocation5 + $0x8] sm:$0xff]
    %v872 = vld [vmem:[#allocation5 + $0x10] sm:$0xff]
    %v873 = vld [vmem:[#allocation5 + $0x18] sm:$0xff]
    %v874 = vld [vmem:[#allocation5 + $0x20] sm:$0xff]
    %v875 = vld [vmem:[#allocation5 + $0x28] sm:$0xff]
    %v876 = vld [vmem:[#allocation5 + $0x30] sm:$0xff]
    %v877 = vld [vmem:[#allocation5 + $0x38] sm:$0xff]
    %v878 = vld [vmem:[#allocation5 + $0x40] sm:$0xff]
    %v879 = vld [vmem:[#allocation5 + $0x48] sm:$0xff]
    %v880 = vld [vmem:[#allocation5 + $0x50] sm:$0xff]
    %v881 = vld [vmem:[#allocation5 + $0x58] sm:$0xff]
    %v882 = vld [vmem:[#allocation5 + $0x60] sm:$0xff]
    %v883 = vld [vmem:[#allocation5 + $0x68] sm:$0xff]
    %v884 = vld [vmem:[#allocation5 + $0x70] sm:$0xff]
    %v885 = vld [vmem:[#allocation5 + $0x78] sm:$0xff]
    %v886 = vld [vmem:[#allocation5 + $0x80] sm:$0xff]
    %v887 = vld [vmem:[#allocation5 + $0x88] sm:$0xff]
    %v888 = vld [vmem:[#allocation5 + $0x90] sm:$0xff]
    %v889 = vld [vmem:[#allocation5 + $0x98] sm:$0xff]
    %v890 = vld [vmem:[#allocation5 + $0xa0] sm:$0xff]
    %v891 = vld [vmem:[#allocation5 + $0xa8] sm:$0xff]
    %v892 = vld [vmem:[#allocation5 + $0xb0] sm:$0xff]
    %v893 = vld [vmem:[#allocation5 + $0xb8] sm:$0xff]
    %v894 = vld [vmem:[#allocation5 + $0xc0] sm:$0xff]
    %v895 = vld [vmem:[#allocation5 + $0xc8] sm:$0xff]
    %v896 = vld [vmem:[#allocation5 + $0xd0] sm:$0xff]
    %v897 = vld [vmem:[#allocation5 + $0xd8] sm:$0xff]
    %v898 = vld [vmem:[#allocation5 + $0xe0] sm:$0xff]
    %v899 = vld [vmem:[#allocation5 + $0xe8] sm:$0xff]
    %v900 = vld [vmem:[#allocation5 + $0xf0] sm:$0xff]
    %v901 = vld [vmem:[#allocation5 + $0xf8] sm:$0xff]
    %v902 = vld [vmem:[#allocation5 + $0x100] sm:$0xff]
    %v903 = vld [vmem:[#allocation5 + $0x108] sm:$0xff]
    %v904 = vld [vmem:[#allocation5 + $0x110] sm:$0xff]
    %v905 = vld [vmem:[#allocation5 + $0x118] sm:$0xff]
    %v906 = vld [vmem:[#allocation5 + $0x120] sm:$0xff]
    %v907 = vld [vmem:[#allocation5 + $0x128] sm:$0xff]
    %v908 = vld [vmem:[#allocation5 + $0x130] sm:$0xff]
    %v909 = vld [vmem:[#allocation5 + $0x138] sm:$0xff]
    %v910 = vld [vmem:[#allocation5 + $0x140] sm:$0xff]
    %v911 = vld [vmem:[#allocation5 + $0x148] sm:$0xff]
    %v912 = vld [vmem:[#allocation5 + $0x150] sm:$0xff]
    %v913 = vld [vmem:[#allocation5 + $0x158] sm:$0xff]
    %v914 = vld [vmem:[#allocation5 + $0x160] sm:$0xff]
    %v915 = vld [vmem:[#allocation5 + $0x168] sm:$0xff]
    %v916 = vld [vmem:[#allocation5 + $0x170] sm:$0xff]
    %v917 = vld [vmem:[#allocation5 + $0x178] sm:$0xff]
    %v918 = vld [vmem:[%s7] sm:$0x7]
    %v920 = vlaneseq
    %v921 = vshrl.u32 %v920, 7
    %v922 = vsub.s32 0, %v921
    %v923 = vrot.slane %v918, %v922
    %v924 = vlaneseq
    %v925 = vshrl.u32 %v924, 7
    %v926 = vsub.s32 1, %v925
    %v927 = vrot.slane %v918, %v926
    %v928 = vlaneseq
    %v929 = vshrl.u32 %v928, 7
    %v930 = vsub.s32 2, %v929
    %v931 = vrot.slane %v918, %v930
    %935 = vmatprep.subr.mxu0 %v871
    %936 = vmatpush1.msra.mxu0 %v870
    %937 = vmatprep.subr.mxu0 %v874
    %938 = vmatpush1.msra.mxu0 %v873
    %939 = vmatprep.subr.mxu0 %v877
    %940 = vmatpush1.msra.mxu0 %v876
    %941 = vmatprep.subr.mxu0 %v880
    %942 = vmatpush1.msra.mxu0 %v879
    %943 = vmatprep.subr.mxu0 %v883
    %944 = vmatpush1.msra.mxu0 %v882
    %945 = vmatprep.subr.mxu0 %v886
    %946 = vmatpush1.msra.mxu0 %v885
    %947 = vmatprep.subr.mxu0 %v889
    %948 = vmatpush1.msra.mxu0 %v888
    %949 = vmatprep.subr.mxu0 %v892
    %950 = vmatpush1.msra.mxu0 %v891
    %951 = vmatprep.subr.mxu0 %v895
    %952 = vmatpush1.msra.mxu0 %v894
    %953 = vmatprep.subr.mxu0 %v898
    %954 = vmatpush1.msra.mxu0 %v897
    %955 = vmatprep.subr.mxu0 %v901
    %956 = vmatpush1.msra.mxu0 %v900
    %957 = vmatprep.subr.mxu0 %v904
    %958 = vmatpush1.msra.mxu0 %v903
    %959 = vmatprep.subr.mxu0 %v907
    %960 = vmatpush1.msra.mxu0 %v906
    %961 = vmatprep.subr.mxu0 %v910
    %962 = vmatpush1.msra.mxu0 %v909
    %963 = vmatprep.subr.mxu0 %v913
    %964 = vmatpush1.msra.mxu0 %v912
    %965 = vmatprep.subr.mxu0 %v916
    %966 = vmatpush1.msra.mxu0 %v915
    %967 = vmatprep.subr.mxu0 0.0
    %968 = vmatpush1.msra.mxu0 0.0
    %969 = vmatprep.subr.mxu0 0.0
    %970 = vmatpush1.msra.mxu0 0.0
    %971 = vmatprep.subr.mxu0 0.0
    %972 = vmatpush1.msra.mxu0 0.0
    %973 = vmatprep.subr.mxu0 0.0
    %974 = vmatpush1.msra.mxu0 0.0
    %975 = vmatprep.subr.mxu0 0.0
    %976 = vmatpush1.msra.mxu0 0.0
    %977 = vmatprep.subr.mxu0 0.0
    %978 = vmatpush1.msra.mxu0 0.0
    %979 = vmatprep.subr.mxu0 0.0
    %980 = vmatpush1.msra.mxu0 0.0
    %981 = vmatprep.subr.mxu0 0.0
    %982 = vmatpush1.msra.mxu0 0.0
    %983 = vmatprep.subr.mxu0 0.0
    %984 = vmatpush1.msra.mxu0 0.0
    %985 = vmatprep.subr.mxu0 0.0
    %986 = vmatpush1.msra.mxu0 0.0
    %987 = vmatprep.subr.mxu0 0.0
    %988 = vmatpush1.msra.mxu0 0.0
    %989 = vmatprep.subr.mxu0 0.0
    %990 = vmatpush1.msra.mxu0 0.0
    %991 = vmatprep.subr.mxu0 0.0
    %992 = vmatpush1.msra.mxu0 0.0
    %993 = vmatprep.subr.mxu0 0.0
    %994 = vmatpush1.msra.mxu0 0.0
    %995 = vmatprep.subr.mxu0 0.0
    %996 = vmatpush1.msra.mxu0 0.0
    %997 = vmatprep.subr.mxu0 0.0
    %998 = vmatpush1.msra.mxu0 0.0
    %999 = vmatprep.mubr.f32.mxu0 0.0
    %1000 = vmatmul.mubr.f32.gmra.mrb[0].mxu0 %v869
    %v1001 = vpop.f32.mrb[0].mxu0
    %v1002 = vadd.f32 %v923, %v1001
    %v1003 = vpop.f32.mrb[0].mxu0
    %v1004 = vadd.f32 %v927, %v1003
    %1005 = vdwg.mxu0
    %1006 = vmatprep.subr.mxu0 0.0
    %1007 = vmatpush1.msra.mxu0 %v872
    %1008 = vmatprep.subr.mxu0 0.0
    %1009 = vmatpush1.msra.mxu0 %v875
    %1010 = vmatprep.subr.mxu0 0.0
    %1011 = vmatpush1.msra.mxu0 %v878
    %1012 = vmatprep.subr.mxu0 0.0
    %1013 = vmatpush1.msra.mxu0 %v881
    %1014 = vmatprep.subr.mxu0 0.0
    %1015 = vmatpush1.msra.mxu0 %v884
    %1016 = vmatprep.subr.mxu0 0.0
    %1017 = vmatpush1.msra.mxu0 %v887
    %1018 = vmatprep.subr.mxu0 0.0
    %1019 = vmatpush1.msra.mxu0 %v890
    %1020 = vmatprep.subr.mxu0 0.0
    %1021 = vmatpush1.msra.mxu0 %v893
    %1022 = vmatprep.subr.mxu0 0.0
    %1023 = vmatpush1.msra.mxu0 %v896
    %1024 = vmatprep.subr.mxu0 0.0
    %1025 = vmatpush1.msra.mxu0 %v899
    %1026 = vmatprep.subr.mxu0 0.0
    %1027 = vmatpush1.msra.mxu0 %v902
    %1028 = vmatprep.subr.mxu0 0.0
    %1029 = vmatpush1.msra.mxu0 %v905
    %1030 = vmatprep.subr.mxu0 0.0
    %1031 = vmatpush1.msra.mxu0 %v908
    %1032 = vmatprep.subr.mxu0 0.0
    %1033 = vmatpush1.msra.mxu0 %v911
    %1034 = vmatprep.subr.mxu0 0.0
    %1035 = vmatpush1.msra.mxu0 %v914
    %1036 = vmatprep.subr.mxu0 0.0
    %1037 = vmatpush1.msra.mxu0 %v917
    %1038 = vmatprep.subr.mxu0 0.0
    %1039 = vmatpush1.msra.mxu0 0.0
    %1040 = vmatprep.subr.mxu0 0.0
    %1041 = vmatpush1.msra.mxu0 0.0
    %1042 = vmatprep.subr.mxu0 0.0
    %1043 = vmatpush1.msra.mxu0 0.0
    %1044 = vmatprep.subr.mxu0 0.0
    %1045 = vmatpush1.msra.mxu0 0.0
    %1046 = vmatprep.subr.mxu0 0.0
    %1047 = vmatpush1.msra.mxu0 0.0
    %1048 = vmatprep.subr.mxu0 0.0
    %1049 = vmatpush1.msra.mxu0 0.0
    %1050 = vmatprep.subr.mxu0 0.0
    %1051 = vmatpush1.msra.mxu0 0.0
    %1052 = vmatprep.subr.mxu0 0.0
    %1053 = vmatpush1.msra.mxu0 0.0
    %1054 = vmatprep.subr.mxu0 0.0
    %1055 = vmatpush1.msra.mxu0 0.0
    %1056 = vmatprep.subr.mxu0 0.0
    %1057 = vmatpush1.msra.mxu0 0.0
    %1058 = vmatprep.subr.mxu0 0.0
    %1059 = vmatpush1.msra.mxu0 0.0
    %1060 = vmatprep.subr.mxu0 0.0
    %1061 = vmatpush1.msra.mxu0 0.0
    %1062 = vmatprep.subr.mxu0 0.0
    %1063 = vmatpush1.msra.mxu0 0.0
    %1064 = vmatprep.subr.mxu0 0.0
    %1065 = vmatpush1.msra.mxu0 0.0
    %1066 = vmatprep.subr.mxu0 0.0
    %1067 = vmatpush1.msra.mxu0 0.0
    %1068 = vmatprep.subr.mxu0 0.0
    %1069 = vmatpush1.msra.mxu0 0.0
    %1070 = vmatprep.mubr.f32.mxu0 0.0
    %1071 = vmatmul.mubr.f32.gmra.mrb[0].mxu0 %v869
    %v1072 = vpop.f32.mrb[0].mxu0
    %v1073 = vadd.f32 %v931, %v1072
    %v1074 = vpop.f32.mrb[0].mxu0
    %1075 = vdwg.mxu0
    %v1076 = vld [vmem:[#allocation7] sm:$0xff]
    %v1077 = vld [vmem:[#allocation7 + $0x8] sm:$0xff]
    %v1078 = vld [vmem:[#allocation7 + $0x10] sm:$0xff]
    %v1079 = vld [vmem:[#allocation7 + $0x18] sm:$0xff]
    %v1080 = vld [vmem:[#allocation7 + $0x20] sm:$0xff]
    %v1081 = vld [vmem:[#allocation7 + $0x28] sm:$0xff]
    %v1082 = vld [vmem:[#allocation7 + $0x30] sm:$0xff]
    %v1083 = vld [vmem:[#allocation7 + $0x38] sm:$0xff]
    %v1084 = vld [vmem:[#allocation7 + $0x40] sm:$0xff]
    %v1085 = vld [vmem:[#allocation7 + $0x48] sm:$0xff]
    %v1086 = vld [vmem:[#allocation7 + $0x50] sm:$0xff]
    %v1087 = vld [vmem:[#allocation7 + $0x58] sm:$0xff]
    %v1088 = vld [vmem:[#allocation7 + $0x60] sm:$0xff]
    %v1089 = vld [vmem:[#allocation7 + $0x68] sm:$0xff]
    %v1090 = vld [vmem:[#allocation7 + $0x70] sm:$0xff]
    %v1091 = vld [vmem:[#allocation7 + $0x78] sm:$0xff]
    %v1092 = vld [vmem:[#allocation7 + $0x80] sm:$0xff]
    %v1093 = vld [vmem:[#allocation7 + $0x88] sm:$0xff]
    %v1094 = vld [vmem:[#allocation7 + $0x90] sm:$0xff]
    %v1095 = vld [vmem:[#allocation7 + $0x98] sm:$0xff]
    %v1096 = vld [vmem:[#allocation7 + $0xa0] sm:$0xff]
    %v1097 = vld [vmem:[#allocation7 + $0xa8] sm:$0xff]
    %v1098 = vld [vmem:[#allocation7 + $0xb0] sm:$0xff]
    %v1099 = vld [vmem:[#allocation7 + $0xb8] sm:$0xff]
    %v1100 = vld [vmem:[#allocation7 + $0xc0] sm:$0xff]
    %v1101 = vld [vmem:[#allocation7 + $0xc8] sm:$0xff]
    %v1102 = vld [vmem:[#allocation7 + $0xd0] sm:$0xff]
    %v1103 = vld [vmem:[#allocation7 + $0xd8] sm:$0xff]
    %v1104 = vld [vmem:[#allocation7 + $0xe0] sm:$0xff]
    %v1105 = vld [vmem:[#allocation7 + $0xe8] sm:$0xff]
    %v1106 = vld [vmem:[#allocation7 + $0xf0] sm:$0xff]
    %v1107 = vld [vmem:[#allocation7 + $0xf8] sm:$0xff]
    %v1108 = vld [vmem:[#allocation7 + $0x100] sm:$0xff]
    %v1109 = vld [vmem:[#allocation7 + $0x108] sm:$0xff]
    %v1110 = vld [vmem:[#allocation7 + $0x110] sm:$0xff]
    %v1111 = vld [vmem:[#allocation7 + $0x118] sm:$0xff]
    %v1112 = vld [vmem:[#allocation7 + $0x120] sm:$0xff]
    %v1113 = vld [vmem:[#allocation7 + $0x128] sm:$0xff]
    %v1114 = vld [vmem:[#allocation7 + $0x130] sm:$0xff]
    %v1115 = vld [vmem:[#allocation7 + $0x138] sm:$0xff]
    %v1116 = vld [vmem:[#allocation7 + $0x140] sm:$0xff]
    %v1117 = vld [vmem:[#allocation7 + $0x148] sm:$0xff]
    %v1118 = vld [vmem:[#allocation7 + $0x150] sm:$0xff]
    %v1119 = vld [vmem:[#allocation7 + $0x158] sm:$0xff]
    %v1120 = vld [vmem:[#allocation7 + $0x160] sm:$0xff]
    %v1121 = vld [vmem:[#allocation7 + $0x168] sm:$0xff]
    %v1122 = vld [vmem:[#allocation7 + $0x170] sm:$0xff]
    %v1123 = vld [vmem:[#allocation7 + $0x178] sm:$0xff]
    %v1124 = vld [vmem:[%s9] sm:$0x7]
    %v1126 = vlaneseq
    %v1127 = vshrl.u32 %v1126, 7
    %v1128 = vsub.s32 0, %v1127
    %v1129 = vrot.slane %v1124, %v1128
    %v1130 = vlaneseq
    %v1131 = vshrl.u32 %v1130, 7
    %v1132 = vsub.s32 1, %v1131
    %v1133 = vrot.slane %v1124, %v1132
    %v1134 = vlaneseq
    %v1135 = vshrl.u32 %v1134, 7
    %v1136 = vsub.s32 2, %v1135
    %v1137 = vrot.slane %v1124, %v1136
    %1141 = vmatprep.subr.mxu0 %v1077
    %1142 = vmatpush1.msra.mxu0 %v1076
    %1143 = vmatprep.subr.mxu0 %v1080
    %1144 = vmatpush1.msra.mxu0 %v1079
    %1145 = vmatprep.subr.mxu0 %v1083
    %1146 = vmatpush1.msra.mxu0 %v1082
    %1147 = vmatprep.subr.mxu0 %v1086
    %1148 = vmatpush1.msra.mxu0 %v1085
    %1149 = vmatprep.subr.mxu0 %v1089
    %1150 = vmatpush1.msra.mxu0 %v1088
    %1151 = vmatprep.subr.mxu0 %v1092
    %1152 = vmatpush1.msra.mxu0 %v1091
    %1153 = vmatprep.subr.mxu0 %v1095
    %1154 = vmatpush1.msra.mxu0 %v1094
    %1155 = vmatprep.subr.mxu0 %v1098
    %1156 = vmatpush1.msra.mxu0 %v1097
    %1157 = vmatprep.subr.mxu0 %v1101
    %1158 = vmatpush1.msra.mxu0 %v1100
    %1159 = vmatprep.subr.mxu0 %v1104
    %1160 = vmatpush1.msra.mxu0 %v1103
    %1161 = vmatprep.subr.mxu0 %v1107
    %1162 = vmatpush1.msra.mxu0 %v1106
    %1163 = vmatprep.subr.mxu0 %v1110
    %1164 = vmatpush1.msra.mxu0 %v1109
    %1165 = vmatprep.subr.mxu0 %v1113
    %1166 = vmatpush1.msra.mxu0 %v1112
    %1167 = vmatprep.subr.mxu0 %v1116
    %1168 = vmatpush1.msra.mxu0 %v1115
    %1169 = vmatprep.subr.mxu0 %v1119
    %1170 = vmatpush1.msra.mxu0 %v1118
    %1171 = vmatprep.subr.mxu0 %v1122
    %1172 = vmatpush1.msra.mxu0 %v1121
    %1173 = vmatprep.subr.mxu0 0.0
    %1174 = vmatpush1.msra.mxu0 0.0
    %1175 = vmatprep.subr.mxu0 0.0
    %1176 = vmatpush1.msra.mxu0 0.0
    %1177 = vmatprep.subr.mxu0 0.0
    %1178 = vmatpush1.msra.mxu0 0.0
    %1179 = vmatprep.subr.mxu0 0.0
    %1180 = vmatpush1.msra.mxu0 0.0
    %1181 = vmatprep.subr.mxu0 0.0
    %1182 = vmatpush1.msra.mxu0 0.0
    %1183 = vmatprep.subr.mxu0 0.0
    %1184 = vmatpush1.msra.mxu0 0.0
    %1185 = vmatprep.subr.mxu0 0.0
    %1186 = vmatpush1.msra.mxu0 0.0
    %1187 = vmatprep.subr.mxu0 0.0
    %1188 = vmatpush1.msra.mxu0 0.0
    %1189 = vmatprep.subr.mxu0 0.0
    %1190 = vmatpush1.msra.mxu0 0.0
    %1191 = vmatprep.subr.mxu0 0.0
    %1192 = vmatpush1.msra.mxu0 0.0
    %1193 = vmatprep.subr.mxu0 0.0
    %1194 = vmatpush1.msra.mxu0 0.0
    %1195 = vmatprep.subr.mxu0 0.0
    %1196 = vmatpush1.msra.mxu0 0.0
    %1197 = vmatprep.subr.mxu0 0.0
    %1198 = vmatpush1.msra.mxu0 0.0
    %1199 = vmatprep.subr.mxu0 0.0
    %1200 = vmatpush1.msra.mxu0 0.0
    %1201 = vmatprep.subr.mxu0 0.0
    %1202 = vmatpush1.msra.mxu0 0.0
    %1203 = vmatprep.subr.mxu0 0.0
    %1204 = vmatpush1.msra.mxu0 0.0
    %1205 = vmatprep.mubr.f32.mxu0 0.0
    %1206 = vmatmul.mubr.f32.gmra.mrb[0].mxu0 %v656
    %v1207 = vpop.f32.mrb[0].mxu0
    %v1208 = vadd.f32 %v1129, %v1207
    %v1209 = vpop.f32.mrb[0].mxu0
    %v1210 = vadd.f32 %v1133, %v1209
    %1211 = vdwg.mxu0
    %1212 = vmatprep.subr.mxu0 0.0
    %1213 = vmatpush1.msra.mxu0 %v1078
    %1214 = vmatprep.subr.mxu0 0.0
    %1215 = vmatpush1.msra.mxu0 %v1081
    %1216 = vmatprep.subr.mxu0 0.0
    %1217 = vmatpush1.msra.mxu0 %v1084
    %1218 = vmatprep.subr.mxu0 0.0
    %1219 = vmatpush1.msra.mxu0 %v1087
    %1220 = vmatprep.subr.mxu0 0.0
    %1221 = vmatpush1.msra.mxu0 %v1090
    %1222 = vmatprep.subr.mxu0 0.0
    %1223 = vmatpush1.msra.mxu0 %v1093
    %1224 = vmatprep.subr.mxu0 0.0
    %1225 = vmatpush1.msra.mxu0 %v1096
    %1226 = vmatprep.subr.mxu0 0.0
    %1227 = vmatpush1.msra.mxu0 %v1099
    %1228 = vmatprep.subr.mxu0 0.0
    %1229 = vmatpush1.msra.mxu0 %v1102
    %1230 = vmatprep.subr.mxu0 0.0
    %1231 = vmatpush1.msra.mxu0 %v1105
    %1232 = vmatprep.subr.mxu0 0.0
    %1233 = vmatpush1.msra.mxu0 %v1108
    %1234 = vmatprep.subr.mxu0 0.0
    %1235 = vmatpush1.msra.mxu0 %v1111
    %1236 = vmatprep.subr.mxu0 0.0
    %1237 = vmatpush1.msra.mxu0 %v1114
    %1238 = vmatprep.subr.mxu0 0.0
    %1239 = vmatpush1.msra.mxu0 %v1117
    %1240 = vmatprep.subr.mxu0 0.0
    %1241 = vmatpush1.msra.mxu0 %v1120
    %1242 = vmatprep.subr.mxu0 0.0
    %1243 = vmatpush1.msra.mxu0 %v1123
    %1244 = vmatprep.subr.mxu0 0.0
    %1245 = vmatpush1.msra.mxu0 0.0
    %1246 = vmatprep.subr.mxu0 0.0
    %1247 = vmatpush1.msra.mxu0 0.0
    %1248 = vmatprep.subr.mxu0 0.0
    %1249 = vmatpush1.msra.mxu0 0.0
    %1250 = vmatprep.subr.mxu0 0.0
    %1251 = vmatpush1.msra.mxu0 0.0
    %1252 = vmatprep.subr.mxu0 0.0
    %1253 = vmatpush1.msra.mxu0 0.0
    %1254 = vmatprep.subr.mxu0 0.0
    %1255 = vmatpush1.msra.mxu0 0.0
    %1256 = vmatprep.subr.mxu0 0.0
    %1257 = vmatpush1.msra.mxu0 0.0
    %1258 = vmatprep.subr.mxu0 0.0
    %1259 = vmatpush1.msra.mxu0 0.0
    %1260 = vmatprep.subr.mxu0 0.0
    %1261 = vmatpush1.msra.mxu0 0.0
    %1262 = vmatprep.subr.mxu0 0.0
    %1263 = vmatpush1.msra.mxu0 0.0
    %1264 = vmatprep.subr.mxu0 0.0
    %1265 = vmatpush1.msra.mxu0 0.0
    %1266 = vmatprep.subr.mxu0 0.0
    %1267 = vmatpush1.msra.mxu0 0.0
    %1268 = vmatprep.subr.mxu0 0.0
    %1269 = vmatpush1.msra.mxu0 0.0
    %1270 = vmatprep.subr.mxu0 0.0
    %1271 = vmatpush1.msra.mxu0 0.0
    %1272 = vmatprep.subr.mxu0 0.0
    %1273 = vmatpush1.msra.mxu0 0.0
    %1274 = vmatprep.subr.mxu0 0.0
    %1275 = vmatpush1.msra.mxu0 0.0
    %1276 = vmatprep.mubr.f32.mxu0 0.0
    %1277 = vmatmul.mubr.f32.gmra.mrb[0].mxu0 %v656
    %v1278 = vpop.f32.mrb[0].mxu0
    %v1279 = vadd.f32 %v1137, %v1278
    %v1280 = vpop.f32.mrb[0].mxu0
    %1281 = vdwg.mxu0
    %v1282 = vadd.f32 %v1002, %v1208
    %v1283 = vxor.u32 %v1282, 2147483648
    %v1284 = vmul.f32 %v1283, 1.442695
    %v1285 = vpow.pop %v1284
    %v1286 = vadd.f32 %v1285, 1.0
    %v1287 = vrcp.pop %v1286
    %v1288 = vmul.f32 1.0, %v1287
    %v1289 = vadd.f32 %v1004, %v1210
    %v1290 = vxor.u32 %v1289, 2147483648
    %v1291 = vmul.f32 %v1290, 1.442695
    %v1292 = vpow.pop %v1291
    %v1293 = vadd.f32 %v1292, 1.0
    %v1294 = vrcp.pop %v1293
    %v1295 = vmul.f32 1.0, %v1294
    %v1296 = vmul.f32 %v1288, %v1279
    %v1297 = vadd.f32 %v1073, %v1296
    %v1298 = vtanh.pop %v1297
    %v1299 = vsub.f32 1.0, %v1295
    %v1300 = vmul.f32 %v1299, %v1298
    %v1301 = vmul.f32 %v1295, %v656
    %v1302 = vadd.f32 %v1300, %v1301
    %v1303 = vld [vmem:[#allocation8] sm:$0xff]
    %v1304 = vld [vmem:[#allocation8 + $0x8] sm:$0xff]
    %v1305 = vld [vmem:[#allocation8 + $0x10] sm:$0xff]
    %v1306 = vld [vmem:[#allocation8 + $0x18] sm:$0xff]
    %v1307 = vld [vmem:[#allocation8 + $0x20] sm:$0xff]
    %v1308 = vld [vmem:[#allocation8 + $0x28] sm:$0xff]
    %v1309 = vld [vmem:[#allocation8 + $0x30] sm:$0xff]
    %v1310 = vld [vmem:[#allocation8 + $0x38] sm:$0xff]
    %v1311 = vld [vmem:[#allocation8 + $0x40] sm:$0xff]
    %v1312 = vld [vmem:[#allocation8 + $0x48] sm:$0xff]
    %v1313 = vld [vmem:[#allocation8 + $0x50] sm:$0xff]
    %v1314 = vld [vmem:[#allocation8 + $0x58] sm:$0xff]
    %v1315 = vld [vmem:[#allocation8 + $0x60] sm:$0xff]
    %v1316 = vld [vmem:[#allocation8 + $0x68] sm:$0xff]
    %v1317 = vld [vmem:[#allocation8 + $0x70] sm:$0xff]
    %v1318 = vld [vmem:[#allocation8 + $0x78] sm:$0xff]
    %v1319 = vld [vmem:[%s11] sm:$0x1]
    %v1321 = vlaneseq
    %v1322 = vshrl.u32 %v1321, 7
    %v1323 = vsub.s32 0, %v1322
    %v1324 = vrot.slane %v1319, %v1323
    %1326 = vmatprep.subr.mxu0 0.0
    %1327 = vmatpush1.msra.mxu0 %v1303
    %1328 = vmatprep.subr.mxu0 0.0
    %1329 = vmatpush1.msra.mxu0 %v1304
    %1330 = vmatprep.subr.mxu0 0.0
    %1331 = vmatpush1.msra.mxu0 %v1305
    %1332 = vmatprep.subr.mxu0 0.0
    %1333 = vmatpush1.msra.mxu0 %v1306
    %1334 = vmatprep.subr.mxu0 0.0
    %1335 = vmatpush1.msra.mxu0 %v1307
    %1336 = vmatprep.subr.mxu0 0.0
    %1337 = vmatpush1.msra.mxu0 %v1308
    %1338 = vmatprep.subr.mxu0 0.0
    %1339 = vmatpush1.msra.mxu0 %v1309
    %1340 = vmatprep.subr.mxu0 0.0
    %1341 = vmatpush1.msra.mxu0 %v1310
    %1342 = vmatprep.subr.mxu0 0.0
    %1343 = vmatpush1.msra.mxu0 %v1311
    %1344 = vmatprep.subr.mxu0 0.0
    %1345 = vmatpush1.msra.mxu0 %v1312
    %1346 = vmatprep.subr.mxu0 0.0
    %1347 = vmatpush1.msra.mxu0 %v1313
    %1348 = vmatprep.subr.mxu0 0.0
    %1349 = vmatpush1.msra.mxu0 %v1314
    %1350 = vmatprep.subr.mxu0 0.0
    %1351 = vmatpush1.msra.mxu0 %v1315
    %1352 = vmatprep.subr.mxu0 0.0
    %1353 = vmatpush1.msra.mxu0 %v1316
    %1354 = vmatprep.subr.mxu0 0.0
    %1355 = vmatpush1.msra.mxu0 %v1317
    %1356 = vmatprep.subr.mxu0 0.0
    %1357 = vmatpush1.msra.mxu0 %v1318
    %1358 = vmatprep.subr.mxu0 0.0
    %1359 = vmatpush1.msra.mxu0 0.0
    %1360 = vmatprep.subr.mxu0 0.0
    %1361 = vmatpush1.msra.mxu0 0.0
    %1362 = vmatprep.subr.mxu0 0.0
    %1363 = vmatpush1.msra.mxu0 0.0
    %1364 = vmatprep.subr.mxu0 0.0
    %1365 = vmatpush1.msra.mxu0 0.0
    %1366 = vmatprep.subr.mxu0 0.0
    %1367 = vmatpush1.msra.mxu0 0.0
    %1368 = vmatprep.subr.mxu0 0.0
    %1369 = vmatpush1.msra.mxu0 0.0
    %1370 = vmatprep.subr.mxu0 0.0
    %1371 = vmatpush1.msra.mxu0 0.0
    %1372 = vmatprep.subr.mxu0 0.0
    %1373 = vmatpush1.msra.mxu0 0.0
    %1374 = vmatprep.subr.mxu0 0.0
    %1375 = vmatpush1.msra.mxu0 0.0
    %1376 = vmatprep.subr.mxu0 0.0
    %1377 = vmatpush1.msra.mxu0 0.0
    %1378 = vmatprep.subr.mxu0 0.0
    %1379 = vmatpush1.msra.mxu0 0.0
    %1380 = vmatprep.subr.mxu0 0.0
    %1381 = vmatpush1.msra.mxu0 0.0
    %1382 = vmatprep.subr.mxu0 0.0
    %1383 = vmatpush1.msra.mxu0 0.0
    %1384 = vmatprep.subr.mxu0 0.0
    %1385 = vmatpush1.msra.mxu0 0.0
    %1386 = vmatprep.subr.mxu0 0.0
    %1387 = vmatpush1.msra.mxu0 0.0
    %1388 = vmatprep.subr.mxu0 0.0
    %1389 = vmatpush1.msra.mxu0 0.0
    %1390 = vmatprep.mubr.f32.mxu0 0.0
    %1391 = vmatmul.mubr.f32.gmra.mrb[0].mxu0 %v1302
    %v1392 = vpop.f32.mrb[0].mxu0
    %v1393 = vadd.f32 %v1324, %v1392
    %v1394 = vpop.f32.mrb[0].mxu0
    %1395 = vdwg.mxu0
    %s1396 = scalar_lea.vmem %s12, 8
    %1397 = vst [vmem:[%s1396] sm:$0xff] %v1393
    %s1398 = scalar_lea.vmem [#allocation3], 16
    %v1399 = vld [vmem:[%s1398] sm:$0xff]
    %v1400 = vld [vmem:[%s2] sm:$0xff]
    %v1401 = vld [vmem:[%s2 + $0x8] sm:$0xff]
    %v1402 = vld [vmem:[%s2 + $0x10] sm:$0xff]
    %v1403 = vld [vmem:[%s2 + $0x18] sm:$0xff]
    %v1404 = vld [vmem:[%s2 + $0x20] sm:$0xff]
    %v1405 = vld [vmem:[%s2 + $0x28] sm:$0xff]
    %v1406 = vld [vmem:[%s3] sm:$0x1]
    %v1408 = vlaneseq
    %v1409 = vshrl.u32 %v1408, 7
    %v1410 = vsub.s32 0, %v1409
    %v1411 = vrot.slane %v1406, %v1410
    %v1414 = vsel %vm119, %v1399, 0
    %1416 = vmatprep.subr.mxu0 0.0
    %1417 = vmatpush1.msra.mxu0 %v1400
    %1418 = vmatprep.subr.mxu0 0.0
    %1419 = vmatpush1.msra.mxu0 %v1401
    %1420 = vmatprep.subr.mxu0 0.0
    %1421 = vmatpush1.msra.mxu0 %v1402
    %1422 = vmatprep.subr.mxu0 0.0
    %1423 = vmatpush1.msra.mxu0 %v1403
    %1424 = vmatprep.subr.mxu0 0.0
    %1425 = vmatpush1.msra.mxu0 %v1404
    %1426 = vmatprep.subr.mxu0 0.0
    %1427 = vmatpush1.msra.mxu0 %v1405
    %1428 = vmatprep.subr.mxu0 0.0
    %1429 = vmatpush1.msra.mxu0 0.0
    %1430 = vmatprep.subr.mxu0 0.0
    %1431 = vmatpush1.msra.mxu0 0.0
    %1432 = vmatprep.subr.mxu0 0.0
    %1433 = vmatpush1.msra.mxu0 0.0
    %1434 = vmatprep.subr.mxu0 0.0
    %1435 = vmatpush1.msra.mxu0 0.0
    %1436 = vmatprep.subr.mxu0 0.0
    %1437 = vmatpush1.msra.mxu0 0.0
    %1438 = vmatprep.subr.mxu0 0.0
    %1439 = vmatpush1.msra.mxu0 0.0
    %1440 = vmatprep.subr.mxu0 0.0
    %1441 = vmatpush1.msra.mxu0 0.0
    %1442 = vmatprep.subr.mxu0 0.0
    %1443 = vmatpush1.msra.mxu0 0.0
    %1444 = vmatprep.subr.mxu0 0.0
    %1445 = vmatpush1.msra.mxu0 0.0
    %1446 = vmatprep.subr.mxu0 0.0
    %1447 = vmatpush1.msra.mxu0 0.0
    %1448 = vmatprep.subr.mxu0 0.0
    %1449 = vmatpush1.msra.mxu0 0.0
    %1450 = vmatprep.subr.mxu0 0.0
    %1451 = vmatpush1.msra.mxu0 0.0
    %1452 = vmatprep.subr.mxu0 0.0
    %1453 = vmatpush1.msra.mxu0 0.0
    %1454 = vmatprep.subr.mxu0 0.0
    %1455 = vmatpush1.msra.mxu0 0.0
    %1456 = vmatprep.subr.mxu0 0.0
    %1457 = vmatpush1.msra.mxu0 0.0
    %1458 = vmatprep.subr.mxu0 0.0
    %1459 = vmatpush1.msra.mxu0 0.0
    %1460 = vmatprep.subr.mxu0 0.0
    %1461 = vmatpush1.msra.mxu0 0.0
    %1462 = vmatprep.subr.mxu0 0.0
    %1463 = vmatpush1.msra.mxu0 0.0
    %1464 = vmatprep.subr.mxu0 0.0
    %1465 = vmatpush1.msra.mxu0 0.0
    %1466 = vmatprep.subr.mxu0 0.0
    %1467 = vmatpush1.msra.mxu0 0.0
    %1468 = vmatprep.subr.mxu0 0.0
    %1469 = vmatpush1.msra.mxu0 0.0
    %1470 = vmatprep.subr.mxu0 0.0
    %1471 = vmatpush1.msra.mxu0 0.0
    %1472 = vmatprep.subr.mxu0 0.0
    %1473 = vmatpush1.msra.mxu0 0.0
    %1474 = vmatprep.subr.mxu0 0.0
    %1475 = vmatpush1.msra.mxu0 0.0
    %1476 = vmatprep.subr.mxu0 0.0
    %1477 = vmatpush1.msra.mxu0 0.0
    %1478 = vmatprep.subr.mxu0 0.0
    %1479 = vmatpush1.msra.mxu0 0.0
    %1480 = vmatprep.mubr.f32.mxu0 0.0
    %1481 = vmatmul.mubr.f32.gmra.mrb[0].mxu0 %v1414
    %v1482 = vpop.f32.mrb[0].mxu0
    %v1483 = vadd.f32 %v1411, %v1482
    %v1484 = vpop.f32.mrb[0].mxu0
    %1485 = vdwg.mxu0
    %1486 = vadd.xlane.f32.xlu0 %v1483
    %v1487 = vpop.xlane.xlu0 %1486
    %v1488 = vmul.f32 %v1487, 0.03125
    %v1489 = vmul.f32 %v1483, %v1483
    %1490 = vadd.xlane.f32.xlu0 %v1489
    %v1491 = vpop.xlane.xlu0 %1490
    %v1492 = vmul.f32 %v1491, 0.03125
    %v1493 = vmul.f32 %v1488, %v1488
    %v1494 = vsub.f32 %v1492, %v1493
    %v1495 = vmax.f32 %v1494, 0.0
    %v1496 = vsub.f32 %v1483, %v1488
    %v1497 = vadd.f32 %v1495, 1e-05
    %v1498 = vrsqrt.pop %v1497
    %v1499 = vmul.f32 %v1496, %v1498
    %v1500 = vld [vmem:[%s4] sm:$0x1]
    %v1502 = vlaneseq
    %v1503 = vshrl.u32 %v1502, 7
    %v1504 = vsub.s32 0, %v1503
    %v1505 = vrot.slane %v1500, %v1504
    %v1507 = vmul.f32 %v1499, %v1505
    %v1508 = vld [vmem:[%s5] sm:$0x1]
    %v1510 = vlaneseq
    %v1511 = vshrl.u32 %v1510, 7
    %v1512 = vsub.s32 0, %v1511
    %v1513 = vrot.slane %v1508, %v1512
    %v1515 = vadd.f32 %v1507, %v1513
    %v1516 = vmax.f32 %v1515, 0.0
    %v1517 = vld [vmem:[#allocation5] sm:$0xff]
    %v1518 = vld [vmem:[#allocation5 + $0x8] sm:$0xff]
    %v1519 = vld [vmem:[#allocation5 + $0x10] sm:$0xff]
    %v1520 = vld [vmem:[#allocation5 + $0x18] sm:$0xff]
    %v1521 = vld [vmem:[#allocation5 + $0x20] sm:$0xff]
    %v1522 = vld [vmem:[#allocation5 + $0x28] sm:$0xff]
    %v1523 = vld [vmem:[#allocation5 + $0x30] sm:$0xff]
    %v1524 = vld [vmem:[#allocation5 + $0x38] sm:$0xff]
    %v1525 = vld [vmem:[#allocation5 + $0x40] sm:$0xff]
    %v1526 = vld [vmem:[#allocation5 + $0x48] sm:$0xff]
    %v1527 = vld [vmem:[#allocation5 + $0x50] sm:$0xff]
    %v1528 = vld [vmem:[#allocation5 + $0x58] sm:$0xff]
    %v1529 = vld [vmem:[#allocation5 + $0x60] sm:$0xff]
    %v1530 = vld [vmem:[#allocation5 + $0x68] sm:$0xff]
    %v1531 = vld [vmem:[#allocation5 + $0x70] sm:$0xff]
    %v1532 = vld [vmem:[#allocation5 + $0x78] sm:$0xff]
    %v1533 = vld [vmem:[#allocation5 + $0x80] sm:$0xff]
    %v1534 = vld [vmem:[#allocation5 + $0x88] sm:$0xff]
    %v1535 = vld [vmem:[#allocation5 + $0x90] sm:$0xff]
    %v1536 = vld [vmem:[#allocation5 + $0x98] sm:$0xff]
    %v1537 = vld [vmem:[#allocation5 + $0xa0] sm:$0xff]
    %v1538 = vld [vmem:[#allocation5 + $0xa8] sm:$0xff]
    %v1539 = vld [vmem:[#allocation5 + $0xb0] sm:$0xff]
    %v1540 = vld [vmem:[#allocation5 + $0xb8] sm:$0xff]
    %v1541 = vld [vmem:[#allocation5 + $0xc0] sm:$0xff]
    %v1542 = vld [vmem:[#allocation5 + $0xc8] sm:$0xff]
    %v1543 = vld [vmem:[#allocation5 + $0xd0] sm:$0xff]
    %v1544 = vld [vmem:[#allocation5 + $0xd8] sm:$0xff]
    %v1545 = vld [vmem:[#allocation5 + $0xe0] sm:$0xff]
    %v1546 = vld [vmem:[#allocation5 + $0xe8] sm:$0xff]
    %v1547 = vld [vmem:[#allocation5 + $0xf0] sm:$0xff]
    %v1548 = vld [vmem:[#allocation5 + $0xf8] sm:$0xff]
    %v1549 = vld [vmem:[#allocation5 + $0x100] sm:$0xff]
    %v1550 = vld [vmem:[#allocation5 + $0x108] sm:$0xff]
    %v1551 = vld [vmem:[#allocation5 + $0x110] sm:$0xff]
    %v1552 = vld [vmem:[#allocation5 + $0x118] sm:$0xff]
    %v1553 = vld [vmem:[#allocation5 + $0x120] sm:$0xff]
    %v1554 = vld [vmem:[#allocation5 + $0x128] sm:$0xff]
    %v1555 = vld [vmem:[#allocation5 + $0x130] sm:$0xff]
    %v1556 = vld [vmem:[#allocation5 + $0x138] sm:$0xff]
    %v1557 = vld [vmem:[#allocation5 + $0x140] sm:$0xff]
    %v1558 = vld [vmem:[#allocation5 + $0x148] sm:$0xff]
    %v1559 = vld [vmem:[#allocation5 + $0x150] sm:$0xff]
    %v1560 = vld [vmem:[#allocation5 + $0x158] sm:$0xff]
    %v1561 = vld [vmem:[#allocation5 + $0x160] sm:$0xff]
    %v1562 = vld [vmem:[#allocation5 + $0x168] sm:$0xff]
    %v1563 = vld [vmem:[#allocation5 + $0x170] sm:$0xff]
    %v1564 = vld [vmem:[#allocation5 + $0x178] sm:$0xff]
    %v1565 = vld [vmem:[%s7] sm:$0x7]
    %v1567 = vlaneseq
    %v1568 = vshrl.u32 %v1567, 7
    %v1569 = vsub.s32 0, %v1568
    %v1570 = vrot.slane %v1565, %v1569
    %v1571 = vlaneseq
    %v1572 = vshrl.u32 %v1571, 7
    %v1573 = vsub.s32 1, %v1572
    %v1574 = vrot.slane %v1565, %v1573
    %v1575 = vlaneseq
    %v1576 = vshrl.u32 %v1575, 7
    %v1577 = vsub.s32 2, %v1576
    %v1578 = vrot.slane %v1565, %v1577
    %1582 = vmatprep.subr.mxu0 %v1518
    %1583 = vmatpush1.msra.mxu0 %v1517
    %1584 = vmatprep.subr.mxu0 %v1521
    %1585 = vmatpush1.msra.mxu0 %v1520
    %1586 = vmatprep.subr.mxu0 %v1524
    %1587 = vmatpush1.msra.mxu0 %v1523
    %1588 = vmatprep.subr.mxu0 %v1527
    %1589 = vmatpush1.msra.mxu0 %v1526
    %1590 = vmatprep.subr.mxu0 %v1530
    %1591 = vmatpush1.msra.mxu0 %v1529
    %1592 = vmatprep.subr.mxu0 %v1533
    %1593 = vmatpush1.msra.mxu0 %v1532
    %1594 = vmatprep.subr.mxu0 %v1536
    %1595 = vmatpush1.msra.mxu0 %v1535
    %1596 = vmatprep.subr.mxu0 %v1539
    %1597 = vmatpush1.msra.mxu0 %v1538
    %1598 = vmatprep.subr.mxu0 %v1542
    %1599 = vmatpush1.msra.mxu0 %v1541
    %1600 = vmatprep.subr.mxu0 %v1545
    %1601 = vmatpush1.msra.mxu0 %v1544
    %1602 = vmatprep.subr.mxu0 %v1548
    %1603 = vmatpush1.msra.mxu0 %v1547
    %1604 = vmatprep.subr.mxu0 %v1551
    %1605 = vmatpush1.msra.mxu0 %v1550
    %1606 = vmatprep.subr.mxu0 %v1554
    %1607 = vmatpush1.msra.mxu0 %v1553
    %1608 = vmatprep.subr.mxu0 %v1557
    %1609 = vmatpush1.msra.mxu0 %v1556
    %1610 = vmatprep.subr.mxu0 %v1560
    %1611 = vmatpush1.msra.mxu0 %v1559
    %1612 = vmatprep.subr.mxu0 %v1563
    %1613 = vmatpush1.msra.mxu0 %v1562
    %1614 = vmatprep.subr.mxu0 0.0
    %1615 = vmatpush1.msra.mxu0 0.0
    %1616 = vmatprep.subr.mxu0 0.0
    %1617 = vmatpush1.msra.mxu0 0.0
    %1618 = vmatprep.subr.mxu0 0.0
    %1619 = vmatpush1.msra.mxu0 0.0
    %1620 = vmatprep.subr.mxu0 0.0
    %1621 = vmatpush1.msra.mxu0 0.0
    %1622 = vmatprep.subr.mxu0 0.0
    %1623 = vmatpush1.msra.mxu0 0.0
    %1624 = vmatprep.subr.mxu0 0.0
    %1625 = vmatpush1.msra.mxu0 0.0
    %1626 = vmatprep.subr.mxu0 0.0
    %1627 = vmatpush1.msra.mxu0 0.0
    %1628 = vmatprep.subr.mxu0 0.0
    %1629 = vmatpush1.msra.mxu0 0.0
    %1630 = vmatprep.subr.mxu0 0.0
    %1631 = vmatpush1.msra.mxu0 0.0
    %1632 = vmatprep.subr.mxu0 0.0
    %1633 = vmatpush1.msra.mxu0 0.0
    %1634 = vmatprep.subr.mxu0 0.0
    %1635 = vmatpush1.msra.mxu0 0.0
    %1636 = vmatprep.subr.mxu0 0.0
    %1637 = vmatpush1.msra.mxu0 0.0
    %1638 = vmatprep.subr.mxu0 0.0
    %1639 = vmatpush1.msra.mxu0 0.0
    %1640 = vmatprep.subr.mxu0 0.0
    %1641 = vmatpush1.msra.mxu0 0.0
    %1642 = vmatprep.subr.mxu0 0.0
    %1643 = vmatpush1.msra.mxu0 0.0
    %1644 = vmatprep.subr.mxu0 0.0
    %1645 = vmatpush1.msra.mxu0 0.0
    %1646 = vmatprep.mubr.f32.mxu0 0.0
    %1647 = vmatmul.mubr.f32.gmra.mrb[0].mxu0 %v1516
    %v1648 = vpop.f32.mrb[0].mxu0
    %v1649 = vadd.f32 %v1570, %v1648
    %v1650 = vpop.f32.mrb[0].mxu0
    %v1651 = vadd.f32 %v1574, %v1650
    %1652 = vdwg.mxu0
    %1653 = vmatprep.subr.mxu0 0.0
    %1654 = vmatpush1.msra.mxu0 %v1519
    %1655 = vmatprep.subr.mxu0 0.0
    %1656 = vmatpush1.msra.mxu0 %v1522
    %1657 = vmatprep.subr.mxu0 0.0
    %1658 = vmatpush1.msra.mxu0 %v1525
    %1659 = vmatprep.subr.mxu0 0.0
    %1660 = vmatpush1.msra.mxu0 %v1528
    %1661 = vmatprep.subr.mxu0 0.0
    %1662 = vmatpush1.msra.mxu0 %v1531
    %1663 = vmatprep.subr.mxu0 0.0
    %1664 = vmatpush1.msra.mxu0 %v1534
    %1665 = vmatprep.subr.mxu0 0.0
    %1666 = vmatpush1.msra.mxu0 %v1537
    %1667 = vmatprep.subr.mxu0 0.0
    %1668 = vmatpush1.msra.mxu0 %v1540
    %1669 = vmatprep.subr.mxu0 0.0
    %1670 = vmatpush1.msra.mxu0 %v1543
    %1671 = vmatprep.subr.mxu0 0.0
    %1672 = vmatpush1.msra.mxu0 %v1546
    %1673 = vmatprep.subr.mxu0 0.0
    %1674 = vmatpush1.msra.mxu0 %v1549
    %1675 = vmatprep.subr.mxu0 0.0
    %1676 = vmatpush1.msra.mxu0 %v1552
    %1677 = vmatprep.subr.mxu0 0.0
    %1678 = vmatpush1.msra.mxu0 %v1555
    %1679 = vmatprep.subr.mxu0 0.0
    %1680 = vmatpush1.msra.mxu0 %v1558
    %1681 = vmatprep.subr.mxu0 0.0
    %1682 = vmatpush1.msra.mxu0 %v1561
    %1683 = vmatprep.subr.mxu0 0.0
    %1684 = vmatpush1.msra.mxu0 %v1564
    %1685 = vmatprep.subr.mxu0 0.0
    %1686 = vmatpush1.msra.mxu0 0.0
    %1687 = vmatprep.subr.mxu0 0.0
    %1688 = vmatpush1.msra.mxu0 0.0
    %1689 = vmatprep.subr.mxu0 0.0
    %1690 = vmatpush1.msra.mxu0 0.0
    %1691 = vmatprep.subr.mxu0 0.0
    %1692 = vmatpush1.msra.mxu0 0.0
    %1693 = vmatprep.subr.mxu0 0.0
    %1694 = vmatpush1.msra.mxu0 0.0
    %1695 = vmatprep.subr.mxu0 0.0
    %1696 = vmatpush1.msra.mxu0 0.0
    %1697 = vmatprep.subr.mxu0 0.0
    %1698 = vmatpush1.msra.mxu0 0.0
    %1699 = vmatprep.subr.mxu0 0.0
    %1700 = vmatpush1.msra.mxu0 0.0
    %1701 = vmatprep.subr.mxu0 0.0
    %1702 = vmatpush1.msra.mxu0 0.0
    %1703 = vmatprep.subr.mxu0 0.0
    %1704 = vmatpush1.msra.mxu0 0.0
    %1705 = vmatprep.subr.mxu0 0.0
    %1706 = vmatpush1.msra.mxu0 0.0
    %1707 = vmatprep.subr.mxu0 0.0
    %1708 = vmatpush1.msra.mxu0 0.0
    %1709 = vmatprep.subr.mxu0 0.0
    %1710 = vmatpush1.msra.mxu0 0.0
    %1711 = vmatprep.subr.mxu0 0.0
    %1712 = vmatpush1.msra.mxu0 0.0
    %1713 = vmatprep.subr.mxu0 0.0
    %1714 = vmatpush1.msra.mxu0 0.0
    %1715 = vmatprep.subr.mxu0 0.0
    %1716 = vmatpush1.msra.mxu0 0.0
    %1717 = vmatprep.mubr.f32.mxu0 0.0
    %1718 = vmatmul.mubr.f32.gmra.mrb[0].mxu0 %v1516
    %v1719 = vpop.f32.mrb[0].mxu0
    %v1720 = vadd.f32 %v1578, %v1719
    %v1721 = vpop.f32.mrb[0].mxu0
    %1722 = vdwg.mxu0
    %v1723 = vld [vmem:[#allocation7] sm:$0xff]
    %v1724 = vld [vmem:[#allocation7 + $0x8] sm:$0xff]
    %v1725 = vld [vmem:[#allocation7 + $0x10] sm:$0xff]
    %v1726 = vld [vmem:[#allocation7 + $0x18] sm:$0xff]
    %v1727 = vld [vmem:[#allocation7 + $0x20] sm:$0xff]
    %v1728 = vld [vmem:[#allocation7 + $0x28] sm:$0xff]
    %v1729 = vld [vmem:[#allocation7 + $0x30] sm:$0xff]
    %v1730 = vld [vmem:[#allocation7 + $0x38] sm:$0xff]
    %v1731 = vld [vmem:[#allocation7 + $0x40] sm:$0xff]
    %v1732 = vld [vmem:[#allocation7 + $0x48] sm:$0xff]
    %v1733 = vld [vmem:[#allocation7 + $0x50] sm:$0xff]
    %v1734 = vld [vmem:[#allocation7 + $0x58] sm:$0xff]
    %v1735 = vld [vmem:[#allocation7 + $0x60] sm:$0xff]
    %v1736 = vld [vmem:[#allocation7 + $0x68] sm:$0xff]
    %v1737 = vld [vmem:[#allocation7 + $0x70] sm:$0xff]
    %v1738 = vld [vmem:[#allocation7 + $0x78] sm:$0xff]
    %v1739 = vld [vmem:[#allocation7 + $0x80] sm:$0xff]
    %v1740 = vld [vmem:[#allocation7 + $0x88] sm:$0xff]
    %v1741 = vld [vmem:[#allocation7 + $0x90] sm:$0xff]
    %v1742 = vld [vmem:[#allocation7 + $0x98] sm:$0xff]
    %v1743 = vld [vmem:[#allocation7 + $0xa0] sm:$0xff]
    %v1744 = vld [vmem:[#allocation7 + $0xa8] sm:$0xff]
    %v1745 = vld [vmem:[#allocation7 + $0xb0] sm:$0xff]
    %v1746 = vld [vmem:[#allocation7 + $0xb8] sm:$0xff]
    %v1747 = vld [vmem:[#allocation7 + $0xc0] sm:$0xff]
    %v1748 = vld [vmem:[#allocation7 + $0xc8] sm:$0xff]
    %v1749 = vld [vmem:[#allocation7 + $0xd0] sm:$0xff]
    %v1750 = vld [vmem:[#allocation7 + $0xd8] sm:$0xff]
    %v1751 = vld [vmem:[#allocation7 + $0xe0] sm:$0xff]
    %v1752 = vld [vmem:[#allocation7 + $0xe8] sm:$0xff]
    %v1753 = vld [vmem:[#allocation7 + $0xf0] sm:$0xff]
    %v1754 = vld [vmem:[#allocation7 + $0xf8] sm:$0xff]
    %v1755 = vld [vmem:[#allocation7 + $0x100] sm:$0xff]
    %v1756 = vld [vmem:[#allocation7 + $0x108] sm:$0xff]
    %v1757 = vld [vmem:[#allocation7 + $0x110] sm:$0xff]
    %v1758 = vld [vmem:[#allocation7 + $0x118] sm:$0xff]
    %v1759 = vld [vmem:[#allocation7 + $0x120] sm:$0xff]
    %v1760 = vld [vmem:[#allocation7 + $0x128] sm:$0xff]
    %v1761 = vld [vmem:[#allocation7 + $0x130] sm:$0xff]
    %v1762 = vld [vmem:[#allocation7 + $0x138] sm:$0xff]
    %v1763 = vld [vmem:[#allocation7 + $0x140] sm:$0xff]
    %v1764 = vld [vmem:[#allocation7 + $0x148] sm:$0xff]
    %v1765 = vld [vmem:[#allocation7 + $0x150] sm:$0xff]
    %v1766 = vld [vmem:[#allocation7 + $0x158] sm:$0xff]
    %v1767 = vld [vmem:[#allocation7 + $0x160] sm:$0xff]
    %v1768 = vld [vmem:[#allocation7 + $0x168] sm:$0xff]
    %v1769 = vld [vmem:[#allocation7 + $0x170] sm:$0xff]
    %v1770 = vld [vmem:[#allocation7 + $0x178] sm:$0xff]
    %v1771 = vld [vmem:[%s9] sm:$0x7]
    %v1773 = vlaneseq
    %v1774 = vshrl.u32 %v1773, 7
    %v1775 = vsub.s32 0, %v1774
    %v1776 = vrot.slane %v1771, %v1775
    %v1777 = vlaneseq
    %v1778 = vshrl.u32 %v1777, 7
    %v1779 = vsub.s32 1, %v1778
    %v1780 = vrot.slane %v1771, %v1779
    %v1781 = vlaneseq
    %v1782 = vshrl.u32 %v1781, 7
    %v1783 = vsub.s32 2, %v1782
    %v1784 = vrot.slane %v1771, %v1783
    %1788 = vmatprep.subr.mxu0 %v1724
    %1789 = vmatpush1.msra.mxu0 %v1723
    %1790 = vmatprep.subr.mxu0 %v1727
    %1791 = vmatpush1.msra.mxu0 %v1726
    %1792 = vmatprep.subr.mxu0 %v1730
    %1793 = vmatpush1.msra.mxu0 %v1729
    %1794 = vmatprep.subr.mxu0 %v1733
    %1795 = vmatpush1.msra.mxu0 %v1732
    %1796 = vmatprep.subr.mxu0 %v1736
    %1797 = vmatpush1.msra.mxu0 %v1735
    %1798 = vmatprep.subr.mxu0 %v1739
    %1799 = vmatpush1.msra.mxu0 %v1738
    %1800 = vmatprep.subr.mxu0 %v1742
    %1801 = vmatpush1.msra.mxu0 %v1741
    %1802 = vmatprep.subr.mxu0 %v1745
    %1803 = vmatpush1.msra.mxu0 %v1744
    %1804 = vmatprep.subr.mxu0 %v1748
    %1805 = vmatpush1.msra.mxu0 %v1747
    %1806 = vmatprep.subr.mxu0 %v1751
    %1807 = vmatpush1.msra.mxu0 %v1750
    %1808 = vmatprep.subr.mxu0 %v1754
    %1809 = vmatpush1.msra.mxu0 %v1753
    %1810 = vmatprep.subr.mxu0 %v1757
    %1811 = vmatpush1.msra.mxu0 %v1756
    %1812 = vmatprep.subr.mxu0 %v1760
    %1813 = vmatpush1.msra.mxu0 %v1759
    %1814 = vmatprep.subr.mxu0 %v1763
    %1815 = vmatpush1.msra.mxu0 %v1762
    %1816 = vmatprep.subr.mxu0 %v1766
    %1817 = vmatpush1.msra.mxu0 %v1765
    %1818 = vmatprep.subr.mxu0 %v1769
    %1819 = vmatpush1.msra.mxu0 %v1768
    %1820 = vmatprep.subr.mxu0 0.0
    %1821 = vmatpush1.msra.mxu0 0.0
    %1822 = vmatprep.subr.mxu0 0.0
    %1823 = vmatpush1.msra.mxu0 0.0
    %1824 = vmatprep.subr.mxu0 0.0
    %1825 = vmatpush1.msra.mxu0 0.0
    %1826 = vmatprep.subr.mxu0 0.0
    %1827 = vmatpush1.msra.mxu0 0.0
    %1828 = vmatprep.subr.mxu0 0.0
    %1829 = vmatpush1.msra.mxu0 0.0
    %1830 = vmatprep.subr.mxu0 0.0
    %1831 = vmatpush1.msra.mxu0 0.0
    %1832 = vmatprep.subr.mxu0 0.0
    %1833 = vmatpush1.msra.mxu0 0.0
    %1834 = vmatprep.subr.mxu0 0.0
    %1835 = vmatpush1.msra.mxu0 0.0
    %1836 = vmatprep.subr.mxu0 0.0
    %1837 = vmatpush1.msra.mxu0 0.0
    %1838 = vmatprep.subr.mxu0 0.0
    %1839 = vmatpush1.msra.mxu0 0.0
    %1840 = vmatprep.subr.mxu0 0.0
    %1841 = vmatpush1.msra.mxu0 0.0
    %1842 = vmatprep.subr.mxu0 0.0
    %1843 = vmatpush1.msra.mxu0 0.0
    %1844 = vmatprep.subr.mxu0 0.0
    %1845 = vmatpush1.msra.mxu0 0.0
    %1846 = vmatprep.subr.mxu0 0.0
    %1847 = vmatpush1.msra.mxu0 0.0
    %1848 = vmatprep.subr.mxu0 0.0
    %1849 = vmatpush1.msra.mxu0 0.0
    %1850 = vmatprep.subr.mxu0 0.0
    %1851 = vmatpush1.msra.mxu0 0.0
    %1852 = vmatprep.mubr.f32.mxu0 0.0
    %1853 = vmatmul.mubr.f32.gmra.mrb[0].mxu0 %v1302
    %v1854 = vpop.f32.mrb[0].mxu0
    %v1855 = vadd.f32 %v1776, %v1854
    %v1856 = vpop.f32.mrb[0].mxu0
    %v1857 = vadd.f32 %v1780, %v1856
    %1858 = vdwg.mxu0
    %1859 = vmatprep.subr.mxu0 0.0
    %1860 = vmatpush1.msra.mxu0 %v1725
    %1861 = vmatprep.subr.mxu0 0.0
    %1862 = vmatpush1.msra.mxu0 %v1728
    %1863 = vmatprep.subr.mxu0 0.0
    %1864 = vmatpush1.msra.mxu0 %v1731
    %1865 = vmatprep.subr.mxu0 0.0
    %1866 = vmatpush1.msra.mxu0 %v1734
    %1867 = vmatprep.subr.mxu0 0.0
    %1868 = vmatpush1.msra.mxu0 %v1737
    %1869 = vmatprep.subr.mxu0 0.0
    %1870 = vmatpush1.msra.mxu0 %v1740
    %1871 = vmatprep.subr.mxu0 0.0
    %1872 = vmatpush1.msra.mxu0 %v1743
    %1873 = vmatprep.subr.mxu0 0.0
    %1874 = vmatpush1.msra.mxu0 %v1746
    %1875 = vmatprep.subr.mxu0 0.0
    %1876 = vmatpush1.msra.mxu0 %v1749
    %1877 = vmatprep.subr.mxu0 0.0
    %1878 = vmatpush1.msra.mxu0 %v1752
    %1879 = vmatprep.subr.mxu0 0.0
    %1880 = vmatpush1.msra.mxu0 %v1755
    %1881 = vmatprep.subr.mxu0 0.0
    %1882 = vmatpush1.msra.mxu0 %v1758
    %1883 = vmatprep.subr.mxu0 0.0
    %1884 = vmatpush1.msra.mxu0 %v1761
    %1885 = vmatprep.subr.mxu0 0.0
    %1886 = vmatpush1.msra.mxu0 %v1764
    %1887 = vmatprep.subr.mxu0 0.0
    %1888 = vmatpush1.msra.mxu0 %v1767
    %1889 = vmatprep.subr.mxu0 0.0
    %1890 = vmatpush1.msra.mxu0 %v1770
    %1891 = vmatprep.subr.mxu0 0.0
    %1892 = vmatpush1.msra.mxu0 0.0
    %1893 = vmatprep.subr.mxu0 0.0
    %1894 = vmatpush1.msra.mxu0 0.0
    %1895 = vmatprep.subr.mxu0 0.0
    %1896 = vmatpush1.msra.mxu0 0.0
    %1897 = vmatprep.subr.mxu0 0.0
    %1898 = vmatpush1.msra.mxu0 0.0
    %1899 = vmatprep.subr.mxu0 0.0
    %1900 = vmatpush1.msra.mxu0 0.0
    %1901 = vmatprep.subr.mxu0 0.0
    %1902 = vmatpush1.msra.mxu0 0.0
    %1903 = vmatprep.subr.mxu0 0.0
    %1904 = vmatpush1.msra.mxu0 0.0
    %1905 = vmatprep.subr.mxu0 0.0
    %1906 = vmatpush1.msra.mxu0 0.0
    %1907 = vmatprep.subr.mxu0 0.0
    %1908 = vmatpush1.msra.mxu0 0.0
    %1909 = vmatprep.subr.mxu0 0.0
    %1910 = vmatpush1.msra.mxu0 0.0
    %1911 = vmatprep.subr.mxu0 0.0
    %1912 = vmatpush1.msra.mxu0 0.0
    %1913 = vmatprep.subr.mxu0 0.0
    %1914 = vmatpush1.msra.mxu0 0.0
    %1915 = vmatprep.subr.mxu0 0.0
    %1916 = vmatpush1.msra.mxu0 0.0
    %1917 = vmatprep.subr.mxu0 0.0
    %1918 = vmatpush1.msra.mxu0 0.0
    %1919 = vmatprep.subr.mxu0 0.0
    %1920 = vmatpush1.msra.mxu0 0.0
    %1921 = vmatprep.subr.mxu0 0.0
    %1922 = vmatpush1.msra.mxu0 0.0
    %1923 = vmatprep.mubr.f32.mxu0 0.0
    %1924 = vmatmul.mubr.f32.gmra.mrb[0].mxu0 %v1302
    %v1925 = vpop.f32.mrb[0].mxu0
    %v1926 = vadd.f32 %v1784, %v1925
    %v1927 = vpop.f32.mrb[0].mxu0
    %1928 = vdwg.mxu0
    %v1929 = vadd.f32 %v1649, %v1855
    %v1930 = vxor.u32 %v1929, 2147483648
    %v1931 = vmul.f32 %v1930, 1.442695
    %v1932 = vpow.pop %v1931
    %v1933 = vadd.f32 %v1932, 1.0
    %v1934 = vrcp.pop %v1933
    %v1935 = vmul.f32 1.0, %v1934
    %v1936 = vadd.f32 %v1651, %v1857
    %v1937 = vxor.u32 %v1936, 2147483648
    %v1938 = vmul.f32 %v1937, 1.442695
    %v1939 = vpow.pop %v1938
    %v1940 = vadd.f32 %v1939, 1.0
    %v1941 = vrcp.pop %v1940
    %v1942 = vmul.f32 1.0, %v1941
    %v1943 = vmul.f32 %v1935, %v1926
    %v1944 = vadd.f32 %v1720, %v1943
    %v1945 = vtanh.pop %v1944
    %v1946 = vsub.f32 1.0, %v1942
    %v1947 = vmul.f32 %v1946, %v1945
    %v1948 = vmul.f32 %v1942, %v1302
    %v1949 = vadd.f32 %v1947, %v1948
    %v1950 = vld [vmem:[#allocation8] sm:$0xff]
    %v1951 = vld [vmem:[#allocation8 + $0x8] sm:$0xff]
    %v1952 = vld [vmem:[#allocation8 + $0x10] sm:$0xff]
    %v1953 = vld [vmem:[#allocation8 + $0x18] sm:$0xff]
    %v1954 = vld [vmem:[#allocation8 + $0x20] sm:$0xff]
    %v1955 = vld [vmem:[#allocation8 + $0x28] sm:$0xff]
    %v1956 = vld [vmem:[#allocation8 + $0x30] sm:$0xff]
    %v1957 = vld [vmem:[#allocation8 + $0x38] sm:$0xff]
    %v1958 = vld [vmem:[#allocation8 + $0x40] sm:$0xff]
    %v1959 = vld [vmem:[#allocation8 + $0x48] sm:$0xff]
    %v1960 = vld [vmem:[#allocation8 + $0x50] sm:$0xff]
    %v1961 = vld [vmem:[#allocation8 + $0x58] sm:$0xff]
    %v1962 = vld [vmem:[#allocation8 + $0x60] sm:$0xff]
    %v1963 = vld [vmem:[#allocation8 + $0x68] sm:$0xff]
    %v1964 = vld [vmem:[#allocation8 + $0x70] sm:$0xff]
    %v1965 = vld [vmem:[#allocation8 + $0x78] sm:$0xff]
    %v1966 = vld [vmem:[%s11] sm:$0x1]
    %v1968 = vlaneseq
    %v1969 = vshrl.u32 %v1968, 7
    %v1970 = vsub.s32 0, %v1969
    %v1971 = vrot.slane %v1966, %v1970
    %1973 = vmatprep.subr.mxu0 0.0
    %1974 = vmatpush1.msra.mxu0 %v1950
    %1975 = vmatprep.subr.mxu0 0.0
    %1976 = vmatpush1.msra.mxu0 %v1951
    %1977 = vmatprep.subr.mxu0 0.0
    %1978 = vmatpush1.msra.mxu0 %v1952
    %1979 = vmatprep.subr.mxu0 0.0
    %1980 = vmatpush1.msra.mxu0 %v1953
    %1981 = vmatprep.subr.mxu0 0.0
    %1982 = vmatpush1.msra.mxu0 %v1954
    %1983 = vmatprep.subr.mxu0 0.0
    %1984 = vmatpush1.msra.mxu0 %v1955
    %1985 = vmatprep.subr.mxu0 0.0
    %1986 = vmatpush1.msra.mxu0 %v1956
    %1987 = vmatprep.subr.mxu0 0.0
    %1988 = vmatpush1.msra.mxu0 %v1957
    %1989 = vmatprep.subr.mxu0 0.0
    %1990 = vmatpush1.msra.mxu0 %v1958
    %1991 = vmatprep.subr.mxu0 0.0
    %1992 = vmatpush1.msra.mxu0 %v1959
    %1993 = vmatprep.subr.mxu0 0.0
    %1994 = vmatpush1.msra.mxu0 %v1960
    %1995 = vmatprep.subr.mxu0 0.0
    %1996 = vmatpush1.msra.mxu0 %v1961
    %1997 = vmatprep.subr.mxu0 0.0
    %1998 = vmatpush1.msra.mxu0 %v1962
    %1999 = vmatprep.subr.mxu0 0.0
    %2000 = vmatpush1.msra.mxu0 %v1963
    %2001 = vmatprep.subr.mxu0 0.0
    %2002 = vmatpush1.msra.mxu0 %v1964
    %2003 = vmatprep.subr.mxu0 0.0
    %2004 = vmatpush1.msra.mxu0 %v1965
    %2005 = vmatprep.subr.mxu0 0.0
    %2006 = vmatpush1.msra.mxu0 0.0
    %2007 = vmatprep.subr.mxu0 0.0
    %2008 = vmatpush1.msra.mxu0 0.0
    %2009 = vmatprep.subr.mxu0 0.0
    %2010 = vmatpush1.msra.mxu0 0.0
    %2011 = vmatprep.subr.mxu0 0.0
    %2012 = vmatpush1.msra.mxu0 0.0
    %2013 = vmatprep.subr.mxu0 0.0
    %2014 = vmatpush1.msra.mxu0 0.0
    %2015 = vmatprep.subr.mxu0 0.0
    %2016 = vmatpush1.msra.mxu0 0.0
    %2017 = vmatprep.subr.mxu0 0.0
    %2018 = vmatpush1.msra.mxu0 0.0
    %2019 = vmatprep.subr.mxu0 0.0
    %2020 = vmatpush1.msra.mxu0 0.0
    %2021 = vmatprep.subr.mxu0 0.0
    %2022 = vmatpush1.msra.mxu0 0.0
    %2023 = vmatprep.subr.mxu0 0.0
    %2024 = vmatpush1.msra.mxu0 0.0
    %2025 = vmatprep.subr.mxu0 0.0
    %2026 = vmatpush1.msra.mxu0 0.0
    %2027 = vmatprep.subr.mxu0 0.0
    %2028 = vmatpush1.msra.mxu0 0.0
    %2029 = vmatprep.subr.mxu0 0.0
    %2030 = vmatpush1.msra.mxu0 0.0
    %2031 = vmatprep.subr.mxu0 0.0
    %2032 = vmatpush1.msra.mxu0 0.0
    %2033 = vmatprep.subr.mxu0 0.0
    %2034 = vmatpush1.msra.mxu0 0.0
    %2035 = vmatprep.subr.mxu0 0.0
    %2036 = vmatpush1.msra.mxu0 0.0
    %2037 = vmatprep.mubr.f32.mxu0 0.0
    %2038 = vmatmul.mubr.f32.gmra.mrb[0].mxu0 %v1949
    %v2039 = vpop.f32.mrb[0].mxu0
    %v2040 = vadd.f32 %v1971, %v2039
    %v2041 = vpop.f32.mrb[0].mxu0
    %2042 = vdwg.mxu0
    %s2043 = scalar_lea.vmem %s12, 16
    %2044 = vst [vmem:[%s2043] sm:$0xff] %v2040
    %s2045 = scalar_lea.vmem [#allocation3], 24
    %v2046 = vld [vmem:[%s2045] sm:$0xff]
    %v2047 = vld [vmem:[%s2] sm:$0xff]
    %v2048 = vld [vmem:[%s2 + $0x8] sm:$0xff]
    %v2049 = vld [vmem:[%s2 + $0x10] sm:$0xff]
    %v2050 = vld [vmem:[%s2 + $0x18] sm:$0xff]
    %v2051 = vld [vmem:[%s2 + $0x20] sm:$0xff]
    %v2052 = vld [vmem:[%s2 + $0x28] sm:$0xff]
    %v2053 = vld [vmem:[%s3] sm:$0x1]
    %v2055 = vlaneseq
    %v2056 = vshrl.u32 %v2055, 7
    %v2057 = vsub.s32 0, %v2056
    %v2058 = vrot.slane %v2053, %v2057
    %v2061 = vsel %vm119, %v2046, 0
    %2063 = vmatprep.subr.mxu0 0.0
    %2064 = vmatpush1.msra.mxu0 %v2047
    %2065 = vmatprep.subr.mxu0 0.0
    %2066 = vmatpush1.msra.mxu0 %v2048
    %2067 = vmatprep.subr.mxu0 0.0
    %2068 = vmatpush1.msra.mxu0 %v2049
    %2069 = vmatprep.subr.mxu0 0.0
    %2070 = vmatpush1.msra.mxu0 %v2050
    %2071 = vmatprep.subr.mxu0 0.0
    %2072 = vmatpush1.msra.mxu0 %v2051
    %2073 = vmatprep.subr.mxu0 0.0
    %2074 = vmatpush1.msra.mxu0 %v2052
    %2075 = vmatprep.subr.mxu0 0.0
    %2076 = vmatpush1.msra.mxu0 0.0
    %2077 = vmatprep.subr.mxu0 0.0
    %2078 = vmatpush1.msra.mxu0 0.0
    %2079 = vmatprep.subr.mxu0 0.0
    %2080 = vmatpush1.msra.mxu0 0.0
    %2081 = vmatprep.subr.mxu0 0.0
    %2082 = vmatpush1.msra.mxu0 0.0
    %2083 = vmatprep.subr.mxu0 0.0
    %2084 = vmatpush1.msra.mxu0 0.0
    %2085 = vmatprep.subr.mxu0 0.0
    %2086 = vmatpush1.msra.mxu0 0.0
    %2087 = vmatprep.subr.mxu0 0.0
    %2088 = vmatpush1.msra.mxu0 0.0
    %2089 = vmatprep.subr.mxu0 0.0
    %2090 = vmatpush1.msra.mxu0 0.0
    %2091 = vmatprep.subr.mxu0 0.0
    %2092 = vmatpush1.msra.mxu0 0.0
    %2093 = vmatprep.subr.mxu0 0.0
    %2094 = vmatpush1.msra.mxu0 0.0
    %2095 = vmatprep.subr.mxu0 0.0
    %2096 = vmatpush1.msra.mxu0 0.0
    %2097 = vmatprep.subr.mxu0 0.0
    %2098 = vmatpush1.msra.mxu0 0.0
    %2099 = vmatprep.subr.mxu0 0.0
    %2100 = vmatpush1.msra.mxu0 0.0
    %2101 = vmatprep.subr.mxu0 0.0
    %2102 = vmatpush1.msra.mxu0 0.0
    %2103 = vmatprep.subr.mxu0 0.0
    %2104 = vmatpush1.msra.mxu0 0.0
    %2105 = vmatprep.subr.mxu0 0.0
    %2106 = vmatpush1.msra.mxu0 0.0
    %2107 = vmatprep.subr.mxu0 0.0
    %2108 = vmatpush1.msra.mxu0 0.0
    %2109 = vmatprep.subr.mxu0 0.0
    %2110 = vmatpush1.msra.mxu0 0.0
    %2111 = vmatprep.subr.mxu0 0.0
    %2112 = vmatpush1.msra.mxu0 0.0
    %2113 = vmatprep.subr.mxu0 0.0
    %2114 = vmatpush1.msra.mxu0 0.0
    %2115 = vmatprep.subr.mxu0 0.0
    %2116 = vmatpush1.msra.mxu0 0.0
    %2117 = vmatprep.subr.mxu0 0.0
    %2118 = vmatpush1.msra.mxu0 0.0
    %2119 = vmatprep.subr.mxu0 0.0
    %2120 = vmatpush1.msra.mxu0 0.0
    %2121 = vmatprep.subr.mxu0 0.0
    %2122 = vmatpush1.msra.mxu0 0.0
    %2123 = vmatprep.subr.mxu0 0.0
    %2124 = vmatpush1.msra.mxu0 0.0
    %2125 = vmatprep.subr.mxu0 0.0
    %2126 = vmatpush1.msra.mxu0 0.0
    %2127 = vmatprep.mubr.f32.mxu0 0.0
    %2128 = vmatmul.mubr.f32.gmra.mrb[0].mxu0 %v2061
    %v2129 = vpop.f32.mrb[0].mxu0
    %v2130 = vadd.f32 %v2058, %v2129
    %v2131 = vpop.f32.mrb[0].mxu0
    %2132 = vdwg.mxu0
    %2133 = vadd.xlane.f32.xlu0 %v2130
    %v2134 = vpop.xlane.xlu0 %2133
    %v2135 = vmul.f32 %v2134, 0.03125
    %v2136 = vmul.f32 %v2130, %v2130
    %2137 = vadd.xlane.f32.xlu0 %v2136
    %v2138 = vpop.xlane.xlu0 %2137
    %v2139 = vmul.f32 %v2138, 0.03125
    %v2140 = vmul.f32 %v2135, %v2135
    %v2141 = vsub.f32 %v2139, %v2140
    %v2142 = vmax.f32 %v2141, 0.0
    %v2143 = vsub.f32 %v2130, %v2135
    %v2144 = vadd.f32 %v2142, 1e-05
    %v2145 = vrsqrt.pop %v2144
    %v2146 = vmul.f32 %v2143, %v2145
    %v2147 = vld [vmem:[%s4] sm:$0x1]
    %v2149 = vlaneseq
    %v2150 = vshrl.u32 %v2149, 7
    %v2151 = vsub.s32 0, %v2150
    %v2152 = vrot.slane %v2147, %v2151
    %v2154 = vmul.f32 %v2146, %v2152
    %v2155 = vld [vmem:[%s5] sm:$0x1]
    %v2157 = vlaneseq
    %v2158 = vshrl.u32 %v2157, 7
    %v2159 = vsub.s32 0, %v2158
    %v2160 = vrot.slane %v2155, %v2159
    %v2162 = vadd.f32 %v2154, %v2160
    %v2163 = vmax.f32 %v2162, 0.0
    %v2164 = vld [vmem:[#allocation5] sm:$0xff]
    %v2165 = vld [vmem:[#allocation5 + $0x8] sm:$0xff]
    %v2166 = vld [vmem:[#allocation5 + $0x10] sm:$0xff]
    %v2167 = vld [vmem:[#allocation5 + $0x18] sm:$0xff]
    %v2168 = vld [vmem:[#allocation5 + $0x20] sm:$0xff]
    %v2169 = vld [vmem:[#allocation5 + $0x28] sm:$0xff]
    %v2170 = vld [vmem:[#allocation5 + $0x30] sm:$0xff]
    %v2171 = vld [vmem:[#allocation5 + $0x38] sm:$0xff]
    %v2172 = vld [vmem:[#allocation5 + $0x40] sm:$0xff]
    %v2173 = vld [vmem:[#allocation5 + $0x48] sm:$0xff]
    %v2174 = vld [vmem:[#allocation5 + $0x50] sm:$0xff]
    %v2175 = vld [vmem:[#allocation5 + $0x58] sm:$0xff]
    %v2176 = vld [vmem:[#allocation5 + $0x60] sm:$0xff]
    %v2177 = vld [vmem:[#allocation5 + $0x68] sm:$0xff]
    %v2178 = vld [vmem:[#allocation5 + $0x70] sm:$0xff]
    %v2179 = vld [vmem:[#allocation5 + $0x78] sm:$0xff]
    %v2180 = vld [vmem:[#allocation5 + $0x80] sm:$0xff]
    %v2181 = vld [vmem:[#allocation5 + $0x88] sm:$0xff]
    %v2182 = vld [vmem:[#allocation5 + $0x90] sm:$0xff]
    %v2183 = vld [vmem:[#allocation5 + $0x98] sm:$0xff]
    %v2184 = vld [vmem:[#allocation5 + $0xa0] sm:$0xff]
    %v2185 = vld [vmem:[#allocation5 + $0xa8] sm:$0xff]
    %v2186 = vld [vmem:[#allocation5 + $0xb0] sm:$0xff]
    %v2187 = vld [vmem:[#allocation5 + $0xb8] sm:$0xff]
    %v2188 = vld [vmem:[#allocation5 + $0xc0] sm:$0xff]
    %v2189 = vld [vmem:[#allocation5 + $0xc8] sm:$0xff]
    %v2190 = vld [vmem:[#allocation5 + $0xd0] sm:$0xff]
    %v2191 = vld [vmem:[#allocation5 + $0xd8] sm:$0xff]
    %v2192 = vld [vmem:[#allocation5 + $0xe0] sm:$0xff]
    %v2193 = vld [vmem:[#allocation5 + $0xe8] sm:$0xff]
    %v2194 = vld [vmem:[#allocation5 + $0xf0] sm:$0xff]
    %v2195 = vld [vmem:[#allocation5 + $0xf8] sm:$0xff]
    %v2196 = vld [vmem:[#allocation5 + $0x100] sm:$0xff]
    %v2197 = vld [vmem:[#allocation5 + $0x108] sm:$0xff]
    %v2198 = vld [vmem:[#allocation5 + $0x110] sm:$0xff]
    %v2199 = vld [vmem:[#allocation5 + $0x118] sm:$0xff]
    %v2200 = vld [vmem:[#allocation5 + $0x120] sm:$0xff]
    %v2201 = vld [vmem:[#allocation5 + $0x128] sm:$0xff]
    %v2202 = vld [vmem:[#allocation5 + $0x130] sm:$0xff]
    %v2203 = vld [vmem:[#allocation5 + $0x138] sm:$0xff]
    %v2204 = vld [vmem:[#allocation5 + $0x140] sm:$0xff]
    %v2205 = vld [vmem:[#allocation5 + $0x148] sm:$0xff]
    %v2206 = vld [vmem:[#allocation5 + $0x150] sm:$0xff]
    %v2207 = vld [vmem:[#allocation5 + $0x158] sm:$0xff]
    %v2208 = vld [vmem:[#allocation5 + $0x160] sm:$0xff]
    %v2209 = vld [vmem:[#allocation5 + $0x168] sm:$0xff]
    %v2210 = vld [vmem:[#allocation5 + $0x170] sm:$0xff]
    %v2211 = vld [vmem:[#allocation5 + $0x178] sm:$0xff]
    %v2212 = vld [vmem:[%s7] sm:$0x7]
    %v2214 = vlaneseq
    %v2215 = vshrl.u32 %v2214, 7
    %v2216 = vsub.s32 0, %v2215
    %v2217 = vrot.slane %v2212, %v2216
    %v2218 = vlaneseq
    %v2219 = vshrl.u32 %v2218, 7
    %v2220 = vsub.s32 1, %v2219
    %v2221 = vrot.slane %v2212, %v2220
    %v2222 = vlaneseq
    %v2223 = vshrl.u32 %v2222, 7
    %v2224 = vsub.s32 2, %v2223
    %v2225 = vrot.slane %v2212, %v2224
    %2229 = vmatprep.subr.mxu0 %v2165
    %2230 = vmatpush1.msra.mxu0 %v2164
    %2231 = vmatprep.subr.mxu0 %v2168
    %2232 = vmatpush1.msra.mxu0 %v2167
    %2233 = vmatprep.subr.mxu0 %v2171
    %2234 = vmatpush1.msra.mxu0 %v2170
    %2235 = vmatprep.subr.mxu0 %v2174
    %2236 = vmatpush1.msra.mxu0 %v2173
    %2237 = vmatprep.subr.mxu0 %v2177
    %2238 = vmatpush1.msra.mxu0 %v2176
    %2239 = vmatprep.subr.mxu0 %v2180
    %2240 = vmatpush1.msra.mxu0 %v2179
    %2241 = vmatprep.subr.mxu0 %v2183
    %2242 = vmatpush1.msra.mxu0 %v2182
    %2243 = vmatprep.subr.mxu0 %v2186
    %2244 = vmatpush1.msra.mxu0 %v2185
    %2245 = vmatprep.subr.mxu0 %v2189
    %2246 = vmatpush1.msra.mxu0 %v2188
    %2247 = vmatprep.subr.mxu0 %v2192
    %2248 = vmatpush1.msra.mxu0 %v2191
    %2249 = vmatprep.subr.mxu0 %v2195
    %2250 = vmatpush1.msra.mxu0 %v2194
    %2251 = vmatprep.subr.mxu0 %v2198
    %2252 = vmatpush1.msra.mxu0 %v2197
    %2253 = vmatprep.subr.mxu0 %v2201
    %2254 = vmatpush1.msra.mxu0 %v2200
    %2255 = vmatprep.subr.mxu0 %v2204
    %2256 = vmatpush1.msra.mxu0 %v2203
    %2257 = vmatprep.subr.mxu0 %v2207
    %2258 = vmatpush1.msra.mxu0 %v2206
    %2259 = vmatprep.subr.mxu0 %v2210
    %2260 = vmatpush1.msra.mxu0 %v2209
    %2261 = vmatprep.subr.mxu0 0.0
    %2262 = vmatpush1.msra.mxu0 0.0
    %2263 = vmatprep.subr.mxu0 0.0
    %2264 = vmatpush1.msra.mxu0 0.0
    %2265 = vmatprep.subr.mxu0 0.0
    %2266 = vmatpush1.msra.mxu0 0.0
    %2267 = vmatprep.subr.mxu0 0.0
    %2268 = vmatpush1.msra.mxu0 0.0
    %2269 = vmatprep.subr.mxu0 0.0
    %2270 = vmatpush1.msra.mxu0 0.0
    %2271 = vmatprep.subr.mxu0 0.0
    %2272 = vmatpush1.msra.mxu0 0.0
    %2273 = vmatprep.subr.mxu0 0.0
    %2274 = vmatpush1.msra.mxu0 0.0
    %2275 = vmatprep.subr.mxu0 0.0
    %2276 = vmatpush1.msra.mxu0 0.0
    %2277 = vmatprep.subr.mxu0 0.0
    %2278 = vmatpush1.msra.mxu0 0.0
    %2279 = vmatprep.subr.mxu0 0.0
    %2280 = vmatpush1.msra.mxu0 0.0
    %2281 = vmatprep.subr.mxu0 0.0
    %2282 = vmatpush1.msra.mxu0 0.0
    %2283 = vmatprep.subr.mxu0 0.0
    %2284 = vmatpush1.msra.mxu0 0.0
    %2285 = vmatprep.subr.mxu0 0.0
    %2286 = vmatpush1.msra.mxu0 0.0
    %2287 = vmatprep.subr.mxu0 0.0
    %2288 = vmatpush1.msra.mxu0 0.0
    %2289 = vmatprep.subr.mxu0 0.0
    %2290 = vmatpush1.msra.mxu0 0.0
    %2291 = vmatprep.subr.mxu0 0.0
    %2292 = vmatpush1.msra.mxu0 0.0
    %2293 = vmatprep.mubr.f32.mxu0 0.0
    %2294 = vmatmul.mubr.f32.gmra.mrb[0].mxu0 %v2163
    %v2295 = vpop.f32.mrb[0].mxu0
    %v2296 = vadd.f32 %v2217, %v2295
    %v2297 = vpop.f32.mrb[0].mxu0
    %v2298 = vadd.f32 %v2221, %v2297
    %2299 = vdwg.mxu0
    %2300 = vmatprep.subr.mxu0 0.0
    %2301 = vmatpush1.msra.mxu0 %v2166
    %2302 = vmatprep.subr.mxu0 0.0
    %2303 = vmatpush1.msra.mxu0 %v2169
    %2304 = vmatprep.subr.mxu0 0.0
    %2305 = vmatpush1.msra.mxu0 %v2172
    %2306 = vmatprep.subr.mxu0 0.0
    %2307 = vmatpush1.msra.mxu0 %v2175
    %2308 = vmatprep.subr.mxu0 0.0
    %2309 = vmatpush1.msra.mxu0 %v2178
    %2310 = vmatprep.subr.mxu0 0.0
    %2311 = vmatpush1.msra.mxu0 %v2181
    %2312 = vmatprep.subr.mxu0 0.0
    %2313 = vmatpush1.msra.mxu0 %v2184
    %2314 = vmatprep.subr.mxu0 0.0
    %2315 = vmatpush1.msra.mxu0 %v2187
    %2316 = vmatprep.subr.mxu0 0.0
    %2317 = vmatpush1.msra.mxu0 %v2190
    %2318 = vmatprep.subr.mxu0 0.0
    %2319 = vmatpush1.msra.mxu0 %v2193
    %2320 = vmatprep.subr.mxu0 0.0
    %2321 = vmatpush1.msra.mxu0 %v2196
    %2322 = vmatprep.subr.mxu0 0.0
    %2323 = vmatpush1.msra.mxu0 %v2199
    %2324 = vmatprep.subr.mxu0 0.0
    %2325 = vmatpush1.msra.mxu0 %v2202
    %2326 = vmatprep.subr.mxu0 0.0
    %2327 = vmatpush1.msra.mxu0 %v2205
    %2328 = vmatprep.subr.mxu0 0.0
    %2329 = vmatpush1.msra.mxu0 %v2208
    %2330 = vmatprep.subr.mxu0 0.0
    %2331 = vmatpush1.msra.mxu0 %v2211
    %2332 = vmatprep.subr.mxu0 0.0
    %2333 = vmatpush1.msra.mxu0 0.0
    %2334 = vmatprep.subr.mxu0 0.0
    %2335 = vmatpush1.msra.mxu0 0.0
    %2336 = vmatprep.subr.mxu0 0.0
    %2337 = vmatpush1.msra.mxu0 0.0
    %2338 = vmatprep.subr.mxu0 0.0
    %2339 = vmatpush1.msra.mxu0 0.0
    %2340 = vmatprep.subr.mxu0 0.0
    %2341 = vmatpush1.msra.mxu0 0.0
    %2342 = vmatprep.subr.mxu0 0.0
    %2343 = vmatpush1.msra.mxu0 0.0
    %2344 = vmatprep.subr.mxu0 0.0
    %2345 = vmatpush1.msra.mxu0 0.0
    %2346 = vmatprep.subr.mxu0 0.0
    %2347 = vmatpush1.msra.mxu0 0.0
    %2348 = vmatprep.subr.mxu0 0.0
    %2349 = vmatpush1.msra.mxu0 0.0
    %2350 = vmatprep.subr.mxu0 0.0
    %2351 = vmatpush1.msra.mxu0 0.0
    %2352 = vmatprep.subr.mxu0 0.0
    %2353 = vmatpush1.msra.mxu0 0.0
    %2354 = vmatprep.subr.mxu0 0.0
    %2355 = vmatpush1.msra.mxu0 0.0
    %2356 = vmatprep.subr.mxu0 0.0
    %2357 = vmatpush1.msra.mxu0 0.0
    %2358 = vmatprep.subr.mxu0 0.0
    %2359 = vmatpush1.msra.mxu0 0.0
    %2360 = vmatprep.subr.mxu0 0.0
    %2361 = vmatpush1.msra.mxu0 0.0
    %2362 = vmatprep.subr.mxu0 0.0
    %2363 = vmatpush1.msra.mxu0 0.0
    %2364 = vmatprep.mubr.f32.mxu0 0.0
    %2365 = vmatmul.mubr.f32.gmra.mrb[0].mxu0 %v2163
    %v2366 = vpop.f32.mrb[0].mxu0
    %v2367 = vadd.f32 %v2225, %v2366
    %v2368 = vpop.f32.mrb[0].mxu0
    %2369 = vdwg.mxu0
    %v2370 = vld [vmem:[#allocation7] sm:$0xff]
    %v2371 = vld [vmem:[#allocation7 + $0x8] sm:$0xff]
    %v2372 = vld [vmem:[#allocation7 + $0x10] sm:$0xff]
    %v2373 = vld [vmem:[#allocation7 + $0x18] sm:$0xff]
    %v2374 = vld [vmem:[#allocation7 + $0x20] sm:$0xff]
    %v2375 = vld [vmem:[#allocation7 + $0x28] sm:$0xff]
    %v2376 = vld [vmem:[#allocation7 + $0x30] sm:$0xff]
    %v2377 = vld [vmem:[#allocation7 + $0x38] sm:$0xff]
    %v2378 = vld [vmem:[#allocation7 + $0x40] sm:$0xff]
    %v2379 = vld [vmem:[#allocation7 + $0x48] sm:$0xff]
    %v2380 = vld [vmem:[#allocation7 + $0x50] sm:$0xff]
    %v2381 = vld [vmem:[#allocation7 + $0x58] sm:$0xff]
    %v2382 = vld [vmem:[#allocation7 + $0x60] sm:$0xff]
    %v2383 = vld [vmem:[#allocation7 + $0x68] sm:$0xff]
    %v2384 = vld [vmem:[#allocation7 + $0x70] sm:$0xff]
    %v2385 = vld [vmem:[#allocation7 + $0x78] sm:$0xff]
    %v2386 = vld [vmem:[#allocation7 + $0x80] sm:$0xff]
    %v2387 = vld [vmem:[#allocation7 + $0x88] sm:$0xff]
    %v2388 = vld [vmem:[#allocation7 + $0x90] sm:$0xff]
    %v2389 = vld [vmem:[#allocation7 + $0x98] sm:$0xff]
    %v2390 = vld [vmem:[#allocation7 + $0xa0] sm:$0xff]
    %v2391 = vld [vmem:[#allocation7 + $0xa8] sm:$0xff]
    %v2392 = vld [vmem:[#allocation7 + $0xb0] sm:$0xff]
    %v2393 = vld [vmem:[#allocation7 + $0xb8] sm:$0xff]
    %v2394 = vld [vmem:[#allocation7 + $0xc0] sm:$0xff]
    %v2395 = vld [vmem:[#allocation7 + $0xc8] sm:$0xff]
    %v2396 = vld [vmem:[#allocation7 + $0xd0] sm:$0xff]
    %v2397 = vld [vmem:[#allocation7 + $0xd8] sm:$0xff]
    %v2398 = vld [vmem:[#allocation7 + $0xe0] sm:$0xff]
    %v2399 = vld [vmem:[#allocation7 + $0xe8] sm:$0xff]
    %v2400 = vld [vmem:[#allocation7 + $0xf0] sm:$0xff]
    %v2401 = vld [vmem:[#allocation7 + $0xf8] sm:$0xff]
    %v2402 = vld [vmem:[#allocation7 + $0x100] sm:$0xff]
    %v2403 = vld [vmem:[#allocation7 + $0x108] sm:$0xff]
    %v2404 = vld [vmem:[#allocation7 + $0x110] sm:$0xff]
    %v2405 = vld [vmem:[#allocation7 + $0x118] sm:$0xff]
    %v2406 = vld [vmem:[#allocation7 + $0x120] sm:$0xff]
    %v2407 = vld [vmem:[#allocation7 + $0x128] sm:$0xff]
    %v2408 = vld [vmem:[#allocation7 + $0x130] sm:$0xff]
    %v2409 = vld [vmem:[#allocation7 + $0x138] sm:$0xff]
    %v2410 = vld [vmem:[#allocation7 + $0x140] sm:$0xff]
    %v2411 = vld [vmem:[#allocation7 + $0x148] sm:$0xff]
    %v2412 = vld [vmem:[#allocation7 + $0x150] sm:$0xff]
    %v2413 = vld [vmem:[#allocation7 + $0x158] sm:$0xff]
    %v2414 = vld [vmem:[#allocation7 + $0x160] sm:$0xff]
    %v2415 = vld [vmem:[#allocation7 + $0x168] sm:$0xff]
    %v2416 = vld [vmem:[#allocation7 + $0x170] sm:$0xff]
    %v2417 = vld [vmem:[#allocation7 + $0x178] sm:$0xff]
    %v2418 = vld [vmem:[%s9] sm:$0x7]
    %v2420 = vlaneseq
    %v2421 = vshrl.u32 %v2420, 7
    %v2422 = vsub.s32 0, %v2421
    %v2423 = vrot.slane %v2418, %v2422
    %v2424 = vlaneseq
    %v2425 = vshrl.u32 %v2424, 7
    %v2426 = vsub.s32 1, %v2425
    %v2427 = vrot.slane %v2418, %v2426
    %v2428 = vlaneseq
    %v2429 = vshrl.u32 %v2428, 7
    %v2430 = vsub.s32 2, %v2429
    %v2431 = vrot.slane %v2418, %v2430
    %2435 = vmatprep.subr.mxu0 %v2371
    %2436 = vmatpush1.msra.mxu0 %v2370
    %2437 = vmatprep.subr.mxu0 %v2374
    %2438 = vmatpush1.msra.mxu0 %v2373
    %2439 = vmatprep.subr.mxu0 %v2377
    %2440 = vmatpush1.msra.mxu0 %v2376
    %2441 = vmatprep.subr.mxu0 %v2380
    %2442 = vmatpush1.msra.mxu0 %v2379
    %2443 = vmatprep.subr.mxu0 %v2383
    %2444 = vmatpush1.msra.mxu0 %v2382
    %2445 = vmatprep.subr.mxu0 %v2386
    %2446 = vmatpush1.msra.mxu0 %v2385
    %2447 = vmatprep.subr.mxu0 %v2389
    %2448 = vmatpush1.msra.mxu0 %v2388
    %2449 = vmatprep.subr.mxu0 %v2392
    %2450 = vmatpush1.msra.mxu0 %v2391
    %2451 = vmatprep.subr.mxu0 %v2395
    %2452 = vmatpush1.msra.mxu0 %v2394
    %2453 = vmatprep.subr.mxu0 %v2398
    %2454 = vmatpush1.msra.mxu0 %v2397
    %2455 = vmatprep.subr.mxu0 %v2401
    %2456 = vmatpush1.msra.mxu0 %v2400
    %2457 = vmatprep.subr.mxu0 %v2404
    %2458 = vmatpush1.msra.mxu0 %v2403
    %2459 = vmatprep.subr.mxu0 %v2407
    %2460 = vmatpush1.msra.mxu0 %v2406
    %2461 = vmatprep.subr.mxu0 %v2410
    %2462 = vmatpush1.msra.mxu0 %v2409
    %2463 = vmatprep.subr.mxu0 %v2413
    %2464 = vmatpush1.msra.mxu0 %v2412
    %2465 = vmatprep.subr.mxu0 %v2416
    %2466 = vmatpush1.msra.mxu0 %v2415
    %2467 = vmatprep.subr.mxu0 0.0
    %2468 = vmatpush1.msra.mxu0 0.0
    %2469 = vmatprep.subr.mxu0 0.0
    %2470 = vmatpush1.msra.mxu0 0.0
    %2471 = vmatprep.subr.mxu0 0.0
    %2472 = vmatpush1.msra.mxu0 0.0
    %2473 = vmatprep.subr.mxu0 0.0
    %2474 = vmatpush1.msra.mxu0 0.0
    %2475 = vmatprep.subr.mxu0 0.0
    %2476 = vmatpush1.msra.mxu0 0.0
    %2477 = vmatprep.subr.mxu0 0.0
    %2478 = vmatpush1.msra.mxu0 0.0
    %2479 = vmatprep.subr.mxu0 0.0
    %2480 = vmatpush1.msra.mxu0 0.0
    %2481 = vmatprep.subr.mxu0 0.0
    %2482 = vmatpush1.msra.mxu0 0.0
    %2483 = vmatprep.subr.mxu0 0.0
    %2484 = vmatpush1.msra.mxu0 0.0
    %2485 = vmatprep.subr.mxu0 0.0
    %2486 = vmatpush1.msra.mxu0 0.0
    %2487 = vmatprep.subr.mxu0 0.0
    %2488 = vmatpush1.msra.mxu0 0.0
    %2489 = vmatprep.subr.mxu0 0.0
    %2490 = vmatpush1.msra.mxu0 0.0
    %2491 = vmatprep.subr.mxu0 0.0
    %2492 = vmatpush1.msra.mxu0 0.0
    %2493 = vmatprep.subr.mxu0 0.0
    %2494 = vmatpush1.msra.mxu0 0.0
    %2495 = vmatprep.subr.mxu0 0.0
    %2496 = vmatpush1.msra.mxu0 0.0
    %2497 = vmatprep.subr.mxu0 0.0
    %2498 = vmatpush1.msra.mxu0 0.0
    %2499 = vmatprep.mubr.f32.mxu0 0.0
    %2500 = vmatmul.mubr.f32.gmra.mrb[0].mxu0 %v1949
    %v2501 = vpop.f32.mrb[0].mxu0
    %v2502 = vadd.f32 %v2423, %v2501
    %v2503 = vpop.f32.mrb[0].mxu0
    %v2504 = vadd.f32 %v2427, %v2503
    %2505 = vdwg.mxu0
    %2506 = vmatprep.subr.mxu0 0.0
    %2507 = vmatpush1.msra.mxu0 %v2372
    %2508 = vmatprep.subr.mxu0 0.0
    %2509 = vmatpush1.msra.mxu0 %v2375
    %2510 = vmatprep.subr.mxu0 0.0
    %2511 = vmatpush1.msra.mxu0 %v2378
    %2512 = vmatprep.subr.mxu0 0.0
    %2513 = vmatpush1.msra.mxu0 %v2381
    %2514 = vmatprep.subr.mxu0 0.0
    %2515 = vmatpush1.msra.mxu0 %v2384
    %2516 = vmatprep.subr.mxu0 0.0
    %2517 = vmatpush1.msra.mxu0 %v2387
    %2518 = vmatprep.subr.mxu0 0.0
    %2519 = vmatpush1.msra.mxu0 %v2390
    %2520 = vmatprep.subr.mxu0 0.0
    %2521 = vmatpush1.msra.mxu0 %v2393
    %2522 = vmatprep.subr.mxu0 0.0
    %2523 = vmatpush1.msra.mxu0 %v2396
    %2524 = vmatprep.subr.mxu0 0.0
    %2525 = vmatpush1.msra.mxu0 %v2399
    %2526 = vmatprep.subr.mxu0 0.0
    %2527 = vmatpush1.msra.mxu0 %v2402
    %2528 = vmatprep.subr.mxu0 0.0
    %2529 = vmatpush1.msra.mxu0 %v2405
    %2530 = vmatprep.subr.mxu0 0.0
    %2531 = vmatpush1.msra.mxu0 %v2408
    %2532 = vmatprep.subr.mxu0 0.0
    %2533 = vmatpush1.msra.mxu0 %v2411
    %2534 = vmatprep.subr.mxu0 0.0
    %2535 = vmatpush1.msra.mxu0 %v2414
    %2536 = vmatprep.subr.mxu0 0.0
    %2537 = vmatpush1.msra.mxu0 %v2417
    %2538 = vmatprep.subr.mxu0 0.0
    %2539 = vmatpush1.msra.mxu0 0.0
    %2540 = vmatprep.subr.mxu0 0.0
    %2541 = vmatpush1.msra.mxu0 0.0
    %2542 = vmatprep.subr.mxu0 0.0
    %2543 = vmatpush1.msra.mxu0 0.0
    %2544 = vmatprep.subr.mxu0 0.0
    %2545 = vmatpush1.msra.mxu0 0.0
    %2546 = vmatprep.subr.mxu0 0.0
    %2547 = vmatpush1.msra.mxu0 0.0
    %2548 = vmatprep.subr.mxu0 0.0
    %2549 = vmatpush1.msra.mxu0 0.0
    %2550 = vmatprep.subr.mxu0 0.0
    %2551 = vmatpush1.msra.mxu0 0.0
    %2552 = vmatprep.subr.mxu0 0.0
    %2553 = vmatpush1.msra.mxu0 0.0
    %2554 = vmatprep.subr.mxu0 0.0
    %2555 = vmatpush1.msra.mxu0 0.0
    %2556 = vmatprep.subr.mxu0 0.0
    %2557 = vmatpush1.msra.mxu0 0.0
    %2558 = vmatprep.subr.mxu0 0.0
    %2559 = vmatpush1.msra.mxu0 0.0
    %2560 = vmatprep.subr.mxu0 0.0
    %2561 = vmatpush1.msra.mxu0 0.0
    %2562 = vmatprep.subr.mxu0 0.0
    %2563 = vmatpush1.msra.mxu0 0.0
    %2564 = vmatprep.subr.mxu0 0.0
    %2565 = vmatpush1.msra.mxu0 0.0
    %2566 = vmatprep.subr.mxu0 0.0
    %2567 = vmatpush1.msra.mxu0 0.0
    %2568 = vmatprep.subr.mxu0 0.0
    %2569 = vmatpush1.msra.mxu0 0.0
    %2570 = vmatprep.mubr.f32.mxu0 0.0
    %2571 = vmatmul.mubr.f32.gmra.mrb[0].mxu0 %v1949
    %v2572 = vpop.f32.mrb[0].mxu0
    %v2573 = vadd.f32 %v2431, %v2572
    %v2574 = vpop.f32.mrb[0].mxu0
    %2575 = vdwg.mxu0
    %v2576 = vadd.f32 %v2296, %v2502
    %v2577 = vxor.u32 %v2576, 2147483648
    %v2578 = vmul.f32 %v2577, 1.442695
    %v2579 = vpow.pop %v2578
    %v2580 = vadd.f32 %v2579, 1.0
    %v2581 = vrcp.pop %v2580
    %v2582 = vmul.f32 1.0, %v2581
    %v2583 = vadd.f32 %v2298, %v2504
    %v2584 = vxor.u32 %v2583, 2147483648
    %v2585 = vmul.f32 %v2584, 1.442695
    %v2586 = vpow.pop %v2585
    %v2587 = vadd.f32 %v2586, 1.0
    %v2588 = vrcp.pop %v2587
    %v2589 = vmul.f32 1.0, %v2588
    %v2590 = vmul.f32 %v2582, %v2573
    %v2591 = vadd.f32 %v2367, %v2590
    %v2592 = vtanh.pop %v2591
    %v2593 = vsub.f32 1.0, %v2589
    %v2594 = vmul.f32 %v2593, %v2592
    %v2595 = vmul.f32 %v2589, %v1949
    %v2596 = vadd.f32 %v2594, %v2595
    %v2597 = vld [vmem:[#allocation8] sm:$0xff]
    %v2598 = vld [vmem:[#allocation8 + $0x8] sm:$0xff]
    %v2599 = vld [vmem:[#allocation8 + $0x10] sm:$0xff]
    %v2600 = vld [vmem:[#allocation8 + $0x18] sm:$0xff]
    %v2601 = vld [vmem:[#allocation8 + $0x20] sm:$0xff]
    %v2602 = vld [vmem:[#allocation8 + $0x28] sm:$0xff]
    %v2603 = vld [vmem:[#allocation8 + $0x30] sm:$0xff]
    %v2604 = vld [vmem:[#allocation8 + $0x38] sm:$0xff]
    %v2605 = vld [vmem:[#allocation8 + $0x40] sm:$0xff]
    %v2606 = vld [vmem:[#allocation8 + $0x48] sm:$0xff]
    %v2607 = vld [vmem:[#allocation8 + $0x50] sm:$0xff]
    %v2608 = vld [vmem:[#allocation8 + $0x58] sm:$0xff]
    %v2609 = vld [vmem:[#allocation8 + $0x60] sm:$0xff]
    %v2610 = vld [vmem:[#allocation8 + $0x68] sm:$0xff]
    %v2611 = vld [vmem:[#allocation8 + $0x70] sm:$0xff]
    %v2612 = vld [vmem:[#allocation8 + $0x78] sm:$0xff]
    %v2613 = vld [vmem:[%s11] sm:$0x1]
    %v2615 = vlaneseq
    %v2616 = vshrl.u32 %v2615, 7
    %v2617 = vsub.s32 0, %v2616
    %v2618 = vrot.slane %v2613, %v2617
    %2620 = vmatprep.subr.mxu0 0.0
    %2621 = vmatpush1.msra.mxu0 %v2597
    %2622 = vmatprep.subr.mxu0 0.0
    %2623 = vmatpush1.msra.mxu0 %v2598
    %2624 = vmatprep.subr.mxu0 0.0
    %2625 = vmatpush1.msra.mxu0 %v2599
    %2626 = vmatprep.subr.mxu0 0.0
    %2627 = vmatpush1.msra.mxu0 %v2600
    %2628 = vmatprep.subr.mxu0 0.0
    %2629 = vmatpush1.msra.mxu0 %v2601
    %2630 = vmatprep.subr.mxu0 0.0
    %2631 = vmatpush1.msra.mxu0 %v2602
    %2632 = vmatprep.subr.mxu0 0.0
    %2633 = vmatpush1.msra.mxu0 %v2603
    %2634 = vmatprep.subr.mxu0 0.0
    %2635 = vmatpush1.msra.mxu0 %v2604
    %2636 = vmatprep.subr.mxu0 0.0
    %2637 = vmatpush1.msra.mxu0 %v2605
    %2638 = vmatprep.subr.mxu0 0.0
    %2639 = vmatpush1.msra.mxu0 %v2606
    %2640 = vmatprep.subr.mxu0 0.0
    %2641 = vmatpush1.msra.mxu0 %v2607
    %2642 = vmatprep.subr.mxu0 0.0
    %2643 = vmatpush1.msra.mxu0 %v2608
    %2644 = vmatprep.subr.mxu0 0.0
    %2645 = vmatpush1.msra.mxu0 %v2609
    %2646 = vmatprep.subr.mxu0 0.0
    %2647 = vmatpush1.msra.mxu0 %v2610
    %2648 = vmatprep.subr.mxu0 0.0
    %2649 = vmatpush1.msra.mxu0 %v2611
    %2650 = vmatprep.subr.mxu0 0.0
    %2651 = vmatpush1.msra.mxu0 %v2612
    %2652 = vmatprep.subr.mxu0 0.0
    %2653 = vmatpush1.msra.mxu0 0.0
    %2654 = vmatprep.subr.mxu0 0.0
    %2655 = vmatpush1.msra.mxu0 0.0
    %2656 = vmatprep.subr.mxu0 0.0
    %2657 = vmatpush1.msra.mxu0 0.0
    %2658 = vmatprep.subr.mxu0 0.0
    %2659 = vmatpush1.msra.mxu0 0.0
    %2660 = vmatprep.subr.mxu0 0.0
    %2661 = vmatpush1.msra.mxu0 0.0
    %2662 = vmatprep.subr.mxu0 0.0
    %2663 = vmatpush1.msra.mxu0 0.0
    %2664 = vmatprep.subr.mxu0 0.0
    %2665 = vmatpush1.msra.mxu0 0.0
    %2666 = vmatprep.subr.mxu0 0.0
    %2667 = vmatpush1.msra.mxu0 0.0
    %2668 = vmatprep.subr.mxu0 0.0
    %2669 = vmatpush1.msra.mxu0 0.0
    %2670 = vmatprep.subr.mxu0 0.0
    %2671 = vmatpush1.msra.mxu0 0.0
    %2672 = vmatprep.subr.mxu0 0.0
    %2673 = vmatpush1.msra.mxu0 0.0
    %2674 = vmatprep.subr.mxu0 0.0
    %2675 = vmatpush1.msra.mxu0 0.0
    %2676 = vmatprep.subr.mxu0 0.0
    %2677 = vmatpush1.msra.mxu0 0.0
    %2678 = vmatprep.subr.mxu0 0.0
    %2679 = vmatpush1.msra.mxu0 0.0
    %2680 = vmatprep.subr.mxu0 0.0
    %2681 = vmatpush1.msra.mxu0 0.0
    %2682 = vmatprep.subr.mxu0 0.0
    %2683 = vmatpush1.msra.mxu0 0.0
    %2684 = vmatprep.mubr.f32.mxu0 0.0
    %2685 = vmatmul.mubr.f32.gmra.mrb[0].mxu0 %v2596
    %v2686 = vpop.f32.mrb[0].mxu0
    %v2687 = vadd.f32 %v2618, %v2686
    %v2688 = vpop.f32.mrb[0].mxu0
    %2689 = vdwg.mxu0
    %s2690 = scalar_lea.vmem %s12, 24
    %2691 = vst [vmem:[%s2690] sm:$0xff] %v2687
    %s2692 = scalar_lea.vmem [#allocation3], 32
    %v2693 = vld [vmem:[%s2692] sm:$0xff]
    %v2694 = vld [vmem:[%s2] sm:$0xff]
    %v2695 = vld [vmem:[%s2 + $0x8] sm:$0xff]
    %v2696 = vld [vmem:[%s2 + $0x10] sm:$0xff]
    %v2697 = vld [vmem:[%s2 + $0x18] sm:$0xff]
    %v2698 = vld [vmem:[%s2 + $0x20] sm:$0xff]
    %v2699 = vld [vmem:[%s2 + $0x28] sm:$0xff]
    %v2700 = vld [vmem:[%s3] sm:$0x1]
    %v2702 = vlaneseq
    %v2703 = vshrl.u32 %v2702, 7
    %v2704 = vsub.s32 0, %v2703
    %v2705 = vrot.slane %v2700, %v2704
    %v2708 = vsel %vm119, %v2693, 0
    %2710 = vmatprep.subr.mxu0 0.0
    %2711 = vmatpush1.msra.mxu0 %v2694
    %2712 = vmatprep.subr.mxu0 0.0
    %2713 = vmatpush1.msra.mxu0 %v2695
    %2714 = vmatprep.subr.mxu0 0.0
    %2715 = vmatpush1.msra.mxu0 %v2696
    %2716 = vmatprep.subr.mxu0 0.0
    %2717 = vmatpush1.msra.mxu0 %v2697
    %2718 = vmatprep.subr.mxu0 0.0
    %2719 = vmatpush1.msra.mxu0 %v2698
    %2720 = vmatprep.subr.mxu0 0.0
    %2721 = vmatpush1.msra.mxu0 %v2699
    %2722 = vmatprep.subr.mxu0 0.0
    %2723 = vmatpush1.msra.mxu0 0.0
    %2724 = vmatprep.subr.mxu0 0.0
    %2725 = vmatpush1.msra.mxu0 0.0
    %2726 = vmatprep.subr.mxu0 0.0
    %2727 = vmatpush1.msra.mxu0 0.0
    %2728 = vmatprep.subr.mxu0 0.0
    %2729 = vmatpush1.msra.mxu0 0.0
    %2730 = vmatprep.subr.mxu0 0.0
    %2731 = vmatpush1.msra.mxu0 0.0
    %2732 = vmatprep.subr.mxu0 0.0
    %2733 = vmatpush1.msra.mxu0 0.0
    %2734 = vmatprep.subr.mxu0 0.0
    %2735 = vmatpush1.msra.mxu0 0.0
    %2736 = vmatprep.subr.mxu0 0.0
    %2737 = vmatpush1.msra.mxu0 0.0
    %2738 = vmatprep.subr.mxu0 0.0
    %2739 = vmatpush1.msra.mxu0 0.0
    %2740 = vmatprep.subr.mxu0 0.0
    %2741 = vmatpush1.msra.mxu0 0.0
    %2742 = vmatprep.subr.mxu0 0.0
    %2743 = vmatpush1.msra.mxu0 0.0
    %2744 = vmatprep.subr.mxu0 0.0
    %2745 = vmatpush1.msra.mxu0 0.0
    %2746 = vmatprep.subr.mxu0 0.0
    %2747 = vmatpush1.msra.mxu0 0.0
    %2748 = vmatprep.subr.mxu0 0.0
    %2749 = vmatpush1.msra.mxu0 0.0
    %2750 = vmatprep.subr.mxu0 0.0
    %2751 = vmatpush1.msra.mxu0 0.0
    %2752 = vmatprep.subr.mxu0 0.0
    %2753 = vmatpush1.msra.mxu0 0.0
    %2754 = vmatprep.subr.mxu0 0.0
    %2755 = vmatpush1.msra.mxu0 0.0
    %2756 = vmatprep.subr.mxu0 0.0
    %2757 = vmatpush1.msra.mxu0 0.0
    %2758 = vmatprep.subr.mxu0 0.0
    %2759 = vmatpush1.msra.mxu0 0.0
    %2760 = vmatprep.subr.mxu0 0.0
    %2761 = vmatpush1.msra.mxu0 0.0
    %2762 = vmatprep.subr.mxu0 0.0
    %2763 = vmatpush1.msra.mxu0 0.0
    %2764 = vmatprep.subr.mxu0 0.0
    %2765 = vmatpush1.msra.mxu0 0.0
    %2766 = vmatprep.subr.mxu0 0.0
    %2767 = vmatpush1.msra.mxu0 0.0
    %2768 = vmatprep.subr.mxu0 0.0
    %2769 = vmatpush1.msra.mxu0 0.0
    %2770 = vmatprep.subr.mxu0 0.0
    %2771 = vmatpush1.msra.mxu0 0.0
    %2772 = vmatprep.subr.mxu0 0.0
    %2773 = vmatpush1.msra.mxu0 0.0
    %2774 = vmatprep.mubr.f32.mxu0 0.0
    %2775 = vmatmul.mubr.f32.gmra.mrb[0].mxu0 %v2708
    %v2776 = vpop.f32.mrb[0].mxu0
    %v2777 = vadd.f32 %v2705, %v2776
    %v2778 = vpop.f32.mrb[0].mxu0
    %2779 = vdwg.mxu0
    %2780 = vadd.xlane.f32.xlu0 %v2777
    %v2781 = vpop.xlane.xlu0 %2780
    %v2782 = vmul.f32 %v2781, 0.03125
    %v2783 = vmul.f32 %v2777, %v2777
    %2784 = vadd.xlane.f32.xlu0 %v2783
    %v2785 = vpop.xlane.xlu0 %2784
    %v2786 = vmul.f32 %v2785, 0.03125
    %v2787 = vmul.f32 %v2782, %v2782
    %v2788 = vsub.f32 %v2786, %v2787
    %v2789 = vmax.f32 %v2788, 0.0
    %v2790 = vsub.f32 %v2777, %v2782
    %v2791 = vadd.f32 %v2789, 1e-05
    %v2792 = vrsqrt.pop %v2791
    %v2793 = vmul.f32 %v2790, %v2792
    %v2794 = vld [vmem:[%s4] sm:$0x1]
    %v2796 = vlaneseq
    %v2797 = vshrl.u32 %v2796, 7
    %v2798 = vsub.s32 0, %v2797
    %v2799 = vrot.slane %v2794, %v2798
    %v2801 = vmul.f32 %v2793, %v2799
    %v2802 = vld [vmem:[%s5] sm:$0x1]
    %v2804 = vlaneseq
    %v2805 = vshrl.u32 %v2804, 7
    %v2806 = vsub.s32 0, %v2805
    %v2807 = vrot.slane %v2802, %v2806
    %v2809 = vadd.f32 %v2801, %v2807
    %v2810 = vmax.f32 %v2809, 0.0
    %v2811 = vld [vmem:[#allocation5] sm:$0xff]
    %v2812 = vld [vmem:[#allocation5 + $0x8] sm:$0xff]
    %v2813 = vld [vmem:[#allocation5 + $0x10] sm:$0xff]
    %v2814 = vld [vmem:[#allocation5 + $0x18] sm:$0xff]
    %v2815 = vld [vmem:[#allocation5 + $0x20] sm:$0xff]
    %v2816 = vld [vmem:[#allocation5 + $0x28] sm:$0xff]
    %v2817 = vld [vmem:[#allocation5 + $0x30] sm:$0xff]
    %v2818 = vld [vmem:[#allocation5 + $0x38] sm:$0xff]
    %v2819 = vld [vmem:[#allocation5 + $0x40] sm:$0xff]
    %v2820 = vld [vmem:[#allocation5 + $0x48] sm:$0xff]
    %v2821 = vld [vmem:[#allocation5 + $0x50] sm:$0xff]
    %v2822 = vld [vmem:[#allocation5 + $0x58] sm:$0xff]
    %v2823 = vld [vmem:[#allocation5 + $0x60] sm:$0xff]
    %v2824 = vld [vmem:[#allocation5 + $0x68] sm:$0xff]
    %v2825 = vld [vmem:[#allocation5 + $0x70] sm:$0xff]
    %v2826 = vld [vmem:[#allocation5 + $0x78] sm:$0xff]
    %v2827 = vld [vmem:[#allocation5 + $0x80] sm:$0xff]
    %v2828 = vld [vmem:[#allocation5 + $0x88] sm:$0xff]
    %v2829 = vld [vmem:[#allocation5 + $0x90] sm:$0xff]
    %v2830 = vld [vmem:[#allocation5 + $0x98] sm:$0xff]
    %v2831 = vld [vmem:[#allocation5 + $0xa0] sm:$0xff]
    %v2832 = vld [vmem:[#allocation5 + $0xa8] sm:$0xff]
    %v2833 = vld [vmem:[#allocation5 + $0xb0] sm:$0xff]
    %v2834 = vld [vmem:[#allocation5 + $0xb8] sm:$0xff]
    %v2835 = vld [vmem:[#allocation5 + $0xc0] sm:$0xff]
    %v2836 = vld [vmem:[#allocation5 + $0xc8] sm:$0xff]
    %v2837 = vld [vmem:[#allocation5 + $0xd0] sm:$0xff]
    %v2838 = vld [vmem:[#allocation5 + $0xd8] sm:$0xff]
    %v2839 = vld [vmem:[#allocation5 + $0xe0] sm:$0xff]
    %v2840 = vld [vmem:[#allocation5 + $0xe8] sm:$0xff]
    %v2841 = vld [vmem:[#allocation5 + $0xf0] sm:$0xff]
    %v2842 = vld [vmem:[#allocation5 + $0xf8] sm:$0xff]
    %v2843 = vld [vmem:[#allocation5 + $0x100] sm:$0xff]
    %v2844 = vld [vmem:[#allocation5 + $0x108] sm:$0xff]
    %v2845 = vld [vmem:[#allocation5 + $0x110] sm:$0xff]
    %v2846 = vld [vmem:[#allocation5 + $0x118] sm:$0xff]
    %v2847 = vld [vmem:[#allocation5 + $0x120] sm:$0xff]
    %v2848 = vld [vmem:[#allocation5 + $0x128] sm:$0xff]
    %v2849 = vld [vmem:[#allocation5 + $0x130] sm:$0xff]
    %v2850 = vld [vmem:[#allocation5 + $0x138] sm:$0xff]
    %v2851 = vld [vmem:[#allocation5 + $0x140] sm:$0xff]
    %v2852 = vld [vmem:[#allocation5 + $0x148] sm:$0xff]
    %v2853 = vld [vmem:[#allocation5 + $0x150] sm:$0xff]
    %v2854 = vld [vmem:[#allocation5 + $0x158] sm:$0xff]
    %v2855 = vld [vmem:[#allocation5 + $0x160] sm:$0xff]
    %v2856 = vld [vmem:[#allocation5 + $0x168] sm:$0xff]
    %v2857 = vld [vmem:[#allocation5 + $0x170] sm:$0xff]
    %v2858 = vld [vmem:[#allocation5 + $0x178] sm:$0xff]
    %v2859 = vld [vmem:[%s7] sm:$0x7]
    %v2861 = vlaneseq
    %v2862 = vshrl.u32 %v2861, 7
    %v2863 = vsub.s32 0, %v2862
    %v2864 = vrot.slane %v2859, %v2863
    %v2865 = vlaneseq
    %v2866 = vshrl.u32 %v2865, 7
    %v2867 = vsub.s32 1, %v2866
    %v2868 = vrot.slane %v2859, %v2867
    %v2869 = vlaneseq
    %v2870 = vshrl.u32 %v2869, 7
    %v2871 = vsub.s32 2, %v2870
    %v2872 = vrot.slane %v2859, %v2871
    %2876 = vmatprep.subr.mxu0 %v2812
    %2877 = vmatpush1.msra.mxu0 %v2811
    %2878 = vmatprep.subr.mxu0 %v2815
    %2879 = vmatpush1.msra.mxu0 %v2814
    %2880 = vmatprep.subr.mxu0 %v2818
    %2881 = vmatpush1.msra.mxu0 %v2817
    %2882 = vmatprep.subr.mxu0 %v2821
    %2883 = vmatpush1.msra.mxu0 %v2820
    %2884 = vmatprep.subr.mxu0 %v2824
    %2885 = vmatpush1.msra.mxu0 %v2823
    %2886 = vmatprep.subr.mxu0 %v2827
    %2887 = vmatpush1.msra.mxu0 %v2826
    %2888 = vmatprep.subr.mxu0 %v2830
    %2889 = vmatpush1.msra.mxu0 %v2829
    %2890 = vmatprep.subr.mxu0 %v2833
    %2891 = vmatpush1.msra.mxu0 %v2832
    %2892 = vmatprep.subr.mxu0 %v2836
    %2893 = vmatpush1.msra.mxu0 %v2835
    %2894 = vmatprep.subr.mxu0 %v2839
    %2895 = vmatpush1.msra.mxu0 %v2838
    %2896 = vmatprep.subr.mxu0 %v2842
    %2897 = vmatpush1.msra.mxu0 %v2841
    %2898 = vmatprep.subr.mxu0 %v2845
    %2899 = vmatpush1.msra.mxu0 %v2844
    %2900 = vmatprep.subr.mxu0 %v2848
    %2901 = vmatpush1.msra.mxu0 %v2847
    %2902 = vmatprep.subr.mxu0 %v2851
    %2903 = vmatpush1.msra.mxu0 %v2850
    %2904 = vmatprep.subr.mxu0 %v2854
    %2905 = vmatpush1.msra.mxu0 %v2853
    %2906 = vmatprep.subr.mxu0 %v2857
    %2907 = vmatpush1.msra.mxu0 %v2856
    %2908 = vmatprep.subr.mxu0 0.0
    %2909 = vmatpush1.msra.mxu0 0.0
    %2910 = vmatprep.subr.mxu0 0.0
    %2911 = vmatpush1.msra.mxu0 0.0
    %2912 = vmatprep.subr.mxu0 0.0
    %2913 = vmatpush1.msra.mxu0 0.0
    %2914 = vmatprep.subr.mxu0 0.0
    %2915 = vmatpush1.msra.mxu0 0.0
    %2916 = vmatprep.subr.mxu0 0.0
    %2917 = vmatpush1.msra.mxu0 0.0
    %2918 = vmatprep.subr.mxu0 0.0
    %2919 = vmatpush1.msra.mxu0 0.0
    %2920 = vmatprep.subr.mxu0 0.0
    %2921 = vmatpush1.msra.mxu0 0.0
    %2922 = vmatprep.subr.mxu0 0.0
    %2923 = vmatpush1.msra.mxu0 0.0
    %2924 = vmatprep.subr.mxu0 0.0
    %2925 = vmatpush1.msra.mxu0 0.0
    %2926 = vmatprep.subr.mxu0 0.0
    %2927 = vmatpush1.msra.mxu0 0.0
    %2928 = vmatprep.subr.mxu0 0.0
    %2929 = vmatpush1.msra.mxu0 0.0
    %2930 = vmatprep.subr.mxu0 0.0
    %2931 = vmatpush1.msra.mxu0 0.0
    %2932 = vmatprep.subr.mxu0 0.0
    %2933 = vmatpush1.msra.mxu0 0.0
    %2934 = vmatprep.subr.mxu0 0.0
    %2935 = vmatpush1.msra.mxu0 0.0
    %2936 = vmatprep.subr.mxu0 0.0
    %2937 = vmatpush1.msra.mxu0 0.0
    %2938 = vmatprep.subr.mxu0 0.0
    %2939 = vmatpush1.msra.mxu0 0.0
    %2940 = vmatprep.mubr.f32.mxu0 0.0
    %2941 = vmatmul.mubr.f32.gmra.mrb[0].mxu0 %v2810
    %v2942 = vpop.f32.mrb[0].mxu0
    %v2943 = vadd.f32 %v2864, %v2942
    %v2944 = vpop.f32.mrb[0].mxu0
    %v2945 = vadd.f32 %v2868, %v2944
    %2946 = vdwg.mxu0
    %2947 = vmatprep.subr.mxu0 0.0
    %2948 = vmatpush1.msra.mxu0 %v2813
    %2949 = vmatprep.subr.mxu0 0.0
    %2950 = vmatpush1.msra.mxu0 %v2816
    %2951 = vmatprep.subr.mxu0 0.0
    %2952 = vmatpush1.msra.mxu0 %v2819
    %2953 = vmatprep.subr.mxu0 0.0
    %2954 = vmatpush1.msra.mxu0 %v2822
    %2955 = vmatprep.subr.mxu0 0.0
    %2956 = vmatpush1.msra.mxu0 %v2825
    %2957 = vmatprep.subr.mxu0 0.0
    %2958 = vmatpush1.msra.mxu0 %v2828
    %2959 = vmatprep.subr.mxu0 0.0
    %2960 = vmatpush1.msra.mxu0 %v2831
    %2961 = vmatprep.subr.mxu0 0.0
    %2962 = vmatpush1.msra.mxu0 %v2834
    %2963 = vmatprep.subr.mxu0 0.0
    %2964 = vmatpush1.msra.mxu0 %v2837
    %2965 = vmatprep.subr.mxu0 0.0
    %2966 = vmatpush1.msra.mxu0 %v2840
    %2967 = vmatprep.subr.mxu0 0.0
    %2968 = vmatpush1.msra.mxu0 %v2843
    %2969 = vmatprep.subr.mxu0 0.0
    %2970 = vmatpush1.msra.mxu0 %v2846
    %2971 = vmatprep.subr.mxu0 0.0
    %2972 = vmatpush1.msra.mxu0 %v2849
    %2973 = vmatprep.subr.mxu0 0.0
    %2974 = vmatpush1.msra.mxu0 %v2852
    %2975 = vmatprep.subr.mxu0 0.0
    %2976 = vmatpush1.msra.mxu0 %v2855
    %2977 = vmatprep.subr.mxu0 0.0
    %2978 = vmatpush1.msra.mxu0 %v2858
    %2979 = vmatprep.subr.mxu0 0.0
    %2980 = vmatpush1.msra.mxu0 0.0
    %2981 = vmatprep.subr.mxu0 0.0
    %2982 = vmatpush1.msra.mxu0 0.0
    %2983 = vmatprep.subr.mxu0 0.0
    %2984 = vmatpush1.msra.mxu0 0.0
    %2985 = vmatprep.subr.mxu0 0.0
    %2986 = vmatpush1.msra.mxu0 0.0
    %2987 = vmatprep.subr.mxu0 0.0
    %2988 = vmatpush1.msra.mxu0 0.0
    %2989 = vmatprep.subr.mxu0 0.0
    %2990 = vmatpush1.msra.mxu0 0.0
    %2991 = vmatprep.subr.mxu0 0.0
    %2992 = vmatpush1.msra.mxu0 0.0
    %2993 = vmatprep.subr.mxu0 0.0
    %2994 = vmatpush1.msra.mxu0 0.0
    %2995 = vmatprep.subr.mxu0 0.0
    %2996 = vmatpush1.msra.mxu0 0.0
    %2997 = vmatprep.subr.mxu0 0.0
    %2998 = vmatpush1.msra.mxu0 0.0
    %2999 = vmatprep.subr.mxu0 0.0
    %3000 = vmatpush1.msra.mxu0 0.0
    %3001 = vmatprep.subr.mxu0 0.0
    %3002 = vmatpush1.msra.mxu0 0.0
    %3003 = vmatprep.subr.mxu0 0.0
    %3004 = vmatpush1.msra.mxu0 0.0
    %3005 = vmatprep.subr.mxu0 0.0
    %3006 = vmatpush1.msra.mxu0 0.0
    %3007 = vmatprep.subr.mxu0 0.0
    %3008 = vmatpush1.msra.mxu0 0.0
    %3009 = vmatprep.subr.mxu0 0.0
    %3010 = vmatpush1.msra.mxu0 0.0
    %3011 = vmatprep.mubr.f32.mxu0 0.0
    %3012 = vmatmul.mubr.f32.gmra.mrb[0].mxu0 %v2810
    %v3013 = vpop.f32.mrb[0].mxu0
    %v3014 = vadd.f32 %v2872, %v3013
    %v3015 = vpop.f32.mrb[0].mxu0
    %3016 = vdwg.mxu0
    %v3017 = vld [vmem:[#allocation7] sm:$0xff]
    %v3018 = vld [vmem:[#allocation7 + $0x8] sm:$0xff]
    %v3019 = vld [vmem:[#allocation7 + $0x10] sm:$0xff]
    %v3020 = vld [vmem:[#allocation7 + $0x18] sm:$0xff]
    %v3021 = vld [vmem:[#allocation7 + $0x20] sm:$0xff]
    %v3022 = vld [vmem:[#allocation7 + $0x28] sm:$0xff]
    %v3023 = vld [vmem:[#allocation7 + $0x30] sm:$0xff]
    %v3024 = vld [vmem:[#allocation7 + $0x38] sm:$0xff]
    %v3025 = vld [vmem:[#allocation7 + $0x40] sm:$0xff]
    %v3026 = vld [vmem:[#allocation7 + $0x48] sm:$0xff]
    %v3027 = vld [vmem:[#allocation7 + $0x50] sm:$0xff]
    %v3028 = vld [vmem:[#allocation7 + $0x58] sm:$0xff]
    %v3029 = vld [vmem:[#allocation7 + $0x60] sm:$0xff]
    %v3030 = vld [vmem:[#allocation7 + $0x68] sm:$0xff]
    %v3031 = vld [vmem:[#allocation7 + $0x70] sm:$0xff]
    %v3032 = vld [vmem:[#allocation7 + $0x78] sm:$0xff]
    %v3033 = vld [vmem:[#allocation7 + $0x80] sm:$0xff]
    %v3034 = vld [vmem:[#allocation7 + $0x88] sm:$0xff]
    %v3035 = vld [vmem:[#allocation7 + $0x90] sm:$0xff]
    %v3036 = vld [vmem:[#allocation7 + $0x98] sm:$0xff]
    %v3037 = vld [vmem:[#allocation7 + $0xa0] sm:$0xff]
    %v3038 = vld [vmem:[#allocation7 + $0xa8] sm:$0xff]
    %v3039 = vld [vmem:[#allocation7 + $0xb0] sm:$0xff]
    %v3040 = vld [vmem:[#allocation7 + $0xb8] sm:$0xff]
    %v3041 = vld [vmem:[#allocation7 + $0xc0] sm:$0xff]
    %v3042 = vld [vmem:[#allocation7 + $0xc8] sm:$0xff]
    %v3043 = vld [vmem:[#allocation7 + $0xd0] sm:$0xff]
    %v3044 = vld [vmem:[#allocation7 + $0xd8] sm:$0xff]
    %v3045 = vld [vmem:[#allocation7 + $0xe0] sm:$0xff]
    %v3046 = vld [vmem:[#allocation7 + $0xe8] sm:$0xff]
    %v3047 = vld [vmem:[#allocation7 + $0xf0] sm:$0xff]
    %v3048 = vld [vmem:[#allocation7 + $0xf8] sm:$0xff]
    %v3049 = vld [vmem:[#allocation7 + $0x100] sm:$0xff]
    %v3050 = vld [vmem:[#allocation7 + $0x108] sm:$0xff]
    %v3051 = vld [vmem:[#allocation7 + $0x110] sm:$0xff]
    %v3052 = vld [vmem:[#allocation7 + $0x118] sm:$0xff]
    %v3053 = vld [vmem:[#allocation7 + $0x120] sm:$0xff]
    %v3054 = vld [vmem:[#allocation7 + $0x128] sm:$0xff]
    %v3055 = vld [vmem:[#allocation7 + $0x130] sm:$0xff]
    %v3056 = vld [vmem:[#allocation7 + $0x138] sm:$0xff]
    %v3057 = vld [vmem:[#allocation7 + $0x140] sm:$0xff]
    %v3058 = vld [vmem:[#allocation7 + $0x148] sm:$0xff]
    %v3059 = vld [vmem:[#allocation7 + $0x150] sm:$0xff]
    %v3060 = vld [vmem:[#allocation7 + $0x158] sm:$0xff]
    %v3061 = vld [vmem:[#allocation7 + $0x160] sm:$0xff]
    %v3062 = vld [vmem:[#allocation7 + $0x168] sm:$0xff]
    %v3063 = vld [vmem:[#allocation7 + $0x170] sm:$0xff]
    %v3064 = vld [vmem:[#allocation7 + $0x178] sm:$0xff]
    %v3065 = vld [vmem:[%s9] sm:$0x7]
    %v3067 = vlaneseq
    %v3068 = vshrl.u32 %v3067, 7
    %v3069 = vsub.s32 0, %v3068
    %v3070 = vrot.slane %v3065, %v3069
    %v3071 = vlaneseq
    %v3072 = vshrl.u32 %v3071, 7
    %v3073 = vsub.s32 1, %v3072
    %v3074 = vrot.slane %v3065, %v3073
    %v3075 = vlaneseq
    %v3076 = vshrl.u32 %v3075, 7
    %v3077 = vsub.s32 2, %v3076
    %v3078 = vrot.slane %v3065, %v3077
    %3082 = vmatprep.subr.mxu0 %v3018
    %3083 = vmatpush1.msra.mxu0 %v3017
    %3084 = vmatprep.subr.mxu0 %v3021
    %3085 = vmatpush1.msra.mxu0 %v3020
    %3086 = vmatprep.subr.mxu0 %v3024
    %3087 = vmatpush1.msra.mxu0 %v3023
    %3088 = vmatprep.subr.mxu0 %v3027
    %3089 = vmatpush1.msra.mxu0 %v3026
    %3090 = vmatprep.subr.mxu0 %v3030
    %3091 = vmatpush1.msra.mxu0 %v3029
    %3092 = vmatprep.subr.mxu0 %v3033
    %3093 = vmatpush1.msra.mxu0 %v3032
    %3094 = vmatprep.subr.mxu0 %v3036
    %3095 = vmatpush1.msra.mxu0 %v3035
    %3096 = vmatprep.subr.mxu0 %v3039
    %3097 = vmatpush1.msra.mxu0 %v3038
    %3098 = vmatprep.subr.mxu0 %v3042
    %3099 = vmatpush1.msra.mxu0 %v3041
    %3100 = vmatprep.subr.mxu0 %v3045
    %3101 = vmatpush1.msra.mxu0 %v3044
    %3102 = vmatprep.subr.mxu0 %v3048
    %3103 = vmatpush1.msra.mxu0 %v3047
    %3104 = vmatprep.subr.mxu0 %v3051
    %3105 = vmatpush1.msra.mxu0 %v3050
    %3106 = vmatprep.subr.mxu0 %v3054
    %3107 = vmatpush1.msra.mxu0 %v3053
    %3108 = vmatprep.subr.mxu0 %v3057
    %3109 = vmatpush1.msra.mxu0 %v3056
    %3110 = vmatprep.subr.mxu0 %v3060
    %3111 = vmatpush1.msra.mxu0 %v3059
    %3112 = vmatprep.subr.mxu0 %v3063
    %3113 = vmatpush1.msra.mxu0 %v3062
    %3114 = vmatprep.subr.mxu0 0.0
    %3115 = vmatpush1.msra.mxu0 0.0
    %3116 = vmatprep.subr.mxu0 0.0
    %3117 = vmatpush1.msra.mxu0 0.0
    %3118 = vmatprep.subr.mxu0 0.0
    %3119 = vmatpush1.msra.mxu0 0.0
    %3120 = vmatprep.subr.mxu0 0.0
    %3121 = vmatpush1.msra.mxu0 0.0
    %3122 = vmatprep.subr.mxu0 0.0
    %3123 = vmatpush1.msra.mxu0 0.0
    %3124 = vmatprep.subr.mxu0 0.0
    %3125 = vmatpush1.msra.mxu0 0.0
    %3126 = vmatprep.subr.mxu0 0.0
    %3127 = vmatpush1.msra.mxu0 0.0
    %3128 = vmatprep.subr.mxu0 0.0
    %3129 = vmatpush1.msra.mxu0 0.0
    %3130 = vmatprep.subr.mxu0 0.0
    %3131 = vmatpush1.msra.mxu0 0.0
    %3132 = vmatprep.subr.mxu0 0.0
    %3133 = vmatpush1.msra.mxu0 0.0
    %3134 = vmatprep.subr.mxu0 0.0
    %3135 = vmatpush1.msra.mxu0 0.0
    %3136 = vmatprep.subr.mxu0 0.0
    %3137 = vmatpush1.msra.mxu0 0.0
    %3138 = vmatprep.subr.mxu0 0.0
    %3139 = vmatpush1.msra.mxu0 0.0
    %3140 = vmatprep.subr.mxu0 0.0
    %3141 = vmatpush1.msra.mxu0 0.0
    %3142 = vmatprep.subr.mxu0 0.0
    %3143 = vmatpush1.msra.mxu0 0.0
    %3144 = vmatprep.subr.mxu0 0.0
    %3145 = vmatpush1.msra.mxu0 0.0
    %3146 = vmatprep.mubr.f32.mxu0 0.0
    %3147 = vmatmul.mubr.f32.gmra.mrb[0].mxu0 %v2596
    %v3148 = vpop.f32.mrb[0].mxu0
    %v3149 = vadd.f32 %v3070, %v3148
    %v3150 = vpop.f32.mrb[0].mxu0
    %v3151 = vadd.f32 %v3074, %v3150
    %3152 = vdwg.mxu0
    %3153 = vmatprep.subr.mxu0 0.0
    %3154 = vmatpush1.msra.mxu0 %v3019
    %3155 = vmatprep.subr.mxu0 0.0
    %3156 = vmatpush1.msra.mxu0 %v3022
    %3157 = vmatprep.subr.mxu0 0.0
    %3158 = vmatpush1.msra.mxu0 %v3025
    %3159 = vmatprep.subr.mxu0 0.0
    %3160 = vmatpush1.msra.mxu0 %v3028
    %3161 = vmatprep.subr.mxu0 0.0
    %3162 = vmatpush1.msra.mxu0 %v3031
    %3163 = vmatprep.subr.mxu0 0.0
    %3164 = vmatpush1.msra.mxu0 %v3034
    %3165 = vmatprep.subr.mxu0 0.0
    %3166 = vmatpush1.msra.mxu0 %v3037
    %3167 = vmatprep.subr.mxu0 0.0
    %3168 = vmatpush1.msra.mxu0 %v3040
    %3169 = vmatprep.subr.mxu0 0.0
    %3170 = vmatpush1.msra.mxu0 %v3043
    %3171 = vmatprep.subr.mxu0 0.0
    %3172 = vmatpush1.msra.mxu0 %v3046
    %3173 = vmatprep.subr.mxu0 0.0
    %3174 = vmatpush1.msra.mxu0 %v3049
    %3175 = vmatprep.subr.mxu0 0.0
    %3176 = vmatpush1.msra.mxu0 %v3052
    %3177 = vmatprep.subr.mxu0 0.0
    %3178 = vmatpush1.msra.mxu0 %v3055
    %3179 = vmatprep.subr.mxu0 0.0
    %3180 = vmatpush1.msra.mxu0 %v3058
    %3181 = vmatprep.subr.mxu0 0.0
    %3182 = vmatpush1.msra.mxu0 %v3061
    %3183 = vmatprep.subr.mxu0 0.0
    %3184 = vmatpush1.msra.mxu0 %v3064
    %3185 = vmatprep.subr.mxu0 0.0
    %3186 = vmatpush1.msra.mxu0 0.0
    %3187 = vmatprep.subr.mxu0 0.0
    %3188 = vmatpush1.msra.mxu0 0.0
    %3189 = vmatprep.subr.mxu0 0.0
    %3190 = vmatpush1.msra.mxu0 0.0
    %3191 = vmatprep.subr.mxu0 0.0
    %3192 = vmatpush1.msra.mxu0 0.0
    %3193 = vmatprep.subr.mxu0 0.0
    %3194 = vmatpush1.msra.mxu0 0.0
    %3195 = vmatprep.subr.mxu0 0.0
    %3196 = vmatpush1.msra.mxu0 0.0
    %3197 = vmatprep.subr.mxu0 0.0
    %3198 = vmatpush1.msra.mxu0 0.0
    %3199 = vmatprep.subr.mxu0 0.0
    %3200 = vmatpush1.msra.mxu0 0.0
    %3201 = vmatprep.subr.mxu0 0.0
    %3202 = vmatpush1.msra.mxu0 0.0
    %3203 = vmatprep.subr.mxu0 0.0
    %3204 = vmatpush1.msra.mxu0 0.0
    %3205 = vmatprep.subr.mxu0 0.0
    %3206 = vmatpush1.msra.mxu0 0.0
    %3207 = vmatprep.subr.mxu0 0.0
    %3208 = vmatpush1.msra.mxu0 0.0
    %3209 = vmatprep.subr.mxu0 0.0
    %3210 = vmatpush1.msra.mxu0 0.0
    %3211 = vmatprep.subr.mxu0 0.0
    %3212 = vmatpush1.msra.mxu0 0.0
    %3213 = vmatprep.subr.mxu0 0.0
    %3214 = vmatpush1.msra.mxu0 0.0
    %3215 = vmatprep.subr.mxu0 0.0
    %3216 = vmatpush1.msra.mxu0 0.0
    %3217 = vmatprep.mubr.f32.mxu0 0.0
    %3218 = vmatmul.mubr.f32.gmra.mrb[0].mxu0 %v2596
    %v3219 = vpop.f32.mrb[0].mxu0
    %v3220 = vadd.f32 %v3078, %v3219
    %v3221 = vpop.f32.mrb[0].mxu0
    %3222 = vdwg.mxu0
    %v3223 = vadd.f32 %v2943, %v3149
    %v3224 = vxor.u32 %v3223, 2147483648
    %v3225 = vmul.f32 %v3224, 1.442695
    %v3226 = vpow.pop %v3225
    %v3227 = vadd.f32 %v3226, 1.0
    %v3228 = vrcp.pop %v3227
    %v3229 = vmul.f32 1.0, %v3228
    %v3230 = vadd.f32 %v2945, %v3151
    %v3231 = vxor.u32 %v3230, 2147483648
    %v3232 = vmul.f32 %v3231, 1.442695
    %v3233 = vpow.pop %v3232
    %v3234 = vadd.f32 %v3233, 1.0
    %v3235 = vrcp.pop %v3234
    %v3236 = vmul.f32 1.0, %v3235
    %v3237 = vmul.f32 %v3229, %v3220
    %v3238 = vadd.f32 %v3014, %v3237
    %v3239 = vtanh.pop %v3238
    %v3240 = vsub.f32 1.0, %v3236
    %v3241 = vmul.f32 %v3240, %v3239
    %v3242 = vmul.f32 %v3236, %v2596
    %v3243 = vadd.f32 %v3241, %v3242
    %v3244 = vld [vmem:[#allocation8] sm:$0xff]
    %v3245 = vld [vmem:[#allocation8 + $0x8] sm:$0xff]
    %v3246 = vld [vmem:[#allocation8 + $0x10] sm:$0xff]
    %v3247 = vld [vmem:[#allocation8 + $0x18] sm:$0xff]
    %v3248 = vld [vmem:[#allocation8 + $0x20] sm:$0xff]
    %v3249 = vld [vmem:[#allocation8 + $0x28] sm:$0xff]
    %v3250 = vld [vmem:[#allocation8 + $0x30] sm:$0xff]
    %v3251 = vld [vmem:[#allocation8 + $0x38] sm:$0xff]
    %v3252 = vld [vmem:[#allocation8 + $0x40] sm:$0xff]
    %v3253 = vld [vmem:[#allocation8 + $0x48] sm:$0xff]
    %v3254 = vld [vmem:[#allocation8 + $0x50] sm:$0xff]
    %v3255 = vld [vmem:[#allocation8 + $0x58] sm:$0xff]
    %v3256 = vld [vmem:[#allocation8 + $0x60] sm:$0xff]
    %v3257 = vld [vmem:[#allocation8 + $0x68] sm:$0xff]
    %v3258 = vld [vmem:[#allocation8 + $0x70] sm:$0xff]
    %v3259 = vld [vmem:[#allocation8 + $0x78] sm:$0xff]
    %v3260 = vld [vmem:[%s11] sm:$0x1]
    %v3262 = vlaneseq
    %v3263 = vshrl.u32 %v3262, 7
    %v3264 = vsub.s32 0, %v3263
    %v3265 = vrot.slane %v3260, %v3264
    %3267 = vmatprep.subr.mxu0 0.0
    %3268 = vmatpush1.msra.mxu0 %v3244
    %3269 = vmatprep.subr.mxu0 0.0
    %3270 = vmatpush1.msra.mxu0 %v3245
    %3271 = vmatprep.subr.mxu0 0.0
    %3272 = vmatpush1.msra.mxu0 %v3246
    %3273 = vmatprep.subr.mxu0 0.0
    %3274 = vmatpush1.msra.mxu0 %v3247
    %3275 = vmatprep.subr.mxu0 0.0
    %3276 = vmatpush1.msra.mxu0 %v3248
    %3277 = vmatprep.subr.mxu0 0.0
    %3278 = vmatpush1.msra.mxu0 %v3249
    %3279 = vmatprep.subr.mxu0 0.0
    %3280 = vmatpush1.msra.mxu0 %v3250
    %3281 = vmatprep.subr.mxu0 0.0
    %3282 = vmatpush1.msra.mxu0 %v3251
    %3283 = vmatprep.subr.mxu0 0.0
    %3284 = vmatpush1.msra.mxu0 %v3252
    %3285 = vmatprep.subr.mxu0 0.0
    %3286 = vmatpush1.msra.mxu0 %v3253
    %3287 = vmatprep.subr.mxu0 0.0
    %3288 = vmatpush1.msra.mxu0 %v3254
    %3289 = vmatprep.subr.mxu0 0.0
    %3290 = vmatpush1.msra.mxu0 %v3255
    %3291 = vmatprep.subr.mxu0 0.0
    %3292 = vmatpush1.msra.mxu0 %v3256
    %3293 = vmatprep.subr.mxu0 0.0
    %3294 = vmatpush1.msra.mxu0 %v3257
    %3295 = vmatprep.subr.mxu0 0.0
    %3296 = vmatpush1.msra.mxu0 %v3258
    %3297 = vmatprep.subr.mxu0 0.0
    %3298 = vmatpush1.msra.mxu0 %v3259
    %3299 = vmatprep.subr.mxu0 0.0
    %3300 = vmatpush1.msra.mxu0 0.0
    %3301 = vmatprep.subr.mxu0 0.0
    %3302 = vmatpush1.msra.mxu0 0.0
    %3303 = vmatprep.subr.mxu0 0.0
    %3304 = vmatpush1.msra.mxu0 0.0
    %3305 = vmatprep.subr.mxu0 0.0
    %3306 = vmatpush1.msra.mxu0 0.0
    %3307 = vmatprep.subr.mxu0 0.0
    %3308 = vmatpush1.msra.mxu0 0.0
    %3309 = vmatprep.subr.mxu0 0.0
    %3310 = vmatpush1.msra.mxu0 0.0
    %3311 = vmatprep.subr.mxu0 0.0
    %3312 = vmatpush1.msra.mxu0 0.0
    %3313 = vmatprep.subr.mxu0 0.0
    %3314 = vmatpush1.msra.mxu0 0.0
    %3315 = vmatprep.subr.mxu0 0.0
    %3316 = vmatpush1.msra.mxu0 0.0
    %3317 = vmatprep.subr.mxu0 0.0
    %3318 = vmatpush1.msra.mxu0 0.0
    %3319 = vmatprep.subr.mxu0 0.0
    %3320 = vmatpush1.msra.mxu0 0.0
    %3321 = vmatprep.subr.mxu0 0.0
    %3322 = vmatpush1.msra.mxu0 0.0
    %3323 = vmatprep.subr.mxu0 0.0
    %3324 = vmatpush1.msra.mxu0 0.0
    %3325 = vmatprep.subr.mxu0 0.0
    %3326 = vmatpush1.msra.mxu0 0.0
    %3327 = vmatprep.subr.mxu0 0.0
    %3328 = vmatpush1.msra.mxu0 0.0
    %3329 = vmatprep.subr.mxu0 0.0
    %3330 = vmatpush1.msra.mxu0 0.0
    %3331 = vmatprep.mubr.f32.mxu0 0.0
    %3332 = vmatmul.mubr.f32.gmra.mrb[0].mxu0 %v3243
    %v3333 = vpop.f32.mrb[0].mxu0
    %v3334 = vadd.f32 %v3265, %v3333
    %v3335 = vpop.f32.mrb[0].mxu0
    %3336 = vdwg.mxu0
    %s3337 = scalar_lea.vmem %s12, 32
    %3338 = vst [vmem:[%s3337] sm:$0xff] %v3334
    %s3339 = scalar_lea.vmem [#allocation3], 40
    %v3340 = vld [vmem:[%s3339] sm:$0xff]
    %v3341 = vld [vmem:[%s2] sm:$0xff]
    %v3342 = vld [vmem:[%s2 + $0x8] sm:$0xff]
    %v3343 = vld [vmem:[%s2 + $0x10] sm:$0xff]
    %v3344 = vld [vmem:[%s2 + $0x18] sm:$0xff]
    %v3345 = vld [vmem:[%s2 + $0x20] sm:$0xff]
    %v3346 = vld [vmem:[%s2 + $0x28] sm:$0xff]
    %v3347 = vld [vmem:[%s3] sm:$0x1]
    %v3349 = vlaneseq
    %v3350 = vshrl.u32 %v3349, 7
    %v3351 = vsub.s32 0, %v3350
    %v3352 = vrot.slane %v3347, %v3351
    %v3355 = vsel %vm119, %v3340, 0
    %3357 = vmatprep.subr.mxu0 0.0
    %3358 = vmatpush1.msra.mxu0 %v3341
    %3359 = vmatprep.subr.mxu0 0.0
    %3360 = vmatpush1.msra.mxu0 %v3342
    %3361 = vmatprep.subr.mxu0 0.0
    %3362 = vmatpush1.msra.mxu0 %v3343
    %3363 = vmatprep.subr.mxu0 0.0
    %3364 = vmatpush1.msra.mxu0 %v3344
    %3365 = vmatprep.subr.mxu0 0.0
    %3366 = vmatpush1.msra.mxu0 %v3345
    %3367 = vmatprep.subr.mxu0 0.0
    %3368 = vmatpush1.msra.mxu0 %v3346
    %3369 = vmatprep.subr.mxu0 0.0
    %3370 = vmatpush1.msra.mxu0 0.0
    %3371 = vmatprep.subr.mxu0 0.0
    %3372 = vmatpush1.msra.mxu0 0.0
    %3373 = vmatprep.subr.mxu0 0.0
    %3374 = vmatpush1.msra.mxu0 0.0
    %3375 = vmatprep.subr.mxu0 0.0
    %3376 = vmatpush1.msra.mxu0 0.0
    %3377 = vmatprep.subr.mxu0 0.0
    %3378 = vmatpush1.msra.mxu0 0.0
    %3379 = vmatprep.subr.mxu0 0.0
    %3380 = vmatpush1.msra.mxu0 0.0
    %3381 = vmatprep.subr.mxu0 0.0
    %3382 = vmatpush1.msra.mxu0 0.0
    %3383 = vmatprep.subr.mxu0 0.0
    %3384 = vmatpush1.msra.mxu0 0.0
    %3385 = vmatprep.subr.mxu0 0.0
    %3386 = vmatpush1.msra.mxu0 0.0
    %3387 = vmatprep.subr.mxu0 0.0
    %3388 = vmatpush1.msra.mxu0 0.0
    %3389 = vmatprep.subr.mxu0 0.0
    %3390 = vmatpush1.msra.mxu0 0.0
    %3391 = vmatprep.subr.mxu0 0.0
    %3392 = vmatpush1.msra.mxu0 0.0
    %3393 = vmatprep.subr.mxu0 0.0
    %3394 = vmatpush1.msra.mxu0 0.0
    %3395 = vmatprep.subr.mxu0 0.0
    %3396 = vmatpush1.msra.mxu0 0.0
    %3397 = vmatprep.subr.mxu0 0.0
    %3398 = vmatpush1.msra.mxu0 0.0
    %3399 = vmatprep.subr.mxu0 0.0
    %3400 = vmatpush1.msra.mxu0 0.0
    %3401 = vmatprep.subr.mxu0 0.0
    %3402 = vmatpush1.msra.mxu0 0.0
    %3403 = vmatprep.subr.mxu0 0.0
    %3404 = vmatpush1.msra.mxu0 0.0
    %3405 = vmatprep.subr.mxu0 0.0
    %3406 = vmatpush1.msra.mxu0 0.0
    %3407 = vmatprep.subr.mxu0 0.0
    %3408 = vmatpush1.msra.mxu0 0.0
    %3409 = vmatprep.subr.mxu0 0.0
    %3410 = vmatpush1.msra.mxu0 0.0
    %3411 = vmatprep.subr.mxu0 0.0
    %3412 = vmatpush1.msra.mxu0 0.0
    %3413 = vmatprep.subr.mxu0 0.0
    %3414 = vmatpush1.msra.mxu0 0.0
    %3415 = vmatprep.subr.mxu0 0.0
    %3416 = vmatpush1.msra.mxu0 0.0
    %3417 = vmatprep.subr.mxu0 0.0
    %3418 = vmatpush1.msra.mxu0 0.0
    %3419 = vmatprep.subr.mxu0 0.0
    %3420 = vmatpush1.msra.mxu0 0.0
    %3421 = vmatprep.mubr.f32.mxu0 0.0
    %3422 = vmatmul.mubr.f32.gmra.mrb[0].mxu0 %v3355
    %v3423 = vpop.f32.mrb[0].mxu0
    %v3424 = vadd.f32 %v3352, %v3423
    %v3425 = vpop.f32.mrb[0].mxu0
    %3426 = vdwg.mxu0
    %3427 = vadd.xlane.f32.xlu0 %v3424
    %v3428 = vpop.xlane.xlu0 %3427
    %v3429 = vmul.f32 %v3428, 0.03125
    %v3430 = vmul.f32 %v3424, %v3424
    %3431 = vadd.xlane.f32.xlu0 %v3430
    %v3432 = vpop.xlane.xlu0 %3431
    %v3433 = vmul.f32 %v3432, 0.03125
    %v3434 = vmul.f32 %v3429, %v3429
    %v3435 = vsub.f32 %v3433, %v3434
    %v3436 = vmax.f32 %v3435, 0.0
    %v3437 = vsub.f32 %v3424, %v3429
    %v3438 = vadd.f32 %v3436, 1e-05
    %v3439 = vrsqrt.pop %v3438
    %v3440 = vmul.f32 %v3437, %v3439
    %v3441 = vld [vmem:[%s4] sm:$0x1]
    %v3443 = vlaneseq
    %v3444 = vshrl.u32 %v3443, 7
    %v3445 = vsub.s32 0, %v3444
    %v3446 = vrot.slane %v3441, %v3445
    %v3448 = vmul.f32 %v3440, %v3446
    %v3449 = vld [vmem:[%s5] sm:$0x1]
    %v3451 = vlaneseq
    %v3452 = vshrl.u32 %v3451, 7
    %v3453 = vsub.s32 0, %v3452
    %v3454 = vrot.slane %v3449, %v3453
    %v3456 = vadd.f32 %v3448, %v3454
    %v3457 = vmax.f32 %v3456, 0.0
    %v3458 = vld [vmem:[#allocation5] sm:$0xff]
    %v3459 = vld [vmem:[#allocation5 + $0x8] sm:$0xff]
    %v3460 = vld [vmem:[#allocation5 + $0x10] sm:$0xff]
    %v3461 = vld [vmem:[#allocation5 + $0x18] sm:$0xff]
    %v3462 = vld [vmem:[#allocation5 + $0x20] sm:$0xff]
    %v3463 = vld [vmem:[#allocation5 + $0x28] sm:$0xff]
    %v3464 = vld [vmem:[#allocation5 + $0x30] sm:$0xff]
    %v3465 = vld [vmem:[#allocation5 + $0x38] sm:$0xff]
    %v3466 = vld [vmem:[#allocation5 + $0x40] sm:$0xff]
    %v3467 = vld [vmem:[#allocation5 + $0x48] sm:$0xff]
    %v3468 = vld [vmem:[#allocation5 + $0x50] sm:$0xff]
    %v3469 = vld [vmem:[#allocation5 + $0x58] sm:$0xff]
    %v3470 = vld [vmem:[#allocation5 + $0x60] sm:$0xff]
    %v3471 = vld [vmem:[#allocation5 + $0x68] sm:$0xff]
    %v3472 = vld [vmem:[#allocation5 + $0x70] sm:$0xff]
    %v3473 = vld [vmem:[#allocation5 + $0x78] sm:$0xff]
    %v3474 = vld [vmem:[#allocation5 + $0x80] sm:$0xff]
    %v3475 = vld [vmem:[#allocation5 + $0x88] sm:$0xff]
    %v3476 = vld [vmem:[#allocation5 + $0x90] sm:$0xff]
    %v3477 = vld [vmem:[#allocation5 + $0x98] sm:$0xff]
    %v3478 = vld [vmem:[#allocation5 + $0xa0] sm:$0xff]
    %v3479 = vld [vmem:[#allocation5 + $0xa8] sm:$0xff]
    %v3480 = vld [vmem:[#allocation5 + $0xb0] sm:$0xff]
    %v3481 = vld [vmem:[#allocation5 + $0xb8] sm:$0xff]
    %v3482 = vld [vmem:[#allocation5 + $0xc0] sm:$0xff]
    %v3483 = vld [vmem:[#allocation5 + $0xc8] sm:$0xff]
    %v3484 = vld [vmem:[#allocation5 + $0xd0] sm:$0xff]
    %v3485 = vld [vmem:[#allocation5 + $0xd8] sm:$0xff]
    %v3486 = vld [vmem:[#allocation5 + $0xe0] sm:$0xff]
    %v3487 = vld [vmem:[#allocation5 + $0xe8] sm:$0xff]
    %v3488 = vld [vmem:[#allocation5 + $0xf0] sm:$0xff]
    %v3489 = vld [vmem:[#allocation5 + $0xf8] sm:$0xff]
    %v3490 = vld [vmem:[#allocation5 + $0x100] sm:$0xff]
    %v3491 = vld [vmem:[#allocation5 + $0x108] sm:$0xff]
    %v3492 = vld [vmem:[#allocation5 + $0x110] sm:$0xff]
    %v3493 = vld [vmem:[#allocation5 + $0x118] sm:$0xff]
    %v3494 = vld [vmem:[#allocation5 + $0x120] sm:$0xff]
    %v3495 = vld [vmem:[#allocation5 + $0x128] sm:$0xff]
    %v3496 = vld [vmem:[#allocation5 + $0x130] sm:$0xff]
    %v3497 = vld [vmem:[#allocation5 + $0x138] sm:$0xff]
    %v3498 = vld [vmem:[#allocation5 + $0x140] sm:$0xff]
    %v3499 = vld [vmem:[#allocation5 + $0x148] sm:$0xff]
    %v3500 = vld [vmem:[#allocation5 + $0x150] sm:$0xff]
    %v3501 = vld [vmem:[#allocation5 + $0x158] sm:$0xff]
    %v3502 = vld [vmem:[#allocation5 + $0x160] sm:$0xff]
    %v3503 = vld [vmem:[#allocation5 + $0x168] sm:$0xff]
    %v3504 = vld [vmem:[#allocation5 + $0x170] sm:$0xff]
    %v3505 = vld [vmem:[#allocation5 + $0x178] sm:$0xff]
    %v3506 = vld [vmem:[%s7] sm:$0x7]
    %v3508 = vlaneseq
    %v3509 = vshrl.u32 %v3508, 7
    %v3510 = vsub.s32 0, %v3509
    %v3511 = vrot.slane %v3506, %v3510
    %v3512 = vlaneseq
    %v3513 = vshrl.u32 %v3512, 7
    %v3514 = vsub.s32 1, %v3513
    %v3515 = vrot.slane %v3506, %v3514
    %v3516 = vlaneseq
    %v3517 = vshrl.u32 %v3516, 7
    %v3518 = vsub.s32 2, %v3517
    %v3519 = vrot.slane %v3506, %v3518
    %3523 = vmatprep.subr.mxu0 %v3459
    %3524 = vmatpush1.msra.mxu0 %v3458
    %3525 = vmatprep.subr.mxu0 %v3462
    %3526 = vmatpush1.msra.mxu0 %v3461
    %3527 = vmatprep.subr.mxu0 %v3465
    %3528 = vmatpush1.msra.mxu0 %v3464
    %3529 = vmatprep.subr.mxu0 %v3468
    %3530 = vmatpush1.msra.mxu0 %v3467
    %3531 = vmatprep.subr.mxu0 %v3471
    %3532 = vmatpush1.msra.mxu0 %v3470
    %3533 = vmatprep.subr.mxu0 %v3474
    %3534 = vmatpush1.msra.mxu0 %v3473
    %3535 = vmatprep.subr.mxu0 %v3477
    %3536 = vmatpush1.msra.mxu0 %v3476
    %3537 = vmatprep.subr.mxu0 %v3480
    %3538 = vmatpush1.msra.mxu0 %v3479
    %3539 = vmatprep.subr.mxu0 %v3483
    %3540 = vmatpush1.msra.mxu0 %v3482
    %3541 = vmatprep.subr.mxu0 %v3486
    %3542 = vmatpush1.msra.mxu0 %v3485
    %3543 = vmatprep.subr.mxu0 %v3489
    %3544 = vmatpush1.msra.mxu0 %v3488
    %3545 = vmatprep.subr.mxu0 %v3492
    %3546 = vmatpush1.msra.mxu0 %v3491
    %3547 = vmatprep.subr.mxu0 %v3495
    %3548 = vmatpush1.msra.mxu0 %v3494
    %3549 = vmatprep.subr.mxu0 %v3498
    %3550 = vmatpush1.msra.mxu0 %v3497
    %3551 = vmatprep.subr.mxu0 %v3501
    %3552 = vmatpush1.msra.mxu0 %v3500
    %3553 = vmatprep.subr.mxu0 %v3504
    %3554 = vmatpush1.msra.mxu0 %v3503
    %3555 = vmatprep.subr.mxu0 0.0
    %3556 = vmatpush1.msra.mxu0 0.0
    %3557 = vmatprep.subr.mxu0 0.0
    %3558 = vmatpush1.msra.mxu0 0.0
    %3559 = vmatprep.subr.mxu0 0.0
    %3560 = vmatpush1.msra.mxu0 0.0
    %3561 = vmatprep.subr.mxu0 0.0
    %3562 = vmatpush1.msra.mxu0 0.0
    %3563 = vmatprep.subr.mxu0 0.0
    %3564 = vmatpush1.msra.mxu0 0.0
    %3565 = vmatprep.subr.mxu0 0.0
    %3566 = vmatpush1.msra.mxu0 0.0
    %3567 = vmatprep.subr.mxu0 0.0
    %3568 = vmatpush1.msra.mxu0 0.0
    %3569 = vmatprep.subr.mxu0 0.0
    %3570 = vmatpush1.msra.mxu0 0.0
    %3571 = vmatprep.subr.mxu0 0.0
    %3572 = vmatpush1.msra.mxu0 0.0
    %3573 = vmatprep.subr.mxu0 0.0
    %3574 = vmatpush1.msra.mxu0 0.0
    %3575 = vmatprep.subr.mxu0 0.0
    %3576 = vmatpush1.msra.mxu0 0.0
    %3577 = vmatprep.subr.mxu0 0.0
    %3578 = vmatpush1.msra.mxu0 0.0
    %3579 = vmatprep.subr.mxu0 0.0
    %3580 = vmatpush1.msra.mxu0 0.0
    %3581 = vmatprep.subr.mxu0 0.0
    %3582 = vmatpush1.msra.mxu0 0.0
    %3583 = vmatprep.subr.mxu0 0.0
    %3584 = vmatpush1.msra.mxu0 0.0
    %3585 = vmatprep.subr.mxu0 0.0
    %3586 = vmatpush1.msra.mxu0 0.0
    %3587 = vmatprep.mubr.f32.mxu0 0.0
    %3588 = vmatmul.mubr.f32.gmra.mrb[0].mxu0 %v3457
    %v3589 = vpop.f32.mrb[0].mxu0
    %v3590 = vadd.f32 %v3511, %v3589
    %v3591 = vpop.f32.mrb[0].mxu0
    %v3592 = vadd.f32 %v3515, %v3591
    %3593 = vdwg.mxu0
    %3594 = vmatprep.subr.mxu0 0.0
    %3595 = vmatpush1.msra.mxu0 %v3460
    %3596 = vmatprep.subr.mxu0 0.0
    %3597 = vmatpush1.msra.mxu0 %v3463
    %3598 = vmatprep.subr.mxu0 0.0
    %3599 = vmatpush1.msra.mxu0 %v3466
    %3600 = vmatprep.subr.mxu0 0.0
    %3601 = vmatpush1.msra.mxu0 %v3469
    %3602 = vmatprep.subr.mxu0 0.0
    %3603 = vmatpush1.msra.mxu0 %v3472
    %3604 = vmatprep.subr.mxu0 0.0
    %3605 = vmatpush1.msra.mxu0 %v3475
    %3606 = vmatprep.subr.mxu0 0.0
    %3607 = vmatpush1.msra.mxu0 %v3478
    %3608 = vmatprep.subr.mxu0 0.0
    %3609 = vmatpush1.msra.mxu0 %v3481
    %3610 = vmatprep.subr.mxu0 0.0
    %3611 = vmatpush1.msra.mxu0 %v3484
    %3612 = vmatprep.subr.mxu0 0.0
    %3613 = vmatpush1.msra.mxu0 %v3487
    %3614 = vmatprep.subr.mxu0 0.0
    %3615 = vmatpush1.msra.mxu0 %v3490
    %3616 = vmatprep.subr.mxu0 0.0
    %3617 = vmatpush1.msra.mxu0 %v3493
    %3618 = vmatprep.subr.mxu0 0.0
    %3619 = vmatpush1.msra.mxu0 %v3496
    %3620 = vmatprep.subr.mxu0 0.0
    %3621 = vmatpush1.msra.mxu0 %v3499
    %3622 = vmatprep.subr.mxu0 0.0
    %3623 = vmatpush1.msra.mxu0 %v3502
    %3624 = vmatprep.subr.mxu0 0.0
    %3625 = vmatpush1.msra.mxu0 %v3505
    %3626 = vmatprep.subr.mxu0 0.0
    %3627 = vmatpush1.msra.mxu0 0.0
    %3628 = vmatprep.subr.mxu0 0.0
    %3629 = vmatpush1.msra.mxu0 0.0
    %3630 = vmatprep.subr.mxu0 0.0
    %3631 = vmatpush1.msra.mxu0 0.0
    %3632 = vmatprep.subr.mxu0 0.0
    %3633 = vmatpush1.msra.mxu0 0.0
    %3634 = vmatprep.subr.mxu0 0.0
    %3635 = vmatpush1.msra.mxu0 0.0
    %3636 = vmatprep.subr.mxu0 0.0
    %3637 = vmatpush1.msra.mxu0 0.0
    %3638 = vmatprep.subr.mxu0 0.0
    %3639 = vmatpush1.msra.mxu0 0.0
    %3640 = vmatprep.subr.mxu0 0.0
    %3641 = vmatpush1.msra.mxu0 0.0
    %3642 = vmatprep.subr.mxu0 0.0
    %3643 = vmatpush1.msra.mxu0 0.0
    %3644 = vmatprep.subr.mxu0 0.0
    %3645 = vmatpush1.msra.mxu0 0.0
    %3646 = vmatprep.subr.mxu0 0.0
    %3647 = vmatpush1.msra.mxu0 0.0
    %3648 = vmatprep.subr.mxu0 0.0
    %3649 = vmatpush1.msra.mxu0 0.0
    %3650 = vmatprep.subr.mxu0 0.0
    %3651 = vmatpush1.msra.mxu0 0.0
    %3652 = vmatprep.subr.mxu0 0.0
    %3653 = vmatpush1.msra.mxu0 0.0
    %3654 = vmatprep.subr.mxu0 0.0
    %3655 = vmatpush1.msra.mxu0 0.0
    %3656 = vmatprep.subr.mxu0 0.0
    %3657 = vmatpush1.msra.mxu0 0.0
    %3658 = vmatprep.mubr.f32.mxu0 0.0
    %3659 = vmatmul.mubr.f32.gmra.mrb[0].mxu0 %v3457
    %v3660 = vpop.f32.mrb[0].mxu0
    %v3661 = vadd.f32 %v3519, %v3660
    %v3662 = vpop.f32.mrb[0].mxu0
    %3663 = vdwg.mxu0
    %v3664 = vld [vmem:[#allocation7] sm:$0xff]
    %v3665 = vld [vmem:[#allocation7 + $0x8] sm:$0xff]
    %v3666 = vld [vmem:[#allocation7 + $0x10] sm:$0xff]
    %v3667 = vld [vmem:[#allocation7 + $0x18] sm:$0xff]
    %v3668 = vld [vmem:[#allocation7 + $0x20] sm:$0xff]
    %v3669 = vld [vmem:[#allocation7 + $0x28] sm:$0xff]
    %v3670 = vld [vmem:[#allocation7 + $0x30] sm:$0xff]
    %v3671 = vld [vmem:[#allocation7 + $0x38] sm:$0xff]
    %v3672 = vld [vmem:[#allocation7 + $0x40] sm:$0xff]
    %v3673 = vld [vmem:[#allocation7 + $0x48] sm:$0xff]
    %v3674 = vld [vmem:[#allocation7 + $0x50] sm:$0xff]
    %v3675 = vld [vmem:[#allocation7 + $0x58] sm:$0xff]
    %v3676 = vld [vmem:[#allocation7 + $0x60] sm:$0xff]
    %v3677 = vld [vmem:[#allocation7 + $0x68] sm:$0xff]
    %v3678 = vld [vmem:[#allocation7 + $0x70] sm:$0xff]
    %v3679 = vld [vmem:[#allocation7 + $0x78] sm:$0xff]
    %v3680 = vld [vmem:[#allocation7 + $0x80] sm:$0xff]
    %v3681 = vld [vmem:[#allocation7 + $0x88] sm:$0xff]
    %v3682 = vld [vmem:[#allocation7 + $0x90] sm:$0xff]
    %v3683 = vld [vmem:[#allocation7 + $0x98] sm:$0xff]
    %v3684 = vld [vmem:[#allocation7 + $0xa0] sm:$0xff]
    %v3685 = vld [vmem:[#allocation7 + $0xa8] sm:$0xff]
    %v3686 = vld [vmem:[#allocation7 + $0xb0] sm:$0xff]
    %v3687 = vld [vmem:[#allocation7 + $0xb8] sm:$0xff]
    %v3688 = vld [vmem:[#allocation7 + $0xc0] sm:$0xff]
    %v3689 = vld [vmem:[#allocation7 + $0xc8] sm:$0xff]
    %v3690 = vld [vmem:[#allocation7 + $0xd0] sm:$0xff]
    %v3691 = vld [vmem:[#allocation7 + $0xd8] sm:$0xff]
    %v3692 = vld [vmem:[#allocation7 + $0xe0] sm:$0xff]
    %v3693 = vld [vmem:[#allocation7 + $0xe8] sm:$0xff]
    %v3694 = vld [vmem:[#allocation7 + $0xf0] sm:$0xff]
    %v3695 = vld [vmem:[#allocation7 + $0xf8] sm:$0xff]
    %v3696 = vld [vmem:[#allocation7 + $0x100] sm:$0xff]
    %v3697 = vld [vmem:[#allocation7 + $0x108] sm:$0xff]
    %v3698 = vld [vmem:[#allocation7 + $0x110] sm:$0xff]
    %v3699 = vld [vmem:[#allocation7 + $0x118] sm:$0xff]
    %v3700 = vld [vmem:[#allocation7 + $0x120] sm:$0xff]
    %v3701 = vld [vmem:[#allocation7 + $0x128] sm:$0xff]
    %v3702 = vld [vmem:[#allocation7 + $0x130] sm:$0xff]
    %v3703 = vld [vmem:[#allocation7 + $0x138] sm:$0xff]
    %v3704 = vld [vmem:[#allocation7 + $0x140] sm:$0xff]
    %v3705 = vld [vmem:[#allocation7 + $0x148] sm:$0xff]
    %v3706 = vld [vmem:[#allocation7 + $0x150] sm:$0xff]
    %v3707 = vld [vmem:[#allocation7 + $0x158] sm:$0xff]
    %v3708 = vld [vmem:[#allocation7 + $0x160] sm:$0xff]
    %v3709 = vld [vmem:[#allocation7 + $0x168] sm:$0xff]
    %v3710 = vld [vmem:[#allocation7 + $0x170] sm:$0xff]
    %v3711 = vld [vmem:[#allocation7 + $0x178] sm:$0xff]
    %v3712 = vld [vmem:[%s9] sm:$0x7]
    %v3714 = vlaneseq
    %v3715 = vshrl.u32 %v3714, 7
    %v3716 = vsub.s32 0, %v3715
    %v3717 = vrot.slane %v3712, %v3716
    %v3718 = vlaneseq
    %v3719 = vshrl.u32 %v3718, 7
    %v3720 = vsub.s32 1, %v3719
    %v3721 = vrot.slane %v3712, %v3720
    %v3722 = vlaneseq
    %v3723 = vshrl.u32 %v3722, 7
    %v3724 = vsub.s32 2, %v3723
    %v3725 = vrot.slane %v3712, %v3724
    %3729 = vmatprep.subr.mxu0 %v3665
    %3730 = vmatpush1.msra.mxu0 %v3664
    %3731 = vmatprep.subr.mxu0 %v3668
    %3732 = vmatpush1.msra.mxu0 %v3667
    %3733 = vmatprep.subr.mxu0 %v3671
    %3734 = vmatpush1.msra.mxu0 %v3670
    %3735 = vmatprep.subr.mxu0 %v3674
    %3736 = vmatpush1.msra.mxu0 %v3673
    %3737 = vmatprep.subr.mxu0 %v3677
    %3738 = vmatpush1.msra.mxu0 %v3676
    %3739 = vmatprep.subr.mxu0 %v3680
    %3740 = vmatpush1.msra.mxu0 %v3679
    %3741 = vmatprep.subr.mxu0 %v3683
    %3742 = vmatpush1.msra.mxu0 %v3682
    %3743 = vmatprep.subr.mxu0 %v3686
    %3744 = vmatpush1.msra.mxu0 %v3685
    %3745 = vmatprep.subr.mxu0 %v3689
    %3746 = vmatpush1.msra.mxu0 %v3688
    %3747 = vmatprep.subr.mxu0 %v3692
    %3748 = vmatpush1.msra.mxu0 %v3691
    %3749 = vmatprep.subr.mxu0 %v3695
    %3750 = vmatpush1.msra.mxu0 %v3694
    %3751 = vmatprep.subr.mxu0 %v3698
    %3752 = vmatpush1.msra.mxu0 %v3697
    %3753 = vmatprep.subr.mxu0 %v3701
    %3754 = vmatpush1.msra.mxu0 %v3700
    %3755 = vmatprep.subr.mxu0 %v3704
    %3756 = vmatpush1.msra.mxu0 %v3703
    %3757 = vmatprep.subr.mxu0 %v3707
    %3758 = vmatpush1.msra.mxu0 %v3706
    %3759 = vmatprep.subr.mxu0 %v3710
    %3760 = vmatpush1.msra.mxu0 %v3709
    %3761 = vmatprep.subr.mxu0 0.0
    %3762 = vmatpush1.msra.mxu0 0.0
    %3763 = vmatprep.subr.mxu0 0.0
    %3764 = vmatpush1.msra.mxu0 0.0
    %3765 = vmatprep.subr.mxu0 0.0
    %3766 = vmatpush1.msra.mxu0 0.0
    %3767 = vmatprep.subr.mxu0 0.0
    %3768 = vmatpush1.msra.mxu0 0.0
    %3769 = vmatprep.subr.mxu0 0.0
    %3770 = vmatpush1.msra.mxu0 0.0
    %3771 = vmatprep.subr.mxu0 0.0
    %3772 = vmatpush1.msra.mxu0 0.0
    %3773 = vmatprep.subr.mxu0 0.0
    %3774 = vmatpush1.msra.mxu0 0.0
    %3775 = vmatprep.subr.mxu0 0.0
    %3776 = vmatpush1.msra.mxu0 0.0
    %3777 = vmatprep.subr.mxu0 0.0
    %3778 = vmatpush1.msra.mxu0 0.0
    %3779 = vmatprep.subr.mxu0 0.0
    %3780 = vmatpush1.msra.mxu0 0.0
    %3781 = vmatprep.subr.mxu0 0.0
    %3782 = vmatpush1.msra.mxu0 0.0
    %3783 = vmatprep.subr.mxu0 0.0
    %3784 = vmatpush1.msra.mxu0 0.0
    %3785 = vmatprep.subr.mxu0 0.0
    %3786 = vmatpush1.msra.mxu0 0.0
    %3787 = vmatprep.subr.mxu0 0.0
    %3788 = vmatpush1.msra.mxu0 0.0
    %3789 = vmatprep.subr.mxu0 0.0
    %3790 = vmatpush1.msra.mxu0 0.0
    %3791 = vmatprep.subr.mxu0 0.0
    %3792 = vmatpush1.msra.mxu0 0.0
    %3793 = vmatprep.mubr.f32.mxu0 0.0
    %3794 = vmatmul.mubr.f32.gmra.mrb[0].mxu0 %v3243
    %v3795 = vpop.f32.mrb[0].mxu0
    %v3796 = vadd.f32 %v3717, %v3795
    %v3797 = vpop.f32.mrb[0].mxu0
    %v3798 = vadd.f32 %v3721, %v3797
    %3799 = vdwg.mxu0
    %3800 = vmatprep.subr.mxu0 0.0
    %3801 = vmatpush1.msra.mxu0 %v3666
    %3802 = vmatprep.subr.mxu0 0.0
    %3803 = vmatpush1.msra.mxu0 %v3669
    %3804 = vmatprep.subr.mxu0 0.0
    %3805 = vmatpush1.msra.mxu0 %v3672
    %3806 = vmatprep.subr.mxu0 0.0
    %3807 = vmatpush1.msra.mxu0 %v3675
    %3808 = vmatprep.subr.mxu0 0.0
    %3809 = vmatpush1.msra.mxu0 %v3678
    %3810 = vmatprep.subr.mxu0 0.0
    %3811 = vmatpush1.msra.mxu0 %v3681
    %3812 = vmatprep.subr.mxu0 0.0
    %3813 = vmatpush1.msra.mxu0 %v3684
    %3814 = vmatprep.subr.mxu0 0.0
    %3815 = vmatpush1.msra.mxu0 %v3687
    %3816 = vmatprep.subr.mxu0 0.0
    %3817 = vmatpush1.msra.mxu0 %v3690
    %3818 = vmatprep.subr.mxu0 0.0
    %3819 = vmatpush1.msra.mxu0 %v3693
    %3820 = vmatprep.subr.mxu0 0.0
    %3821 = vmatpush1.msra.mxu0 %v3696
    %3822 = vmatprep.subr.mxu0 0.0
    %3823 = vmatpush1.msra.mxu0 %v3699
    %3824 = vmatprep.subr.mxu0 0.0
    %3825 = vmatpush1.msra.mxu0 %v3702
    %3826 = vmatprep.subr.mxu0 0.0
    %3827 = vmatpush1.msra.mxu0 %v3705
    %3828 = vmatprep.subr.mxu0 0.0
    %3829 = vmatpush1.msra.mxu0 %v3708
    %3830 = vmatprep.subr.mxu0 0.0
    %3831 = vmatpush1.msra.mxu0 %v3711
    %3832 = vmatprep.subr.mxu0 0.0
    %3833 = vmatpush1.msra.mxu0 0.0
    %3834 = vmatprep.subr.mxu0 0.0
    %3835 = vmatpush1.msra.mxu0 0.0
    %3836 = vmatprep.subr.mxu0 0.0
    %3837 = vmatpush1.msra.mxu0 0.0
    %3838 = vmatprep.subr.mxu0 0.0
    %3839 = vmatpush1.msra.mxu0 0.0
    %3840 = vmatprep.subr.mxu0 0.0
    %3841 = vmatpush1.msra.mxu0 0.0
    %3842 = vmatprep.subr.mxu0 0.0
    %3843 = vmatpush1.msra.mxu0 0.0
    %3844 = vmatprep.subr.mxu0 0.0
    %3845 = vmatpush1.msra.mxu0 0.0
    %3846 = vmatprep.subr.mxu0 0.0
    %3847 = vmatpush1.msra.mxu0 0.0
    %3848 = vmatprep.subr.mxu0 0.0
    %3849 = vmatpush1.msra.mxu0 0.0
    %3850 = vmatprep.subr.mxu0 0.0
    %3851 = vmatpush1.msra.mxu0 0.0
    %3852 = vmatprep.subr.mxu0 0.0
    %3853 = vmatpush1.msra.mxu0 0.0
    %3854 = vmatprep.subr.mxu0 0.0
    %3855 = vmatpush1.msra.mxu0 0.0
    %3856 = vmatprep.subr.mxu0 0.0
    %3857 = vmatpush1.msra.mxu0 0.0
    %3858 = vmatprep.subr.mxu0 0.0
    %3859 = vmatpush1.msra.mxu0 0.0
    %3860 = vmatprep.subr.mxu0 0.0
    %3861 = vmatpush1.msra.mxu0 0.0
    %3862 = vmatprep.subr.mxu0 0.0
    %3863 = vmatpush1.msra.mxu0 0.0
    %3864 = vmatprep.mubr.f32.mxu0 0.0
    %3865 = vmatmul.mubr.f32.gmra.mrb[0].mxu0 %v3243
    %v3866 = vpop.f32.mrb[0].mxu0
    %v3867 = vadd.f32 %v3725, %v3866
    %v3868 = vpop.f32.mrb[0].mxu0
    %3869 = vdwg.mxu0
    %v3870 = vadd.f32 %v3590, %v3796
    %v3871 = vxor.u32 %v3870, 2147483648
    %v3872 = vmul.f32 %v3871, 1.442695
    %v3873 = vpow.pop %v3872
    %v3874 = vadd.f32 %v3873, 1.0
    %v3875 = vrcp.pop %v3874
    %v3876 = vmul.f32 1.0, %v3875
    %v3877 = vadd.f32 %v3592, %v3798
    %v3878 = vxor.u32 %v3877, 2147483648
    %v3879 = vmul.f32 %v3878, 1.442695
    %v3880 = vpow.pop %v3879
    %v3881 = vadd.f32 %v3880, 1.0
    %v3882 = vrcp.pop %v3881
    %v3883 = vmul.f32 1.0, %v3882
    %v3884 = vmul.f32 %v3876, %v3867
    %v3885 = vadd.f32 %v3661, %v3884
    %v3886 = vtanh.pop %v3885
    %v3887 = vsub.f32 1.0, %v3883
    %v3888 = vmul.f32 %v3887, %v3886
    %v3889 = vmul.f32 %v3883, %v3243
    %v3890 = vadd.f32 %v3888, %v3889
    %v3891 = vld [vmem:[#allocation8] sm:$0xff]
    %v3892 = vld [vmem:[#allocation8 + $0x8] sm:$0xff]
    %v3893 = vld [vmem:[#allocation8 + $0x10] sm:$0xff]
    %v3894 = vld [vmem:[#allocation8 + $0x18] sm:$0xff]
    %v3895 = vld [vmem:[#allocation8 + $0x20] sm:$0xff]
    %v3896 = vld [vmem:[#allocation8 + $0x28] sm:$0xff]
    %v3897 = vld [vmem:[#allocation8 + $0x30] sm:$0xff]
    %v3898 = vld [vmem:[#allocation8 + $0x38] sm:$0xff]
    %v3899 = vld [vmem:[#allocation8 + $0x40] sm:$0xff]
    %v3900 = vld [vmem:[#allocation8 + $0x48] sm:$0xff]
    %v3901 = vld [vmem:[#allocation8 + $0x50] sm:$0xff]
    %v3902 = vld [vmem:[#allocation8 + $0x58] sm:$0xff]
    %v3903 = vld [vmem:[#allocation8 + $0x60] sm:$0xff]
    %v3904 = vld [vmem:[#allocation8 + $0x68] sm:$0xff]
    %v3905 = vld [vmem:[#allocation8 + $0x70] sm:$0xff]
    %v3906 = vld [vmem:[#allocation8 + $0x78] sm:$0xff]
    %v3907 = vld [vmem:[%s11] sm:$0x1]
    %v3909 = vlaneseq
    %v3910 = vshrl.u32 %v3909, 7
    %v3911 = vsub.s32 0, %v3910
    %v3912 = vrot.slane %v3907, %v3911
    %3914 = vmatprep.subr.mxu0 0.0
    %3915 = vmatpush1.msra.mxu0 %v3891
    %3916 = vmatprep.subr.mxu0 0.0
    %3917 = vmatpush1.msra.mxu0 %v3892
    %3918 = vmatprep.subr.mxu0 0.0
    %3919 = vmatpush1.msra.mxu0 %v3893
    %3920 = vmatprep.subr.mxu0 0.0
    %3921 = vmatpush1.msra.mxu0 %v3894
    %3922 = vmatprep.subr.mxu0 0.0
    %3923 = vmatpush1.msra.mxu0 %v3895
    %3924 = vmatprep.subr.mxu0 0.0
    %3925 = vmatpush1.msra.mxu0 %v3896
    %3926 = vmatprep.subr.mxu0 0.0
    %3927 = vmatpush1.msra.mxu0 %v3897
    %3928 = vmatprep.subr.mxu0 0.0
    %3929 = vmatpush1.msra.mxu0 %v3898
    %3930 = vmatprep.subr.mxu0 0.0
    %3931 = vmatpush1.msra.mxu0 %v3899
    %3932 = vmatprep.subr.mxu0 0.0
    %3933 = vmatpush1.msra.mxu0 %v3900
    %3934 = vmatprep.subr.mxu0 0.0
    %3935 = vmatpush1.msra.mxu0 %v3901
    %3936 = vmatprep.subr.mxu0 0.0
    %3937 = vmatpush1.msra.mxu0 %v3902
    %3938 = vmatprep.subr.mxu0 0.0
    %3939 = vmatpush1.msra.mxu0 %v3903
    %3940 = vmatprep.subr.mxu0 0.0
    %3941 = vmatpush1.msra.mxu0 %v3904
    %3942 = vmatprep.subr.mxu0 0.0
    %3943 = vmatpush1.msra.mxu0 %v3905
    %3944 = vmatprep.subr.mxu0 0.0
    %3945 = vmatpush1.msra.mxu0 %v3906
    %3946 = vmatprep.subr.mxu0 0.0
    %3947 = vmatpush1.msra.mxu0 0.0
    %3948 = vmatprep.subr.mxu0 0.0
    %3949 = vmatpush1.msra.mxu0 0.0
    %3950 = vmatprep.subr.mxu0 0.0
    %3951 = vmatpush1.msra.mxu0 0.0
    %3952 = vmatprep.subr.mxu0 0.0
    %3953 = vmatpush1.msra.mxu0 0.0
    %3954 = vmatprep.subr.mxu0 0.0
    %3955 = vmatpush1.msra.mxu0 0.0
    %3956 = vmatprep.subr.mxu0 0.0
    %3957 = vmatpush1.msra.mxu0 0.0
    %3958 = vmatprep.subr.mxu0 0.0
    %3959 = vmatpush1.msra.mxu0 0.0
    %3960 = vmatprep.subr.mxu0 0.0
    %3961 = vmatpush1.msra.mxu0 0.0
    %3962 = vmatprep.subr.mxu0 0.0
    %3963 = vmatpush1.msra.mxu0 0.0
    %3964 = vmatprep.subr.mxu0 0.0
    %3965 = vmatpush1.msra.mxu0 0.0
    %3966 = vmatprep.subr.mxu0 0.0
    %3967 = vmatpush1.msra.mxu0 0.0
    %3968 = vmatprep.subr.mxu0 0.0
    %3969 = vmatpush1.msra.mxu0 0.0
    %3970 = vmatprep.subr.mxu0 0.0
    %3971 = vmatpush1.msra.mxu0 0.0
    %3972 = vmatprep.subr.mxu0 0.0
    %3973 = vmatpush1.msra.mxu0 0.0
    %3974 = vmatprep.subr.mxu0 0.0
    %3975 = vmatpush1.msra.mxu0 0.0
    %3976 = vmatprep.subr.mxu0 0.0
    %3977 = vmatpush1.msra.mxu0 0.0
    %3978 = vmatprep.mubr.f32.mxu0 0.0
    %3979 = vmatmul.mubr.f32.gmra.mrb[0].mxu0 %v3890
    %v3980 = vpop.f32.mrb[0].mxu0
    %v3981 = vadd.f32 %v3912, %v3980
    %v3982 = vpop.f32.mrb[0].mxu0
    %3983 = vdwg.mxu0
    %s3984 = scalar_lea.vmem %s12, 40
    %3985 = vst [vmem:[%s3984] sm:$0xff] %v3981
    %s3986 = scalar_lea.vmem [#allocation3], 48
    %v3987 = vld [vmem:[%s3986] sm:$0xff]
    %v3988 = vld [vmem:[%s2] sm:$0xff]
    %v3989 = vld [vmem:[%s2 + $0x8] sm:$0xff]
    %v3990 = vld [vmem:[%s2 + $0x10] sm:$0xff]
    %v3991 = vld [vmem:[%s2 + $0x18] sm:$0xff]
    %v3992 = vld [vmem:[%s2 + $0x20] sm:$0xff]
    %v3993 = vld [vmem:[%s2 + $0x28] sm:$0xff]
    %v3994 = vld [vmem:[%s3] sm:$0x1]
    %v3996 = vlaneseq
    %v3997 = vshrl.u32 %v3996, 7
    %v3998 = vsub.s32 0, %v3997
    %v3999 = vrot.slane %v3994, %v3998
    %v4002 = vsel %vm119, %v3987, 0
    %4004 = vmatprep.subr.mxu0 0.0
    %4005 = vmatpush1.msra.mxu0 %v3988
    %4006 = vmatprep.subr.mxu0 0.0
    %4007 = vmatpush1.msra.mxu0 %v3989
    %4008 = vmatprep.subr.mxu0 0.0
    %4009 = vmatpush1.msra.mxu0 %v3990
    %4010 = vmatprep.subr.mxu0 0.0
    %4011 = vmatpush1.msra.mxu0 %v3991
    %4012 = vmatprep.subr.mxu0 0.0
    %4013 = vmatpush1.msra.mxu0 %v3992
    %4014 = vmatprep.subr.mxu0 0.0
    %4015 = vmatpush1.msra.mxu0 %v3993
    %4016 = vmatprep.subr.mxu0 0.0
    %4017 = vmatpush1.msra.mxu0 0.0
    %4018 = vmatprep.subr.mxu0 0.0
    %4019 = vmatpush1.msra.mxu0 0.0
    %4020 = vmatprep.subr.mxu0 0.0
    %4021 = vmatpush1.msra.mxu0 0.0
    %4022 = vmatprep.subr.mxu0 0.0
    %4023 = vmatpush1.msra.mxu0 0.0
    %4024 = vmatprep.subr.mxu0 0.0
    %4025 = vmatpush1.msra.mxu0 0.0
    %4026 = vmatprep.subr.mxu0 0.0
    %4027 = vmatpush1.msra.mxu0 0.0
    %4028 = vmatprep.subr.mxu0 0.0
    %4029 = vmatpush1.msra.mxu0 0.0
    %4030 = vmatprep.subr.mxu0 0.0
    %4031 = vmatpush1.msra.mxu0 0.0
    %4032 = vmatprep.subr.mxu0 0.0
    %4033 = vmatpush1.msra.mxu0 0.0
    %4034 = vmatprep.subr.mxu0 0.0
    %4035 = vmatpush1.msra.mxu0 0.0
    %4036 = vmatprep.subr.mxu0 0.0
    %4037 = vmatpush1.msra.mxu0 0.0
    %4038 = vmatprep.subr.mxu0 0.0
    %4039 = vmatpush1.msra.mxu0 0.0
    %4040 = vmatprep.subr.mxu0 0.0
    %4041 = vmatpush1.msra.mxu0 0.0
    %4042 = vmatprep.subr.mxu0 0.0
    %4043 = vmatpush1.msra.mxu0 0.0
    %4044 = vmatprep.subr.mxu0 0.0
    %4045 = vmatpush1.msra.mxu0 0.0
    %4046 = vmatprep.subr.mxu0 0.0
    %4047 = vmatpush1.msra.mxu0 0.0
    %4048 = vmatprep.subr.mxu0 0.0
    %4049 = vmatpush1.msra.mxu0 0.0
    %4050 = vmatprep.subr.mxu0 0.0
    %4051 = vmatpush1.msra.mxu0 0.0
    %4052 = vmatprep.subr.mxu0 0.0
    %4053 = vmatpush1.msra.mxu0 0.0
    %4054 = vmatprep.subr.mxu0 0.0
    %4055 = vmatpush1.msra.mxu0 0.0
    %4056 = vmatprep.subr.mxu0 0.0
    %4057 = vmatpush1.msra.mxu0 0.0
    %4058 = vmatprep.subr.mxu0 0.0
    %4059 = vmatpush1.msra.mxu0 0.0
    %4060 = vmatprep.subr.mxu0 0.0
    %4061 = vmatpush1.msra.mxu0 0.0
    %4062 = vmatprep.subr.mxu0 0.0
    %4063 = vmatpush1.msra.mxu0 0.0
    %4064 = vmatprep.subr.mxu0 0.0
    %4065 = vmatpush1.msra.mxu0 0.0
    %4066 = vmatprep.subr.mxu0 0.0
    %4067 = vmatpush1.msra.mxu0 0.0
    %4068 = vmatprep.mubr.f32.mxu0 0.0
    %4069 = vmatmul.mubr.f32.gmra.mrb[0].mxu0 %v4002
    %v4070 = vpop.f32.mrb[0].mxu0
    %v4071 = vadd.f32 %v3999, %v4070
    %v4072 = vpop.f32.mrb[0].mxu0
    %4073 = vdwg.mxu0
    %4074 = vadd.xlane.f32.xlu0 %v4071
    %v4075 = vpop.xlane.xlu0 %4074
    %v4076 = vmul.f32 %v4075, 0.03125
    %v4077 = vmul.f32 %v4071, %v4071
    %4078 = vadd.xlane.f32.xlu0 %v4077
    %v4079 = vpop.xlane.xlu0 %4078
    %v4080 = vmul.f32 %v4079, 0.03125
    %v4081 = vmul.f32 %v4076, %v4076
    %v4082 = vsub.f32 %v4080, %v4081
    %v4083 = vmax.f32 %v4082, 0.0
    %v4084 = vsub.f32 %v4071, %v4076
    %v4085 = vadd.f32 %v4083, 1e-05
    %v4086 = vrsqrt.pop %v4085
    %v4087 = vmul.f32 %v4084, %v4086
    %v4088 = vld [vmem:[%s4] sm:$0x1]
    %v4090 = vlaneseq
    %v4091 = vshrl.u32 %v4090, 7
    %v4092 = vsub.s32 0, %v4091
    %v4093 = vrot.slane %v4088, %v4092
    %v4095 = vmul.f32 %v4087, %v4093
    %v4096 = vld [vmem:[%s5] sm:$0x1]
    %v4098 = vlaneseq
    %v4099 = vshrl.u32 %v4098, 7
    %v4100 = vsub.s32 0, %v4099
    %v4101 = vrot.slane %v4096, %v4100
    %v4103 = vadd.f32 %v4095, %v4101
    %v4104 = vmax.f32 %v4103, 0.0
    %v4105 = vld [vmem:[#allocation5] sm:$0xff]
    %v4106 = vld [vmem:[#allocation5 + $0x8] sm:$0xff]
    %v4107 = vld [vmem:[#allocation5 + $0x10] sm:$0xff]
    %v4108 = vld [vmem:[#allocation5 + $0x18] sm:$0xff]
    %v4109 = vld [vmem:[#allocation5 + $0x20] sm:$0xff]
    %v4110 = vld [vmem:[#allocation5 + $0x28] sm:$0xff]
    %v4111 = vld [vmem:[#allocation5 + $0x30] sm:$0xff]
    %v4112 = vld [vmem:[#allocation5 + $0x38] sm:$0xff]
    %v4113 = vld [vmem:[#allocation5 + $0x40] sm:$0xff]
    %v4114 = vld [vmem:[#allocation5 + $0x48] sm:$0xff]
    %v4115 = vld [vmem:[#allocation5 + $0x50] sm:$0xff]
    %v4116 = vld [vmem:[#allocation5 + $0x58] sm:$0xff]
    %v4117 = vld [vmem:[#allocation5 + $0x60] sm:$0xff]
    %v4118 = vld [vmem:[#allocation5 + $0x68] sm:$0xff]
    %v4119 = vld [vmem:[#allocation5 + $0x70] sm:$0xff]
    %v4120 = vld [vmem:[#allocation5 + $0x78] sm:$0xff]
    %v4121 = vld [vmem:[#allocation5 + $0x80] sm:$0xff]
    %v4122 = vld [vmem:[#allocation5 + $0x88] sm:$0xff]
    %v4123 = vld [vmem:[#allocation5 + $0x90] sm:$0xff]
    %v4124 = vld [vmem:[#allocation5 + $0x98] sm:$0xff]
    %v4125 = vld [vmem:[#allocation5 + $0xa0] sm:$0xff]
    %v4126 = vld [vmem:[#allocation5 + $0xa8] sm:$0xff]
    %v4127 = vld [vmem:[#allocation5 + $0xb0] sm:$0xff]
    %v4128 = vld [vmem:[#allocation5 + $0xb8] sm:$0xff]
    %v4129 = vld [vmem:[#allocation5 + $0xc0] sm:$0xff]
    %v4130 = vld [vmem:[#allocation5 + $0xc8] sm:$0xff]
    %v4131 = vld [vmem:[#allocation5 + $0xd0] sm:$0xff]
    %v4132 = vld [vmem:[#allocation5 + $0xd8] sm:$0xff]
    %v4133 = vld [vmem:[#allocation5 + $0xe0] sm:$0xff]
    %v4134 = vld [vmem:[#allocation5 + $0xe8] sm:$0xff]
    %v4135 = vld [vmem:[#allocation5 + $0xf0] sm:$0xff]
    %v4136 = vld [vmem:[#allocation5 + $0xf8] sm:$0xff]
    %v4137 = vld [vmem:[#allocation5 + $0x100] sm:$0xff]
    %v4138 = vld [vmem:[#allocation5 + $0x108] sm:$0xff]
    %v4139 = vld [vmem:[#allocation5 + $0x110] sm:$0xff]
    %v4140 = vld [vmem:[#allocation5 + $0x118] sm:$0xff]
    %v4141 = vld [vmem:[#allocation5 + $0x120] sm:$0xff]
    %v4142 = vld [vmem:[#allocation5 + $0x128] sm:$0xff]
    %v4143 = vld [vmem:[#allocation5 + $0x130] sm:$0xff]
    %v4144 = vld [vmem:[#allocation5 + $0x138] sm:$0xff]
    %v4145 = vld [vmem:[#allocation5 + $0x140] sm:$0xff]
    %v4146 = vld [vmem:[#allocation5 + $0x148] sm:$0xff]
    %v4147 = vld [vmem:[#allocation5 + $0x150] sm:$0xff]
    %v4148 = vld [vmem:[#allocation5 + $0x158] sm:$0xff]
    %v4149 = vld [vmem:[#allocation5 + $0x160] sm:$0xff]
    %v4150 = vld [vmem:[#allocation5 + $0x168] sm:$0xff]
    %v4151 = vld [vmem:[#allocation5 + $0x170] sm:$0xff]
    %v4152 = vld [vmem:[#allocation5 + $0x178] sm:$0xff]
    %v4153 = vld [vmem:[%s7] sm:$0x7]
    %v4155 = vlaneseq
    %v4156 = vshrl.u32 %v4155, 7
    %v4157 = vsub.s32 0, %v4156
    %v4158 = vrot.slane %v4153, %v4157
    %v4159 = vlaneseq
    %v4160 = vshrl.u32 %v4159, 7
    %v4161 = vsub.s32 1, %v4160
    %v4162 = vrot.slane %v4153, %v4161
    %v4163 = vlaneseq
    %v4164 = vshrl.u32 %v4163, 7
    %v4165 = vsub.s32 2, %v4164
    %v4166 = vrot.slane %v4153, %v4165
    %4170 = vmatprep.subr.mxu0 %v4106
    %4171 = vmatpush1.msra.mxu0 %v4105
    %4172 = vmatprep.subr.mxu0 %v4109
    %4173 = vmatpush1.msra.mxu0 %v4108
    %4174 = vmatprep.subr.mxu0 %v4112
    %4175 = vmatpush1.msra.mxu0 %v4111
    %4176 = vmatprep.subr.mxu0 %v4115
    %4177 = vmatpush1.msra.mxu0 %v4114
    %4178 = vmatprep.subr.mxu0 %v4118
    %4179 = vmatpush1.msra.mxu0 %v4117
    %4180 = vmatprep.subr.mxu0 %v4121
    %4181 = vmatpush1.msra.mxu0 %v4120
    %4182 = vmatprep.subr.mxu0 %v4124
    %4183 = vmatpush1.msra.mxu0 %v4123
    %4184 = vmatprep.subr.mxu0 %v4127
    %4185 = vmatpush1.msra.mxu0 %v4126
    %4186 = vmatprep.subr.mxu0 %v4130
    %4187 = vmatpush1.msra.mxu0 %v4129
    %4188 = vmatprep.subr.mxu0 %v4133
    %4189 = vmatpush1.msra.mxu0 %v4132
    %4190 = vmatprep.subr.mxu0 %v4136
    %4191 = vmatpush1.msra.mxu0 %v4135
    %4192 = vmatprep.subr.mxu0 %v4139
    %4193 = vmatpush1.msra.mxu0 %v4138
    %4194 = vmatprep.subr.mxu0 %v4142
    %4195 = vmatpush1.msra.mxu0 %v4141
    %4196 = vmatprep.subr.mxu0 %v4145
    %4197 = vmatpush1.msra.mxu0 %v4144
    %4198 = vmatprep.subr.mxu0 %v4148
    %4199 = vmatpush1.msra.mxu0 %v4147
    %4200 = vmatprep.subr.mxu0 %v4151
    %4201 = vmatpush1.msra.mxu0 %v4150
    %4202 = vmatprep.subr.mxu0 0.0
    %4203 = vmatpush1.msra.mxu0 0.0
    %4204 = vmatprep.subr.mxu0 0.0
    %4205 = vmatpush1.msra.mxu0 0.0
    %4206 = vmatprep.subr.mxu0 0.0
    %4207 = vmatpush1.msra.mxu0 0.0
    %4208 = vmatprep.subr.mxu0 0.0
    %4209 = vmatpush1.msra.mxu0 0.0
    %4210 = vmatprep.subr.mxu0 0.0
    %4211 = vmatpush1.msra.mxu0 0.0
    %4212 = vmatprep.subr.mxu0 0.0
    %4213 = vmatpush1.msra.mxu0 0.0
    %4214 = vmatprep.subr.mxu0 0.0
    %4215 = vmatpush1.msra.mxu0 0.0
    %4216 = vmatprep.subr.mxu0 0.0
    %4217 = vmatpush1.msra.mxu0 0.0
    %4218 = vmatprep.subr.mxu0 0.0
    %4219 = vmatpush1.msra.mxu0 0.0
    %4220 = vmatprep.subr.mxu0 0.0
    %4221 = vmatpush1.msra.mxu0 0.0
    %4222 = vmatprep.subr.mxu0 0.0
    %4223 = vmatpush1.msra.mxu0 0.0
    %4224 = vmatprep.subr.mxu0 0.0
    %4225 = vmatpush1.msra.mxu0 0.0
    %4226 = vmatprep.subr.mxu0 0.0
    %4227 = vmatpush1.msra.mxu0 0.0
    %4228 = vmatprep.subr.mxu0 0.0
    %4229 = vmatpush1.msra.mxu0 0.0
    %4230 = vmatprep.subr.mxu0 0.0
    %4231 = vmatpush1.msra.mxu0 0.0
    %4232 = vmatprep.subr.mxu0 0.0
    %4233 = vmatpush1.msra.mxu0 0.0
    %4234 = vmatprep.mubr.f32.mxu0 0.0
    %4235 = vmatmul.mubr.f32.gmra.mrb[0].mxu0 %v4104
    %v4236 = vpop.f32.mrb[0].mxu0
    %v4237 = vadd.f32 %v4158, %v4236
    %v4238 = vpop.f32.mrb[0].mxu0
    %v4239 = vadd.f32 %v4162, %v4238
    %4240 = vdwg.mxu0
    %4241 = vmatprep.subr.mxu0 0.0
    %4242 = vmatpush1.msra.mxu0 %v4107
    %4243 = vmatprep.subr.mxu0 0.0
    %4244 = vmatpush1.msra.mxu0 %v4110
    %4245 = vmatprep.subr.mxu0 0.0
    %4246 = vmatpush1.msra.mxu0 %v4113
    %4247 = vmatprep.subr.mxu0 0.0
    %4248 = vmatpush1.msra.mxu0 %v4116
    %4249 = vmatprep.subr.mxu0 0.0
    %4250 = vmatpush1.msra.mxu0 %v4119
    %4251 = vmatprep.subr.mxu0 0.0
    %4252 = vmatpush1.msra.mxu0 %v4122
    %4253 = vmatprep.subr.mxu0 0.0
    %4254 = vmatpush1.msra.mxu0 %v4125
    %4255 = vmatprep.subr.mxu0 0.0
    %4256 = vmatpush1.msra.mxu0 %v4128
    %4257 = vmatprep.subr.mxu0 0.0
    %4258 = vmatpush1.msra.mxu0 %v4131
    %4259 = vmatprep.subr.mxu0 0.0
    %4260 = vmatpush1.msra.mxu0 %v4134
    %4261 = vmatprep.subr.mxu0 0.0
    %4262 = vmatpush1.msra.mxu0 %v4137
    %4263 = vmatprep.subr.mxu0 0.0
    %4264 = vmatpush1.msra.mxu0 %v4140
    %4265 = vmatprep.subr.mxu0 0.0
    %4266 = vmatpush1.msra.mxu0 %v4143
    %4267 = vmatprep.subr.mxu0 0.0
    %4268 = vmatpush1.msra.mxu0 %v4146
    %4269 = vmatprep.subr.mxu0 0.0
    %4270 = vmatpush1.msra.mxu0 %v4149
    %4271 = vmatprep.subr.mxu0 0.0
    %4272 = vmatpush1.msra.mxu0 %v4152
    %4273 = vmatprep.subr.mxu0 0.0
    %4274 = vmatpush1.msra.mxu0 0.0
    %4275 = vmatprep.subr.mxu0 0.0
    %4276 = vmatpush1.msra.mxu0 0.0
    %4277 = vmatprep.subr.mxu0 0.0
    %4278 = vmatpush1.msra.mxu0 0.0
    %4279 = vmatprep.subr.mxu0 0.0
    %4280 = vmatpush1.msra.mxu0 0.0
    %4281 = vmatprep.subr.mxu0 0.0
    %4282 = vmatpush1.msra.mxu0 0.0
    %4283 = vmatprep.subr.mxu0 0.0
    %4284 = vmatpush1.msra.mxu0 0.0
    %4285 = vmatprep.subr.mxu0 0.0
    %4286 = vmatpush1.msra.mxu0 0.0
    %4287 = vmatprep.subr.mxu0 0.0
    %4288 = vmatpush1.msra.mxu0 0.0
    %4289 = vmatprep.subr.mxu0 0.0
    %4290 = vmatpush1.msra.mxu0 0.0
    %4291 = vmatprep.subr.mxu0 0.0
    %4292 = vmatpush1.msra.mxu0 0.0
    %4293 = vmatprep.subr.mxu0 0.0
    %4294 = vmatpush1.msra.mxu0 0.0
    %4295 = vmatprep.subr.mxu0 0.0
    %4296 = vmatpush1.msra.mxu0 0.0
    %4297 = vmatprep.subr.mxu0 0.0
    %4298 = vmatpush1.msra.mxu0 0.0
    %4299 = vmatprep.subr.mxu0 0.0
    %4300 = vmatpush1.msra.mxu0 0.0
    %4301 = vmatprep.subr.mxu0 0.0
    %4302 = vmatpush1.msra.mxu0 0.0
    %4303 = vmatprep.subr.mxu0 0.0
    %4304 = vmatpush1.msra.mxu0 0.0
    %4305 = vmatprep.mubr.f32.mxu0 0.0
    %4306 = vmatmul.mubr.f32.gmra.mrb[0].mxu0 %v4104
    %v4307 = vpop.f32.mrb[0].mxu0
    %v4308 = vadd.f32 %v4166, %v4307
    %v4309 = vpop.f32.mrb[0].mxu0
    %4310 = vdwg.mxu0
    %v4311 = vld [vmem:[#allocation7] sm:$0xff]
    %v4312 = vld [vmem:[#allocation7 + $0x8] sm:$0xff]
    %v4313 = vld [vmem:[#allocation7 + $0x10] sm:$0xff]
    %v4314 = vld [vmem:[#allocation7 + $0x18] sm:$0xff]
    %v4315 = vld [vmem:[#allocation7 + $0x20] sm:$0xff]
    %v4316 = vld [vmem:[#allocation7 + $0x28] sm:$0xff]
    %v4317 = vld [vmem:[#allocation7 + $0x30] sm:$0xff]
    %v4318 = vld [vmem:[#allocation7 + $0x38] sm:$0xff]
    %v4319 = vld [vmem:[#allocation7 + $0x40] sm:$0xff]
    %v4320 = vld [vmem:[#allocation7 + $0x48] sm:$0xff]
    %v4321 = vld [vmem:[#allocation7 + $0x50] sm:$0xff]
    %v4322 = vld [vmem:[#allocation7 + $0x58] sm:$0xff]
    %v4323 = vld [vmem:[#allocation7 + $0x60] sm:$0xff]
    %v4324 = vld [vmem:[#allocation7 + $0x68] sm:$0xff]
    %v4325 = vld [vmem:[#allocation7 + $0x70] sm:$0xff]
    %v4326 = vld [vmem:[#allocation7 + $0x78] sm:$0xff]
    %v4327 = vld [vmem:[#allocation7 + $0x80] sm:$0xff]
    %v4328 = vld [vmem:[#allocation7 + $0x88] sm:$0xff]
    %v4329 = vld [vmem:[#allocation7 + $0x90] sm:$0xff]
    %v4330 = vld [vmem:[#allocation7 + $0x98] sm:$0xff]
    %v4331 = vld [vmem:[#allocation7 + $0xa0] sm:$0xff]
    %v4332 = vld [vmem:[#allocation7 + $0xa8] sm:$0xff]
    %v4333 = vld [vmem:[#allocation7 + $0xb0] sm:$0xff]
    %v4334 = vld [vmem:[#allocation7 + $0xb8] sm:$0xff]
    %v4335 = vld [vmem:[#allocation7 + $0xc0] sm:$0xff]
    %v4336 = vld [vmem:[#allocation7 + $0xc8] sm:$0xff]
    %v4337 = vld [vmem:[#allocation7 + $0xd0] sm:$0xff]
    %v4338 = vld [vmem:[#allocation7 + $0xd8] sm:$0xff]
    %v4339 = vld [vmem:[#allocation7 + $0xe0] sm:$0xff]
    %v4340 = vld [vmem:[#allocation7 + $0xe8] sm:$0xff]
    %v4341 = vld [vmem:[#allocation7 + $0xf0] sm:$0xff]
    %v4342 = vld [vmem:[#allocation7 + $0xf8] sm:$0xff]
    %v4343 = vld [vmem:[#allocation7 + $0x100] sm:$0xff]
    %v4344 = vld [vmem:[#allocation7 + $0x108] sm:$0xff]
    %v4345 = vld [vmem:[#allocation7 + $0x110] sm:$0xff]
    %v4346 = vld [vmem:[#allocation7 + $0x118] sm:$0xff]
    %v4347 = vld [vmem:[#allocation7 + $0x120] sm:$0xff]
    %v4348 = vld [vmem:[#allocation7 + $0x128] sm:$0xff]
    %v4349 = vld [vmem:[#allocation7 + $0x130] sm:$0xff]
    %v4350 = vld [vmem:[#allocation7 + $0x138] sm:$0xff]
    %v4351 = vld [vmem:[#allocation7 + $0x140] sm:$0xff]
    %v4352 = vld [vmem:[#allocation7 + $0x148] sm:$0xff]
    %v4353 = vld [vmem:[#allocation7 + $0x150] sm:$0xff]
    %v4354 = vld [vmem:[#allocation7 + $0x158] sm:$0xff]
    %v4355 = vld [vmem:[#allocation7 + $0x160] sm:$0xff]
    %v4356 = vld [vmem:[#allocation7 + $0x168] sm:$0xff]
    %v4357 = vld [vmem:[#allocation7 + $0x170] sm:$0xff]
    %v4358 = vld [vmem:[#allocation7 + $0x178] sm:$0xff]
    %v4359 = vld [vmem:[%s9] sm:$0x7]
    %v4361 = vlaneseq
    %v4362 = vshrl.u32 %v4361, 7
    %v4363 = vsub.s32 0, %v4362
    %v4364 = vrot.slane %v4359, %v4363
    %v4365 = vlaneseq
    %v4366 = vshrl.u32 %v4365, 7
    %v4367 = vsub.s32 1, %v4366
    %v4368 = vrot.slane %v4359, %v4367
    %v4369 = vlaneseq
    %v4370 = vshrl.u32 %v4369, 7
    %v4371 = vsub.s32 2, %v4370
    %v4372 = vrot.slane %v4359, %v4371
    %4376 = vmatprep.subr.mxu0 %v4312
    %4377 = vmatpush1.msra.mxu0 %v4311
    %4378 = vmatprep.subr.mxu0 %v4315
    %4379 = vmatpush1.msra.mxu0 %v4314
    %4380 = vmatprep.subr.mxu0 %v4318
    %4381 = vmatpush1.msra.mxu0 %v4317
    %4382 = vmatprep.subr.mxu0 %v4321
    %4383 = vmatpush1.msra.mxu0 %v4320
    %4384 = vmatprep.subr.mxu0 %v4324
    %4385 = vmatpush1.msra.mxu0 %v4323
    %4386 = vmatprep.subr.mxu0 %v4327
    %4387 = vmatpush1.msra.mxu0 %v4326
    %4388 = vmatprep.subr.mxu0 %v4330
    %4389 = vmatpush1.msra.mxu0 %v4329
    %4390 = vmatprep.subr.mxu0 %v4333
    %4391 = vmatpush1.msra.mxu0 %v4332
    %4392 = vmatprep.subr.mxu0 %v4336
    %4393 = vmatpush1.msra.mxu0 %v4335
    %4394 = vmatprep.subr.mxu0 %v4339
    %4395 = vmatpush1.msra.mxu0 %v4338
    %4396 = vmatprep.subr.mxu0 %v4342
    %4397 = vmatpush1.msra.mxu0 %v4341
    %4398 = vmatprep.subr.mxu0 %v4345
    %4399 = vmatpush1.msra.mxu0 %v4344
    %4400 = vmatprep.subr.mxu0 %v4348
    %4401 = vmatpush1.msra.mxu0 %v4347
    %4402 = vmatprep.subr.mxu0 %v4351
    %4403 = vmatpush1.msra.mxu0 %v4350
    %4404 = vmatprep.subr.mxu0 %v4354
    %4405 = vmatpush1.msra.mxu0 %v4353
    %4406 = vmatprep.subr.mxu0 %v4357
    %4407 = vmatpush1.msra.mxu0 %v4356
    %4408 = vmatprep.subr.mxu0 0.0
    %4409 = vmatpush1.msra.mxu0 0.0
    %4410 = vmatprep.subr.mxu0 0.0
    %4411 = vmatpush1.msra.mxu0 0.0
    %4412 = vmatprep.subr.mxu0 0.0
    %4413 = vmatpush1.msra.mxu0 0.0
    %4414 = vmatprep.subr.mxu0 0.0
    %4415 = vmatpush1.msra.mxu0 0.0
    %4416 = vmatprep.subr.mxu0 0.0
    %4417 = vmatpush1.msra.mxu0 0.0
    %4418 = vmatprep.subr.mxu0 0.0
    %4419 = vmatpush1.msra.mxu0 0.0
    %4420 = vmatprep.subr.mxu0 0.0
    %4421 = vmatpush1.msra.mxu0 0.0
    %4422 = vmatprep.subr.mxu0 0.0
    %4423 = vmatpush1.msra.mxu0 0.0
    %4424 = vmatprep.subr.mxu0 0.0
    %4425 = vmatpush1.msra.mxu0 0.0
    %4426 = vmatprep.subr.mxu0 0.0
    %4427 = vmatpush1.msra.mxu0 0.0
    %4428 = vmatprep.subr.mxu0 0.0
    %4429 = vmatpush1.msra.mxu0 0.0
    %4430 = vmatprep.subr.mxu0 0.0
    %4431 = vmatpush1.msra.mxu0 0.0
    %4432 = vmatprep.subr.mxu0 0.0
    %4433 = vmatpush1.msra.mxu0 0.0
    %4434 = vmatprep.subr.mxu0 0.0
    %4435 = vmatpush1.msra.mxu0 0.0
    %4436 = vmatprep.subr.mxu0 0.0
    %4437 = vmatpush1.msra.mxu0 0.0
    %4438 = vmatprep.subr.mxu0 0.0
    %4439 = vmatpush1.msra.mxu0 0.0
    %4440 = vmatprep.mubr.f32.mxu0 0.0
    %4441 = vmatmul.mubr.f32.gmra.mrb[0].mxu0 %v3890
    %v4442 = vpop.f32.mrb[0].mxu0
    %v4443 = vadd.f32 %v4364, %v4442
    %v4444 = vpop.f32.mrb[0].mxu0
    %v4445 = vadd.f32 %v4368, %v4444
    %4446 = vdwg.mxu0
    %4447 = vmatprep.subr.mxu0 0.0
    %4448 = vmatpush1.msra.mxu0 %v4313
    %4449 = vmatprep.subr.mxu0 0.0
    %4450 = vmatpush1.msra.mxu0 %v4316
    %4451 = vmatprep.subr.mxu0 0.0
    %4452 = vmatpush1.msra.mxu0 %v4319
    %4453 = vmatprep.subr.mxu0 0.0
    %4454 = vmatpush1.msra.mxu0 %v4322
    %4455 = vmatprep.subr.mxu0 0.0
    %4456 = vmatpush1.msra.mxu0 %v4325
    %4457 = vmatprep.subr.mxu0 0.0
    %4458 = vmatpush1.msra.mxu0 %v4328
    %4459 = vmatprep.subr.mxu0 0.0
    %4460 = vmatpush1.msra.mxu0 %v4331
    %4461 = vmatprep.subr.mxu0 0.0
    %4462 = vmatpush1.msra.mxu0 %v4334
    %4463 = vmatprep.subr.mxu0 0.0
    %4464 = vmatpush1.msra.mxu0 %v4337
    %4465 = vmatprep.subr.mxu0 0.0
    %4466 = vmatpush1.msra.mxu0 %v4340
    %4467 = vmatprep.subr.mxu0 0.0
    %4468 = vmatpush1.msra.mxu0 %v4343
    %4469 = vmatprep.subr.mxu0 0.0
    %4470 = vmatpush1.msra.mxu0 %v4346
    %4471 = vmatprep.subr.mxu0 0.0
    %4472 = vmatpush1.msra.mxu0 %v4349
    %4473 = vmatprep.subr.mxu0 0.0
    %4474 = vmatpush1.msra.mxu0 %v4352
    %4475 = vmatprep.subr.mxu0 0.0
    %4476 = vmatpush1.msra.mxu0 %v4355
    %4477 = vmatprep.subr.mxu0 0.0
    %4478 = vmatpush1.msra.mxu0 %v4358
    %4479 = vmatprep.subr.mxu0 0.0
    %4480 = vmatpush1.msra.mxu0 0.0
    %4481 = vmatprep.subr.mxu0 0.0
    %4482 = vmatpush1.msra.mxu0 0.0
    %4483 = vmatprep.subr.mxu0 0.0
    %4484 = vmatpush1.msra.mxu0 0.0
    %4485 = vmatprep.subr.mxu0 0.0
    %4486 = vmatpush1.msra.mxu0 0.0
    %4487 = vmatprep.subr.mxu0 0.0
    %4488 = vmatpush1.msra.mxu0 0.0
    %4489 = vmatprep.subr.mxu0 0.0
    %4490 = vmatpush1.msra.mxu0 0.0
    %4491 = vmatprep.subr.mxu0 0.0
    %4492 = vmatpush1.msra.mxu0 0.0
    %4493 = vmatprep.subr.mxu0 0.0
    %4494 = vmatpush1.msra.mxu0 0.0
    %4495 = vmatprep.subr.mxu0 0.0
    %4496 = vmatpush1.msra.mxu0 0.0
    %4497 = vmatprep.subr.mxu0 0.0
    %4498 = vmatpush1.msra.mxu0 0.0
    %4499 = vmatprep.subr.mxu0 0.0
    %4500 = vmatpush1.msra.mxu0 0.0
    %4501 = vmatprep.subr.mxu0 0.0
    %4502 = vmatpush1.msra.mxu0 0.0
    %4503 = vmatprep.subr.mxu0 0.0
    %4504 = vmatpush1.msra.mxu0 0.0
    %4505 = vmatprep.subr.mxu0 0.0
    %4506 = vmatpush1.msra.mxu0 0.0
    %4507 = vmatprep.subr.mxu0 0.0
    %4508 = vmatpush1.msra.mxu0 0.0
    %4509 = vmatprep.subr.mxu0 0.0
    %4510 = vmatpush1.msra.mxu0 0.0
    %4511 = vmatprep.mubr.f32.mxu0 0.0
    %4512 = vmatmul.mubr.f32.gmra.mrb[0].mxu0 %v3890
    %v4513 = vpop.f32.mrb[0].mxu0
    %v4514 = vadd.f32 %v4372, %v4513
    %v4515 = vpop.f32.mrb[0].mxu0
    %4516 = vdwg.mxu0
    %v4517 = vadd.f32 %v4237, %v4443
    %v4518 = vxor.u32 %v4517, 2147483648
    %v4519 = vmul.f32 %v4518, 1.442695
    %v4520 = vpow.pop %v4519
    %v4521 = vadd.f32 %v4520, 1.0
    %v4522 = vrcp.pop %v4521
    %v4523 = vmul.f32 1.0, %v4522
    %v4524 = vadd.f32 %v4239, %v4445
    %v4525 = vxor.u32 %v4524, 2147483648
    %v4526 = vmul.f32 %v4525, 1.442695
    %v4527 = vpow.pop %v4526
    %v4528 = vadd.f32 %v4527, 1.0
    %v4529 = vrcp.pop %v4528
    %v4530 = vmul.f32 1.0, %v4529
    %v4531 = vmul.f32 %v4523, %v4514
    %v4532 = vadd.f32 %v4308, %v4531
    %v4533 = vtanh.pop %v4532
    %v4534 = vsub.f32 1.0, %v4530
    %v4535 = vmul.f32 %v4534, %v4533
    %v4536 = vmul.f32 %v4530, %v3890
    %v4537 = vadd.f32 %v4535, %v4536
    %v4538 = vld [vmem:[#allocation8] sm:$0xff]
    %v4539 = vld [vmem:[#allocation8 + $0x8] sm:$0xff]
    %v4540 = vld [vmem:[#allocation8 + $0x10] sm:$0xff]
    %v4541 = vld [vmem:[#allocation8 + $0x18] sm:$0xff]
    %v4542 = vld [vmem:[#allocation8 + $0x20] sm:$0xff]
    %v4543 = vld [vmem:[#allocation8 + $0x28] sm:$0xff]
    %v4544 = vld [vmem:[#allocation8 + $0x30] sm:$0xff]
    %v4545 = vld [vmem:[#allocation8 + $0x38] sm:$0xff]
    %v4546 = vld [vmem:[#allocation8 + $0x40] sm:$0xff]
    %v4547 = vld [vmem:[#allocation8 + $0x48] sm:$0xff]
    %v4548 = vld [vmem:[#allocation8 + $0x50] sm:$0xff]
    %v4549 = vld [vmem:[#allocation8 + $0x58] sm:$0xff]
    %v4550 = vld [vmem:[#allocation8 + $0x60] sm:$0xff]
    %v4551 = vld [vmem:[#allocation8 + $0x68] sm:$0xff]
    %v4552 = vld [vmem:[#allocation8 + $0x70] sm:$0xff]
    %v4553 = vld [vmem:[#allocation8 + $0x78] sm:$0xff]
    %v4554 = vld [vmem:[%s11] sm:$0x1]
    %v4556 = vlaneseq
    %v4557 = vshrl.u32 %v4556, 7
    %v4558 = vsub.s32 0, %v4557
    %v4559 = vrot.slane %v4554, %v4558
    %4561 = vmatprep.subr.mxu0 0.0
    %4562 = vmatpush1.msra.mxu0 %v4538
    %4563 = vmatprep.subr.mxu0 0.0
    %4564 = vmatpush1.msra.mxu0 %v4539
    %4565 = vmatprep.subr.mxu0 0.0
    %4566 = vmatpush1.msra.mxu0 %v4540
    %4567 = vmatprep.subr.mxu0 0.0
    %4568 = vmatpush1.msra.mxu0 %v4541
    %4569 = vmatprep.subr.mxu0 0.0
    %4570 = vmatpush1.msra.mxu0 %v4542
    %4571 = vmatprep.subr.mxu0 0.0
    %4572 = vmatpush1.msra.mxu0 %v4543
    %4573 = vmatprep.subr.mxu0 0.0
    %4574 = vmatpush1.msra.mxu0 %v4544
    %4575 = vmatprep.subr.mxu0 0.0
    %4576 = vmatpush1.msra.mxu0 %v4545
    %4577 = vmatprep.subr.mxu0 0.0
    %4578 = vmatpush1.msra.mxu0 %v4546
    %4579 = vmatprep.subr.mxu0 0.0
    %4580 = vmatpush1.msra.mxu0 %v4547
    %4581 = vmatprep.subr.mxu0 0.0
    %4582 = vmatpush1.msra.mxu0 %v4548
    %4583 = vmatprep.subr.mxu0 0.0
    %4584 = vmatpush1.msra.mxu0 %v4549
    %4585 = vmatprep.subr.mxu0 0.0
    %4586 = vmatpush1.msra.mxu0 %v4550
    %4587 = vmatprep.subr.mxu0 0.0
    %4588 = vmatpush1.msra.mxu0 %v4551
    %4589 = vmatprep.subr.mxu0 0.0
    %4590 = vmatpush1.msra.mxu0 %v4552
    %4591 = vmatprep.subr.mxu0 0.0
    %4592 = vmatpush1.msra.mxu0 %v4553
    %4593 = vmatprep.subr.mxu0 0.0
    %4594 = vmatpush1.msra.mxu0 0.0
    %4595 = vmatprep.subr.mxu0 0.0
    %4596 = vmatpush1.msra.mxu0 0.0
    %4597 = vmatprep.subr.mxu0 0.0
    %4598 = vmatpush1.msra.mxu0 0.0
    %4599 = vmatprep.subr.mxu0 0.0
    %4600 = vmatpush1.msra.mxu0 0.0
    %4601 = vmatprep.subr.mxu0 0.0
    %4602 = vmatpush1.msra.mxu0 0.0
    %4603 = vmatprep.subr.mxu0 0.0
    %4604 = vmatpush1.msra.mxu0 0.0
    %4605 = vmatprep.subr.mxu0 0.0
    %4606 = vmatpush1.msra.mxu0 0.0
    %4607 = vmatprep.subr.mxu0 0.0
    %4608 = vmatpush1.msra.mxu0 0.0
    %4609 = vmatprep.subr.mxu0 0.0
    %4610 = vmatpush1.msra.mxu0 0.0
    %4611 = vmatprep.subr.mxu0 0.0
    %4612 = vmatpush1.msra.mxu0 0.0
    %4613 = vmatprep.subr.mxu0 0.0
    %4614 = vmatpush1.msra.mxu0 0.0
    %4615 = vmatprep.subr.mxu0 0.0
    %4616 = vmatpush1.msra.mxu0 0.0
    %4617 = vmatprep.subr.mxu0 0.0
    %4618 = vmatpush1.msra.mxu0 0.0
    %4619 = vmatprep.subr.mxu0 0.0
    %4620 = vmatpush1.msra.mxu0 0.0
    %4621 = vmatprep.subr.mxu0 0.0
    %4622 = vmatpush1.msra.mxu0 0.0
    %4623 = vmatprep.subr.mxu0 0.0
    %4624 = vmatpush1.msra.mxu0 0.0
    %4625 = vmatprep.mubr.f32.mxu0 0.0
    %4626 = vmatmul.mubr.f32.gmra.mrb[0].mxu0 %v4537
    %v4627 = vpop.f32.mrb[0].mxu0
    %v4628 = vadd.f32 %v4559, %v4627
    %v4629 = vpop.f32.mrb[0].mxu0
    %4630 = vdwg.mxu0
    %s4631 = scalar_lea.vmem %s12, 48
    %4632 = vst [vmem:[%s4631] sm:$0xff] %v4628
    %s4633 = scalar_lea.vmem [#allocation3], 56
    %v4634 = vld [vmem:[%s4633] sm:$0xff]
    %v4635 = vld [vmem:[%s2] sm:$0xff]
    %v4636 = vld [vmem:[%s2 + $0x8] sm:$0xff]
    %v4637 = vld [vmem:[%s2 + $0x10] sm:$0xff]
    %v4638 = vld [vmem:[%s2 + $0x18] sm:$0xff]
    %v4639 = vld [vmem:[%s2 + $0x20] sm:$0xff]
    %v4640 = vld [vmem:[%s2 + $0x28] sm:$0xff]
    %v4641 = vld [vmem:[%s3] sm:$0x1]
    %v4643 = vlaneseq
    %v4644 = vshrl.u32 %v4643, 7
    %v4645 = vsub.s32 0, %v4644
    %v4646 = vrot.slane %v4641, %v4645
    %v4649 = vsel %vm119, %v4634, 0
    %4651 = vmatprep.subr.mxu0 0.0
    %4652 = vmatpush1.msra.mxu0 %v4635
    %4653 = vmatprep.subr.mxu0 0.0
    %4654 = vmatpush1.msra.mxu0 %v4636
    %4655 = vmatprep.subr.mxu0 0.0
    %4656 = vmatpush1.msra.mxu0 %v4637
    %4657 = vmatprep.subr.mxu0 0.0
    %4658 = vmatpush1.msra.mxu0 %v4638
    %4659 = vmatprep.subr.mxu0 0.0
    %4660 = vmatpush1.msra.mxu0 %v4639
    %4661 = vmatprep.subr.mxu0 0.0
    %4662 = vmatpush1.msra.mxu0 %v4640
    %4663 = vmatprep.subr.mxu0 0.0
    %4664 = vmatpush1.msra.mxu0 0.0
    %4665 = vmatprep.subr.mxu0 0.0
    %4666 = vmatpush1.msra.mxu0 0.0
    %4667 = vmatprep.subr.mxu0 0.0
    %4668 = vmatpush1.msra.mxu0 0.0
    %4669 = vmatprep.subr.mxu0 0.0
    %4670 = vmatpush1.msra.mxu0 0.0
    %4671 = vmatprep.subr.mxu0 0.0
    %4672 = vmatpush1.msra.mxu0 0.0
    %4673 = vmatprep.subr.mxu0 0.0
    %4674 = vmatpush1.msra.mxu0 0.0
    %4675 = vmatprep.subr.mxu0 0.0
    %4676 = vmatpush1.msra.mxu0 0.0
    %4677 = vmatprep.subr.mxu0 0.0
    %4678 = vmatpush1.msra.mxu0 0.0
    %4679 = vmatprep.subr.mxu0 0.0
    %4680 = vmatpush1.msra.mxu0 0.0
    %4681 = vmatprep.subr.mxu0 0.0
    %4682 = vmatpush1.msra.mxu0 0.0
    %4683 = vmatprep.subr.mxu0 0.0
    %4684 = vmatpush1.msra.mxu0 0.0
    %4685 = vmatprep.subr.mxu0 0.0
    %4686 = vmatpush1.msra.mxu0 0.0
    %4687 = vmatprep.subr.mxu0 0.0
    %4688 = vmatpush1.msra.mxu0 0.0
    %4689 = vmatprep.subr.mxu0 0.0
    %4690 = vmatpush1.msra.mxu0 0.0
    %4691 = vmatprep.subr.mxu0 0.0
    %4692 = vmatpush1.msra.mxu0 0.0
    %4693 = vmatprep.subr.mxu0 0.0
    %4694 = vmatpush1.msra.mxu0 0.0
    %4695 = vmatprep.subr.mxu0 0.0
    %4696 = vmatpush1.msra.mxu0 0.0
    %4697 = vmatprep.subr.mxu0 0.0
    %4698 = vmatpush1.msra.mxu0 0.0
    %4699 = vmatprep.subr.mxu0 0.0
    %4700 = vmatpush1.msra.mxu0 0.0
    %4701 = vmatprep.subr.mxu0 0.0
    %4702 = vmatpush1.msra.mxu0 0.0
    %4703 = vmatprep.subr.mxu0 0.0
    %4704 = vmatpush1.msra.mxu0 0.0
    %4705 = vmatprep.subr.mxu0 0.0
    %4706 = vmatpush1.msra.mxu0 0.0
    %4707 = vmatprep.subr.mxu0 0.0
    %4708 = vmatpush1.msra.mxu0 0.0
    %4709 = vmatprep.subr.mxu0 0.0
    %4710 = vmatpush1.msra.mxu0 0.0
    %4711 = vmatprep.subr.mxu0 0.0
    %4712 = vmatpush1.msra.mxu0 0.0
    %4713 = vmatprep.subr.mxu0 0.0
    %4714 = vmatpush1.msra.mxu0 0.0
    %4715 = vmatprep.mubr.f32.mxu0 0.0
    %4716 = vmatmul.mubr.f32.gmra.mrb[0].mxu0 %v4649
    %v4717 = vpop.f32.mrb[0].mxu0
    %v4718 = vadd.f32 %v4646, %v4717
    %v4719 = vpop.f32.mrb[0].mxu0
    %4720 = vdwg.mxu0
    %4721 = vadd.xlane.f32.xlu0 %v4718
    %v4722 = vpop.xlane.xlu0 %4721
    %v4723 = vmul.f32 %v4722, 0.03125
    %v4724 = vmul.f32 %v4718, %v4718
    %4725 = vadd.xlane.f32.xlu0 %v4724
    %v4726 = vpop.xlane.xlu0 %4725
    %v4727 = vmul.f32 %v4726, 0.03125
    %v4728 = vmul.f32 %v4723, %v4723
    %v4729 = vsub.f32 %v4727, %v4728
    %v4730 = vmax.f32 %v4729, 0.0
    %v4731 = vsub.f32 %v4718, %v4723
    %v4732 = vadd.f32 %v4730, 1e-05
    %v4733 = vrsqrt.pop %v4732
    %v4734 = vmul.f32 %v4731, %v4733
    %v4735 = vld [vmem:[%s4] sm:$0x1]
    %v4737 = vlaneseq
    %v4738 = vshrl.u32 %v4737, 7
    %v4739 = vsub.s32 0, %v4738
    %v4740 = vrot.slane %v4735, %v4739
    %v4742 = vmul.f32 %v4734, %v4740
    %v4743 = vld [vmem:[%s5] sm:$0x1]
    %v4745 = vlaneseq
    %v4746 = vshrl.u32 %v4745, 7
    %v4747 = vsub.s32 0, %v4746
    %v4748 = vrot.slane %v4743, %v4747
    %v4750 = vadd.f32 %v4742, %v4748
    %v4751 = vmax.f32 %v4750, 0.0
    %v4752 = vld [vmem:[#allocation5] sm:$0xff]
    %v4753 = vld [vmem:[#allocation5 + $0x8] sm:$0xff]
    %v4754 = vld [vmem:[#allocation5 + $0x10] sm:$0xff]
    %v4755 = vld [vmem:[#allocation5 + $0x18] sm:$0xff]
    %v4756 = vld [vmem:[#allocation5 + $0x20] sm:$0xff]
    %v4757 = vld [vmem:[#allocation5 + $0x28] sm:$0xff]
    %v4758 = vld [vmem:[#allocation5 + $0x30] sm:$0xff]
    %v4759 = vld [vmem:[#allocation5 + $0x38] sm:$0xff]
    %v4760 = vld [vmem:[#allocation5 + $0x40] sm:$0xff]
    %v4761 = vld [vmem:[#allocation5 + $0x48] sm:$0xff]
    %v4762 = vld [vmem:[#allocation5 + $0x50] sm:$0xff]
    %v4763 = vld [vmem:[#allocation5 + $0x58] sm:$0xff]
    %v4764 = vld [vmem:[#allocation5 + $0x60] sm:$0xff]
    %v4765 = vld [vmem:[#allocation5 + $0x68] sm:$0xff]
    %v4766 = vld [vmem:[#allocation5 + $0x70] sm:$0xff]
    %v4767 = vld [vmem:[#allocation5 + $0x78] sm:$0xff]
    %v4768 = vld [vmem:[#allocation5 + $0x80] sm:$0xff]
    %v4769 = vld [vmem:[#allocation5 + $0x88] sm:$0xff]
    %v4770 = vld [vmem:[#allocation5 + $0x90] sm:$0xff]
    %v4771 = vld [vmem:[#allocation5 + $0x98] sm:$0xff]
    %v4772 = vld [vmem:[#allocation5 + $0xa0] sm:$0xff]
    %v4773 = vld [vmem:[#allocation5 + $0xa8] sm:$0xff]
    %v4774 = vld [vmem:[#allocation5 + $0xb0] sm:$0xff]
    %v4775 = vld [vmem:[#allocation5 + $0xb8] sm:$0xff]
    %v4776 = vld [vmem:[#allocation5 + $0xc0] sm:$0xff]
    %v4777 = vld [vmem:[#allocation5 + $0xc8] sm:$0xff]
    %v4778 = vld [vmem:[#allocation5 + $0xd0] sm:$0xff]
    %v4779 = vld [vmem:[#allocation5 + $0xd8] sm:$0xff]
    %v4780 = vld [vmem:[#allocation5 + $0xe0] sm:$0xff]
    %v4781 = vld [vmem:[#allocation5 + $0xe8] sm:$0xff]
    %v4782 = vld [vmem:[#allocation5 + $0xf0] sm:$0xff]
    %v4783 = vld [vmem:[#allocation5 + $0xf8] sm:$0xff]
    %v4784 = vld [vmem:[#allocation5 + $0x100] sm:$0xff]
    %v4785 = vld [vmem:[#allocation5 + $0x108] sm:$0xff]
    %v4786 = vld [vmem:[#allocation5 + $0x110] sm:$0xff]
    %v4787 = vld [vmem:[#allocation5 + $0x118] sm:$0xff]
    %v4788 = vld [vmem:[#allocation5 + $0x120] sm:$0xff]
    %v4789 = vld [vmem:[#allocation5 + $0x128] sm:$0xff]
    %v4790 = vld [vmem:[#allocation5 + $0x130] sm:$0xff]
    %v4791 = vld [vmem:[#allocation5 + $0x138] sm:$0xff]
    %v4792 = vld [vmem:[#allocation5 + $0x140] sm:$0xff]
    %v4793 = vld [vmem:[#allocation5 + $0x148] sm:$0xff]
    %v4794 = vld [vmem:[#allocation5 + $0x150] sm:$0xff]
    %v4795 = vld [vmem:[#allocation5 + $0x158] sm:$0xff]
    %v4796 = vld [vmem:[#allocation5 + $0x160] sm:$0xff]
    %v4797 = vld [vmem:[#allocation5 + $0x168] sm:$0xff]
    %v4798 = vld [vmem:[#allocation5 + $0x170] sm:$0xff]
    %v4799 = vld [vmem:[#allocation5 + $0x178] sm:$0xff]
    %v4800 = vld [vmem:[%s7] sm:$0x7]
    %v4802 = vlaneseq
    %v4803 = vshrl.u32 %v4802, 7
    %v4804 = vsub.s32 0, %v4803
    %v4805 = vrot.slane %v4800, %v4804
    %v4806 = vlaneseq
    %v4807 = vshrl.u32 %v4806, 7
    %v4808 = vsub.s32 1, %v4807
    %v4809 = vrot.slane %v4800, %v4808
    %v4810 = vlaneseq
    %v4811 = vshrl.u32 %v4810, 7
    %v4812 = vsub.s32 2, %v4811
    %v4813 = vrot.slane %v4800, %v4812
    %4817 = vmatprep.subr.mxu0 %v4753
    %4818 = vmatpush1.msra.mxu0 %v4752
    %4819 = vmatprep.subr.mxu0 %v4756
    %4820 = vmatpush1.msra.mxu0 %v4755
    %4821 = vmatprep.subr.mxu0 %v4759
    %4822 = vmatpush1.msra.mxu0 %v4758
    %4823 = vmatprep.subr.mxu0 %v4762
    %4824 = vmatpush1.msra.mxu0 %v4761
    %4825 = vmatprep.subr.mxu0 %v4765
    %4826 = vmatpush1.msra.mxu0 %v4764
    %4827 = vmatprep.subr.mxu0 %v4768
    %4828 = vmatpush1.msra.mxu0 %v4767
    %4829 = vmatprep.subr.mxu0 %v4771
    %4830 = vmatpush1.msra.mxu0 %v4770
    %4831 = vmatprep.subr.mxu0 %v4774
    %4832 = vmatpush1.msra.mxu0 %v4773
    %4833 = vmatprep.subr.mxu0 %v4777
    %4834 = vmatpush1.msra.mxu0 %v4776
    %4835 = vmatprep.subr.mxu0 %v4780
    %4836 = vmatpush1.msra.mxu0 %v4779
    %4837 = vmatprep.subr.mxu0 %v4783
    %4838 = vmatpush1.msra.mxu0 %v4782
    %4839 = vmatprep.subr.mxu0 %v4786
    %4840 = vmatpush1.msra.mxu0 %v4785
    %4841 = vmatprep.subr.mxu0 %v4789
    %4842 = vmatpush1.msra.mxu0 %v4788
    %4843 = vmatprep.subr.mxu0 %v4792
    %4844 = vmatpush1.msra.mxu0 %v4791
    %4845 = vmatprep.subr.mxu0 %v4795
    %4846 = vmatpush1.msra.mxu0 %v4794
    %4847 = vmatprep.subr.mxu0 %v4798
    %4848 = vmatpush1.msra.mxu0 %v4797
    %4849 = vmatprep.subr.mxu0 0.0
    %4850 = vmatpush1.msra.mxu0 0.0
    %4851 = vmatprep.subr.mxu0 0.0
    %4852 = vmatpush1.msra.mxu0 0.0
    %4853 = vmatprep.subr.mxu0 0.0
    %4854 = vmatpush1.msra.mxu0 0.0
    %4855 = vmatprep.subr.mxu0 0.0
    %4856 = vmatpush1.msra.mxu0 0.0
    %4857 = vmatprep.subr.mxu0 0.0
    %4858 = vmatpush1.msra.mxu0 0.0
    %4859 = vmatprep.subr.mxu0 0.0
    %4860 = vmatpush1.msra.mxu0 0.0
    %4861 = vmatprep.subr.mxu0 0.0
    %4862 = vmatpush1.msra.mxu0 0.0
    %4863 = vmatprep.subr.mxu0 0.0
    %4864 = vmatpush1.msra.mxu0 0.0
    %4865 = vmatprep.subr.mxu0 0.0
    %4866 = vmatpush1.msra.mxu0 0.0
    %4867 = vmatprep.subr.mxu0 0.0
    %4868 = vmatpush1.msra.mxu0 0.0
    %4869 = vmatprep.subr.mxu0 0.0
    %4870 = vmatpush1.msra.mxu0 0.0
    %4871 = vmatprep.subr.mxu0 0.0
    %4872 = vmatpush1.msra.mxu0 0.0
    %4873 = vmatprep.subr.mxu0 0.0
    %4874 = vmatpush1.msra.mxu0 0.0
    %4875 = vmatprep.subr.mxu0 0.0
    %4876 = vmatpush1.msra.mxu0 0.0
    %4877 = vmatprep.subr.mxu0 0.0
    %4878 = vmatpush1.msra.mxu0 0.0
    %4879 = vmatprep.subr.mxu0 0.0
    %4880 = vmatpush1.msra.mxu0 0.0
    %4881 = vmatprep.mubr.f32.mxu0 0.0
    %4882 = vmatmul.mubr.f32.gmra.mrb[0].mxu0 %v4751
    %v4883 = vpop.f32.mrb[0].mxu0
    %v4884 = vadd.f32 %v4805, %v4883
    %v4885 = vpop.f32.mrb[0].mxu0
    %v4886 = vadd.f32 %v4809, %v4885
    %4887 = vdwg.mxu0
    %4888 = vmatprep.subr.mxu0 0.0
    %4889 = vmatpush1.msra.mxu0 %v4754
    %4890 = vmatprep.subr.mxu0 0.0
    %4891 = vmatpush1.msra.mxu0 %v4757
    %4892 = vmatprep.subr.mxu0 0.0
    %4893 = vmatpush1.msra.mxu0 %v4760
    %4894 = vmatprep.subr.mxu0 0.0
    %4895 = vmatpush1.msra.mxu0 %v4763
    %4896 = vmatprep.subr.mxu0 0.0
    %4897 = vmatpush1.msra.mxu0 %v4766
    %4898 = vmatprep.subr.mxu0 0.0
    %4899 = vmatpush1.msra.mxu0 %v4769
    %4900 = vmatprep.subr.mxu0 0.0
    %4901 = vmatpush1.msra.mxu0 %v4772
    %4902 = vmatprep.subr.mxu0 0.0
    %4903 = vmatpush1.msra.mxu0 %v4775
    %4904 = vmatprep.subr.mxu0 0.0
    %4905 = vmatpush1.msra.mxu0 %v4778
    %4906 = vmatprep.subr.mxu0 0.0
    %4907 = vmatpush1.msra.mxu0 %v4781
    %4908 = vmatprep.subr.mxu0 0.0
    %4909 = vmatpush1.msra.mxu0 %v4784
    %4910 = vmatprep.subr.mxu0 0.0
    %4911 = vmatpush1.msra.mxu0 %v4787
    %4912 = vmatprep.subr.mxu0 0.0
    %4913 = vmatpush1.msra.mxu0 %v4790
    %4914 = vmatprep.subr.mxu0 0.0
    %4915 = vmatpush1.msra.mxu0 %v4793
    %4916 = vmatprep.subr.mxu0 0.0
    %4917 = vmatpush1.msra.mxu0 %v4796
    %4918 = vmatprep.subr.mxu0 0.0
    %4919 = vmatpush1.msra.mxu0 %v4799
    %4920 = vmatprep.subr.mxu0 0.0
    %4921 = vmatpush1.msra.mxu0 0.0
    %4922 = vmatprep.subr.mxu0 0.0
    %4923 = vmatpush1.msra.mxu0 0.0
    %4924 = vmatprep.subr.mxu0 0.0
    %4925 = vmatpush1.msra.mxu0 0.0
    %4926 = vmatprep.subr.mxu0 0.0
    %4927 = vmatpush1.msra.mxu0 0.0
    %4928 = vmatprep.subr.mxu0 0.0
    %4929 = vmatpush1.msra.mxu0 0.0
    %4930 = vmatprep.subr.mxu0 0.0
    %4931 = vmatpush1.msra.mxu0 0.0
    %4932 = vmatprep.subr.mxu0 0.0
    %4933 = vmatpush1.msra.mxu0 0.0
    %4934 = vmatprep.subr.mxu0 0.0
    %4935 = vmatpush1.msra.mxu0 0.0
    %4936 = vmatprep.subr.mxu0 0.0
    %4937 = vmatpush1.msra.mxu0 0.0
    %4938 = vmatprep.subr.mxu0 0.0
    %4939 = vmatpush1.msra.mxu0 0.0
    %4940 = vmatprep.subr.mxu0 0.0
    %4941 = vmatpush1.msra.mxu0 0.0
    %4942 = vmatprep.subr.mxu0 0.0
    %4943 = vmatpush1.msra.mxu0 0.0
    %4944 = vmatprep.subr.mxu0 0.0
    %4945 = vmatpush1.msra.mxu0 0.0
    %4946 = vmatprep.subr.mxu0 0.0
    %4947 = vmatpush1.msra.mxu0 0.0
    %4948 = vmatprep.subr.mxu0 0.0
    %4949 = vmatpush1.msra.mxu0 0.0
    %4950 = vmatprep.subr.mxu0 0.0
    %4951 = vmatpush1.msra.mxu0 0.0
    %4952 = vmatprep.mubr.f32.mxu0 0.0
    %4953 = vmatmul.mubr.f32.gmra.mrb[0].mxu0 %v4751
    %v4954 = vpop.f32.mrb[0].mxu0
    %v4955 = vadd.f32 %v4813, %v4954
    %v4956 = vpop.f32.mrb[0].mxu0
    %4957 = vdwg.mxu0
    %v4958 = vld [vmem:[#allocation7] sm:$0xff]
    %v4959 = vld [vmem:[#allocation7 + $0x8] sm:$0xff]
    %v4960 = vld [vmem:[#allocation7 + $0x10] sm:$0xff]
    %v4961 = vld [vmem:[#allocation7 + $0x18] sm:$0xff]
    %v4962 = vld [vmem:[#allocation7 + $0x20] sm:$0xff]
    %v4963 = vld [vmem:[#allocation7 + $0x28] sm:$0xff]
    %v4964 = vld [vmem:[#allocation7 + $0x30] sm:$0xff]
    %v4965 = vld [vmem:[#allocation7 + $0x38] sm:$0xff]
    %v4966 = vld [vmem:[#allocation7 + $0x40] sm:$0xff]
    %v4967 = vld [vmem:[#allocation7 + $0x48] sm:$0xff]
    %v4968 = vld [vmem:[#allocation7 + $0x50] sm:$0xff]
    %v4969 = vld [vmem:[#allocation7 + $0x58] sm:$0xff]
    %v4970 = vld [vmem:[#allocation7 + $0x60] sm:$0xff]
    %v4971 = vld [vmem:[#allocation7 + $0x68] sm:$0xff]
    %v4972 = vld [vmem:[#allocation7 + $0x70] sm:$0xff]
    %v4973 = vld [vmem:[#allocation7 + $0x78] sm:$0xff]
    %v4974 = vld [vmem:[#allocation7 + $0x80] sm:$0xff]
    %v4975 = vld [vmem:[#allocation7 + $0x88] sm:$0xff]
    %v4976 = vld [vmem:[#allocation7 + $0x90] sm:$0xff]
    %v4977 = vld [vmem:[#allocation7 + $0x98] sm:$0xff]
    %v4978 = vld [vmem:[#allocation7 + $0xa0] sm:$0xff]
    %v4979 = vld [vmem:[#allocation7 + $0xa8] sm:$0xff]
    %v4980 = vld [vmem:[#allocation7 + $0xb0] sm:$0xff]
    %v4981 = vld [vmem:[#allocation7 + $0xb8] sm:$0xff]
    %v4982 = vld [vmem:[#allocation7 + $0xc0] sm:$0xff]
    %v4983 = vld [vmem:[#allocation7 + $0xc8] sm:$0xff]
    %v4984 = vld [vmem:[#allocation7 + $0xd0] sm:$0xff]
    %v4985 = vld [vmem:[#allocation7 + $0xd8] sm:$0xff]
    %v4986 = vld [vmem:[#allocation7 + $0xe0] sm:$0xff]
    %v4987 = vld [vmem:[#allocation7 + $0xe8] sm:$0xff]
    %v4988 = vld [vmem:[#allocation7 + $0xf0] sm:$0xff]
    %v4989 = vld [vmem:[#allocation7 + $0xf8] sm:$0xff]
    %v4990 = vld [vmem:[#allocation7 + $0x100] sm:$0xff]
    %v4991 = vld [vmem:[#allocation7 + $0x108] sm:$0xff]
    %v4992 = vld [vmem:[#allocation7 + $0x110] sm:$0xff]
    %v4993 = vld [vmem:[#allocation7 + $0x118] sm:$0xff]
    %v4994 = vld [vmem:[#allocation7 + $0x120] sm:$0xff]
    %v4995 = vld [vmem:[#allocation7 + $0x128] sm:$0xff]
    %v4996 = vld [vmem:[#allocation7 + $0x130] sm:$0xff]
    %v4997 = vld [vmem:[#allocation7 + $0x138] sm:$0xff]
    %v4998 = vld [vmem:[#allocation7 + $0x140] sm:$0xff]
    %v4999 = vld [vmem:[#allocation7 + $0x148] sm:$0xff]
    %v5000 = vld [vmem:[#allocation7 + $0x150] sm:$0xff]
    %v5001 = vld [vmem:[#allocation7 + $0x158] sm:$0xff]
    %v5002 = vld [vmem:[#allocation7 + $0x160] sm:$0xff]
    %v5003 = vld [vmem:[#allocation7 + $0x168] sm:$0xff]
    %v5004 = vld [vmem:[#allocation7 + $0x170] sm:$0xff]
    %v5005 = vld [vmem:[#allocation7 + $0x178] sm:$0xff]
    %v5006 = vld [vmem:[%s9] sm:$0x7]
    %v5008 = vlaneseq
    %v5009 = vshrl.u32 %v5008, 7
    %v5010 = vsub.s32 0, %v5009
    %v5011 = vrot.slane %v5006, %v5010
    %v5012 = vlaneseq
    %v5013 = vshrl.u32 %v5012, 7
    %v5014 = vsub.s32 1, %v5013
    %v5015 = vrot.slane %v5006, %v5014
    %v5016 = vlaneseq
    %v5017 = vshrl.u32 %v5016, 7
    %v5018 = vsub.s32 2, %v5017
    %v5019 = vrot.slane %v5006, %v5018
    %5023 = vmatprep.subr.mxu0 %v4959
    %5024 = vmatpush1.msra.mxu0 %v4958
    %5025 = vmatprep.subr.mxu0 %v4962
    %5026 = vmatpush1.msra.mxu0 %v4961
    %5027 = vmatprep.subr.mxu0 %v4965
    %5028 = vmatpush1.msra.mxu0 %v4964
    %5029 = vmatprep.subr.mxu0 %v4968
    %5030 = vmatpush1.msra.mxu0 %v4967
    %5031 = vmatprep.subr.mxu0 %v4971
    %5032 = vmatpush1.msra.mxu0 %v4970
    %5033 = vmatprep.subr.mxu0 %v4974
    %5034 = vmatpush1.msra.mxu0 %v4973
    %5035 = vmatprep.subr.mxu0 %v4977
    %5036 = vmatpush1.msra.mxu0 %v4976
    %5037 = vmatprep.subr.mxu0 %v4980
    %5038 = vmatpush1.msra.mxu0 %v4979
    %5039 = vmatprep.subr.mxu0 %v4983
    %5040 = vmatpush1.msra.mxu0 %v4982
    %5041 = vmatprep.subr.mxu0 %v4986
    %5042 = vmatpush1.msra.mxu0 %v4985
    %5043 = vmatprep.subr.mxu0 %v4989
    %5044 = vmatpush1.msra.mxu0 %v4988
    %5045 = vmatprep.subr.mxu0 %v4992
    %5046 = vmatpush1.msra.mxu0 %v4991
    %5047 = vmatprep.subr.mxu0 %v4995
    %5048 = vmatpush1.msra.mxu0 %v4994
    %5049 = vmatprep.subr.mxu0 %v4998
    %5050 = vmatpush1.msra.mxu0 %v4997
    %5051 = vmatprep.subr.mxu0 %v5001
    %5052 = vmatpush1.msra.mxu0 %v5000
    %5053 = vmatprep.subr.mxu0 %v5004
    %5054 = vmatpush1.msra.mxu0 %v5003
    %5055 = vmatprep.subr.mxu0 0.0
    %5056 = vmatpush1.msra.mxu0 0.0
    %5057 = vmatprep.subr.mxu0 0.0
    %5058 = vmatpush1.msra.mxu0 0.0
    %5059 = vmatprep.subr.mxu0 0.0
    %5060 = vmatpush1.msra.mxu0 0.0
    %5061 = vmatprep.subr.mxu0 0.0
    %5062 = vmatpush1.msra.mxu0 0.0
    %5063 = vmatprep.subr.mxu0 0.0
    %5064 = vmatpush1.msra.mxu0 0.0
    %5065 = vmatprep.subr.mxu0 0.0
    %5066 = vmatpush1.msra.mxu0 0.0
    %5067 = vmatprep.subr.mxu0 0.0
    %5068 = vmatpush1.msra.mxu0 0.0
    %5069 = vmatprep.subr.mxu0 0.0
    %5070 = vmatpush1.msra.mxu0 0.0
    %5071 = vmatprep.subr.mxu0 0.0
    %5072 = vmatpush1.msra.mxu0 0.0
    %5073 = vmatprep.subr.mxu0 0.0
    %5074 = vmatpush1.msra.mxu0 0.0
    %5075 = vmatprep.subr.mxu0 0.0
    %5076 = vmatpush1.msra.mxu0 0.0
    %5077 = vmatprep.subr.mxu0 0.0
    %5078 = vmatpush1.msra.mxu0 0.0
    %5079 = vmatprep.subr.mxu0 0.0
    %5080 = vmatpush1.msra.mxu0 0.0
    %5081 = vmatprep.subr.mxu0 0.0
    %5082 = vmatpush1.msra.mxu0 0.0
    %5083 = vmatprep.subr.mxu0 0.0
    %5084 = vmatpush1.msra.mxu0 0.0
    %5085 = vmatprep.subr.mxu0 0.0
    %5086 = vmatpush1.msra.mxu0 0.0
    %5087 = vmatprep.mubr.f32.mxu0 0.0
    %5088 = vmatmul.mubr.f32.gmra.mrb[0].mxu0 %v4537
    %v5089 = vpop.f32.mrb[0].mxu0
    %v5090 = vadd.f32 %v5011, %v5089
    %v5091 = vpop.f32.mrb[0].mxu0
    %v5092 = vadd.f32 %v5015, %v5091
    %5093 = vdwg.mxu0
    %5094 = vmatprep.subr.mxu0 0.0
    %5095 = vmatpush1.msra.mxu0 %v4960
    %5096 = vmatprep.subr.mxu0 0.0
    %5097 = vmatpush1.msra.mxu0 %v4963
    %5098 = vmatprep.subr.mxu0 0.0
    %5099 = vmatpush1.msra.mxu0 %v4966
    %5100 = vmatprep.subr.mxu0 0.0
    %5101 = vmatpush1.msra.mxu0 %v4969
    %5102 = vmatprep.subr.mxu0 0.0
    %5103 = vmatpush1.msra.mxu0 %v4972
    %5104 = vmatprep.subr.mxu0 0.0
    %5105 = vmatpush1.msra.mxu0 %v4975
    %5106 = vmatprep.subr.mxu0 0.0
    %5107 = vmatpush1.msra.mxu0 %v4978
    %5108 = vmatprep.subr.mxu0 0.0
    %5109 = vmatpush1.msra.mxu0 %v4981
    %5110 = vmatprep.subr.mxu0 0.0
    %5111 = vmatpush1.msra.mxu0 %v4984
    %5112 = vmatprep.subr.mxu0 0.0
    %5113 = vmatpush1.msra.mxu0 %v4987
    %5114 = vmatprep.subr.mxu0 0.0
    %5115 = vmatpush1.msra.mxu0 %v4990
    %5116 = vmatprep.subr.mxu0 0.0
    %5117 = vmatpush1.msra.mxu0 %v4993
    %5118 = vmatprep.subr.mxu0 0.0
    %5119 = vmatpush1.msra.mxu0 %v4996
    %5120 = vmatprep.subr.mxu0 0.0
    %5121 = vmatpush1.msra.mxu0 %v4999
    %5122 = vmatprep.subr.mxu0 0.0
    %5123 = vmatpush1.msra.mxu0 %v5002
    %5124 = vmatprep.subr.mxu0 0.0
    %5125 = vmatpush1.msra.mxu0 %v5005
    %5126 = vmatprep.subr.mxu0 0.0
    %5127 = vmatpush1.msra.mxu0 0.0
    %5128 = vmatprep.subr.mxu0 0.0
    %5129 = vmatpush1.msra.mxu0 0.0
    %5130 = vmatprep.subr.mxu0 0.0
    %5131 = vmatpush1.msra.mxu0 0.0
    %5132 = vmatprep.subr.mxu0 0.0
    %5133 = vmatpush1.msra.mxu0 0.0
    %5134 = vmatprep.subr.mxu0 0.0
    %5135 = vmatpush1.msra.mxu0 0.0
    %5136 = vmatprep.subr.mxu0 0.0
    %5137 = vmatpush1.msra.mxu0 0.0
    %5138 = vmatprep.subr.mxu0 0.0
    %5139 = vmatpush1.msra.mxu0 0.0
    %5140 = vmatprep.subr.mxu0 0.0
    %5141 = vmatpush1.msra.mxu0 0.0
    %5142 = vmatprep.subr.mxu0 0.0
    %5143 = vmatpush1.msra.mxu0 0.0
    %5144 = vmatprep.subr.mxu0 0.0
    %5145 = vmatpush1.msra.mxu0 0.0
    %5146 = vmatprep.subr.mxu0 0.0
    %5147 = vmatpush1.msra.mxu0 0.0
    %5148 = vmatprep.subr.mxu0 0.0
    %5149 = vmatpush1.msra.mxu0 0.0
    %5150 = vmatprep.subr.mxu0 0.0
    %5151 = vmatpush1.msra.mxu0 0.0
    %5152 = vmatprep.subr.mxu0 0.0
    %5153 = vmatpush1.msra.mxu0 0.0
    %5154 = vmatprep.subr.mxu0 0.0
    %5155 = vmatpush1.msra.mxu0 0.0
    %5156 = vmatprep.subr.mxu0 0.0
    %5157 = vmatpush1.msra.mxu0 0.0
    %5158 = vmatprep.mubr.f32.mxu0 0.0
    %5159 = vmatmul.mubr.f32.gmra.mrb[0].mxu0 %v4537
    %v5160 = vpop.f32.mrb[0].mxu0
    %v5161 = vadd.f32 %v5019, %v5160
    %v5162 = vpop.f32.mrb[0].mxu0
    %5163 = vdwg.mxu0
    %v5164 = vadd.f32 %v4884, %v5090
    %v5165 = vxor.u32 %v5164, 2147483648
    %v5166 = vmul.f32 %v5165, 1.442695
    %v5167 = vpow.pop %v5166
    %v5168 = vadd.f32 %v5167, 1.0
    %v5169 = vrcp.pop %v5168
    %v5170 = vmul.f32 1.0, %v5169
    %v5171 = vadd.f32 %v4886, %v5092
    %v5172 = vxor.u32 %v5171, 2147483648
    %v5173 = vmul.f32 %v5172, 1.442695
    %v5174 = vpow.pop %v5173
    %v5175 = vadd.f32 %v5174, 1.0
    %v5176 = vrcp.pop %v5175
    %v5177 = vmul.f32 1.0, %v5176
    %v5178 = vmul.f32 %v5170, %v5161
    %v5179 = vadd.f32 %v4955, %v5178
    %v5180 = vtanh.pop %v5179
    %v5181 = vsub.f32 1.0, %v5177
    %v5182 = vmul.f32 %v5181, %v5180
    %v5183 = vmul.f32 %v5177, %v4537
    %v5184 = vadd.f32 %v5182, %v5183
    %v5185 = vld [vmem:[#allocation8] sm:$0xff]
    %v5186 = vld [vmem:[#allocation8 + $0x8] sm:$0xff]
    %v5187 = vld [vmem:[#allocation8 + $0x10] sm:$0xff]
    %v5188 = vld [vmem:[#allocation8 + $0x18] sm:$0xff]
    %v5189 = vld [vmem:[#allocation8 + $0x20] sm:$0xff]
    %v5190 = vld [vmem:[#allocation8 + $0x28] sm:$0xff]
    %v5191 = vld [vmem:[#allocation8 + $0x30] sm:$0xff]
    %v5192 = vld [vmem:[#allocation8 + $0x38] sm:$0xff]
    %v5193 = vld [vmem:[#allocation8 + $0x40] sm:$0xff]
    %v5194 = vld [vmem:[#allocation8 + $0x48] sm:$0xff]
    %v5195 = vld [vmem:[#allocation8 + $0x50] sm:$0xff]
    %v5196 = vld [vmem:[#allocation8 + $0x58] sm:$0xff]
    %v5197 = vld [vmem:[#allocation8 + $0x60] sm:$0xff]
    %v5198 = vld [vmem:[#allocation8 + $0x68] sm:$0xff]
    %v5199 = vld [vmem:[#allocation8 + $0x70] sm:$0xff]
    %v5200 = vld [vmem:[#allocation8 + $0x78] sm:$0xff]
    %v5201 = vld [vmem:[%s11] sm:$0x1]
    %v5203 = vlaneseq
    %v5204 = vshrl.u32 %v5203, 7
    %v5205 = vsub.s32 0, %v5204
    %v5206 = vrot.slane %v5201, %v5205
    %5208 = vmatprep.subr.mxu0 0.0
    %5209 = vmatpush1.msra.mxu0 %v5185
    %5210 = vmatprep.subr.mxu0 0.0
    %5211 = vmatpush1.msra.mxu0 %v5186
    %5212 = vmatprep.subr.mxu0 0.0
    %5213 = vmatpush1.msra.mxu0 %v5187
    %5214 = vmatprep.subr.mxu0 0.0
    %5215 = vmatpush1.msra.mxu0 %v5188
    %5216 = vmatprep.subr.mxu0 0.0
    %5217 = vmatpush1.msra.mxu0 %v5189
    %5218 = vmatprep.subr.mxu0 0.0
    %5219 = vmatpush1.msra.mxu0 %v5190
    %5220 = vmatprep.subr.mxu0 0.0
    %5221 = vmatpush1.msra.mxu0 %v5191
    %5222 = vmatprep.subr.mxu0 0.0
    %5223 = vmatpush1.msra.mxu0 %v5192
    %5224 = vmatprep.subr.mxu0 0.0
    %5225 = vmatpush1.msra.mxu0 %v5193
    %5226 = vmatprep.subr.mxu0 0.0
    %5227 = vmatpush1.msra.mxu0 %v5194
    %5228 = vmatprep.subr.mxu0 0.0
    %5229 = vmatpush1.msra.mxu0 %v5195
    %5230 = vmatprep.subr.mxu0 0.0
    %5231 = vmatpush1.msra.mxu0 %v5196
    %5232 = vmatprep.subr.mxu0 0.0
    %5233 = vmatpush1.msra.mxu0 %v5197
    %5234 = vmatprep.subr.mxu0 0.0
    %5235 = vmatpush1.msra.mxu0 %v5198
    %5236 = vmatprep.subr.mxu0 0.0
    %5237 = vmatpush1.msra.mxu0 %v5199
    %5238 = vmatprep.subr.mxu0 0.0
    %5239 = vmatpush1.msra.mxu0 %v5200
    %5240 = vmatprep.subr.mxu0 0.0
    %5241 = vmatpush1.msra.mxu0 0.0
    %5242 = vmatprep.subr.mxu0 0.0
    %5243 = vmatpush1.msra.mxu0 0.0
    %5244 = vmatprep.subr.mxu0 0.0
    %5245 = vmatpush1.msra.mxu0 0.0
    %5246 = vmatprep.subr.mxu0 0.0
    %5247 = vmatpush1.msra.mxu0 0.0
    %5248 = vmatprep.subr.mxu0 0.0
    %5249 = vmatpush1.msra.mxu0 0.0
    %5250 = vmatprep.subr.mxu0 0.0
    %5251 = vmatpush1.msra.mxu0 0.0
    %5252 = vmatprep.subr.mxu0 0.0
    %5253 = vmatpush1.msra.mxu0 0.0
    %5254 = vmatprep.subr.mxu0 0.0
    %5255 = vmatpush1.msra.mxu0 0.0
    %5256 = vmatprep.subr.mxu0 0.0
    %5257 = vmatpush1.msra.mxu0 0.0
    %5258 = vmatprep.subr.mxu0 0.0
    %5259 = vmatpush1.msra.mxu0 0.0
    %5260 = vmatprep.subr.mxu0 0.0
    %5261 = vmatpush1.msra.mxu0 0.0
    %5262 = vmatprep.subr.mxu0 0.0
    %5263 = vmatpush1.msra.mxu0 0.0
    %5264 = vmatprep.subr.mxu0 0.0
    %5265 = vmatpush1.msra.mxu0 0.0
    %5266 = vmatprep.subr.mxu0 0.0
    %5267 = vmatpush1.msra.mxu0 0.0
    %5268 = vmatprep.subr.mxu0 0.0
    %5269 = vmatpush1.msra.mxu0 0.0
    %5270 = vmatprep.subr.mxu0 0.0
    %5271 = vmatpush1.msra.mxu0 0.0
    %5272 = vmatprep.mubr.f32.mxu0 0.0
    %5273 = vmatmul.mubr.f32.gmra.mrb[0].mxu0 %v5184
    %v5274 = vpop.f32.mrb[0].mxu0
    %v5275 = vadd.f32 %v5206, %v5274
    %v5276 = vpop.f32.mrb[0].mxu0
    %5277 = vdwg.mxu0
    %s5278 = scalar_lea.vmem %s12, 56
    %5279 = vst [vmem:[%s5278] sm:$0xff] %v5275
    %5280 = vst [vmem:[#allocation2] sm:$0xff] %v5184
    // Predicated region
    $region70: #{rnn_critic_forward_seq.1} parent=1 // pred_check
      %p5281 = pneg %p98
    $region71: #{rnn_critic_forward_seq.1} parent=1 // pred_check_branch
      %5283 = sbr.rel (%p5281) target = $region73
    $region72: #{rnn_critic_forward_seq.1} parent=1 // pred_region
      %5284 = vst [vmem:[%s13] sm:$0xff] %v5184
    $region73: #{rnn_critic_forward_seq.1} parent=1 // pred_fallthru
      _
    // Predicated region
    $region74: #{rnn_critic_forward_seq.1} parent=1 // pred_check
      _
    $region75: #{rnn_critic_forward_seq.1} parent=1 // pred_check_branch
      %5286 = sbr.rel (0) target = $region77
    $region76: #{rnn_critic_forward_seq.1} parent=1 // pred_region
      _
    $region77: #{rnn_critic_forward_seq.1} parent=1 // pred_fallthru
      _
    // Predicated region
    $region78: #{rnn_critic_forward_seq.1} parent=1 // pred_check
      _
    $region79: #{rnn_critic_forward_seq.1} parent=1 // pred_check_branch
      %5288 = sbr.rel (0) target = $region81
    $region80: #{rnn_critic_forward_seq.1} parent=1 // pred_region
      _
    $region81: #{rnn_critic_forward_seq.1} parent=1 // pred_fallthru
      _
    // Predicated region
    $region82: #{rnn_critic_forward_seq.1} parent=1 // pred_check
      _
    $region83: #{rnn_critic_forward_seq.1} parent=1 // pred_check_branch
      %5290 = sbr.rel (0) target = $region85
    $region84: #{rnn_critic_forward_seq.1} parent=1 // pred_region
      _
    $region85: #{rnn_critic_forward_seq.1} parent=1 // pred_fallthru
      _
    // Predicated region
    $region86: #{rnn_critic_forward_seq.1} parent=1 // pred_check
      _
    $region87: #{rnn_critic_forward_seq.1} parent=1 // pred_check_branch
      %5292 = sbr.rel (0) target = $region89
    $region88: #{rnn_critic_forward_seq.1} parent=1 // pred_region
      _
    $region89: #{rnn_critic_forward_seq.1} parent=1 // pred_fallthru
      _
    %5293 = vsyncpa [#allocation4], 1
    %5294 = vsyncpa [#allocation6], 1
    %5295 = vsyncpa [#allocation9], 1

</llo_original>
